<compile_context>
chip_gen: v7x
topology: tpu7x:2x2x1
jax: 0.10.0
libtpu: 0.0.40
codegen_flags: <defaults>
</compile_context>

<pallas_src>
import math
import functools

import jax
import jax.numpy as jnp
from jax.experimental import pallas as pl
from jax.experimental.pallas import tpu as pltpu


# ----------------------------- tiling helpers ------------------------------

_TM = 512   # max rows per tile (multiple of 8; bandwidth-bound kernels like big)
_TN = 256   # max output lanes per tile (multiple of 128; MXU friendly)


def _row_tile(m):
    return m if m <= _TM else _TM


def _col_tile(n):
    return n if n <= _TN else _TN


def _mosaic_params(*sem):
    # 64 MiB budget: well under the 128 MiB VMEM of v5e/v6e.  On v7x (64 MiB
    # physical per TC) lower to ~48 MiB; actual usage at these tile caps is
    # far below either limit.
    return pltpu.CompilerParams(
        dimension_semantics=sem,
        vmem_limit_bytes=64 * 1024 * 1024,
    )


# ----------------------------- Pallas kernels ------------------------------

def _linear_kernel(x_ref, w_ref, b_ref, o_ref, *, activation):
    # x, w are bf16; accumulate in f32 on the MXU; bias/activation in f32.
    y = jnp.dot(x_ref[...], w_ref[...], preferred_element_type=jnp.float32)
    y = y + b_ref[...]
    if activation == "relu":
        y = jnp.maximum(y, 0.0)
    o_ref[...] = y.astype(o_ref.dtype)


def pallas_linear(x, w, b, *, activation=None, out_dtype=jnp.bfloat16,
                  n_major=False):
    """act(x @ w + b).  x: (M, K) bf16, w: (K, N) bf16, b: (N,) f32."""
    # TODO(synk): add a K reduction grid axis with a VMEM accumulator once K
    # exceeds a few thousand; all K in this model stay VMEM-resident.
    M, K = x.shape
    N = w.shape[1]
    tm, tn = _row_tile(M), _col_tile(N)
    gm, gn = pl.cdiv(M, tm), pl.cdiv(N, tn)

    if n_major:
        # Weight block changes only on the OUTER axis -> the (possibly huge,
        # e.g. vocab-sized) weight is streamed from HBM exactly once.
        grid = (gn, gm)
        x_map = lambda j, i: (i, 0)
        w_map = lambda j, i: (0, j)
        b_map = lambda j, i: (0, j)
        o_map = lambda j, i: (i, j)
    else:
        grid = (gm, gn)
        x_map = lambda i, j: (i, 0)
        w_map = lambda i, j: (0, j)
        b_map = lambda i, j: (0, j)
        o_map = lambda i, j: (i, j)

    out_bytes = jnp.dtype(out_dtype).itemsize
    return pl.pallas_call(
        functools.partial(_linear_kernel, activation=activation),
        out_shape=jax.ShapeDtypeStruct((M, N), out_dtype),
        grid=grid,
        in_specs=[
            pl.BlockSpec((tm, K), x_map),
            pl.BlockSpec((K, tn), w_map),
            pl.BlockSpec((1, tn), b_map),
        ],
        out_specs=pl.BlockSpec((tm, tn), o_map),
        compiler_params=_mosaic_params("parallel", "parallel"),
        cost_estimate=pl.CostEstimate(
            flops=2 * M * N * K,
            transcendentals=0,
            bytes_accessed=(M * K * 2 + K * N * 2 + N * 4 + M * N * out_bytes)),
    )(x, w, b.reshape(1, N))


def _mha_heads(q, k, v, nhead, scale, bias):
    """All heads of one batch element; q:(Sq,D), k/v:(Sk,D) bf16 -> (Sq,D) f32."""
    D = q.shape[-1]
    Dh = D // nhead
    outs = []
    for h in range(nhead):                      # small, unrolled
        sl = slice(h * Dh, (h + 1) * Dh)
        s = jax.lax.dot_general(q[:, sl], k[:, sl], (((1,), (1,)), ((), ())),
                                preferred_element_type=jnp.float32) * scale
        if bias is not None:
            s = s + bias
        m = jnp.max(s, axis=-1, keepdims=True)
        p = jnp.exp(s - m)
        l = jnp.sum(p, axis=-1, keepdims=True)
        o = jax.lax.dot_general(p.astype(v.dtype), v[:, sl],
                                (((1,), (0,)), ((), ())),
                                preferred_element_type=jnp.float32)
        outs.append(o * pl.reciprocal(l, approx=True))
    return jnp.concatenate(outs, axis=-1) if nhead > 1 else outs[0]


def _self_attn_kernel(qkv_ref, o_ref, *, nhead, scale, causal):
    # One batch element per grid step; Q/K/V sliced from the fused lane-dense
    # (S, 3D) block; causal mask generated in-kernel (no mask DMA).
    qkv = qkv_ref[0]                            # (S, 3D) bf16
    D = qkv.shape[-1] // 3
    q, k, v = qkv[:, :D], qkv[:, D:2 * D], qkv[:, 2 * D:]
    bias = None
    if causal:
        S = q.shape[0]
        qi = jax.lax.broadcasted_iota(jnp.int32, (S, S), 0)
        kj = jax.lax.broadcasted_iota(jnp.int32, (S, S), 1)
        bias = jnp.where(kj > qi, -1e30, 0.0).astype(jnp.float32)
    o_ref[0] = _mha_heads(q, k, v, nhead, scale, bias).astype(o_ref.dtype)


def _cross_attn_kernel(q_ref, kv_ref, o_ref, *, nhead, scale):
    q = q_ref[0]                                # (T, D)  bf16
    kv = kv_ref[0]                              # (S, 2D) bf16
    D = q.shape[-1]
    k, v = kv[:, :D], kv[:, D:]
    o_ref[0] = _mha_heads(q, k, v, nhead, scale, None).astype(o_ref.dtype)


def pallas_self_attention(qkv, nhead, scale, causal):
    # qkv: (B, S, 3D) bf16 -> (B, S, D) bf16 (lane-dense output, no head merge).
    # TODO(synk): flash/online-softmax path (Sk grid axis + VMEM m/l/acc
    # scratch) for seq >= ~2K, mandatory on v7x's 64 MiB VMEM.
    B, S, D3 = qkv.shape
    D = D3 // 3
    return pl.pallas_call(
        functools.partial(_self_attn_kernel, nhead=nhead, scale=scale,
                          causal=causal),
        out_shape=jax.ShapeDtypeStruct((B, S, D), jnp.bfloat16),
        grid=(B,),
        in_specs=[pl.BlockSpec((1, S, D3), lambda b: (b, 0, 0))],
        out_specs=pl.BlockSpec((1, S, D), lambda b: (b, 0, 0)),
        compiler_params=_mosaic_params("parallel"),
    )(qkv)


def pallas_cross_attention(q, kv, nhead, scale):
    # q: (B, T, D), kv: (B, S, 2D) bf16 -> (B, T, D) bf16.
    B, T, D = q.shape
    S = kv.shape[1]
    return pl.pallas_call(
        functools.partial(_cross_attn_kernel, nhead=nhead, scale=scale),
        out_shape=jax.ShapeDtypeStruct((B, T, D), jnp.bfloat16),
        grid=(B,),
        in_specs=[pl.BlockSpec((1, T, D), lambda b: (b, 0, 0)),
                  pl.BlockSpec((1, S, 2 * D), lambda b: (b, 0, 0))],
        out_specs=pl.BlockSpec((1, T, D), lambda b: (b, 0, 0)),
        compiler_params=_mosaic_params("parallel"),
    )(q, kv)


def _proj_add_ln_kernel(a_ref, w_ref, b_ref, res_ref, g_ref, beta_ref, o_ref,
                        *, eps):
    # attention out-projection + residual add + LayerNorm (post-norm), fused.
    y = jnp.dot(a_ref[...], w_ref[...],
                preferred_element_type=jnp.float32) + b_ref[...]
    z = y + res_ref[...].astype(jnp.float32)
    mean = jnp.mean(z, axis=-1, keepdims=True)
    c = z - mean
    var = jnp.mean(c * c, axis=-1, keepdims=True)
    o_ref[...] = (c * jax.lax.rsqrt(var + eps) * g_ref[...]
                  + beta_ref[...]).astype(o_ref.dtype)


def pallas_proj_add_layernorm(a, w, b, res, gamma, beta, eps=1e-5):
    # LayerNorm(res + a @ w + b).  a/res: (M, D) bf16, w: (D, D) bf16.
    M, D = a.shape
    tm = _row_tile(M)
    return pl.pallas_call(
        functools.partial(_proj_add_ln_kernel, eps=eps),
        out_shape=jax.ShapeDtypeStruct((M, D), jnp.bfloat16),
        grid=(pl.cdiv(M, tm),),
        in_specs=[
            pl.BlockSpec((tm, D), lambda i: (i, 0)),
            pl.BlockSpec((D, D), lambda i: (0, 0)),
            pl.BlockSpec((1, D), lambda i: (0, 0)),
            pl.BlockSpec((tm, D), lambda i: (i, 0)),
            pl.BlockSpec((1, D), lambda i: (0, 0)),
            pl.BlockSpec((1, D), lambda i: (0, 0)),
        ],
        out_specs=pl.BlockSpec((tm, D), lambda i: (i, 0)),
        compiler_params=_mosaic_params("parallel"),
    )(a, w, b.reshape(1, D), res, gamma.reshape(1, D), beta.reshape(1, D))


def _ffn_add_ln_kernel(x_ref, w1_ref, b1_ref, w2_ref, b2_ref, g_ref, beta_ref,
                       o_ref, *, eps):
    # relu(x @ w1 + b1) @ w2 + b2, + residual, + LayerNorm; the (tm, dff)
    # intermediate never touches HBM.
    x = x_ref[...]
    h = jnp.dot(x, w1_ref[...], preferred_element_type=jnp.float32) + b1_ref[...]
    h = jnp.maximum(h, 0.0)
    y = jnp.dot(h.astype(jnp.bfloat16), w2_ref[...],
                preferred_element_type=jnp.float32) + b2_ref[...]
    z = x.astype(jnp.float32) + y
    mean = jnp.mean(z, axis=-1, keepdims=True)
    c = z - mean
    var = jnp.mean(c * c, axis=-1, keepdims=True)
    o_ref[...] = (c * jax.lax.rsqrt(var + eps) * g_ref[...]
                  + beta_ref[...]).astype(o_ref.dtype)


def pallas_ffn_add_layernorm(x, w1, b1, w2, b2, gamma, beta, eps=1e-5):
    # TODO(synk): for very large dim_feedforward (or on v7x's 64 MiB VMEM),
    # add a dff reduction grid axis with a VMEM f32 accumulator / single-buffer
    # the constant-index weight blocks instead of keeping both fully resident.
    M, D = x.shape
    F = w1.shape[1]
    tm = _row_tile(M)
    return pl.pallas_call(
        functools.partial(_ffn_add_ln_kernel, eps=eps),
        out_shape=jax.ShapeDtypeStruct((M, D), jnp.bfloat16),
        grid=(pl.cdiv(M, tm),),
        in_specs=[
            pl.BlockSpec((tm, D), lambda i: (i, 0)),
            pl.BlockSpec((D, F), lambda i: (0, 0)),
            pl.BlockSpec((1, F), lambda i: (0, 0)),
            pl.BlockSpec((F, D), lambda i: (0, 0)),
            pl.BlockSpec((1, D), lambda i: (0, 0)),
            pl.BlockSpec((1, D), lambda i: (0, 0)),
            pl.BlockSpec((1, D), lambda i: (0, 0)),
        ],
        out_specs=pl.BlockSpec((tm, D), lambda i: (i, 0)),
        compiler_params=_mosaic_params("parallel"),
    )(x, w1, b1.reshape(1, F), w2, b2.reshape(1, D),
      gamma.reshape(1, D), beta.reshape(1, D))


def _ln_kernel(x_ref, g_ref, b_ref, o_ref, *, eps):
    x = x_ref[...].astype(jnp.float32)
    mean = jnp.mean(x, axis=-1, keepdims=True)
    c = x - mean
    var = jnp.mean(c * c, axis=-1, keepdims=True)
    o_ref[...] = (c * jax.lax.rsqrt(var + eps) * g_ref[...]
                  + b_ref[...]).astype(o_ref.dtype)


def pallas_layernorm(x, gamma, beta, eps=1e-5):
    # Residual-free LayerNorm (final encoder/decoder norms).
    M, D = x.shape
    tm = _row_tile(M)
    return pl.pallas_call(
        functools.partial(_ln_kernel, eps=eps),
        out_shape=jax.ShapeDtypeStruct((M, D), jnp.bfloat16),
        grid=(pl.cdiv(M, tm),),
        in_specs=[
            pl.BlockSpec((tm, D), lambda i: (i, 0)),
            pl.BlockSpec((1, D), lambda i: (0, 0)),
            pl.BlockSpec((1, D), lambda i: (0, 0)),
        ],
        out_specs=pl.BlockSpec((tm, D), lambda i: (i, 0)),
        compiler_params=_mosaic_params("parallel"),
    )(x, gamma.reshape(1, D), beta.reshape(1, D))


# ----------------------------- model blocks --------------------------------
# TODO(synk): at toy d_model (<128) the per-kernel launch / grid-step overhead
# dominates; the remaining lever there is fusing a whole encoder/decoder layer
# into one pallas_call.  Kept as separate fused kernels, which is the right
# decomposition at realistic d_model (>=512).

def encoder_layer(x, p, nhead):
    B, S, D = x.shape
    Dh = D // nhead
    scale = 1.0 / math.sqrt(Dh)
    x2 = x.reshape(B * S, D)

    sa = p["self_attn"]
    qkv = pallas_linear(x2, sa["wqkv"], sa["bqkv"])            # fused QKV GEMM
    o = pallas_self_attention(qkv.reshape(B, S, 3 * D), nhead, scale,
                              causal=False)                    # (B, S, D)
    x2 = pallas_proj_add_layernorm(o.reshape(B * S, D), sa["wo"], sa["bo"], x2,
                                   p["ln1_g"], p["ln1_b"])
    x2 = pallas_ffn_add_layernorm(x2, p["w1"], p["b1"], p["w2"], p["b2"],
                                  p["ln2_g"], p["ln2_b"])
    return x2.reshape(B, S, D)


def decoder_layer(y, memory, p, nhead):
    B, T, D = y.shape
    S = memory.shape[1]
    Dh = D // nhead
    scale = 1.0 / math.sqrt(Dh)
    y2 = y.reshape(B * T, D)
    m2 = memory.reshape(B * S, D)

    # Masked self-attention (causal mask generated inside the kernel).
    sa = p["self_attn"]
    qkv = pallas_linear(y2, sa["wqkv"], sa["bqkv"])
    o = pallas_self_attention(qkv.reshape(B, T, 3 * D), nhead, scale,
                              causal=True)
    y2 = pallas_proj_add_layernorm(o.reshape(B * T, D), sa["wo"], sa["bo"], y2,
                                   p["ln1_g"], p["ln1_b"])

    # Cross-attention (fused K/V projection of the memory).
    ca = p["cross_attn"]
    q = pallas_linear(y2, ca["wq"], ca["bq"])                  # (B*T, D)
    kv = pallas_linear(m2, ca["wkv"], ca["bkv"])               # (B*S, 2D)
    o = pallas_cross_attention(q.reshape(B, T, D), kv.reshape(B, S, 2 * D),
                               nhead, scale)
    y2 = pallas_proj_add_layernorm(o.reshape(B * T, D), ca["wo"], ca["bo"], y2,
                                   p["ln2_g"], p["ln2_b"])

    y2 = pallas_ffn_add_layernorm(y2, p["w1"], p["b1"], p["w2"], p["b2"],
                                  p["ln3_g"], p["ln3_b"])
    return y2.reshape(B, T, D)


def positional_encoding_table(max_len, d_model):
    position = jnp.arange(max_len, dtype=jnp.float32)[:, None]
    div_term = jnp.exp(jnp.arange(0, d_model, 2, dtype=jnp.float32) *
                       (-math.log(10000.0) / d_model))
    pe = jnp.zeros((max_len, d_model), jnp.float32)
    pe = pe.at[:, 0::2].set(jnp.sin(position * div_term))
    pe = pe.at[:, 1::2].set(jnp.cos(position * div_term))
    return pe


def transformer_forward(params, src, tgt, *, d_model, nhead):
    pe = params["pe"]
    scale = math.sqrt(d_model)
    # TODO(synk): embedding gather + PE add kept as XLA glue (no benefit from a
    # Pallas gather at these vocab sizes).  Dropout is identity (eval).
    src_emb = (params["src_emb"][src] * scale
               + pe[: src.shape[1]][None, :, :]).astype(jnp.bfloat16)
    tgt_emb = (params["tgt_emb"][tgt] * scale
               + pe[: tgt.shape[1]][None, :, :]).astype(jnp.bfloat16)

    # Encoder stack + final encoder LayerNorm.
    x = src_emb
    for lp in params["enc_layers"]:
        x = encoder_layer(x, lp, nhead)
    B, S, D = x.shape
    memory = pallas_layernorm(x.reshape(B * S, D),
                              params["enc_norm_g"],
                              params["enc_norm_b"]).reshape(B, S, D)

    # Decoder stack + final decoder LayerNorm.
    y = tgt_emb
    for lp in params["dec_layers"]:
        y = decoder_layer(y, memory, lp, nhead)
    B, T, D = y.shape
    y2 = pallas_layernorm(y.reshape(B * T, D),
                          params["dec_norm_g"], params["dec_norm_b"])

    # Output projection to tgt vocab: stream the big vocab weight once.
    logits = pallas_linear(y2, params["fc_w"], params["fc_b"],
                           out_dtype=jnp.float32, n_major=True)
    return logits.reshape(B, T, -1)


# ----------------------------- parameter init ------------------------------

def init_params(key, src_vocab, tgt_vocab, d_model, nhead, n_enc, n_dec, dff,
                max_len=5000):
    keys = iter(jax.random.split(key, 512))
    wdt = jnp.bfloat16   # matmul weights in bf16 (f32 MXU accumulation)

    def nrm(shape, s=0.05, dtype=jnp.float32):
        return (jax.random.normal(next(keys), shape, jnp.float32) * s).astype(dtype)

    def lin(d_in, d_out):
        return nrm((d_in, d_out), dtype=wdt), nrm((d_out,))

    def mha_self():
        p = {}
        p["wqkv"], p["bqkv"] = lin(d_model, 3 * d_model)   # fused Q|K|V
        p["wo"], p["bo"] = lin(d_model, d_model)
        return p

    def mha_cross():
        p = {}
        p["wq"], p["bq"] = lin(d_model, d_model)
        p["wkv"], p["bkv"] = lin(d_model, 2 * d_model)     # fused K|V
        p["wo"], p["bo"] = lin(d_model, d_model)
        return p

    def enc_layer():
        p = {"self_attn": mha_self()}
        p["w1"], p["b1"] = lin(d_model, dff)
        p["w2"], p["b2"] = lin(dff, d_model)
        for n in ("ln1", "ln2"):
            p[n + "_g"] = jnp.ones((d_model,), jnp.float32)
            p[n + "_b"] = jnp.zeros((d_model,), jnp.float32)
        return p

    def dec_layer():
        p = {"self_attn": mha_self(), "cross_attn": mha_cross()}
        p["w1"], p["b1"] = lin(d_model, dff)
        p["w2"], p["b2"] = lin(dff, d_model)
        for n in ("ln1", "ln2", "ln3"):
            p[n + "_g"] = jnp.ones((d_model,), jnp.float32)
            p[n + "_b"] = jnp.zeros((d_model,), jnp.float32)
        return p

    params = {
        "src_emb": nrm((src_vocab, d_model), 1.0),
        "tgt_emb": nrm((tgt_vocab, d_model), 1.0),
        "pe": positional_encoding_table(max_len, d_model),
        "enc_layers": [enc_layer() for _ in range(n_enc)],
        "dec_layers": [dec_layer() for _ in range(n_dec)],
        "enc_norm_g": jnp.ones((d_model,), jnp.float32),
        "enc_norm_b": jnp.zeros((d_model,), jnp.float32),
        "dec_norm_g": jnp.ones((d_model,), jnp.float32),
        "dec_norm_b": jnp.zeros((d_model,), jnp.float32),
    }
    params["fc_w"], params["fc_b"] = lin(d_model, tgt_vocab)
    return params


# --------------------------------- main -------------------------------------

if __name__ == "__main__":
    # Small but TPU-friendly hyperparameters (d_model = 128 keeps the lane dim
    # full; the module constructor allows any of these).
    src_vocab, tgt_vocab = 50, 60
    d_model, nhead, n_enc, n_dec, dff = 128, 4, 2, 2, 256
    B, S_src, S_tgt = 2, 12, 8

    key = jax.random.PRNGKey(0)
    k_params, k_src, k_tgt = jax.random.split(key, 3)

    params = init_params(k_params, src_vocab, tgt_vocab,
                         d_model, nhead, n_enc, n_dec, dff)
    src = jax.random.randint(k_src, (B, S_src), 0, src_vocab, dtype=jnp.int32)
    tgt = jax.random.randint(k_tgt, (B, S_tgt), 0, tgt_vocab, dtype=jnp.int32)

    fwd = jax.jit(functools.partial(transformer_forward,
                                    d_model=d_model, nhead=nhead))
    out = fwd(params, src, tgt)
    out = jax.block_until_ready(out)
    assert out.shape == (B, S_tgt, tgt_vocab), out.shape
    assert bool(jnp.all(jnp.isfinite(out)))
    print("KERNEL_OK")
</pallas_src>

<mosaic_0001>
module attributes {stable_mosaic.version = 11 : i64} {
  func.func @_linear_kernel(%arg0: i32, %arg1: i32, %arg2: memref<24x128xbf16, #tpu.memory_space<vmem>>, %arg3: memref<128x256xbf16, #tpu.memory_space<vmem>>, %arg4: memref<1x256xf32, #tpu.memory_space<vmem>>, %arg5: memref<24x256xbf16, #tpu.memory_space<vmem>>) attributes {dimension_semantics = [#tpu.dimension_semantics<parallel>, #tpu.dimension_semantics<parallel>], iteration_bounds = array<i64: 1, 2>, scalar_prefetch = 0 : i64, scratch_operands = 0 : i64, tpu.core_type = #tpu.core_type<tc>, window_params = [{transform_indices = @transform_0, window_bounds = array<i64: 24, 128>}, {transform_indices = @transform_1, window_bounds = array<i64: 128, 256>}, {transform_indices = @transform_2, window_bounds = array<i64: 1, 256>}, {transform_indices = @transform_3, window_bounds = array<i64: 24, 256>}]} {
    %c0 = arith.constant 0 : index
    %c0_0 = arith.constant 0 : index
    %0 = vector.load %arg2[%c0, %c0_0] : memref<24x128xbf16, #tpu.memory_space<vmem>>, vector<24x128xbf16>
    %c0_1 = arith.constant 0 : index
    %c0_2 = arith.constant 0 : index
    %1 = vector.load %arg3[%c0_1, %c0_2] : memref<128x256xbf16, #tpu.memory_space<vmem>>, vector<128x256xbf16>
    %cst = arith.constant dense<0.000000e+00> : vector<24x256xf32>
    %2 = tpu.matmul %0, %1, %cst {dimension_numbers = #tpu.dot_dimension_numbers<[1], [0], [0], [1], [0, 0, 1, 1], [], []>} : vector<24x128xbf16>, vector<128x256xbf16>, vector<24x256xf32> -> vector<24x256xf32>
    %c0_3 = arith.constant 0 : index
    %c0_4 = arith.constant 0 : index
    %3 = vector.load %arg4[%c0_3, %c0_4] : memref<1x256xf32, #tpu.memory_space<vmem>>, vector<1x256xf32>
    %4 = vector.broadcast %3 : vector<1x256xf32> to vector<24x256xf32>
    %5 = arith.addf %2, %4 : vector<24x256xf32>
    %6 = arith.truncf %5 : vector<24x256xf32> to vector<24x256xbf16>
    %c0_5 = arith.constant 0 : index
    %c0_6 = arith.constant 0 : index
    %7 = vector.load %arg5[%c0_5, %c0_6] : memref<24x256xbf16, #tpu.memory_space<vmem>>, vector<24x256xbf16>
    tpu.vector_store %arg5[%c0_5, %c0_6], %6 {strides = array<i32>} : memref<24x256xbf16, #tpu.memory_space<vmem>>, vector<24x256xbf16>,
    return
  }
  func.func @transform_0(%arg0: i32, %arg1: i32) -> (i32, i32) {
    %c0_i32 = arith.constant 0 : i32
    %c0_i32_0 = arith.constant 0 : i32
    return %arg0, %c0_i32 : i32, i32
  }
  func.func @transform_1(%arg0: i32, %arg1: i32) -> (i32, i32) {
    %c0_i32 = arith.constant 0 : i32
    %c0_i32_0 = arith.constant 0 : i32
    return %c0_i32, %arg1 : i32, i32
  }
  func.func @transform_2(%arg0: i32, %arg1: i32) -> (i32, i32) {
    %c0_i32 = arith.constant 0 : i32
    %c0_i32_0 = arith.constant 0 : i32
    return %c0_i32, %arg1 : i32, i32
  }
  func.func @transform_3(%arg0: i32, %arg1: i32) -> (i32, i32) {
    %c0_i32 = arith.constant 0 : i32
    return %arg0, %arg1 : i32, i32
  }
}

module attributes {stable_mosaic.version = 11 : i64} {
  func.func @_proj_add_ln_kernel(%arg0: i32, %arg1: memref<24x128xbf16, #tpu.memory_space<vmem>>, %arg2: memref<128x128xbf16, #tpu.memory_space<vmem>>, %arg3: memref<1x128xf32, #tpu.memory_space<vmem>>, %arg4: memref<24x128xbf16, #tpu.memory_space<vmem>>, %arg5: memref<1x128xf32, #tpu.memory_space<vmem>>, %arg6: memref<1x128xf32, #tpu.memory_space<vmem>>, %arg7: memref<24x128xbf16, #tpu.memory_space<vmem>>) attributes {dimension_semantics = [#tpu.dimension_semantics<parallel>], iteration_bounds = array<i64: 1>, scalar_prefetch = 0 : i64, scratch_operands = 0 : i64, tpu.core_type = #tpu.core_type<tc>, window_params = [{transform_indices = @transform_0, window_bounds = array<i64: 24, 128>}, {pipeline_mode = #tpu.pipeline_mode<synchronous>, transform_indices = @transform_1, window_bounds = array<i64: 128, 128>}, {pipeline_mode = #tpu.pipeline_mode<synchronous>, transform_indices = @transform_2, window_bounds = array<i64: 1, 128>}, {transform_indices = @transform_3, window_bounds = array<i64: 24, 128>}, {pipeline_mode = #tpu.pipeline_mode<synchronous>, transform_indices = @transform_4, window_bounds = array<i64: 1, 128>}, {pipeline_mode = #tpu.pipeline_mode<synchronous>, transform_indices = @transform_5, window_bounds = array<i64: 1, 128>}, {transform_indices = @transform_6, window_bounds = array<i64: 24, 128>}]} {
    %c0 = arith.constant 0 : index
    %c0_0 = arith.constant 0 : index
    %0 = vector.load %arg1[%c0, %c0_0] : memref<24x128xbf16, #tpu.memory_space<vmem>>, vector<24x128xbf16>
    %c0_1 = arith.constant 0 : index
    %c0_2 = arith.constant 0 : index
    %1 = vector.load %arg2[%c0_1, %c0_2] : memref<128x128xbf16, #tpu.memory_space<vmem>>, vector<128x128xbf16>
    %cst = arith.constant dense<0.000000e+00> : vector<24x128xf32>
    %2 = tpu.matmul %0, %1, %cst {dimension_numbers = #tpu.dot_dimension_numbers<[1], [0], [0], [1], [0, 0, 1, 1], [], []>} : vector<24x128xbf16>, vector<128x128xbf16>, vector<24x128xf32> -> vector<24x128xf32>
    %c0_3 = arith.constant 0 : index
    %c0_4 = arith.constant 0 : index
    %3 = vector.load %arg3[%c0_3, %c0_4] : memref<1x128xf32, #tpu.memory_space<vmem>>, vector<1x128xf32>
    %4 = vector.broadcast %3 : vector<1x128xf32> to vector<24x128xf32>
    %5 = arith.addf %2, %4 : vector<24x128xf32>
    %c0_5 = arith.constant 0 : index
    %c0_6 = arith.constant 0 : index
    %6 = vector.load %arg4[%c0_5, %c0_6] : memref<24x128xbf16, #tpu.memory_space<vmem>>, vector<24x128xbf16>
    %7 = arith.extf %6 : vector<24x128xbf16> to vector<24x128xf32>
    %8 = arith.addf %5, %7 : vector<24x128xf32>
    %cst_7 = arith.constant dense<0.000000e+00> : vector<24xf32>
    %9 = vector.multi_reduction <add>, %8, %cst_7 [1] : vector<24x128xf32> to vector<24xf32>
    %10 = vector.shape_cast %9 : vector<24xf32> to vector<24x1xf32>
    %cst_8 = arith.constant 1.280000e+02 : f32
    %11 = vector.broadcast %cst_8 : f32 to vector<24x1xf32>
    %12 = arith.divf %10, %11 : vector<24x1xf32>
    %13 = vector.broadcast %12 : vector<24x1xf32> to vector<24x128xf32>
    %14 = arith.subf %8, %13 : vector<24x128xf32>
    %15 = arith.mulf %14, %14 : vector<24x128xf32>
    %cst_9 = arith.constant dense<0.000000e+00> : vector<24xf32>
    %16 = vector.multi_reduction <add>, %15, %cst_9 [1] : vector<24x128xf32> to vector<24xf32>
    %17 = vector.shape_cast %16 : vector<24xf32> to vector<24x1xf32>
    %cst_10 = arith.constant 1.280000e+02 : f32
    %18 = vector.broadcast %cst_10 : f32 to vector<24x1xf32>
    %19 = arith.divf %17, %18 : vector<24x1xf32>
    %cst_11 = arith.constant 9.99999974E-6 : f32
    %20 = vector.broadcast %cst_11 : f32 to vector<24x1xf32>
    %21 = arith.addf %19, %20 : vector<24x1xf32>
    %22 = math.rsqrt %21 : vector<24x1xf32>
    %23 = vector.broadcast %22 : vector<24x1xf32> to vector<24x128xf32>
    %24 = arith.mulf %14, %23 : vector<24x128xf32>
    %c0_12 = arith.constant 0 : index
    %c0_13 = arith.constant 0 : index
    %25 = vector.load %arg5[%c0_12, %c0_13] : memref<1x128xf32, #tpu.memory_space<vmem>>, vector<1x128xf32>
    %26 = vector.broadcast %25 : vector<1x128xf32> to vector<24x128xf32>
    %27 = arith.mulf %24, %26 : vector<24x128xf32>
    %c0_14 = arith.constant 0 : index
    %c0_15 = arith.constant 0 : index
    %28 = vector.load %arg6[%c0_14, %c0_15] : memref<1x128xf32, #tpu.memory_space<vmem>>, vector<1x128xf32>
    %29 = vector.broadcast %28 : vector<1x128xf32> to vector<24x128xf32>
    %30 = arith.addf %27, %29 : vector<24x128xf32>
    %31 = arith.truncf %30 : vector<24x128xf32> to vector<24x128xbf16>
    %c0_16 = arith.constant 0 : index
    %c0_17 = arith.constant 0 : index
    %32 = vector.load %arg7[%c0_16, %c0_17] : memref<24x128xbf16, #tpu.memory_space<vmem>>, vector<24x128xbf16>
    tpu.vector_store %arg7[%c0_16, %c0_17], %31 {strides = array<i32>} : memref<24x128xbf16, #tpu.memory_space<vmem>>, vector<24x128xbf16>,
    return
  }
  func.func @transform_0(%arg0: i32) -> (i32, i32) {
    %c0_i32 = arith.constant 0 : i32
    %c0_i32_0 = arith.constant 0 : i32
    return %arg0, %c0_i32 : i32, i32
  }
  func.func @transform_1(%arg0: i32) -> (i32, i32) {
    %c0_i32 = arith.constant 0 : i32
    %c0_i32_0 = arith.constant 0 : i32
    %c0_i32_1 = arith.constant 0 : i32
    return %c0_i32, %c0_i32_0 : i32, i32
  }
  func.func @transform_2(%arg0: i32) -> (i32, i32) {
    %c0_i32 = arith.constant 0 : i32
    %c0_i32_0 = arith.constant 0 : i32
    %c0_i32_1 = arith.constant 0 : i32
    return %c0_i32, %c0_i32_0 : i32, i32
  }
  func.func @transform_3(%arg0: i32) -> (i32, i32) {
    %c0_i32 = arith.constant 0 : i32
    %c0_i32_0 = arith.constant 0 : i32
    return %arg0, %c0_i32 : i32, i32
  }
  func.func @transform_4(%arg0: i32) -> (i32, i32) {
    %c0_i32 = arith.constant 0 : i32
    %c0_i32_0 = arith.constant 0 : i32
    %c0_i32_1 = arith.constant 0 : i32
    return %c0_i32, %c0_i32_0 : i32, i32
  }
  func.func @transform_5(%arg0: i32) -> (i32, i32) {
    %c0_i32 = arith.constant 0 : i32
    %c0_i32_0 = arith.constant 0 : i32
    %c0_i32_1 = arith.constant 0 : i32
    return %c0_i32, %c0_i32_0 : i32, i32
  }
  func.func @transform_6(%arg0: i32) -> (i32, i32) {
    %c0_i32 = arith.constant 0 : i32
    %c0_i32_0 = arith.constant 0 : i32
    return %arg0, %c0_i32 : i32, i32
  }
}

module attributes {stable_mosaic.version = 11 : i64} {
  func.func @_ffn_add_ln_kernel(%arg0: i32, %arg1: memref<24x128xbf16, #tpu.memory_space<vmem>>, %arg2: memref<128x256xbf16, #tpu.memory_space<vmem>>, %arg3: memref<1x256xf32, #tpu.memory_space<vmem>>, %arg4: memref<256x128xbf16, #tpu.memory_space<vmem>>, %arg5: memref<1x128xf32, #tpu.memory_space<vmem>>, %arg6: memref<1x128xf32, #tpu.memory_space<vmem>>, %arg7: memref<1x128xf32, #tpu.memory_space<vmem>>, %arg8: memref<24x128xbf16, #tpu.memory_space<vmem>>) attributes {dimension_semantics = [#tpu.dimension_semantics<parallel>], iteration_bounds = array<i64: 1>, scalar_prefetch = 0 : i64, scratch_operands = 0 : i64, tpu.core_type = #tpu.core_type<tc>, window_params = [{transform_indices = @transform_0, window_bounds = array<i64: 24, 128>}, {pipeline_mode = #tpu.pipeline_mode<synchronous>, transform_indices = @transform_1, window_bounds = array<i64: 128, 256>}, {pipeline_mode = #tpu.pipeline_mode<synchronous>, transform_indices = @transform_2, window_bounds = array<i64: 1, 256>}, {pipeline_mode = #tpu.pipeline_mode<synchronous>, transform_indices = @transform_3, window_bounds = array<i64: 256, 128>}, {pipeline_mode = #tpu.pipeline_mode<synchronous>, transform_indices = @transform_4, window_bounds = array<i64: 1, 128>}, {pipeline_mode = #tpu.pipeline_mode<synchronous>, transform_indices = @transform_5, window_bounds = array<i64: 1, 128>}, {pipeline_mode = #tpu.pipeline_mode<synchronous>, transform_indices = @transform_6, window_bounds = array<i64: 1, 128>}, {transform_indices = @transform_7, window_bounds = array<i64: 24, 128>}]} {
    %c0 = arith.constant 0 : index
    %c0_0 = arith.constant 0 : index
    %0 = vector.load %arg1[%c0, %c0_0] : memref<24x128xbf16, #tpu.memory_space<vmem>>, vector<24x128xbf16>
    %c0_1 = arith.constant 0 : index
    %c0_2 = arith.constant 0 : index
    %1 = vector.load %arg2[%c0_1, %c0_2] : memref<128x256xbf16, #tpu.memory_space<vmem>>, vector<128x256xbf16>
    %cst = arith.constant dense<0.000000e+00> : vector<24x256xf32>
    %2 = tpu.matmul %0, %1, %cst {dimension_numbers = #tpu.dot_dimension_numbers<[1], [0], [0], [1], [0, 0, 1, 1], [], []>} : vector<24x128xbf16>, vector<128x256xbf16>, vector<24x256xf32> -> vector<24x256xf32>
    %c0_3 = arith.constant 0 : index
    %c0_4 = arith.constant 0 : index
    %3 = vector.load %arg3[%c0_3, %c0_4] : memref<1x256xf32, #tpu.memory_space<vmem>>, vector<1x256xf32>
    %4 = vector.broadcast %3 : vector<1x256xf32> to vector<24x256xf32>
    %5 = arith.addf %2, %4 : vector<24x256xf32>
    %cst_5 = arith.constant 0.000000e+00 : f32
    %6 = vector.broadcast %cst_5 : f32 to vector<24x256xf32>
    %7 = arith.maximumf %5, %6 : vector<24x256xf32>
    %8 = arith.truncf %7 : vector<24x256xf32> to vector<24x256xbf16>
    %c0_6 = arith.constant 0 : index
    %c0_7 = arith.constant 0 : index
    %9 = vector.load %arg4[%c0_6, %c0_7] : memref<256x128xbf16, #tpu.memory_space<vmem>>, vector<256x128xbf16>
    %cst_8 = arith.constant dense<0.000000e+00> : vector<24x128xf32>
    %10 = tpu.matmul %8, %9, %cst_8 {dimension_numbers = #tpu.dot_dimension_numbers<[1], [0], [0], [1], [0, 0, 1, 1], [], []>} : vector<24x256xbf16>, vector<256x128xbf16>, vector<24x128xf32> -> vector<24x128xf32>
    %c0_9 = arith.constant 0 : index
    %c0_10 = arith.constant 0 : index
    %11 = vector.load %arg5[%c0_9, %c0_10] : memref<1x128xf32, #tpu.memory_space<vmem>>, vector<1x128xf32>
    %12 = vector.broadcast %11 : vector<1x128xf32> to vector<24x128xf32>
    %13 = arith.addf %10, %12 : vector<24x128xf32>
    %14 = arith.extf %0 : vector<24x128xbf16> to vector<24x128xf32>
    %15 = arith.addf %14, %13 : vector<24x128xf32>
    %cst_11 = arith.constant dense<0.000000e+00> : vector<24xf32>
    %16 = vector.multi_reduction <add>, %15, %cst_11 [1] : vector<24x128xf32> to vector<24xf32>
    %17 = vector.shape_cast %16 : vector<24xf32> to vector<24x1xf32>
    %cst_12 = arith.constant 1.280000e+02 : f32
    %18 = vector.broadcast %cst_12 : f32 to vector<24x1xf32>
    %19 = arith.divf %17, %18 : vector<24x1xf32>
    %20 = vector.broadcast %19 : vector<24x1xf32> to vector<24x128xf32>
    %21 = arith.subf %15, %20 : vector<24x128xf32>
    %22 = arith.mulf %21, %21 : vector<24x128xf32>
    %cst_13 = arith.constant dense<0.000000e+00> : vector<24xf32>
    %23 = vector.multi_reduction <add>, %22, %cst_13 [1] : vector<24x128xf32> to vector<24xf32>
    %24 = vector.shape_cast %23 : vector<24xf32> to vector<24x1xf32>
    %cst_14 = arith.constant 1.280000e+02 : f32
    %25 = vector.broadcast %cst_14 : f32 to vector<24x1xf32>
    %26 = arith.divf %24, %25 : vector<24x1xf32>
    %cst_15 = arith.constant 9.99999974E-6 : f32
    %27 = vector.broadcast %cst_15 : f32 to vector<24x1xf32>
    %28 = arith.addf %26, %27 : vector<24x1xf32>
    %29 = math.rsqrt %28 : vector<24x1xf32>
    %30 = vector.broadcast %29 : vector<24x1xf32> to vector<24x128xf32>
    %31 = arith.mulf %21, %30 : vector<24x128xf32>
    %c0_16 = arith.constant 0 : index
    %c0_17 = arith.constant 0 : index
    %32 = vector.load %arg6[%c0_16, %c0_17] : memref<1x128xf32, #tpu.memory_space<vmem>>, vector<1x128xf32>
    %33 = vector.broadcast %32 : vector<1x128xf32> to vector<24x128xf32>
    %34 = arith.mulf %31, %33 : vector<24x128xf32>
    %c0_18 = arith.constant 0 : index
    %c0_19 = arith.constant 0 : index
    %35 = vector.load %arg7[%c0_18, %c0_19] : memref<1x128xf32, #tpu.memory_space<vmem>>, vector<1x128xf32>
    %36 = vector.broadcast %35 : vector<1x128xf32> to vector<24x128xf32>
    %37 = arith.addf %34, %36 : vector<24x128xf32>
    %38 = arith.truncf %37 : vector<24x128xf32> to vector<24x128xbf16>
    %c0_20 = arith.constant 0 : index
    %c0_21 = arith.constant 0 : index
    %39 = vector.load %arg8[%c0_20, %c0_21] : memref<24x128xbf16, #tpu.memory_space<vmem>>, vector<24x128xbf16>
    tpu.vector_store %arg8[%c0_20, %c0_21], %38 {strides = array<i32>} : memref<24x128xbf16, #tpu.memory_space<vmem>>, vector<24x128xbf16>,
    return
  }
  func.func @transform_0(%arg0: i32) -> (i32, i32) {
    %c0_i32 = arith.constant 0 : i32
    %c0_i32_0 = arith.constant 0 : i32
    return %arg0, %c0_i32 : i32, i32
  }
  func.func @transform_1(%arg0: i32) -> (i32, i32) {
    %c0_i32 = arith.constant 0 : i32
    %c0_i32_0 = arith.constant 0 : i32
    %c0_i32_1 = arith.constant 0 : i32
    return %c0_i32, %c0_i32_0 : i32, i32
  }
  func.func @transform_2(%arg0: i32) -> (i32, i32) {
    %c0_i32 = arith.constant 0 : i32
    %c0_i32_0 = arith.constant 0 : i32
    %c0_i32_1 = arith.constant 0 : i32
    return %c0_i32, %c0_i32_0 : i32, i32
  }
  func.func @transform_3(%arg0: i32) -> (i32, i32) {
    %c0_i32 = arith.constant 0 : i32
    %c0_i32_0 = arith.constant 0 : i32
    %c0_i32_1 = arith.constant 0 : i32
    return %c0_i32, %c0_i32_0 : i32, i32
  }
  func.func @transform_4(%arg0: i32) -> (i32, i32) {
    %c0_i32 = arith.constant 0 : i32
    %c0_i32_0 = arith.constant 0 : i32
    %c0_i32_1 = arith.constant 0 : i32
    return %c0_i32, %c0_i32_0 : i32, i32
  }
  func.func @transform_5(%arg0: i32) -> (i32, i32) {
    %c0_i32 = arith.constant 0 : i32
    %c0_i32_0 = arith.constant 0 : i32
    %c0_i32_1 = arith.constant 0 : i32
    return %c0_i32, %c0_i32_0 : i32, i32
  }
  func.func @transform_6(%arg0: i32) -> (i32, i32) {
    %c0_i32 = arith.constant 0 : i32
    %c0_i32_0 = arith.constant 0 : i32
    %c0_i32_1 = arith.constant 0 : i32
    return %c0_i32, %c0_i32_0 : i32, i32
  }
  func.func @transform_7(%arg0: i32) -> (i32, i32) {
    %c0_i32 = arith.constant 0 : i32
    %c0_i32_0 = arith.constant 0 : i32
    return %arg0, %c0_i32 : i32, i32
  }
}

module attributes {stable_mosaic.version = 11 : i64} {
  func.func @_self_attn_kernel(%arg0: i32, %arg1: memref<1x12x384xbf16, #tpu.memory_space<vmem>>, %arg2: memref<1x12x128xbf16, #tpu.memory_space<vmem>>) attributes {dimension_semantics = [#tpu.dimension_semantics<parallel>], iteration_bounds = array<i64: 2>, scalar_prefetch = 0 : i64, scratch_operands = 0 : i64, tpu.core_type = #tpu.core_type<tc>, window_params = [{transform_indices = @transform_0, window_bounds = array<i64: 1, 12, 384>}, {transform_indices = @transform_1, window_bounds = array<i64: 1, 12, 128>}]} {
    %c0 = arith.constant 0 : index
    %c0_0 = arith.constant 0 : index
    %c0_1 = arith.constant 0 : index
    %0 = vector.load %arg1[%c0, %c0_0, %c0_1] : memref<1x12x384xbf16, #tpu.memory_space<vmem>>, vector<1x12x384xbf16>
    %1 = vector.shape_cast %0 : vector<1x12x384xbf16> to vector<12x384xbf16>
    %2 = vector.extract_strided_slice %1 {offsets = [0, 0], sizes = [12, 128], strides = [1, 1]} : vector<12x384xbf16> to vector<12x128xbf16>
    %3 = vector.extract_strided_slice %1 {offsets = [0, 128], sizes = [12, 128], strides = [1, 1]} : vector<12x384xbf16> to vector<12x128xbf16>
    %4 = vector.extract_strided_slice %1 {offsets = [0, 256], sizes = [12, 128], strides = [1, 1]} : vector<12x384xbf16> to vector<12x128xbf16>
    %5 = vector.extract_strided_slice %2 {offsets = [0, 0], sizes = [12, 32], strides = [1, 1]} : vector<12x128xbf16> to vector<12x32xbf16>
    %6 = vector.extract_strided_slice %3 {offsets = [0, 0], sizes = [12, 32], strides = [1, 1]} : vector<12x128xbf16> to vector<12x32xbf16>
    %cst = arith.constant dense<0.000000e+00> : vector<12x12xf32>
    %7 = tpu.matmul %5, %6, %cst {dimension_numbers = #tpu.dot_dimension_numbers<[1], [1], [0], [0], [0, 0, 1, 0], [], []>} : vector<12x32xbf16>, vector<12x32xbf16>, vector<12x12xf32> -> vector<12x12xf32>
    %cst_2 = arith.constant 0.176776692 : f32
    %8 = vector.broadcast %cst_2 : f32 to vector<12x12xf32>
    %9 = arith.mulf %7, %8 : vector<12x12xf32>
    %cst_3 = arith.constant dense<0xFF800000> : vector<12xf32>
    %10 = vector.multi_reduction <maximumf>, %9, %cst_3 [1] : vector<12x12xf32> to vector<12xf32>
    %11 = vector.shape_cast %10 : vector<12xf32> to vector<12x1xf32>
    %12 = vector.broadcast %11 : vector<12x1xf32> to vector<12x12xf32>
    %13 = arith.subf %9, %12 : vector<12x12xf32>
    %14 = math.exp %13 : vector<12x12xf32>
    %cst_4 = arith.constant dense<0.000000e+00> : vector<12xf32>
    %15 = vector.multi_reduction <add>, %14, %cst_4 [1] : vector<12x12xf32> to vector<12xf32>
    %16 = vector.shape_cast %15 : vector<12xf32> to vector<12x1xf32>
    %17 = arith.truncf %14 : vector<12x12xf32> to vector<12x12xbf16>
    %18 = vector.extract_strided_slice %4 {offsets = [0, 0], sizes = [12, 32], strides = [1, 1]} : vector<12x128xbf16> to vector<12x32xbf16>
    %cst_5 = arith.constant dense<0.000000e+00> : vector<12x32xf32>
    %19 = tpu.matmul %17, %18, %cst_5 {dimension_numbers = #tpu.dot_dimension_numbers<[1], [0], [0], [1], [0, 0, 1, 1], [], []>} : vector<12x12xbf16>, vector<12x32xbf16>, vector<12x32xf32> -> vector<12x32xf32>
    %20 = tpu.reciprocal %16 {approx = true} : vector<12x1xf32> -> vector<12x1xf32>
    %21 = vector.broadcast %20 : vector<12x1xf32> to vector<12x32xf32>
    %22 = arith.mulf %19, %21 : vector<12x32xf32>
    %23 = vector.extract_strided_slice %2 {offsets = [0, 32], sizes = [12, 32], strides = [1, 1]} : vector<12x128xbf16> to vector<12x32xbf16>
    %24 = vector.extract_strided_slice %3 {offsets = [0, 32], sizes = [12, 32], strides = [1, 1]} : vector<12x128xbf16> to vector<12x32xbf16>
    %cst_6 = arith.constant dense<0.000000e+00> : vector<12x12xf32>
    %25 = tpu.matmul %23, %24, %cst_6 {dimension_numbers = #tpu.dot_dimension_numbers<[1], [1], [0], [0], [0, 0, 1, 0], [], []>} : vector<12x32xbf16>, vector<12x32xbf16>, vector<12x12xf32> -> vector<12x12xf32>
    %cst_7 = arith.constant 0.176776692 : f32
    %26 = vector.broadcast %cst_7 : f32 to vector<12x12xf32>
    %27 = arith.mulf %25, %26 : vector<12x12xf32>
    %cst_8 = arith.constant dense<0xFF800000> : vector<12xf32>
    %28 = vector.multi_reduction <maximumf>, %27, %cst_8 [1] : vector<12x12xf32> to vector<12xf32>
    %29 = vector.shape_cast %28 : vector<12xf32> to vector<12x1xf32>
    %30 = vector.broadcast %29 : vector<12x1xf32> to vector<12x12xf32>
    %31 = arith.subf %27, %30 : vector<12x12xf32>
    %32 = math.exp %31 : vector<12x12xf32>
    %cst_9 = arith.constant dense<0.000000e+00> : vector<12xf32>
    %33 = vector.multi_reduction <add>, %32, %cst_9 [1] : vector<12x12xf32> to vector<12xf32>
    %34 = vector.shape_cast %33 : vector<12xf32> to vector<12x1xf32>
    %35 = arith.truncf %32 : vector<12x12xf32> to vector<12x12xbf16>
    %36 = vector.extract_strided_slice %4 {offsets = [0, 32], sizes = [12, 32], strides = [1, 1]} : vector<12x128xbf16> to vector<12x32xbf16>
    %cst_10 = arith.constant dense<0.000000e+00> : vector<12x32xf32>
    %37 = tpu.matmul %35, %36, %cst_10 {dimension_numbers = #tpu.dot_dimension_numbers<[1], [0], [0], [1], [0, 0, 1, 1], [], []>} : vector<12x12xbf16>, vector<12x32xbf16>, vector<12x32xf32> -> vector<12x32xf32>
    %38 = tpu.reciprocal %34 {approx = true} : vector<12x1xf32> -> vector<12x1xf32>
    %39 = vector.broadcast %38 : vector<12x1xf32> to vector<12x32xf32>
    %40 = arith.mulf %37, %39 : vector<12x32xf32>
    %41 = vector.extract_strided_slice %2 {offsets = [0, 64], sizes = [12, 32], strides = [1, 1]} : vector<12x128xbf16> to vector<12x32xbf16>
    %42 = vector.extract_strided_slice %3 {offsets = [0, 64], sizes = [12, 32], strides = [1, 1]} : vector<12x128xbf16> to vector<12x32xbf16>
    %cst_11 = arith.constant dense<0.000000e+00> : vector<12x12xf32>
    %43 = tpu.matmul %41, %42, %cst_11 {dimension_numbers = #tpu.dot_dimension_numbers<[1], [1], [0], [0], [0, 0, 1, 0], [], []>} : vector<12x32xbf16>, vector<12x32xbf16>, vector<12x12xf32> -> vector<12x12xf32>
    %cst_12 = arith.constant 0.176776692 : f32
    %44 = vector.broadcast %cst_12 : f32 to vector<12x12xf32>
    %45 = arith.mulf %43, %44 : vector<12x12xf32>
    %cst_13 = arith.constant dense<0xFF800000> : vector<12xf32>
    %46 = vector.multi_reduction <maximumf>, %45, %cst_13 [1] : vector<12x12xf32> to vector<12xf32>
    %47 = vector.shape_cast %46 : vector<12xf32> to vector<12x1xf32>
    %48 = vector.broadcast %47 : vector<12x1xf32> to vector<12x12xf32>
    %49 = arith.subf %45, %48 : vector<12x12xf32>
    %50 = math.exp %49 : vector<12x12xf32>
    %cst_14 = arith.constant dense<0.000000e+00> : vector<12xf32>
    %51 = vector.multi_reduction <add>, %50, %cst_14 [1] : vector<12x12xf32> to vector<12xf32>
    %52 = vector.shape_cast %51 : vector<12xf32> to vector<12x1xf32>
    %53 = arith.truncf %50 : vector<12x12xf32> to vector<12x12xbf16>
    %54 = vector.extract_strided_slice %4 {offsets = [0, 64], sizes = [12, 32], strides = [1, 1]} : vector<12x128xbf16> to vector<12x32xbf16>
    %cst_15 = arith.constant dense<0.000000e+00> : vector<12x32xf32>
    %55 = tpu.matmul %53, %54, %cst_15 {dimension_numbers = #tpu.dot_dimension_numbers<[1], [0], [0], [1], [0, 0, 1, 1], [], []>} : vector<12x12xbf16>, vector<12x32xbf16>, vector<12x32xf32> -> vector<12x32xf32>
    %56 = tpu.reciprocal %52 {approx = true} : vector<12x1xf32> -> vector<12x1xf32>
    %57 = vector.broadcast %56 : vector<12x1xf32> to vector<12x32xf32>
    %58 = arith.mulf %55, %57 : vector<12x32xf32>
    %59 = vector.extract_strided_slice %2 {offsets = [0, 96], sizes = [12, 32], strides = [1, 1]} : vector<12x128xbf16> to vector<12x32xbf16>
    %60 = vector.extract_strided_slice %3 {offsets = [0, 96], sizes = [12, 32], strides = [1, 1]} : vector<12x128xbf16> to vector<12x32xbf16>
    %cst_16 = arith.constant dense<0.000000e+00> : vector<12x12xf32>
    %61 = tpu.matmul %59, %60, %cst_16 {dimension_numbers = #tpu.dot_dimension_numbers<[1], [1], [0], [0], [0, 0, 1, 0], [], []>} : vector<12x32xbf16>, vector<12x32xbf16>, vector<12x12xf32> -> vector<12x12xf32>
    %cst_17 = arith.constant 0.176776692 : f32
    %62 = vector.broadcast %cst_17 : f32 to vector<12x12xf32>
    %63 = arith.mulf %61, %62 : vector<12x12xf32>
    %cst_18 = arith.constant dense<0xFF800000> : vector<12xf32>
    %64 = vector.multi_reduction <maximumf>, %63, %cst_18 [1] : vector<12x12xf32> to vector<12xf32>
    %65 = vector.shape_cast %64 : vector<12xf32> to vector<12x1xf32>
    %66 = vector.broadcast %65 : vector<12x1xf32> to vector<12x12xf32>
    %67 = arith.subf %63, %66 : vector<12x12xf32>
    %68 = math.exp %67 : vector<12x12xf32>
    %cst_19 = arith.constant dense<0.000000e+00> : vector<12xf32>
    %69 = vector.multi_reduction <add>, %68, %cst_19 [1] : vector<12x12xf32> to vector<12xf32>
    %70 = vector.shape_cast %69 : vector<12xf32> to vector<12x1xf32>
    %71 = arith.truncf %68 : vector<12x12xf32> to vector<12x12xbf16>
    %72 = vector.extract_strided_slice %4 {offsets = [0, 96], sizes = [12, 32], strides = [1, 1]} : vector<12x128xbf16> to vector<12x32xbf16>
    %cst_20 = arith.constant dense<0.000000e+00> : vector<12x32xf32>
    %73 = tpu.matmul %71, %72, %cst_20 {dimension_numbers = #tpu.dot_dimension_numbers<[1], [0], [0], [1], [0, 0, 1, 1], [], []>} : vector<12x12xbf16>, vector<12x32xbf16>, vector<12x32xf32> -> vector<12x32xf32>
    %74 = tpu.reciprocal %70 {approx = true} : vector<12x1xf32> -> vector<12x1xf32>
    %75 = vector.broadcast %74 : vector<12x1xf32> to vector<12x32xf32>
    %76 = arith.mulf %73, %75 : vector<12x32xf32>
    %77 = tpu.concatenate %22, %40, %58, %76 in 1 : vector<12x32xf32>, vector<12x32xf32>, vector<12x32xf32>, vector<12x32xf32> -> vector<12x128xf32>
    %78 = arith.truncf %77 : vector<12x128xf32> to vector<12x128xbf16>
    %c0_21 = arith.constant 0 : index
    %c0_22 = arith.constant 0 : index
    %c0_23 = arith.constant 0 : index
    %79 = vector.load %arg2[%c0_21, %c0_22, %c0_23] : memref<1x12x128xbf16, #tpu.memory_space<vmem>>, vector<1x12x128xbf16>
    %80 = vector.shape_cast %79 : vector<1x12x128xbf16> to vector<12x128xbf16>
    %81 = vector.shape_cast %78 : vector<12x128xbf16> to vector<1x12x128xbf16>
    tpu.vector_store %arg2[%c0_21, %c0_22, %c0_23], %81 {strides = array<i32>} : memref<1x12x128xbf16, #tpu.memory_space<vmem>>, vector<1x12x128xbf16>,
    return
  }
  func.func @transform_0(%arg0: i32) -> (i32, i32, i32) {
    %c0_i32 = arith.constant 0 : i32
    %c0_i32_0 = arith.constant 0 : i32
    %c0_i32_1 = arith.constant 0 : i32
    return %arg0, %c0_i32, %c0_i32_0 : i32, i32, i32
  }
  func.func @transform_1(%arg0: i32) -> (i32, i32, i32) {
    %c0_i32 = arith.constant 0 : i32
    %c0_i32_0 = arith.constant 0 : i32
    %c0_i32_1 = arith.constant 0 : i32
    return %arg0, %c0_i32, %c0_i32_0 : i32, i32, i32
  }
}

module attributes {stable_mosaic.version = 11 : i64} {
  func.func @_ln_kernel(%arg0: i32, %arg1: memref<24x128xbf16, #tpu.memory_space<vmem>>, %arg2: memref<1x128xf32, #tpu.memory_space<vmem>>, %arg3: memref<1x128xf32, #tpu.memory_space<vmem>>, %arg4: memref<24x128xbf16, #tpu.memory_space<vmem>>) attributes {dimension_semantics = [#tpu.dimension_semantics<parallel>], iteration_bounds = array<i64: 1>, scalar_prefetch = 0 : i64, scratch_operands = 0 : i64, tpu.core_type = #tpu.core_type<tc>, window_params = [{transform_indices = @transform_0, window_bounds = array<i64: 24, 128>}, {pipeline_mode = #tpu.pipeline_mode<synchronous>, transform_indices = @transform_1, window_bounds = array<i64: 1, 128>}, {pipeline_mode = #tpu.pipeline_mode<synchronous>, transform_indices = @transform_2, window_bounds = array<i64: 1, 128>}, {transform_indices = @transform_3, window_bounds = array<i64: 24, 128>}]} {
    %c0 = arith.constant 0 : index
    %c0_0 = arith.constant 0 : index
    %0 = vector.load %arg1[%c0, %c0_0] : memref<24x128xbf16, #tpu.memory_space<vmem>>, vector<24x128xbf16>
    %1 = arith.extf %0 : vector<24x128xbf16> to vector<24x128xf32>
    %cst = arith.constant dense<0.000000e+00> : vector<24xf32>
    %2 = vector.multi_reduction <add>, %1, %cst [1] : vector<24x128xf32> to vector<24xf32>
    %3 = vector.shape_cast %2 : vector<24xf32> to vector<24x1xf32>
    %cst_1 = arith.constant 1.280000e+02 : f32
    %4 = vector.broadcast %cst_1 : f32 to vector<24x1xf32>
    %5 = arith.divf %3, %4 : vector<24x1xf32>
    %6 = vector.broadcast %5 : vector<24x1xf32> to vector<24x128xf32>
    %7 = arith.subf %1, %6 : vector<24x128xf32>
    %8 = arith.mulf %7, %7 : vector<24x128xf32>
    %cst_2 = arith.constant dense<0.000000e+00> : vector<24xf32>
    %9 = vector.multi_reduction <add>, %8, %cst_2 [1] : vector<24x128xf32> to vector<24xf32>
    %10 = vector.shape_cast %9 : vector<24xf32> to vector<24x1xf32>
    %cst_3 = arith.constant 1.280000e+02 : f32
    %11 = vector.broadcast %cst_3 : f32 to vector<24x1xf32>
    %12 = arith.divf %10, %11 : vector<24x1xf32>
    %cst_4 = arith.constant 9.99999974E-6 : f32
    %13 = vector.broadcast %cst_4 : f32 to vector<24x1xf32>
    %14 = arith.addf %12, %13 : vector<24x1xf32>
    %15 = math.rsqrt %14 : vector<24x1xf32>
    %16 = vector.broadcast %15 : vector<24x1xf32> to vector<24x128xf32>
    %17 = arith.mulf %7, %16 : vector<24x128xf32>
    %c0_5 = arith.constant 0 : index
    %c0_6 = arith.constant 0 : index
    %18 = vector.load %arg2[%c0_5, %c0_6] : memref<1x128xf32, #tpu.memory_space<vmem>>, vector<1x128xf32>
    %19 = vector.broadcast %18 : vector<1x128xf32> to vector<24x128xf32>
    %20 = arith.mulf %17, %19 : vector<24x128xf32>
    %c0_7 = arith.constant 0 : index
    %c0_8 = arith.constant 0 : index
    %21 = vector.load %arg3[%c0_7, %c0_8] : memref<1x128xf32, #tpu.memory_space<vmem>>, vector<1x128xf32>
    %22 = vector.broadcast %21 : vector<1x128xf32> to vector<24x128xf32>
    %23 = arith.addf %20, %22 : vector<24x128xf32>
    %24 = arith.truncf %23 : vector<24x128xf32> to vector<24x128xbf16>
    %c0_9 = arith.constant 0 : index
    %c0_10 = arith.constant 0 : index
    %25 = vector.load %arg4[%c0_9, %c0_10] : memref<24x128xbf16, #tpu.memory_space<vmem>>, vector<24x128xbf16>
    tpu.vector_store %arg4[%c0_9, %c0_10], %24 {strides = array<i32>} : memref<24x128xbf16, #tpu.memory_space<vmem>>, vector<24x128xbf16>,
    return
  }
  func.func @transform_0(%arg0: i32) -> (i32, i32) {
    %c0_i32 = arith.constant 0 : i32
    %c0_i32_0 = arith.constant 0 : i32
    return %arg0, %c0_i32 : i32, i32
  }
  func.func @transform_1(%arg0: i32) -> (i32, i32) {
    %c0_i32 = arith.constant 0 : i32
    %c0_i32_0 = arith.constant 0 : i32
    %c0_i32_1 = arith.constant 0 : i32
    return %c0_i32, %c0_i32_0 : i32, i32
  }
  func.func @transform_2(%arg0: i32) -> (i32, i32) {
    %c0_i32 = arith.constant 0 : i32
    %c0_i32_0 = arith.constant 0 : i32
    %c0_i32_1 = arith.constant 0 : i32
    return %c0_i32, %c0_i32_0 : i32, i32
  }
  func.func @transform_3(%arg0: i32) -> (i32, i32) {
    %c0_i32 = arith.constant 0 : i32
    %c0_i32_0 = arith.constant 0 : i32
    return %arg0, %c0_i32 : i32, i32
  }
}

module attributes {stable_mosaic.version = 11 : i64} {
  func.func @_linear_kernel(%arg0: i32, %arg1: i32, %arg2: memref<24x128xbf16, #tpu.memory_space<vmem>>, %arg3: memref<128x256xbf16, #tpu.memory_space<vmem>>, %arg4: memref<1x256xf32, #tpu.memory_space<vmem>>, %arg5: memref<24x256xbf16, #tpu.memory_space<vmem>>) attributes {dimension_semantics = [#tpu.dimension_semantics<parallel>, #tpu.dimension_semantics<parallel>], iteration_bounds = array<i64: 1, 1>, scalar_prefetch = 0 : i64, scratch_operands = 0 : i64, tpu.core_type = #tpu.core_type<tc>, window_params = [{transform_indices = @transform_0, window_bounds = array<i64: 24, 128>}, {transform_indices = @transform_1, window_bounds = array<i64: 128, 256>}, {transform_indices = @transform_2, window_bounds = array<i64: 1, 256>}, {transform_indices = @transform_3, window_bounds = array<i64: 24, 256>}]} {
    %c0 = arith.constant 0 : index
    %c0_0 = arith.constant 0 : index
    %0 = vector.load %arg2[%c0, %c0_0] : memref<24x128xbf16, #tpu.memory_space<vmem>>, vector<24x128xbf16>
    %c0_1 = arith.constant 0 : index
    %c0_2 = arith.constant 0 : index
    %1 = vector.load %arg3[%c0_1, %c0_2] : memref<128x256xbf16, #tpu.memory_space<vmem>>, vector<128x256xbf16>
    %cst = arith.constant dense<0.000000e+00> : vector<24x256xf32>
    %2 = tpu.matmul %0, %1, %cst {dimension_numbers = #tpu.dot_dimension_numbers<[1], [0], [0], [1], [0, 0, 1, 1], [], []>} : vector<24x128xbf16>, vector<128x256xbf16>, vector<24x256xf32> -> vector<24x256xf32>
    %c0_3 = arith.constant 0 : index
    %c0_4 = arith.constant 0 : index
    %3 = vector.load %arg4[%c0_3, %c0_4] : memref<1x256xf32, #tpu.memory_space<vmem>>, vector<1x256xf32>
    %4 = vector.broadcast %3 : vector<1x256xf32> to vector<24x256xf32>
    %5 = arith.addf %2, %4 : vector<24x256xf32>
    %6 = arith.truncf %5 : vector<24x256xf32> to vector<24x256xbf16>
    %c0_5 = arith.constant 0 : index
    %c0_6 = arith.constant 0 : index
    %7 = vector.load %arg5[%c0_5, %c0_6] : memref<24x256xbf16, #tpu.memory_space<vmem>>, vector<24x256xbf16>
    tpu.vector_store %arg5[%c0_5, %c0_6], %6 {strides = array<i32>} : memref<24x256xbf16, #tpu.memory_space<vmem>>, vector<24x256xbf16>,
    return
  }
  func.func @transform_0(%arg0: i32, %arg1: i32) -> (i32, i32) {
    %c0_i32 = arith.constant 0 : i32
    %c0_i32_0 = arith.constant 0 : i32
    return %arg0, %c0_i32 : i32, i32
  }
  func.func @transform_1(%arg0: i32, %arg1: i32) -> (i32, i32) {
    %c0_i32 = arith.constant 0 : i32
    %c0_i32_0 = arith.constant 0 : i32
    return %c0_i32, %arg1 : i32, i32
  }
  func.func @transform_2(%arg0: i32, %arg1: i32) -> (i32, i32) {
    %c0_i32 = arith.constant 0 : i32
    %c0_i32_0 = arith.constant 0 : i32
    return %c0_i32, %arg1 : i32, i32
  }
  func.func @transform_3(%arg0: i32, %arg1: i32) -> (i32, i32) {
    %c0_i32 = arith.constant 0 : i32
    return %arg0, %arg1 : i32, i32
  }
}

module attributes {stable_mosaic.version = 11 : i64} {
  func.func @_linear_kernel(%arg0: i32, %arg1: i32, %arg2: memref<16x128xbf16, #tpu.memory_space<vmem>>, %arg3: memref<128x256xbf16, #tpu.memory_space<vmem>>, %arg4: memref<1x256xf32, #tpu.memory_space<vmem>>, %arg5: memref<16x256xbf16, #tpu.memory_space<vmem>>) attributes {dimension_semantics = [#tpu.dimension_semantics<parallel>, #tpu.dimension_semantics<parallel>], iteration_bounds = array<i64: 1, 2>, scalar_prefetch = 0 : i64, scratch_operands = 0 : i64, tpu.core_type = #tpu.core_type<tc>, window_params = [{transform_indices = @transform_0, window_bounds = array<i64: 16, 128>}, {transform_indices = @transform_1, window_bounds = array<i64: 128, 256>}, {transform_indices = @transform_2, window_bounds = array<i64: 1, 256>}, {transform_indices = @transform_3, window_bounds = array<i64: 16, 256>}]} {
    %c0 = arith.constant 0 : index
    %c0_0 = arith.constant 0 : index
    %0 = vector.load %arg2[%c0, %c0_0] : memref<16x128xbf16, #tpu.memory_space<vmem>>, vector<16x128xbf16>
    %c0_1 = arith.constant 0 : index
    %c0_2 = arith.constant 0 : index
    %1 = vector.load %arg3[%c0_1, %c0_2] : memref<128x256xbf16, #tpu.memory_space<vmem>>, vector<128x256xbf16>
    %cst = arith.constant dense<0.000000e+00> : vector<16x256xf32>
    %2 = tpu.matmul %0, %1, %cst {dimension_numbers = #tpu.dot_dimension_numbers<[1], [0], [0], [1], [0, 0, 1, 1], [], []>} : vector<16x128xbf16>, vector<128x256xbf16>, vector<16x256xf32> -> vector<16x256xf32>
    %c0_3 = arith.constant 0 : index
    %c0_4 = arith.constant 0 : index
    %3 = vector.load %arg4[%c0_3, %c0_4] : memref<1x256xf32, #tpu.memory_space<vmem>>, vector<1x256xf32>
    %4 = vector.broadcast %3 : vector<1x256xf32> to vector<16x256xf32>
    %5 = arith.addf %2, %4 : vector<16x256xf32>
    %6 = arith.truncf %5 : vector<16x256xf32> to vector<16x256xbf16>
    %c0_5 = arith.constant 0 : index
    %c0_6 = arith.constant 0 : index
    %7 = vector.load %arg5[%c0_5, %c0_6] : memref<16x256xbf16, #tpu.memory_space<vmem>>, vector<16x256xbf16>
    tpu.vector_store %arg5[%c0_5, %c0_6], %6 {strides = array<i32>} : memref<16x256xbf16, #tpu.memory_space<vmem>>, vector<16x256xbf16>,
    return
  }
  func.func @transform_0(%arg0: i32, %arg1: i32) -> (i32, i32) {
    %c0_i32 = arith.constant 0 : i32
    %c0_i32_0 = arith.constant 0 : i32
    return %arg0, %c0_i32 : i32, i32
  }
  func.func @transform_1(%arg0: i32, %arg1: i32) -> (i32, i32) {
    %c0_i32 = arith.constant 0 : i32
    %c0_i32_0 = arith.constant 0 : i32
    return %c0_i32, %arg1 : i32, i32
  }
  func.func @transform_2(%arg0: i32, %arg1: i32) -> (i32, i32) {
    %c0_i32 = arith.constant 0 : i32
    %c0_i32_0 = arith.constant 0 : i32
    return %c0_i32, %arg1 : i32, i32
  }
  func.func @transform_3(%arg0: i32, %arg1: i32) -> (i32, i32) {
    %c0_i32 = arith.constant 0 : i32
    return %arg0, %arg1 : i32, i32
  }
}

module attributes {stable_mosaic.version = 11 : i64} {
  func.func @_self_attn_kernel(%arg0: i32, %arg1: memref<1x8x384xbf16, #tpu.memory_space<vmem>>, %arg2: memref<1x8x128xbf16, #tpu.memory_space<vmem>>) attributes {dimension_semantics = [#tpu.dimension_semantics<parallel>], iteration_bounds = array<i64: 2>, scalar_prefetch = 0 : i64, scratch_operands = 0 : i64, tpu.core_type = #tpu.core_type<tc>, window_params = [{transform_indices = @transform_0, window_bounds = array<i64: 1, 8, 384>}, {transform_indices = @transform_1, window_bounds = array<i64: 1, 8, 128>}]} {
    %c0 = arith.constant 0 : index
    %c0_0 = arith.constant 0 : index
    %c0_1 = arith.constant 0 : index
    %0 = vector.load %arg1[%c0, %c0_0, %c0_1] : memref<1x8x384xbf16, #tpu.memory_space<vmem>>, vector<1x8x384xbf16>
    %1 = vector.shape_cast %0 : vector<1x8x384xbf16> to vector<8x384xbf16>
    %2 = vector.extract_strided_slice %1 {offsets = [0, 0], sizes = [8, 128], strides = [1, 1]} : vector<8x384xbf16> to vector<8x128xbf16>
    %3 = vector.extract_strided_slice %1 {offsets = [0, 128], sizes = [8, 128], strides = [1, 1]} : vector<8x384xbf16> to vector<8x128xbf16>
    %4 = vector.extract_strided_slice %1 {offsets = [0, 256], sizes = [8, 128], strides = [1, 1]} : vector<8x384xbf16> to vector<8x128xbf16>
    %5 = tpu.iota {dimensions = array<i32: 0>} : vector<8x8xi32>
    %6 = tpu.iota {dimensions = array<i32: 1>} : vector<8x8xi32>
    %7 = arith.cmpi sgt, %6, %5 : vector<8x8xi32>
    %cst = arith.constant -1.000000e+30 : f32
    %cst_2 = arith.constant 0.000000e+00 : f32
    %8 = vector.broadcast %cst : f32 to vector<8x8xf32>
    %9 = vector.broadcast %cst_2 : f32 to vector<8x8xf32>
    %10 = arith.select %7, %8, %9 : vector<8x8xi1>, vector<8x8xf32>
    %11 = vector.extract_strided_slice %2 {offsets = [0, 0], sizes = [8, 32], strides = [1, 1]} : vector<8x128xbf16> to vector<8x32xbf16>
    %12 = vector.extract_strided_slice %3 {offsets = [0, 0], sizes = [8, 32], strides = [1, 1]} : vector<8x128xbf16> to vector<8x32xbf16>
    %cst_3 = arith.constant dense<0.000000e+00> : vector<8x8xf32>
    %13 = tpu.matmul %11, %12, %cst_3 {dimension_numbers = #tpu.dot_dimension_numbers<[1], [1], [0], [0], [0, 0, 1, 0], [], []>} : vector<8x32xbf16>, vector<8x32xbf16>, vector<8x8xf32> -> vector<8x8xf32>
    %cst_4 = arith.constant 0.176776692 : f32
    %14 = vector.broadcast %cst_4 : f32 to vector<8x8xf32>
    %15 = arith.mulf %13, %14 : vector<8x8xf32>
    %16 = arith.addf %15, %10 : vector<8x8xf32>
    %cst_5 = arith.constant dense<0xFF800000> : vector<8xf32>
    %17 = vector.multi_reduction <maximumf>, %16, %cst_5 [1] : vector<8x8xf32> to vector<8xf32>
    %18 = vector.shape_cast %17 : vector<8xf32> to vector<8x1xf32>
    %19 = vector.broadcast %18 : vector<8x1xf32> to vector<8x8xf32>
    %20 = arith.subf %16, %19 : vector<8x8xf32>
    %21 = math.exp %20 : vector<8x8xf32>
    %cst_6 = arith.constant dense<0.000000e+00> : vector<8xf32>
    %22 = vector.multi_reduction <add>, %21, %cst_6 [1] : vector<8x8xf32> to vector<8xf32>
    %23 = vector.shape_cast %22 : vector<8xf32> to vector<8x1xf32>
    %24 = arith.truncf %21 : vector<8x8xf32> to vector<8x8xbf16>
    %25 = vector.extract_strided_slice %4 {offsets = [0, 0], sizes = [8, 32], strides = [1, 1]} : vector<8x128xbf16> to vector<8x32xbf16>
    %cst_7 = arith.constant dense<0.000000e+00> : vector<8x32xf32>
    %26 = tpu.matmul %24, %25, %cst_7 {dimension_numbers = #tpu.dot_dimension_numbers<[1], [0], [0], [1], [0, 0, 1, 1], [], []>} : vector<8x8xbf16>, vector<8x32xbf16>, vector<8x32xf32> -> vector<8x32xf32>
    %27 = tpu.reciprocal %23 {approx = true} : vector<8x1xf32> -> vector<8x1xf32>
    %28 = vector.broadcast %27 : vector<8x1xf32> to vector<8x32xf32>
    %29 = arith.mulf %26, %28 : vector<8x32xf32>
    %30 = vector.extract_strided_slice %2 {offsets = [0, 32], sizes = [8, 32], strides = [1, 1]} : vector<8x128xbf16> to vector<8x32xbf16>
    %31 = vector.extract_strided_slice %3 {offsets = [0, 32], sizes = [8, 32], strides = [1, 1]} : vector<8x128xbf16> to vector<8x32xbf16>
    %cst_8 = arith.constant dense<0.000000e+00> : vector<8x8xf32>
    %32 = tpu.matmul %30, %31, %cst_8 {dimension_numbers = #tpu.dot_dimension_numbers<[1], [1], [0], [0], [0, 0, 1, 0], [], []>} : vector<8x32xbf16>, vector<8x32xbf16>, vector<8x8xf32> -> vector<8x8xf32>
    %cst_9 = arith.constant 0.176776692 : f32
    %33 = vector.broadcast %cst_9 : f32 to vector<8x8xf32>
    %34 = arith.mulf %32, %33 : vector<8x8xf32>
    %35 = arith.addf %34, %10 : vector<8x8xf32>
    %cst_10 = arith.constant dense<0xFF800000> : vector<8xf32>
    %36 = vector.multi_reduction <maximumf>, %35, %cst_10 [1] : vector<8x8xf32> to vector<8xf32>
    %37 = vector.shape_cast %36 : vector<8xf32> to vector<8x1xf32>
    %38 = vector.broadcast %37 : vector<8x1xf32> to vector<8x8xf32>
    %39 = arith.subf %35, %38 : vector<8x8xf32>
    %40 = math.exp %39 : vector<8x8xf32>
    %cst_11 = arith.constant dense<0.000000e+00> : vector<8xf32>
    %41 = vector.multi_reduction <add>, %40, %cst_11 [1] : vector<8x8xf32> to vector<8xf32>
    %42 = vector.shape_cast %41 : vector<8xf32> to vector<8x1xf32>
    %43 = arith.truncf %40 : vector<8x8xf32> to vector<8x8xbf16>
    %44 = vector.extract_strided_slice %4 {offsets = [0, 32], sizes = [8, 32], strides = [1, 1]} : vector<8x128xbf16> to vector<8x32xbf16>
    %cst_12 = arith.constant dense<0.000000e+00> : vector<8x32xf32>
    %45 = tpu.matmul %43, %44, %cst_12 {dimension_numbers = #tpu.dot_dimension_numbers<[1], [0], [0], [1], [0, 0, 1, 1], [], []>} : vector<8x8xbf16>, vector<8x32xbf16>, vector<8x32xf32> -> vector<8x32xf32>
    %46 = tpu.reciprocal %42 {approx = true} : vector<8x1xf32> -> vector<8x1xf32>
    %47 = vector.broadcast %46 : vector<8x1xf32> to vector<8x32xf32>
    %48 = arith.mulf %45, %47 : vector<8x32xf32>
    %49 = vector.extract_strided_slice %2 {offsets = [0, 64], sizes = [8, 32], strides = [1, 1]} : vector<8x128xbf16> to vector<8x32xbf16>
    %50 = vector.extract_strided_slice %3 {offsets = [0, 64], sizes = [8, 32], strides = [1, 1]} : vector<8x128xbf16> to vector<8x32xbf16>
    %cst_13 = arith.constant dense<0.000000e+00> : vector<8x8xf32>
    %51 = tpu.matmul %49, %50, %cst_13 {dimension_numbers = #tpu.dot_dimension_numbers<[1], [1], [0], [0], [0, 0, 1, 0], [], []>} : vector<8x32xbf16>, vector<8x32xbf16>, vector<8x8xf32> -> vector<8x8xf32>
    %cst_14 = arith.constant 0.176776692 : f32
    %52 = vector.broadcast %cst_14 : f32 to vector<8x8xf32>
    %53 = arith.mulf %51, %52 : vector<8x8xf32>
    %54 = arith.addf %53, %10 : vector<8x8xf32>
    %cst_15 = arith.constant dense<0xFF800000> : vector<8xf32>
    %55 = vector.multi_reduction <maximumf>, %54, %cst_15 [1] : vector<8x8xf32> to vector<8xf32>
    %56 = vector.shape_cast %55 : vector<8xf32> to vector<8x1xf32>
    %57 = vector.broadcast %56 : vector<8x1xf32> to vector<8x8xf32>
    %58 = arith.subf %54, %57 : vector<8x8xf32>
    %59 = math.exp %58 : vector<8x8xf32>
    %cst_16 = arith.constant dense<0.000000e+00> : vector<8xf32>
    %60 = vector.multi_reduction <add>, %59, %cst_16 [1] : vector<8x8xf32> to vector<8xf32>
    %61 = vector.shape_cast %60 : vector<8xf32> to vector<8x1xf32>
    %62 = arith.truncf %59 : vector<8x8xf32> to vector<8x8xbf16>
    %63 = vector.extract_strided_slice %4 {offsets = [0, 64], sizes = [8, 32], strides = [1, 1]} : vector<8x128xbf16> to vector<8x32xbf16>
    %cst_17 = arith.constant dense<0.000000e+00> : vector<8x32xf32>
    %64 = tpu.matmul %62, %63, %cst_17 {dimension_numbers = #tpu.dot_dimension_numbers<[1], [0], [0], [1], [0, 0, 1, 1], [], []>} : vector<8x8xbf16>, vector<8x32xbf16>, vector<8x32xf32> -> vector<8x32xf32>
    %65 = tpu.reciprocal %61 {approx = true} : vector<8x1xf32> -> vector<8x1xf32>
    %66 = vector.broadcast %65 : vector<8x1xf32> to vector<8x32xf32>
    %67 = arith.mulf %64, %66 : vector<8x32xf32>
    %68 = vector.extract_strided_slice %2 {offsets = [0, 96], sizes = [8, 32], strides = [1, 1]} : vector<8x128xbf16> to vector<8x32xbf16>
    %69 = vector.extract_strided_slice %3 {offsets = [0, 96], sizes = [8, 32], strides = [1, 1]} : vector<8x128xbf16> to vector<8x32xbf16>
    %cst_18 = arith.constant dense<0.000000e+00> : vector<8x8xf32>
    %70 = tpu.matmul %68, %69, %cst_18 {dimension_numbers = #tpu.dot_dimension_numbers<[1], [1], [0], [0], [0, 0, 1, 0], [], []>} : vector<8x32xbf16>, vector<8x32xbf16>, vector<8x8xf32> -> vector<8x8xf32>
    %cst_19 = arith.constant 0.176776692 : f32
    %71 = vector.broadcast %cst_19 : f32 to vector<8x8xf32>
    %72 = arith.mulf %70, %71 : vector<8x8xf32>
    %73 = arith.addf %72, %10 : vector<8x8xf32>
    %cst_20 = arith.constant dense<0xFF800000> : vector<8xf32>
    %74 = vector.multi_reduction <maximumf>, %73, %cst_20 [1] : vector<8x8xf32> to vector<8xf32>
    %75 = vector.shape_cast %74 : vector<8xf32> to vector<8x1xf32>
    %76 = vector.broadcast %75 : vector<8x1xf32> to vector<8x8xf32>
    %77 = arith.subf %73, %76 : vector<8x8xf32>
    %78 = math.exp %77 : vector<8x8xf32>
    %cst_21 = arith.constant dense<0.000000e+00> : vector<8xf32>
    %79 = vector.multi_reduction <add>, %78, %cst_21 [1] : vector<8x8xf32> to vector<8xf32>
    %80 = vector.shape_cast %79 : vector<8xf32> to vector<8x1xf32>
    %81 = arith.truncf %78 : vector<8x8xf32> to vector<8x8xbf16>
    %82 = vector.extract_strided_slice %4 {offsets = [0, 96], sizes = [8, 32], strides = [1, 1]} : vector<8x128xbf16> to vector<8x32xbf16>
    %cst_22 = arith.constant dense<0.000000e+00> : vector<8x32xf32>
    %83 = tpu.matmul %81, %82, %cst_22 {dimension_numbers = #tpu.dot_dimension_numbers<[1], [0], [0], [1], [0, 0, 1, 1], [], []>} : vector<8x8xbf16>, vector<8x32xbf16>, vector<8x32xf32> -> vector<8x32xf32>
    %84 = tpu.reciprocal %80 {approx = true} : vector<8x1xf32> -> vector<8x1xf32>
    %85 = vector.broadcast %84 : vector<8x1xf32> to vector<8x32xf32>
    %86 = arith.mulf %83, %85 : vector<8x32xf32>
    %87 = tpu.concatenate %29, %48, %67, %86 in 1 : vector<8x32xf32>, vector<8x32xf32>, vector<8x32xf32>, vector<8x32xf32> -> vector<8x128xf32>
    %88 = arith.truncf %87 : vector<8x128xf32> to vector<8x128xbf16>
    %c0_23 = arith.constant 0 : index
    %c0_24 = arith.constant 0 : index
    %c0_25 = arith.constant 0 : index
    %89 = vector.load %arg2[%c0_23, %c0_24, %c0_25] : memref<1x8x128xbf16, #tpu.memory_space<vmem>>, vector<1x8x128xbf16>
    %90 = vector.shape_cast %89 : vector<1x8x128xbf16> to vector<8x128xbf16>
    %91 = vector.shape_cast %88 : vector<8x128xbf16> to vector<1x8x128xbf16>
    tpu.vector_store %arg2[%c0_23, %c0_24, %c0_25], %91 {strides = array<i32>} : memref<1x8x128xbf16, #tpu.memory_space<vmem>>, vector<1x8x128xbf16>,
    return
  }
  func.func @transform_0(%arg0: i32) -> (i32, i32, i32) {
    %c0_i32 = arith.constant 0 : i32
    %c0_i32_0 = arith.constant 0 : i32
    %c0_i32_1 = arith.constant 0 : i32
    return %arg0, %c0_i32, %c0_i32_0 : i32, i32, i32
  }
  func.func @transform_1(%arg0: i32) -> (i32, i32, i32) {
    %c0_i32 = arith.constant 0 : i32
    %c0_i32_0 = arith.constant 0 : i32
    %c0_i32_1 = arith.constant 0 : i32
    return %arg0, %c0_i32, %c0_i32_0 : i32, i32, i32
  }
}

module attributes {stable_mosaic.version = 11 : i64} {
  func.func @_linear_kernel(%arg0: i32, %arg1: i32, %arg2: memref<16x128xbf16, #tpu.memory_space<vmem>>, %arg3: memref<128x128xbf16, #tpu.memory_space<vmem>>, %arg4: memref<1x128xf32, #tpu.memory_space<vmem>>, %arg5: memref<16x128xbf16, #tpu.memory_space<vmem>>) attributes {dimension_semantics = [#tpu.dimension_semantics<parallel>, #tpu.dimension_semantics<parallel>], iteration_bounds = array<i64: 1, 1>, scalar_prefetch = 0 : i64, scratch_operands = 0 : i64, tpu.core_type = #tpu.core_type<tc>, window_params = [{transform_indices = @transform_0, window_bounds = array<i64: 16, 128>}, {transform_indices = @transform_1, window_bounds = array<i64: 128, 128>}, {transform_indices = @transform_2, window_bounds = array<i64: 1, 128>}, {transform_indices = @transform_3, window_bounds = array<i64: 16, 128>}]} {
    %c0 = arith.constant 0 : index
    %c0_0 = arith.constant 0 : index
    %0 = vector.load %arg2[%c0, %c0_0] : memref<16x128xbf16, #tpu.memory_space<vmem>>, vector<16x128xbf16>
    %c0_1 = arith.constant 0 : index
    %c0_2 = arith.constant 0 : index
    %1 = vector.load %arg3[%c0_1, %c0_2] : memref<128x128xbf16, #tpu.memory_space<vmem>>, vector<128x128xbf16>
    %cst = arith.constant dense<0.000000e+00> : vector<16x128xf32>
    %2 = tpu.matmul %0, %1, %cst {dimension_numbers = #tpu.dot_dimension_numbers<[1], [0], [0], [1], [0, 0, 1, 1], [], []>} : vector<16x128xbf16>, vector<128x128xbf16>, vector<16x128xf32> -> vector<16x128xf32>
    %c0_3 = arith.constant 0 : index
    %c0_4 = arith.constant 0 : index
    %3 = vector.load %arg4[%c0_3, %c0_4] : memref<1x128xf32, #tpu.memory_space<vmem>>, vector<1x128xf32>
    %4 = vector.broadcast %3 : vector<1x128xf32> to vector<16x128xf32>
    %5 = arith.addf %2, %4 : vector<16x128xf32>
    %6 = arith.truncf %5 : vector<16x128xf32> to vector<16x128xbf16>
    %c0_5 = arith.constant 0 : index
    %c0_6 = arith.constant 0 : index
    %7 = vector.load %arg5[%c0_5, %c0_6] : memref<16x128xbf16, #tpu.memory_space<vmem>>, vector<16x128xbf16>
    tpu.vector_store %arg5[%c0_5, %c0_6], %6 {strides = array<i32>} : memref<16x128xbf16, #tpu.memory_space<vmem>>, vector<16x128xbf16>,
    return
  }
  func.func @transform_0(%arg0: i32, %arg1: i32) -> (i32, i32) {
    %c0_i32 = arith.constant 0 : i32
    %c0_i32_0 = arith.constant 0 : i32
    return %arg0, %c0_i32 : i32, i32
  }
  func.func @transform_1(%arg0: i32, %arg1: i32) -> (i32, i32) {
    %c0_i32 = arith.constant 0 : i32
    %c0_i32_0 = arith.constant 0 : i32
    return %c0_i32, %arg1 : i32, i32
  }
  func.func @transform_2(%arg0: i32, %arg1: i32) -> (i32, i32) {
    %c0_i32 = arith.constant 0 : i32
    %c0_i32_0 = arith.constant 0 : i32
    return %c0_i32, %arg1 : i32, i32
  }
  func.func @transform_3(%arg0: i32, %arg1: i32) -> (i32, i32) {
    %c0_i32 = arith.constant 0 : i32
    return %arg0, %arg1 : i32, i32
  }
}

module attributes {stable_mosaic.version = 11 : i64} {
  func.func @_proj_add_ln_kernel(%arg0: i32, %arg1: memref<16x128xbf16, #tpu.memory_space<vmem>>, %arg2: memref<128x128xbf16, #tpu.memory_space<vmem>>, %arg3: memref<1x128xf32, #tpu.memory_space<vmem>>, %arg4: memref<16x128xbf16, #tpu.memory_space<vmem>>, %arg5: memref<1x128xf32, #tpu.memory_space<vmem>>, %arg6: memref<1x128xf32, #tpu.memory_space<vmem>>, %arg7: memref<16x128xbf16, #tpu.memory_space<vmem>>) attributes {dimension_semantics = [#tpu.dimension_semantics<parallel>], iteration_bounds = array<i64: 1>, scalar_prefetch = 0 : i64, scratch_operands = 0 : i64, tpu.core_type = #tpu.core_type<tc>, window_params = [{transform_indices = @transform_0, window_bounds = array<i64: 16, 128>}, {pipeline_mode = #tpu.pipeline_mode<synchronous>, transform_indices = @transform_1, window_bounds = array<i64: 128, 128>}, {pipeline_mode = #tpu.pipeline_mode<synchronous>, transform_indices = @transform_2, window_bounds = array<i64: 1, 128>}, {transform_indices = @transform_3, window_bounds = array<i64: 16, 128>}, {pipeline_mode = #tpu.pipeline_mode<synchronous>, transform_indices = @transform_4, window_bounds = array<i64: 1, 128>}, {pipeline_mode = #tpu.pipeline_mode<synchronous>, transform_indices = @transform_5, window_bounds = array<i64: 1, 128>}, {transform_indices = @transform_6, window_bounds = array<i64: 16, 128>}]} {
    %c0 = arith.constant 0 : index
    %c0_0 = arith.constant 0 : index
    %0 = vector.load %arg1[%c0, %c0_0] : memref<16x128xbf16, #tpu.memory_space<vmem>>, vector<16x128xbf16>
    %c0_1 = arith.constant 0 : index
    %c0_2 = arith.constant 0 : index
    %1 = vector.load %arg2[%c0_1, %c0_2] : memref<128x128xbf16, #tpu.memory_space<vmem>>, vector<128x128xbf16>
    %cst = arith.constant dense<0.000000e+00> : vector<16x128xf32>
    %2 = tpu.matmul %0, %1, %cst {dimension_numbers = #tpu.dot_dimension_numbers<[1], [0], [0], [1], [0, 0, 1, 1], [], []>} : vector<16x128xbf16>, vector<128x128xbf16>, vector<16x128xf32> -> vector<16x128xf32>
    %c0_3 = arith.constant 0 : index
    %c0_4 = arith.constant 0 : index
    %3 = vector.load %arg3[%c0_3, %c0_4] : memref<1x128xf32, #tpu.memory_space<vmem>>, vector<1x128xf32>
    %4 = vector.broadcast %3 : vector<1x128xf32> to vector<16x128xf32>
    %5 = arith.addf %2, %4 : vector<16x128xf32>
    %c0_5 = arith.constant 0 : index
    %c0_6 = arith.constant 0 : index
    %6 = vector.load %arg4[%c0_5, %c0_6] : memref<16x128xbf16, #tpu.memory_space<vmem>>, vector<16x128xbf16>
    %7 = arith.extf %6 : vector<16x128xbf16> to vector<16x128xf32>
    %8 = arith.addf %5, %7 : vector<16x128xf32>
    %cst_7 = arith.constant dense<0.000000e+00> : vector<16xf32>
    %9 = vector.multi_reduction <add>, %8, %cst_7 [1] : vector<16x128xf32> to vector<16xf32>
    %10 = vector.shape_cast %9 : vector<16xf32> to vector<16x1xf32>
    %cst_8 = arith.constant 1.280000e+02 : f32
    %11 = vector.broadcast %cst_8 : f32 to vector<16x1xf32>
    %12 = arith.divf %10, %11 : vector<16x1xf32>
    %13 = vector.broadcast %12 : vector<16x1xf32> to vector<16x128xf32>
    %14 = arith.subf %8, %13 : vector<16x128xf32>
    %15 = arith.mulf %14, %14 : vector<16x128xf32>
    %cst_9 = arith.constant dense<0.000000e+00> : vector<16xf32>
    %16 = vector.multi_reduction <add>, %15, %cst_9 [1] : vector<16x128xf32> to vector<16xf32>
    %17 = vector.shape_cast %16 : vector<16xf32> to vector<16x1xf32>
    %cst_10 = arith.constant 1.280000e+02 : f32
    %18 = vector.broadcast %cst_10 : f32 to vector<16x1xf32>
    %19 = arith.divf %17, %18 : vector<16x1xf32>
    %cst_11 = arith.constant 9.99999974E-6 : f32
    %20 = vector.broadcast %cst_11 : f32 to vector<16x1xf32>
    %21 = arith.addf %19, %20 : vector<16x1xf32>
    %22 = math.rsqrt %21 : vector<16x1xf32>
    %23 = vector.broadcast %22 : vector<16x1xf32> to vector<16x128xf32>
    %24 = arith.mulf %14, %23 : vector<16x128xf32>
    %c0_12 = arith.constant 0 : index
    %c0_13 = arith.constant 0 : index
    %25 = vector.load %arg5[%c0_12, %c0_13] : memref<1x128xf32, #tpu.memory_space<vmem>>, vector<1x128xf32>
    %26 = vector.broadcast %25 : vector<1x128xf32> to vector<16x128xf32>
    %27 = arith.mulf %24, %26 : vector<16x128xf32>
    %c0_14 = arith.constant 0 : index
    %c0_15 = arith.constant 0 : index
    %28 = vector.load %arg6[%c0_14, %c0_15] : memref<1x128xf32, #tpu.memory_space<vmem>>, vector<1x128xf32>
    %29 = vector.broadcast %28 : vector<1x128xf32> to vector<16x128xf32>
    %30 = arith.addf %27, %29 : vector<16x128xf32>
    %31 = arith.truncf %30 : vector<16x128xf32> to vector<16x128xbf16>
    %c0_16 = arith.constant 0 : index
    %c0_17 = arith.constant 0 : index
    %32 = vector.load %arg7[%c0_16, %c0_17] : memref<16x128xbf16, #tpu.memory_space<vmem>>, vector<16x128xbf16>
    tpu.vector_store %arg7[%c0_16, %c0_17], %31 {strides = array<i32>} : memref<16x128xbf16, #tpu.memory_space<vmem>>, vector<16x128xbf16>,
    return
  }
  func.func @transform_0(%arg0: i32) -> (i32, i32) {
    %c0_i32 = arith.constant 0 : i32
    %c0_i32_0 = arith.constant 0 : i32
    return %arg0, %c0_i32 : i32, i32
  }
  func.func @transform_1(%arg0: i32) -> (i32, i32) {
    %c0_i32 = arith.constant 0 : i32
    %c0_i32_0 = arith.constant 0 : i32
    %c0_i32_1 = arith.constant 0 : i32
    return %c0_i32, %c0_i32_0 : i32, i32
  }
  func.func @transform_2(%arg0: i32) -> (i32, i32) {
    %c0_i32 = arith.constant 0 : i32
    %c0_i32_0 = arith.constant 0 : i32
    %c0_i32_1 = arith.constant 0 : i32
    return %c0_i32, %c0_i32_0 : i32, i32
  }
  func.func @transform_3(%arg0: i32) -> (i32, i32) {
    %c0_i32 = arith.constant 0 : i32
    %c0_i32_0 = arith.constant 0 : i32
    return %arg0, %c0_i32 : i32, i32
  }
  func.func @transform_4(%arg0: i32) -> (i32, i32) {
    %c0_i32 = arith.constant 0 : i32
    %c0_i32_0 = arith.constant 0 : i32
    %c0_i32_1 = arith.constant 0 : i32
    return %c0_i32, %c0_i32_0 : i32, i32
  }
  func.func @transform_5(%arg0: i32) -> (i32, i32) {
    %c0_i32 = arith.constant 0 : i32
    %c0_i32_0 = arith.constant 0 : i32
    %c0_i32_1 = arith.constant 0 : i32
    return %c0_i32, %c0_i32_0 : i32, i32
  }
  func.func @transform_6(%arg0: i32) -> (i32, i32) {
    %c0_i32 = arith.constant 0 : i32
    %c0_i32_0 = arith.constant 0 : i32
    return %arg0, %c0_i32 : i32, i32
  }
}

module attributes {stable_mosaic.version = 11 : i64} {
  func.func @_cross_attn_kernel(%arg0: i32, %arg1: memref<1x8x128xbf16, #tpu.memory_space<vmem>>, %arg2: memref<1x12x256xbf16, #tpu.memory_space<vmem>>, %arg3: memref<1x8x128xbf16, #tpu.memory_space<vmem>>) attributes {dimension_semantics = [#tpu.dimension_semantics<parallel>], iteration_bounds = array<i64: 2>, scalar_prefetch = 0 : i64, scratch_operands = 0 : i64, tpu.core_type = #tpu.core_type<tc>, window_params = [{transform_indices = @transform_0, window_bounds = array<i64: 1, 8, 128>}, {transform_indices = @transform_1, window_bounds = array<i64: 1, 12, 256>}, {transform_indices = @transform_2, window_bounds = array<i64: 1, 8, 128>}]} {
    %c0 = arith.constant 0 : index
    %c0_0 = arith.constant 0 : index
    %c0_1 = arith.constant 0 : index
    %0 = vector.load %arg1[%c0, %c0_0, %c0_1] : memref<1x8x128xbf16, #tpu.memory_space<vmem>>, vector<1x8x128xbf16>
    %1 = vector.shape_cast %0 : vector<1x8x128xbf16> to vector<8x128xbf16>
    %c0_2 = arith.constant 0 : index
    %c0_3 = arith.constant 0 : index
    %c0_4 = arith.constant 0 : index
    %2 = vector.load %arg2[%c0_2, %c0_3, %c0_4] : memref<1x12x256xbf16, #tpu.memory_space<vmem>>, vector<1x12x256xbf16>
    %3 = vector.shape_cast %2 : vector<1x12x256xbf16> to vector<12x256xbf16>
    %4 = vector.extract_strided_slice %3 {offsets = [0, 0], sizes = [12, 128], strides = [1, 1]} : vector<12x256xbf16> to vector<12x128xbf16>
    %5 = vector.extract_strided_slice %3 {offsets = [0, 128], sizes = [12, 128], strides = [1, 1]} : vector<12x256xbf16> to vector<12x128xbf16>
    %6 = vector.extract_strided_slice %1 {offsets = [0, 0], sizes = [8, 32], strides = [1, 1]} : vector<8x128xbf16> to vector<8x32xbf16>
    %7 = vector.extract_strided_slice %4 {offsets = [0, 0], sizes = [12, 32], strides = [1, 1]} : vector<12x128xbf16> to vector<12x32xbf16>
    %cst = arith.constant dense<0.000000e+00> : vector<8x12xf32>
    %8 = tpu.matmul %6, %7, %cst {dimension_numbers = #tpu.dot_dimension_numbers<[1], [1], [0], [0], [0, 0, 1, 0], [], []>} : vector<8x32xbf16>, vector<12x32xbf16>, vector<8x12xf32> -> vector<8x12xf32>
    %cst_5 = arith.constant 0.176776692 : f32
    %9 = vector.broadcast %cst_5 : f32 to vector<8x12xf32>
    %10 = arith.mulf %8, %9 : vector<8x12xf32>
    %cst_6 = arith.constant dense<0xFF800000> : vector<8xf32>
    %11 = vector.multi_reduction <maximumf>, %10, %cst_6 [1] : vector<8x12xf32> to vector<8xf32>
    %12 = vector.shape_cast %11 : vector<8xf32> to vector<8x1xf32>
    %13 = vector.broadcast %12 : vector<8x1xf32> to vector<8x12xf32>
    %14 = arith.subf %10, %13 : vector<8x12xf32>
    %15 = math.exp %14 : vector<8x12xf32>
    %cst_7 = arith.constant dense<0.000000e+00> : vector<8xf32>
    %16 = vector.multi_reduction <add>, %15, %cst_7 [1] : vector<8x12xf32> to vector<8xf32>
    %17 = vector.shape_cast %16 : vector<8xf32> to vector<8x1xf32>
    %18 = arith.truncf %15 : vector<8x12xf32> to vector<8x12xbf16>
    %19 = vector.extract_strided_slice %5 {offsets = [0, 0], sizes = [12, 32], strides = [1, 1]} : vector<12x128xbf16> to vector<12x32xbf16>
    %cst_8 = arith.constant dense<0.000000e+00> : vector<8x32xf32>
    %20 = tpu.matmul %18, %19, %cst_8 {dimension_numbers = #tpu.dot_dimension_numbers<[1], [0], [0], [1], [0, 0, 1, 1], [], []>} : vector<8x12xbf16>, vector<12x32xbf16>, vector<8x32xf32> -> vector<8x32xf32>
    %21 = tpu.reciprocal %17 {approx = true} : vector<8x1xf32> -> vector<8x1xf32>
    %22 = vector.broadcast %21 : vector<8x1xf32> to vector<8x32xf32>
    %23 = arith.mulf %20, %22 : vector<8x32xf32>
    %24 = vector.extract_strided_slice %1 {offsets = [0, 32], sizes = [8, 32], strides = [1, 1]} : vector<8x128xbf16> to vector<8x32xbf16>
    %25 = vector.extract_strided_slice %4 {offsets = [0, 32], sizes = [12, 32], strides = [1, 1]} : vector<12x128xbf16> to vector<12x32xbf16>
    %cst_9 = arith.constant dense<0.000000e+00> : vector<8x12xf32>
    %26 = tpu.matmul %24, %25, %cst_9 {dimension_numbers = #tpu.dot_dimension_numbers<[1], [1], [0], [0], [0, 0, 1, 0], [], []>} : vector<8x32xbf16>, vector<12x32xbf16>, vector<8x12xf32> -> vector<8x12xf32>
    %cst_10 = arith.constant 0.176776692 : f32
    %27 = vector.broadcast %cst_10 : f32 to vector<8x12xf32>
    %28 = arith.mulf %26, %27 : vector<8x12xf32>
    %cst_11 = arith.constant dense<0xFF800000> : vector<8xf32>
    %29 = vector.multi_reduction <maximumf>, %28, %cst_11 [1] : vector<8x12xf32> to vector<8xf32>
    %30 = vector.shape_cast %29 : vector<8xf32> to vector<8x1xf32>
    %31 = vector.broadcast %30 : vector<8x1xf32> to vector<8x12xf32>
    %32 = arith.subf %28, %31 : vector<8x12xf32>
    %33 = math.exp %32 : vector<8x12xf32>
    %cst_12 = arith.constant dense<0.000000e+00> : vector<8xf32>
    %34 = vector.multi_reduction <add>, %33, %cst_12 [1] : vector<8x12xf32> to vector<8xf32>
    %35 = vector.shape_cast %34 : vector<8xf32> to vector<8x1xf32>
    %36 = arith.truncf %33 : vector<8x12xf32> to vector<8x12xbf16>
    %37 = vector.extract_strided_slice %5 {offsets = [0, 32], sizes = [12, 32], strides = [1, 1]} : vector<12x128xbf16> to vector<12x32xbf16>
    %cst_13 = arith.constant dense<0.000000e+00> : vector<8x32xf32>
    %38 = tpu.matmul %36, %37, %cst_13 {dimension_numbers = #tpu.dot_dimension_numbers<[1], [0], [0], [1], [0, 0, 1, 1], [], []>} : vector<8x12xbf16>, vector<12x32xbf16>, vector<8x32xf32> -> vector<8x32xf32>
    %39 = tpu.reciprocal %35 {approx = true} : vector<8x1xf32> -> vector<8x1xf32>
    %40 = vector.broadcast %39 : vector<8x1xf32> to vector<8x32xf32>
    %41 = arith.mulf %38, %40 : vector<8x32xf32>
    %42 = vector.extract_strided_slice %1 {offsets = [0, 64], sizes = [8, 32], strides = [1, 1]} : vector<8x128xbf16> to vector<8x32xbf16>
    %43 = vector.extract_strided_slice %4 {offsets = [0, 64], sizes = [12, 32], strides = [1, 1]} : vector<12x128xbf16> to vector<12x32xbf16>
    %cst_14 = arith.constant dense<0.000000e+00> : vector<8x12xf32>
    %44 = tpu.matmul %42, %43, %cst_14 {dimension_numbers = #tpu.dot_dimension_numbers<[1], [1], [0], [0], [0, 0, 1, 0], [], []>} : vector<8x32xbf16>, vector<12x32xbf16>, vector<8x12xf32> -> vector<8x12xf32>
    %cst_15 = arith.constant 0.176776692 : f32
    %45 = vector.broadcast %cst_15 : f32 to vector<8x12xf32>
    %46 = arith.mulf %44, %45 : vector<8x12xf32>
    %cst_16 = arith.constant dense<0xFF800000> : vector<8xf32>
    %47 = vector.multi_reduction <maximumf>, %46, %cst_16 [1] : vector<8x12xf32> to vector<8xf32>
    %48 = vector.shape_cast %47 : vector<8xf32> to vector<8x1xf32>
    %49 = vector.broadcast %48 : vector<8x1xf32> to vector<8x12xf32>
    %50 = arith.subf %46, %49 : vector<8x12xf32>
    %51 = math.exp %50 : vector<8x12xf32>
    %cst_17 = arith.constant dense<0.000000e+00> : vector<8xf32>
    %52 = vector.multi_reduction <add>, %51, %cst_17 [1] : vector<8x12xf32> to vector<8xf32>
    %53 = vector.shape_cast %52 : vector<8xf32> to vector<8x1xf32>
    %54 = arith.truncf %51 : vector<8x12xf32> to vector<8x12xbf16>
    %55 = vector.extract_strided_slice %5 {offsets = [0, 64], sizes = [12, 32], strides = [1, 1]} : vector<12x128xbf16> to vector<12x32xbf16>
    %cst_18 = arith.constant dense<0.000000e+00> : vector<8x32xf32>
    %56 = tpu.matmul %54, %55, %cst_18 {dimension_numbers = #tpu.dot_dimension_numbers<[1], [0], [0], [1], [0, 0, 1, 1], [], []>} : vector<8x12xbf16>, vector<12x32xbf16>, vector<8x32xf32> -> vector<8x32xf32>
    %57 = tpu.reciprocal %53 {approx = true} : vector<8x1xf32> -> vector<8x1xf32>
    %58 = vector.broadcast %57 : vector<8x1xf32> to vector<8x32xf32>
    %59 = arith.mulf %56, %58 : vector<8x32xf32>
    %60 = vector.extract_strided_slice %1 {offsets = [0, 96], sizes = [8, 32], strides = [1, 1]} : vector<8x128xbf16> to vector<8x32xbf16>
    %61 = vector.extract_strided_slice %4 {offsets = [0, 96], sizes = [12, 32], strides = [1, 1]} : vector<12x128xbf16> to vector<12x32xbf16>
    %cst_19 = arith.constant dense<0.000000e+00> : vector<8x12xf32>
    %62 = tpu.matmul %60, %61, %cst_19 {dimension_numbers = #tpu.dot_dimension_numbers<[1], [1], [0], [0], [0, 0, 1, 0], [], []>} : vector<8x32xbf16>, vector<12x32xbf16>, vector<8x12xf32> -> vector<8x12xf32>
    %cst_20 = arith.constant 0.176776692 : f32
    %63 = vector.broadcast %cst_20 : f32 to vector<8x12xf32>
    %64 = arith.mulf %62, %63 : vector<8x12xf32>
    %cst_21 = arith.constant dense<0xFF800000> : vector<8xf32>
    %65 = vector.multi_reduction <maximumf>, %64, %cst_21 [1] : vector<8x12xf32> to vector<8xf32>
    %66 = vector.shape_cast %65 : vector<8xf32> to vector<8x1xf32>
    %67 = vector.broadcast %66 : vector<8x1xf32> to vector<8x12xf32>
    %68 = arith.subf %64, %67 : vector<8x12xf32>
    %69 = math.exp %68 : vector<8x12xf32>
    %cst_22 = arith.constant dense<0.000000e+00> : vector<8xf32>
    %70 = vector.multi_reduction <add>, %69, %cst_22 [1] : vector<8x12xf32> to vector<8xf32>
    %71 = vector.shape_cast %70 : vector<8xf32> to vector<8x1xf32>
    %72 = arith.truncf %69 : vector<8x12xf32> to vector<8x12xbf16>
    %73 = vector.extract_strided_slice %5 {offsets = [0, 96], sizes = [12, 32], strides = [1, 1]} : vector<12x128xbf16> to vector<12x32xbf16>
    %cst_23 = arith.constant dense<0.000000e+00> : vector<8x32xf32>
    %74 = tpu.matmul %72, %73, %cst_23 {dimension_numbers = #tpu.dot_dimension_numbers<[1], [0], [0], [1], [0, 0, 1, 1], [], []>} : vector<8x12xbf16>, vector<12x32xbf16>, vector<8x32xf32> -> vector<8x32xf32>
    %75 = tpu.reciprocal %71 {approx = true} : vector<8x1xf32> -> vector<8x1xf32>
    %76 = vector.broadcast %75 : vector<8x1xf32> to vector<8x32xf32>
    %77 = arith.mulf %74, %76 : vector<8x32xf32>
    %78 = tpu.concatenate %23, %41, %59, %77 in 1 : vector<8x32xf32>, vector<8x32xf32>, vector<8x32xf32>, vector<8x32xf32> -> vector<8x128xf32>
    %79 = arith.truncf %78 : vector<8x128xf32> to vector<8x128xbf16>
    %c0_24 = arith.constant 0 : index
    %c0_25 = arith.constant 0 : index
    %c0_26 = arith.constant 0 : index
    %80 = vector.load %arg3[%c0_24, %c0_25, %c0_26] : memref<1x8x128xbf16, #tpu.memory_space<vmem>>, vector<1x8x128xbf16>
    %81 = vector.shape_cast %80 : vector<1x8x128xbf16> to vector<8x128xbf16>
    %82 = vector.shape_cast %79 : vector<8x128xbf16> to vector<1x8x128xbf16>
    tpu.vector_store %arg3[%c0_24, %c0_25, %c0_26], %82 {strides = array<i32>} : memref<1x8x128xbf16, #tpu.memory_space<vmem>>, vector<1x8x128xbf16>,
    return
  }
  func.func @transform_0(%arg0: i32) -> (i32, i32, i32) {
    %c0_i32 = arith.constant 0 : i32
    %c0_i32_0 = arith.constant 0 : i32
    %c0_i32_1 = arith.constant 0 : i32
    return %arg0, %c0_i32, %c0_i32_0 : i32, i32, i32
  }
  func.func @transform_1(%arg0: i32) -> (i32, i32, i32) {
    %c0_i32 = arith.constant 0 : i32
    %c0_i32_0 = arith.constant 0 : i32
    %c0_i32_1 = arith.constant 0 : i32
    return %arg0, %c0_i32, %c0_i32_0 : i32, i32, i32
  }
  func.func @transform_2(%arg0: i32) -> (i32, i32, i32) {
    %c0_i32 = arith.constant 0 : i32
    %c0_i32_0 = arith.constant 0 : i32
    %c0_i32_1 = arith.constant 0 : i32
    return %arg0, %c0_i32, %c0_i32_0 : i32, i32, i32
  }
}

module attributes {stable_mosaic.version = 11 : i64} {
  func.func @_ffn_add_ln_kernel(%arg0: i32, %arg1: memref<16x128xbf16, #tpu.memory_space<vmem>>, %arg2: memref<128x256xbf16, #tpu.memory_space<vmem>>, %arg3: memref<1x256xf32, #tpu.memory_space<vmem>>, %arg4: memref<256x128xbf16, #tpu.memory_space<vmem>>, %arg5: memref<1x128xf32, #tpu.memory_space<vmem>>, %arg6: memref<1x128xf32, #tpu.memory_space<vmem>>, %arg7: memref<1x128xf32, #tpu.memory_space<vmem>>, %arg8: memref<16x128xbf16, #tpu.memory_space<vmem>>) attributes {dimension_semantics = [#tpu.dimension_semantics<parallel>], iteration_bounds = array<i64: 1>, scalar_prefetch = 0 : i64, scratch_operands = 0 : i64, tpu.core_type = #tpu.core_type<tc>, window_params = [{transform_indices = @transform_0, window_bounds = array<i64: 16, 128>}, {pipeline_mode = #tpu.pipeline_mode<synchronous>, transform_indices = @transform_1, window_bounds = array<i64: 128, 256>}, {pipeline_mode = #tpu.pipeline_mode<synchronous>, transform_indices = @transform_2, window_bounds = array<i64: 1, 256>}, {pipeline_mode = #tpu.pipeline_mode<synchronous>, transform_indices = @transform_3, window_bounds = array<i64: 256, 128>}, {pipeline_mode = #tpu.pipeline_mode<synchronous>, transform_indices = @transform_4, window_bounds = array<i64: 1, 128>}, {pipeline_mode = #tpu.pipeline_mode<synchronous>, transform_indices = @transform_5, window_bounds = array<i64: 1, 128>}, {pipeline_mode = #tpu.pipeline_mode<synchronous>, transform_indices = @transform_6, window_bounds = array<i64: 1, 128>}, {transform_indices = @transform_7, window_bounds = array<i64: 16, 128>}]} {
    %c0 = arith.constant 0 : index
    %c0_0 = arith.constant 0 : index
    %0 = vector.load %arg1[%c0, %c0_0] : memref<16x128xbf16, #tpu.memory_space<vmem>>, vector<16x128xbf16>
    %c0_1 = arith.constant 0 : index
    %c0_2 = arith.constant 0 : index
    %1 = vector.load %arg2[%c0_1, %c0_2] : memref<128x256xbf16, #tpu.memory_space<vmem>>, vector<128x256xbf16>
    %cst = arith.constant dense<0.000000e+00> : vector<16x256xf32>
    %2 = tpu.matmul %0, %1, %cst {dimension_numbers = #tpu.dot_dimension_numbers<[1], [0], [0], [1], [0, 0, 1, 1], [], []>} : vector<16x128xbf16>, vector<128x256xbf16>, vector<16x256xf32> -> vector<16x256xf32>
    %c0_3 = arith.constant 0 : index
    %c0_4 = arith.constant 0 : index
    %3 = vector.load %arg3[%c0_3, %c0_4] : memref<1x256xf32, #tpu.memory_space<vmem>>, vector<1x256xf32>
    %4 = vector.broadcast %3 : vector<1x256xf32> to vector<16x256xf32>
    %5 = arith.addf %2, %4 : vector<16x256xf32>
    %cst_5 = arith.constant 0.000000e+00 : f32
    %6 = vector.broadcast %cst_5 : f32 to vector<16x256xf32>
    %7 = arith.maximumf %5, %6 : vector<16x256xf32>
    %8 = arith.truncf %7 : vector<16x256xf32> to vector<16x256xbf16>
    %c0_6 = arith.constant 0 : index
    %c0_7 = arith.constant 0 : index
    %9 = vector.load %arg4[%c0_6, %c0_7] : memref<256x128xbf16, #tpu.memory_space<vmem>>, vector<256x128xbf16>
    %cst_8 = arith.constant dense<0.000000e+00> : vector<16x128xf32>
    %10 = tpu.matmul %8, %9, %cst_8 {dimension_numbers = #tpu.dot_dimension_numbers<[1], [0], [0], [1], [0, 0, 1, 1], [], []>} : vector<16x256xbf16>, vector<256x128xbf16>, vector<16x128xf32> -> vector<16x128xf32>
    %c0_9 = arith.constant 0 : index
    %c0_10 = arith.constant 0 : index
    %11 = vector.load %arg5[%c0_9, %c0_10] : memref<1x128xf32, #tpu.memory_space<vmem>>, vector<1x128xf32>
    %12 = vector.broadcast %11 : vector<1x128xf32> to vector<16x128xf32>
    %13 = arith.addf %10, %12 : vector<16x128xf32>
    %14 = arith.extf %0 : vector<16x128xbf16> to vector<16x128xf32>
    %15 = arith.addf %14, %13 : vector<16x128xf32>
    %cst_11 = arith.constant dense<0.000000e+00> : vector<16xf32>
    %16 = vector.multi_reduction <add>, %15, %cst_11 [1] : vector<16x128xf32> to vector<16xf32>
    %17 = vector.shape_cast %16 : vector<16xf32> to vector<16x1xf32>
    %cst_12 = arith.constant 1.280000e+02 : f32
    %18 = vector.broadcast %cst_12 : f32 to vector<16x1xf32>
    %19 = arith.divf %17, %18 : vector<16x1xf32>
    %20 = vector.broadcast %19 : vector<16x1xf32> to vector<16x128xf32>
    %21 = arith.subf %15, %20 : vector<16x128xf32>
    %22 = arith.mulf %21, %21 : vector<16x128xf32>
    %cst_13 = arith.constant dense<0.000000e+00> : vector<16xf32>
    %23 = vector.multi_reduction <add>, %22, %cst_13 [1] : vector<16x128xf32> to vector<16xf32>
    %24 = vector.shape_cast %23 : vector<16xf32> to vector<16x1xf32>
    %cst_14 = arith.constant 1.280000e+02 : f32
    %25 = vector.broadcast %cst_14 : f32 to vector<16x1xf32>
    %26 = arith.divf %24, %25 : vector<16x1xf32>
    %cst_15 = arith.constant 9.99999974E-6 : f32
    %27 = vector.broadcast %cst_15 : f32 to vector<16x1xf32>
    %28 = arith.addf %26, %27 : vector<16x1xf32>
    %29 = math.rsqrt %28 : vector<16x1xf32>
    %30 = vector.broadcast %29 : vector<16x1xf32> to vector<16x128xf32>
    %31 = arith.mulf %21, %30 : vector<16x128xf32>
    %c0_16 = arith.constant 0 : index
    %c0_17 = arith.constant 0 : index
    %32 = vector.load %arg6[%c0_16, %c0_17] : memref<1x128xf32, #tpu.memory_space<vmem>>, vector<1x128xf32>
    %33 = vector.broadcast %32 : vector<1x128xf32> to vector<16x128xf32>
    %34 = arith.mulf %31, %33 : vector<16x128xf32>
    %c0_18 = arith.constant 0 : index
    %c0_19 = arith.constant 0 : index
    %35 = vector.load %arg7[%c0_18, %c0_19] : memref<1x128xf32, #tpu.memory_space<vmem>>, vector<1x128xf32>
    %36 = vector.broadcast %35 : vector<1x128xf32> to vector<16x128xf32>
    %37 = arith.addf %34, %36 : vector<16x128xf32>
    %38 = arith.truncf %37 : vector<16x128xf32> to vector<16x128xbf16>
    %c0_20 = arith.constant 0 : index
    %c0_21 = arith.constant 0 : index
    %39 = vector.load %arg8[%c0_20, %c0_21] : memref<16x128xbf16, #tpu.memory_space<vmem>>, vector<16x128xbf16>
    tpu.vector_store %arg8[%c0_20, %c0_21], %38 {strides = array<i32>} : memref<16x128xbf16, #tpu.memory_space<vmem>>, vector<16x128xbf16>,
    return
  }
  func.func @transform_0(%arg0: i32) -> (i32, i32) {
    %c0_i32 = arith.constant 0 : i32
    %c0_i32_0 = arith.constant 0 : i32
    return %arg0, %c0_i32 : i32, i32
  }
  func.func @transform_1(%arg0: i32) -> (i32, i32) {
    %c0_i32 = arith.constant 0 : i32
    %c0_i32_0 = arith.constant 0 : i32
    %c0_i32_1 = arith.constant 0 : i32
    return %c0_i32, %c0_i32_0 : i32, i32
  }
  func.func @transform_2(%arg0: i32) -> (i32, i32) {
    %c0_i32 = arith.constant 0 : i32
    %c0_i32_0 = arith.constant 0 : i32
    %c0_i32_1 = arith.constant 0 : i32
    return %c0_i32, %c0_i32_0 : i32, i32
  }
  func.func @transform_3(%arg0: i32) -> (i32, i32) {
    %c0_i32 = arith.constant 0 : i32
    %c0_i32_0 = arith.constant 0 : i32
    %c0_i32_1 = arith.constant 0 : i32
    return %c0_i32, %c0_i32_0 : i32, i32
  }
  func.func @transform_4(%arg0: i32) -> (i32, i32) {
    %c0_i32 = arith.constant 0 : i32
    %c0_i32_0 = arith.constant 0 : i32
    %c0_i32_1 = arith.constant 0 : i32
    return %c0_i32, %c0_i32_0 : i32, i32
  }
  func.func @transform_5(%arg0: i32) -> (i32, i32) {
    %c0_i32 = arith.constant 0 : i32
    %c0_i32_0 = arith.constant 0 : i32
    %c0_i32_1 = arith.constant 0 : i32
    return %c0_i32, %c0_i32_0 : i32, i32
  }
  func.func @transform_6(%arg0: i32) -> (i32, i32) {
    %c0_i32 = arith.constant 0 : i32
    %c0_i32_0 = arith.constant 0 : i32
    %c0_i32_1 = arith.constant 0 : i32
    return %c0_i32, %c0_i32_0 : i32, i32
  }
  func.func @transform_7(%arg0: i32) -> (i32, i32) {
    %c0_i32 = arith.constant 0 : i32
    %c0_i32_0 = arith.constant 0 : i32
    return %arg0, %c0_i32 : i32, i32
  }
}

module attributes {stable_mosaic.version = 11 : i64} {
  func.func @_ln_kernel(%arg0: i32, %arg1: memref<16x128xbf16, #tpu.memory_space<vmem>>, %arg2: memref<1x128xf32, #tpu.memory_space<vmem>>, %arg3: memref<1x128xf32, #tpu.memory_space<vmem>>, %arg4: memref<16x128xbf16, #tpu.memory_space<vmem>>) attributes {dimension_semantics = [#tpu.dimension_semantics<parallel>], iteration_bounds = array<i64: 1>, scalar_prefetch = 0 : i64, scratch_operands = 0 : i64, tpu.core_type = #tpu.core_type<tc>, window_params = [{transform_indices = @transform_0, window_bounds = array<i64: 16, 128>}, {pipeline_mode = #tpu.pipeline_mode<synchronous>, transform_indices = @transform_1, window_bounds = array<i64: 1, 128>}, {pipeline_mode = #tpu.pipeline_mode<synchronous>, transform_indices = @transform_2, window_bounds = array<i64: 1, 128>}, {transform_indices = @transform_3, window_bounds = array<i64: 16, 128>}]} {
    %c0 = arith.constant 0 : index
    %c0_0 = arith.constant 0 : index
    %0 = vector.load %arg1[%c0, %c0_0] : memref<16x128xbf16, #tpu.memory_space<vmem>>, vector<16x128xbf16>
    %1 = arith.extf %0 : vector<16x128xbf16> to vector<16x128xf32>
    %cst = arith.constant dense<0.000000e+00> : vector<16xf32>
    %2 = vector.multi_reduction <add>, %1, %cst [1] : vector<16x128xf32> to vector<16xf32>
    %3 = vector.shape_cast %2 : vector<16xf32> to vector<16x1xf32>
    %cst_1 = arith.constant 1.280000e+02 : f32
    %4 = vector.broadcast %cst_1 : f32 to vector<16x1xf32>
    %5 = arith.divf %3, %4 : vector<16x1xf32>
    %6 = vector.broadcast %5 : vector<16x1xf32> to vector<16x128xf32>
    %7 = arith.subf %1, %6 : vector<16x128xf32>
    %8 = arith.mulf %7, %7 : vector<16x128xf32>
    %cst_2 = arith.constant dense<0.000000e+00> : vector<16xf32>
    %9 = vector.multi_reduction <add>, %8, %cst_2 [1] : vector<16x128xf32> to vector<16xf32>
    %10 = vector.shape_cast %9 : vector<16xf32> to vector<16x1xf32>
    %cst_3 = arith.constant 1.280000e+02 : f32
    %11 = vector.broadcast %cst_3 : f32 to vector<16x1xf32>
    %12 = arith.divf %10, %11 : vector<16x1xf32>
    %cst_4 = arith.constant 9.99999974E-6 : f32
    %13 = vector.broadcast %cst_4 : f32 to vector<16x1xf32>
    %14 = arith.addf %12, %13 : vector<16x1xf32>
    %15 = math.rsqrt %14 : vector<16x1xf32>
    %16 = vector.broadcast %15 : vector<16x1xf32> to vector<16x128xf32>
    %17 = arith.mulf %7, %16 : vector<16x128xf32>
    %c0_5 = arith.constant 0 : index
    %c0_6 = arith.constant 0 : index
    %18 = vector.load %arg2[%c0_5, %c0_6] : memref<1x128xf32, #tpu.memory_space<vmem>>, vector<1x128xf32>
    %19 = vector.broadcast %18 : vector<1x128xf32> to vector<16x128xf32>
    %20 = arith.mulf %17, %19 : vector<16x128xf32>
    %c0_7 = arith.constant 0 : index
    %c0_8 = arith.constant 0 : index
    %21 = vector.load %arg3[%c0_7, %c0_8] : memref<1x128xf32, #tpu.memory_space<vmem>>, vector<1x128xf32>
    %22 = vector.broadcast %21 : vector<1x128xf32> to vector<16x128xf32>
    %23 = arith.addf %20, %22 : vector<16x128xf32>
    %24 = arith.truncf %23 : vector<16x128xf32> to vector<16x128xbf16>
    %c0_9 = arith.constant 0 : index
    %c0_10 = arith.constant 0 : index
    %25 = vector.load %arg4[%c0_9, %c0_10] : memref<16x128xbf16, #tpu.memory_space<vmem>>, vector<16x128xbf16>
    tpu.vector_store %arg4[%c0_9, %c0_10], %24 {strides = array<i32>} : memref<16x128xbf16, #tpu.memory_space<vmem>>, vector<16x128xbf16>,
    return
  }
  func.func @transform_0(%arg0: i32) -> (i32, i32) {
    %c0_i32 = arith.constant 0 : i32
    %c0_i32_0 = arith.constant 0 : i32
    return %arg0, %c0_i32 : i32, i32
  }
  func.func @transform_1(%arg0: i32) -> (i32, i32) {
    %c0_i32 = arith.constant 0 : i32
    %c0_i32_0 = arith.constant 0 : i32
    %c0_i32_1 = arith.constant 0 : i32
    return %c0_i32, %c0_i32_0 : i32, i32
  }
  func.func @transform_2(%arg0: i32) -> (i32, i32) {
    %c0_i32 = arith.constant 0 : i32
    %c0_i32_0 = arith.constant 0 : i32
    %c0_i32_1 = arith.constant 0 : i32
    return %c0_i32, %c0_i32_0 : i32, i32
  }
  func.func @transform_3(%arg0: i32) -> (i32, i32) {
    %c0_i32 = arith.constant 0 : i32
    %c0_i32_0 = arith.constant 0 : i32
    return %arg0, %c0_i32 : i32, i32
  }
}

module attributes {stable_mosaic.version = 11 : i64} {
  func.func @_linear_kernel(%arg0: i32, %arg1: i32, %arg2: memref<16x128xbf16, #tpu.memory_space<vmem>>, %arg3: memref<128x60xbf16, #tpu.memory_space<vmem>>, %arg4: memref<1x60xf32, #tpu.memory_space<vmem>>, %arg5: memref<16x60xf32, #tpu.memory_space<vmem>>) attributes {dimension_semantics = [#tpu.dimension_semantics<parallel>, #tpu.dimension_semantics<parallel>], iteration_bounds = array<i64: 1, 1>, scalar_prefetch = 0 : i64, scratch_operands = 0 : i64, tpu.core_type = #tpu.core_type<tc>, window_params = [{transform_indices = @transform_0, window_bounds = array<i64: 16, 128>}, {transform_indices = @transform_1, window_bounds = array<i64: 128, 60>}, {transform_indices = @transform_2, window_bounds = array<i64: 1, 60>}, {transform_indices = @transform_3, window_bounds = array<i64: 16, 60>}]} {
    %c0 = arith.constant 0 : index
    %c0_0 = arith.constant 0 : index
    %0 = vector.load %arg2[%c0, %c0_0] : memref<16x128xbf16, #tpu.memory_space<vmem>>, vector<16x128xbf16>
    %c0_1 = arith.constant 0 : index
    %c0_2 = arith.constant 0 : index
    %1 = vector.load %arg3[%c0_1, %c0_2] : memref<128x60xbf16, #tpu.memory_space<vmem>>, vector<128x60xbf16>
    %cst = arith.constant dense<0.000000e+00> : vector<16x60xf32>
    %2 = tpu.matmul %0, %1, %cst {dimension_numbers = #tpu.dot_dimension_numbers<[1], [0], [0], [1], [0, 0, 1, 1], [], []>} : vector<16x128xbf16>, vector<128x60xbf16>, vector<16x60xf32> -> vector<16x60xf32>
    %c0_3 = arith.constant 0 : index
    %c0_4 = arith.constant 0 : index
    %3 = vector.load %arg4[%c0_3, %c0_4] : memref<1x60xf32, #tpu.memory_space<vmem>>, vector<1x60xf32>
    %4 = vector.broadcast %3 : vector<1x60xf32> to vector<16x60xf32>
    %5 = arith.addf %2, %4 : vector<16x60xf32>
    %c0_5 = arith.constant 0 : index
    %c0_6 = arith.constant 0 : index
    %6 = vector.load %arg5[%c0_5, %c0_6] : memref<16x60xf32, #tpu.memory_space<vmem>>, vector<16x60xf32>
    tpu.vector_store %arg5[%c0_5, %c0_6], %5 {strides = array<i32>} : memref<16x60xf32, #tpu.memory_space<vmem>>, vector<16x60xf32>,
    return
  }
  func.func @transform_0(%arg0: i32, %arg1: i32) -> (i32, i32) {
    %c0_i32 = arith.constant 0 : i32
    %c0_i32_0 = arith.constant 0 : i32
    return %arg1, %c0_i32 : i32, i32
  }
  func.func @transform_1(%arg0: i32, %arg1: i32) -> (i32, i32) {
    %c0_i32 = arith.constant 0 : i32
    %c0_i32_0 = arith.constant 0 : i32
    return %c0_i32, %arg0 : i32, i32
  }
  func.func @transform_2(%arg0: i32, %arg1: i32) -> (i32, i32) {
    %c0_i32 = arith.constant 0 : i32
    %c0_i32_0 = arith.constant 0 : i32
    return %c0_i32, %arg0 : i32, i32
  }
  func.func @transform_3(%arg0: i32, %arg1: i32) -> (i32, i32) {
    %c0_i32 = arith.constant 0 : i32
    return %arg1, %arg0 : i32, i32
  }
}

</mosaic_0001>

<llo_original>
// kernel: transformer_forward.29
$region0: #{transformer_forward.29}
  #allocation0 [shape = 'u32[]', space=smem, size = 0x4, offset = 0x4, fixed_abs, tag = 'smem constant byte address 0x4 - core index']
  #allocation1 [shape = 'u32[144,128]{1,0:T(1,128)}', space=vmem, size = 0x12000, scoped, tag = 'internal scratch']
  %s0 = inlined_call_operand.hbm [shape: bf16[24,128], index: 0, kind: input, shape index: {}]
  %s1 = inlined_call_operand.hbm [shape: bf16[128,128], index: 1, kind: input, shape index: {}]
  %s2 = inlined_call_operand.hbm [shape: f32[1,128], index: 2, kind: input, shape index: {}]
  %s3 = inlined_call_operand.hbm [shape: bf16[24,128], index: 3, kind: input, shape index: {}]
  %s4 = inlined_call_operand.hbm [shape: f32[1,128], index: 4, kind: input, shape index: {}]
  %s5 = inlined_call_operand.hbm [shape: f32[1,128], index: 5, kind: input, shape index: {}]
  %s6 = inlined_call_operand.hbm [shape: bf16[24,128], index: 6, kind: output, shape index: {}]
  %s7 = sld [smem:[#allocation0]]
  $region58: #{transformer_forward.29} parent=0
    _
  %s9 = ssub.s32 1, %s7
  %s10 = scalar_select 0, %s9, %s7
  $region1: #{transformer_forward.29} parent=0
    #allocation2 [shape = 'u8[6144]{0}', space=vmem, size = 0x1800, scoped, tag = 'input window, operand 0, single buffered']
    #allocation3 [shape = 's32[1]{0}', space=sflag, size = 0x4, scoped, tag = 'scoped memory for transformer_forward.29']
    #allocation4 [shape = 's32[1]{0}', space=sflag, size = 0x4, scoped, tag = 'scoped memory for transformer_forward.29']
    #allocation5 [shape = 'u8[32768]{0}', space=vmem, size = 0x8000, scoped, tag = 'input window, operand 1, single buffered']
    #allocation6 [shape = 's32[1]{0}', space=sflag, size = 0x4, scoped, tag = 'scoped memory for transformer_forward.29']
    #allocation7 [shape = 'u8[512]{0}', space=vmem, size = 0x400, scoped, tag = 'input window, operand 2, single buffered']
    #allocation8 [shape = 'u8[6144]{0}', space=vmem, size = 0x1800, scoped, tag = 'input window, operand 3, single buffered']
    #allocation9 [shape = 's32[1]{0}', space=sflag, size = 0x4, scoped, tag = 'scoped memory for transformer_forward.29']
    #allocation10 [shape = 'u8[512]{0}', space=vmem, size = 0x400, scoped, tag = 'input window, operand 4, single buffered']
    #allocation11 [shape = 'u8[512]{0}', space=vmem, size = 0x400, scoped, tag = 'input window, operand 5, single buffered']
    #allocation12 [shape = 's32[1]{0}', space=sflag, size = 0x4, scoped, tag = 'scoped memory for transformer_forward.29']
    #allocation13 [shape = 'u8[6144]{0}', space=vmem, size = 0x1800, scoped, tag = 'output window, operand 0, single buffered']
    %11 = vsyncpa [#allocation3], 0
    %12 = vsyncpa [#allocation6], 0
    %13 = vsyncpa [#allocation9], 0
    %14 = vsyncpa [#allocation12], 0
    %15 = vsyncpa [#allocation4], 0
    // Predicated region
    $region2: #{transformer_forward.29} parent=1 // pred_check
      _
    $region3: #{transformer_forward.29} parent=1 // pred_check_branch
      %17 = sbr.rel (0) target = $region5
    $region4: #{transformer_forward.29} parent=1 // pred_region
      %s19 = ssub.s32 192, 192
      %20 = vsyncadd [#allocation3], %s19
      %s21 = sshll.u32 [#allocation2], 4
      %s22 = int_to_ptr.vmem [resolvable:$true] %s21
      %27 = dma.hbm_to_vmem [thread:$0]  %s0, 192, %s22, [#allocation3], 64, 64, 4
    $region5: #{transformer_forward.29} parent=1 // pred_fallthru
      _
    // Predicated region
    $region6: #{transformer_forward.29} parent=1 // pred_check
      _
    $region7: #{transformer_forward.29} parent=1 // pred_check_branch
      %29 = sbr.rel (0) target = $region9
    $region8: #{transformer_forward.29} parent=1 // pred_region
      %s31 = ssub.s32 1024, 1024
      %32 = vsyncadd [#allocation6], %s31
      %s33 = sshll.u32 [#allocation5], 4
      %s34 = int_to_ptr.vmem [resolvable:$true] %s33
      %39 = dma.hbm_to_vmem [thread:$0]  %s1, 1024, %s34, [#allocation6], 64, 64, 4
    $region9: #{transformer_forward.29} parent=1 // pred_fallthru
      _
    // Predicated region
    $region10: #{transformer_forward.29} parent=1 // pred_check
      _
    $region11: #{transformer_forward.29} parent=1 // pred_check_branch
      %41 = sbr.rel (0) target = $region13
    $region12: #{transformer_forward.29} parent=1 // pred_region
      %s43 = ssub.s32 16, 16
      %44 = vsyncadd [#allocation6], %s43
      %s46 = sshll.u32 [#allocation7], 4
      %s47 = int_to_ptr.vmem [resolvable:$true] %s46
      %49 = dma.hbm_to_vmem [thread:$0]  %s2, 16, %s47, [#allocation6]
    $region13: #{transformer_forward.29} parent=1 // pred_fallthru
      _
    // Predicated region
    $region14: #{transformer_forward.29} parent=1 // pred_check
      _
    $region15: #{transformer_forward.29} parent=1 // pred_check_branch
      %51 = sbr.rel (0) target = $region17
    $region16: #{transformer_forward.29} parent=1 // pred_region
      %s53 = ssub.s32 192, 192
      %54 = vsyncadd [#allocation9], %s53
      %s55 = sshll.u32 [#allocation8], 4
      %s56 = int_to_ptr.vmem [resolvable:$true] %s55
      %61 = dma.hbm_to_vmem [thread:$0]  %s3, 192, %s56, [#allocation9], 64, 64, 4
    $region17: #{transformer_forward.29} parent=1 // pred_fallthru
      _
    // Predicated region
    $region18: #{transformer_forward.29} parent=1 // pred_check
      _
    $region19: #{transformer_forward.29} parent=1 // pred_check_branch
      %63 = sbr.rel (0) target = $region21
    $region20: #{transformer_forward.29} parent=1 // pred_region
      %s65 = ssub.s32 16, 16
      %66 = vsyncadd [#allocation9], %s65
      %s68 = sshll.u32 [#allocation10], 4
      %s69 = int_to_ptr.vmem [resolvable:$true] %s68
      %71 = dma.hbm_to_vmem [thread:$0]  %s4, 16, %s69, [#allocation9]
    $region21: #{transformer_forward.29} parent=1 // pred_fallthru
      _
    // Predicated region
    $region22: #{transformer_forward.29} parent=1 // pred_check
      _
    $region23: #{transformer_forward.29} parent=1 // pred_check_branch
      %73 = sbr.rel (0) target = $region25
    $region24: #{transformer_forward.29} parent=1 // pred_region
      %s75 = ssub.s32 16, 16
      %76 = vsyncadd [#allocation12], %s75
      %s78 = sshll.u32 [#allocation11], 4
      %s79 = int_to_ptr.vmem [resolvable:$true] %s78
      %81 = dma.hbm_to_vmem [thread:$0]  %s5, 16, %s79, [#allocation12]
    $region25: #{transformer_forward.29} parent=1 // pred_fallthru
      _
    // Predicated region
    $region26: #{transformer_forward.29} parent=1 // pred_check
      _
    $region27: #{transformer_forward.29} parent=1 // pred_check_branch
      %83 = sbr.rel (0) target = $region29
    $region28: #{transformer_forward.29} parent=1 // pred_region
      %84 = dma.done [#allocation3], 192
    $region29: #{transformer_forward.29} parent=1 // pred_fallthru
      _
    // Predicated region
    $region30: #{transformer_forward.29} parent=1 // pred_check
      _
    $region31: #{transformer_forward.29} parent=1 // pred_check_branch
      %86 = sbr.rel (0) target = $region33
    $region32: #{transformer_forward.29} parent=1 // pred_region
      %87 = dma.done [#allocation6], 1024
    $region33: #{transformer_forward.29} parent=1 // pred_fallthru
      _
    // Predicated region
    $region34: #{transformer_forward.29} parent=1 // pred_check
      _
    $region35: #{transformer_forward.29} parent=1 // pred_check_branch
      %89 = sbr.rel (0) target = $region37
    $region36: #{transformer_forward.29} parent=1 // pred_region
      %90 = dma.done [#allocation6], 16
    $region37: #{transformer_forward.29} parent=1 // pred_fallthru
      _
    // Predicated region
    $region38: #{transformer_forward.29} parent=1 // pred_check
      _
    $region39: #{transformer_forward.29} parent=1 // pred_check_branch
      %92 = sbr.rel (0) target = $region41
    $region40: #{transformer_forward.29} parent=1 // pred_region
      %93 = dma.done [#allocation9], 192
    $region41: #{transformer_forward.29} parent=1 // pred_fallthru
      _
    // Predicated region
    $region42: #{transformer_forward.29} parent=1 // pred_check
      _
    $region43: #{transformer_forward.29} parent=1 // pred_check_branch
      %95 = sbr.rel (0) target = $region45
    $region44: #{transformer_forward.29} parent=1 // pred_region
      %96 = dma.done [#allocation9], 16
    $region45: #{transformer_forward.29} parent=1 // pred_fallthru
      _
    // Predicated region
    $region46: #{transformer_forward.29} parent=1 // pred_check
      _
    $region47: #{transformer_forward.29} parent=1 // pred_check_branch
      %98 = sbr.rel (0) target = $region49
    $region48: #{transformer_forward.29} parent=1 // pred_region
      %99 = dma.done [#allocation12], 16
    $region49: #{transformer_forward.29} parent=1 // pred_fallthru
      _
    %v101 = vld [vmem:[#allocation2] sm:$0xf]
    %v102 = vld [vmem:[#allocation2 + $0x4] sm:$0xf]
    %v103 = vld [vmem:[#allocation2 + $0x8] sm:$0xf]
    %v104 = vld [vmem:[#allocation5] sm:$0xf]
    %v105 = vld [vmem:[#allocation5 + $0x4] sm:$0xf]
    %v106 = vld [vmem:[#allocation5 + $0x8] sm:$0xf]
    %v107 = vld [vmem:[#allocation5 + $0xc] sm:$0xf]
    %v108 = vld [vmem:[#allocation5 + $0x10] sm:$0xf]
    %v109 = vld [vmem:[#allocation5 + $0x14] sm:$0xf]
    %v110 = vld [vmem:[#allocation5 + $0x18] sm:$0xf]
    %v111 = vld [vmem:[#allocation5 + $0x1c] sm:$0xf]
    %v112 = vld [vmem:[#allocation5 + $0x20] sm:$0xf]
    %v113 = vld [vmem:[#allocation5 + $0x24] sm:$0xf]
    %v114 = vld [vmem:[#allocation5 + $0x28] sm:$0xf]
    %v115 = vld [vmem:[#allocation5 + $0x2c] sm:$0xf]
    %v116 = vld [vmem:[#allocation5 + $0x30] sm:$0xf]
    %v117 = vld [vmem:[#allocation5 + $0x34] sm:$0xf]
    %v118 = vld [vmem:[#allocation5 + $0x38] sm:$0xf]
    %v119 = vld [vmem:[#allocation5 + $0x3c] sm:$0xf]
    %v120 = vld [vmem:[#allocation7] sm:$0x1]
    %v122 = vlaneseq
    %v123 = vshrl.u32 %v122, 7
    %v124 = vsub.s32 0, %v123
    %v125 = vrot.slane %v120, %v124
    %v130 = vunpack.c.l.b16 %v101
    %v131 = vunpack.c.l.b16 %v102
    %v132 = vunpack.c.l.b16 %v103
    %v133 = vpack.c.b16 %v131, %v130
    %v134 = vpack.c.b16 %v132, %v132
    %v153 = vunpack.c.l.b16 %v104
    %v154 = vunpack.c.l.b16 %v105
    %v155 = vunpack.c.l.b16 %v106
    %v156 = vunpack.c.l.b16 %v107
    %v157 = vunpack.c.l.b16 %v108
    %v158 = vunpack.c.l.b16 %v109
    %v159 = vunpack.c.l.b16 %v110
    %v160 = vunpack.c.l.b16 %v111
    %v161 = vunpack.c.l.b16 %v112
    %v162 = vunpack.c.l.b16 %v113
    %v163 = vunpack.c.l.b16 %v114
    %v164 = vunpack.c.l.b16 %v115
    %v165 = vunpack.c.l.b16 %v116
    %v166 = vunpack.c.l.b16 %v117
    %v167 = vunpack.c.l.b16 %v118
    %v168 = vunpack.c.l.b16 %v119
    %v169 = vpack.c.b16 %v154, %v153
    %v170 = vpack.c.b16 %v156, %v155
    %v171 = vpack.c.b16 %v158, %v157
    %v172 = vpack.c.b16 %v160, %v159
    %v173 = vpack.c.b16 %v162, %v161
    %v174 = vpack.c.b16 %v164, %v163
    %v175 = vpack.c.b16 %v166, %v165
    %v176 = vpack.c.b16 %v168, %v167
    %185 = vmatprep.subr.bf16.mxu0 0
    %186 = vmatpush1.bf16.msra.mxu0 %v169
    %187 = vmatprep.subr.bf16.mxu0 0
    %188 = vmatpush1.bf16.msra.mxu0 %v170
    %189 = vmatprep.subr.bf16.mxu0 0
    %190 = vmatpush1.bf16.msra.mxu0 %v171
    %191 = vmatprep.subr.bf16.mxu0 0
    %192 = vmatpush1.bf16.msra.mxu0 %v172
    %193 = vmatprep.subr.bf16.mxu0 0
    %194 = vmatpush1.bf16.msra.mxu0 %v173
    %195 = vmatprep.subr.bf16.mxu0 0
    %196 = vmatpush1.bf16.msra.mxu0 %v174
    %197 = vmatprep.subr.bf16.mxu0 0
    %198 = vmatpush1.bf16.msra.mxu0 %v175
    %199 = vmatprep.subr.bf16.mxu0 0
    %200 = vmatpush1.bf16.msra.mxu0 %v176
    %201 = vmatprep.subr.bf16.mxu0 0
    %202 = vmatpush1.bf16.msra.mxu0 0
    %203 = vmatprep.subr.bf16.mxu0 0
    %204 = vmatpush1.bf16.msra.mxu0 0
    %205 = vmatprep.subr.bf16.mxu0 0
    %206 = vmatpush1.bf16.msra.mxu0 0
    %207 = vmatprep.subr.bf16.mxu0 0
    %208 = vmatpush1.bf16.msra.mxu0 0
    %209 = vmatprep.subr.bf16.mxu0 0
    %210 = vmatpush1.bf16.msra.mxu0 0
    %211 = vmatprep.subr.bf16.mxu0 0
    %212 = vmatpush1.bf16.msra.mxu0 0
    %213 = vmatprep.subr.bf16.mxu0 0
    %214 = vmatpush1.bf16.msra.mxu0 0
    %215 = vmatprep.subr.bf16.mxu0 0
    %216 = vmatpush1.bf16.msra.mxu0 0
    %217 = vmatprep.mubr.bf16.mxu0 0
    %218 = vmatmul.mubr.bf16.gmra.mrb[0].mxu0 %v133
    %v219 = vpop.f32.mrb[0].mxu0
    %v220 = vadd.f32 %v125, %v219
    %v221 = vpop.f32.mrb[0].mxu0
    %v222 = vpop.f32.mrb[0].mxu0
    %v223 = vadd.f32 %v125, %v222
    %v224 = vpop.f32.mrb[0].mxu0
    %225 = vmatprep.mubr.bf16.mxu0 0
    %226 = vmatmul.mubr.bf16.gmra.mrb[0].mxu0 %v134
    %v227 = vpop.f32.mrb[0].mxu0
    %v228 = vadd.f32 %v125, %v227
    %v229 = vpop.f32.mrb[0].mxu0
    %v230 = vpop.f32.mrb[0].mxu0
    %v231 = vpop.f32.mrb[0].mxu0
    %232 = vdwg.mxu0
    %v233 = vld [vmem:[#allocation8] sm:$0xf]
    %v234 = vld [vmem:[#allocation8 + $0x4] sm:$0xf]
    %v235 = vld [vmem:[#allocation8 + $0x8] sm:$0xf]
    %v236 = vunpack.c.l.bf16 %v233
    %v237 = vunpack.c.l.bf16 %v234
    %v238 = vunpack.c.l.bf16 %v235
    %v239 = vadd.f32 %v220, %v236
    %v240 = vadd.f32 %v223, %v237
    %v241 = vadd.f32 %v228, %v238
    %242 = vadd.xlane.f32.xlu0 %v239
    %v243 = vpop.xlane.xlu0 %242
    %244 = vadd.xlane.f32.xlu0 %v240
    %v245 = vpop.xlane.xlu0 %244
    %246 = vadd.xlane.f32.xlu0 %v241
    %v247 = vpop.xlane.xlu0 %246
    %v248 = vrcp.pop 128.0
    %v249 = vmul.f32 %v243, %v248
    %v250 = vmul.f32 %v245, %v248
    %v251 = vmul.f32 %v247, %v248
    %v252 = vsub.f32 %v239, %v249
    %v253 = vsub.f32 %v240, %v250
    %v254 = vsub.f32 %v241, %v251
    %v255 = vmul.f32 %v252, %v252
    %v256 = vmul.f32 %v253, %v253
    %v257 = vmul.f32 %v254, %v254
    %258 = vadd.xlane.f32.xlu0 %v255
    %v259 = vpop.xlane.xlu0 %258
    %260 = vadd.xlane.f32.xlu0 %v256
    %v261 = vpop.xlane.xlu0 %260
    %262 = vadd.xlane.f32.xlu0 %v257
    %v263 = vpop.xlane.xlu0 %262
    %v264 = vmul.f32 %v259, %v248
    %v265 = vmul.f32 %v261, %v248
    %v266 = vmul.f32 %v263, %v248
    %v267 = vadd.f32 %v264, 1e-05
    %v268 = vadd.f32 %v265, 1e-05
    %v269 = vadd.f32 %v266, 1e-05
    %v270 = vrsqrt.pop %v267
    %v271 = vrsqrt.pop %v268
    %v272 = vrsqrt.pop %v269
    %v273 = vmul.f32 %v252, %v270
    %v274 = vmul.f32 %v253, %v271
    %v275 = vmul.f32 %v254, %v272
    %v276 = vld [vmem:[#allocation10] sm:$0x1]
    %v278 = vlaneseq
    %v279 = vshrl.u32 %v278, 7
    %v280 = vsub.s32 0, %v279
    %v281 = vrot.slane %v276, %v280
    %v283 = vmul.f32 %v273, %v281
    %v284 = vmul.f32 %v274, %v281
    %v285 = vmul.f32 %v275, %v281
    %v286 = vld [vmem:[#allocation11] sm:$0x1]
    %v288 = vlaneseq
    %v289 = vshrl.u32 %v288, 7
    %v290 = vsub.s32 0, %v289
    %v291 = vrot.slane %v286, %v290
    %v293 = vadd.f32 %v283, %v291
    %v294 = vadd.f32 %v284, %v291
    %v295 = vadd.f32 %v285, %v291
    %v296 = vpack.c.bf16 %v294, %v293
    %v297 = vpack.c.bf16 %v295, %v295
    %v300 = vunpack.c.l.b16 %v296
    %v301 = vunpack.c.h.b16 %v296
    %v302 = vunpack.c.l.b16 %v297
    %v303 = vpack.c.b16 %v300, %v300
    %v304 = vpack.c.b16 %v301, %v301
    %v305 = vpack.c.b16 %v302, %v302
    %309 = vst [vmem:[#allocation13] sm:$0xf] %v303
    %310 = vst [vmem:[#allocation13 + $0x4] sm:$0xf] %v304
    %311 = vst [vmem:[#allocation13 + $0x8] sm:$0xf] %v305
    // Predicated region
    $region50: #{transformer_forward.29} parent=1 // pred_check
      _
    $region51: #{transformer_forward.29} parent=1 // pred_check_branch
      %313 = sbr.rel (0) target = $region53
    $region52: #{transformer_forward.29} parent=1 // pred_region
      %s315 = ssub.s32 192, 192
      %316 = vsyncadd [#allocation4], %s315
      %s317 = sshll.u32 [#allocation13], 4
      %s318 = int_to_ptr.vmem [resolvable:$true] %s317
      %323 = dma.vmem_to_hbm [thread:$0]  %s318, 192, %s6, [#allocation4], 64, 64, 4
    $region53: #{transformer_forward.29} parent=1 // pred_fallthru
      _
    // Predicated region
    $region54: #{transformer_forward.29} parent=1 // pred_check
      _
    $region55: #{transformer_forward.29} parent=1 // pred_check_branch
      %325 = sbr.rel (0) target = $region57
    $region56: #{transformer_forward.29} parent=1 // pred_region
      %326 = dma.done [#allocation4], 192
    $region57: #{transformer_forward.29} parent=1 // pred_fallthru
      _
    %327 = vsyncpa [#allocation3], 1
    %328 = vsyncpa [#allocation6], 1
    %329 = vsyncpa [#allocation9], 1
    %330 = vsyncpa [#allocation12], 1
    %331 = vsyncpa [#allocation4], 1

// kernel: transformer_forward.27
$region0: #{transformer_forward.27}
  #allocation0 [shape = 'u32[]', space=smem, size = 0x4, offset = 0x4, fixed_abs, tag = 'smem constant byte address 0x4 - core index']
  #allocation1 [shape = 'u32[144,128]{1,0:T(1,128)}', space=vmem, size = 0x12000, scoped, tag = 'internal scratch']
  %s0 = inlined_call_operand.hbm [shape: bf16[24,128], index: 0, kind: input, shape index: {}]
  %s1 = inlined_call_operand.hbm [shape: bf16[128,384], index: 1, kind: input, shape index: {}]
  %s2 = inlined_call_operand.hbm [shape: f32[1,384], index: 2, kind: input, shape index: {}]
  %s3 = inlined_call_operand.hbm [shape: bf16[24,384], index: 3, kind: output, shape index: {}]
  %s4 = sld [smem:[#allocation0]]
  $region57: #{transformer_forward.27} parent=0
    _
  %s6 = ssub.s32 1, %s4
  %s7 = scalar_select 0, %s6, %s4
  $region1: #{transformer_forward.27} parent=0
    #allocation2 [shape = 'u8[6144]{0}', space=vmem, size = 0x1800, scoped, tag = 'input window, operand 0, single buffered']
    #allocation3 [shape = 's32[2]{0}', space=sflag, size = 0x8, scoped, tag = 'scoped memory for transformer_forward.27']
    #allocation4 [shape = 's32[2]{0}', space=sflag, size = 0x8, scoped, tag = 'scoped memory for transformer_forward.27']
    #allocation5 [shape = 'u8[131072]{0}', space=vmem, size = 0x20000, scoped, tag = 'input window, operand 1']
    #allocation6 [shape = 's32[2]{0}', space=sflag, size = 0x8, scoped, tag = 'scoped memory for transformer_forward.27']
    #allocation7 [shape = 'u8[2048]{0}', space=vmem, size = 0x800, scoped, tag = 'input window, operand 2']
    #allocation8 [shape = 'u8[24576]{0}', space=vmem, size = 0x6000, scoped, tag = 'output window, operand 0']
    %8 = vsyncpa [#allocation3], 0
    %9 = vsyncpa [#allocation6], 0
    %s10 = scalar_lea.sflag [#allocation6], 1
    %11 = vsyncpa %s10, 0
    %12 = vsyncpa [#allocation4], 0
    %s13 = scalar_lea.sflag [#allocation4], 1
    %14 = vsyncpa %s13, 0
    loop: start=0, step=1, limit=4
    $region2: #{transformer_forward.27} parent=1 // loop_pre_header
      _
    $region3: #{transformer_forward.27} parent=1 // loop_header
      %s16 = sphi 0, %s20
      %p17 = scmp.ge.s32.totalorder %s16, 4
      %s23 = sphi 0, %s35
      %s24 = sphi 0, %s31
      %s25 = sphi 0, %s23
      %s26 = sphi 0, %s24
      %s27 = sphi 0, %s25
      %s28 = sphi 0, %s26
      %s38 = sphi 0, %s40
      %s41 = sphi 0, %s38
      %s42 = sphi 0, %s41
      %s58 = sphi 0, %s42
      %s64 = sphi 0, %s66
      %s67 = sphi 0, %s64
      %s68 = sphi 0, %s67
      %s84 = sphi 0, %s68
      %s90 = sphi 0, %s92
      %s93 = sphi 0, %s90
      %s94 = sphi 0, %s93
      %s110 = sphi 0, %s94
      %s118 = sphi 0, %s120
      %s121 = sphi 0, %s118
      %s122 = sphi 0, %s121
      %s138 = sphi 0, %s122
    $region4: #{transformer_forward.27} parent=1 // loop_header_branch
      %19 = sbr.rel (%p17) target = $region8
    $region5: #{transformer_forward.27} parent=1 // loop_body
      %s21 = ssub.s32 %s16, 1
      %s22 = ssub.s32 %s16, 2
      %s29 = sadd.s32 1, %s24
      %p30 = scmp.ge.s32.totalorder %s29, 2
      %s31 = scalar_select %p30, 0, %s29
      %s32 = sadd.s32 1, %s23
      %s33 = scalar_select %p30, %s32, %s23
      %p34 = scmp.ge.s32.totalorder %s33, 1
      %s35 = scalar_select %p34, 0, %s33
      %s36 = ssub.s32 %s23, %s35
      %p37 = scmp.eq.s32.totalorder %s36, 0
      %s39 = sadd.s32 %s38, 1
      %s40 = scalar_select %p37, %s38, %s39
      %p43 = pneg %p37
      %p44 = scmp.eq.s32.totalorder %s16, 1
      %p45 = por %p43, %p44
      %p46 = scmp.ne.s32.totalorder %s38, %s41
      %p47 = scmp.eq.s32.totalorder %s16, 0
      %p48 = por %p46, %p47
      %p49 = scmp.ne.s32.totalorder %s38, %s41
      %p50 = scmp.eq.s32.totalorder %s21, 1
      %p51 = por %p49, %p50
      %p52 = scmp.ne.s32.totalorder %s41, %s42
      %p53 = scmp.eq.s32.totalorder %s21, 0
      %p54 = por %p52, %p53
      %p55 = scmp.ne.s32.totalorder %s41, %s42
      %p56 = scmp.eq.s32.totalorder %s22, 1
      %p57 = por %p55, %p56
      %p59 = scmp.ne.s32.totalorder %s42, %s58
      %p60 = scmp.eq.s32.totalorder %s22, 0
      %p61 = por %p59, %p60
      %s62 = ssub.s32 %s24, %s31
      %p63 = scmp.eq.s32.totalorder %s62, 0
      %s65 = sadd.s32 %s64, 1
      %s66 = scalar_select %p63, %s64, %s65
      %p69 = pneg %p63
      %p70 = scmp.eq.s32.totalorder %s16, 1
      %p71 = por %p69, %p70
      %p72 = scmp.ne.s32.totalorder %s64, %s67
      %p73 = scmp.eq.s32.totalorder %s16, 0
      %p74 = por %p72, %p73
      %p75 = scmp.ne.s32.totalorder %s64, %s67
      %p76 = scmp.eq.s32.totalorder %s21, 1
      %p77 = por %p75, %p76
      %p78 = scmp.ne.s32.totalorder %s67, %s68
      %p79 = scmp.eq.s32.totalorder %s21, 0
      %p80 = por %p78, %p79
      %p81 = scmp.ne.s32.totalorder %s67, %s68
      %p82 = scmp.eq.s32.totalorder %s22, 1
      %p83 = por %p81, %p82
      %p85 = scmp.ne.s32.totalorder %s68, %s84
      %p86 = scmp.eq.s32.totalorder %s22, 0
      %p87 = por %p85, %p86
      %s88 = ssub.s32 %s24, %s31
      %p89 = scmp.eq.s32.totalorder %s88, 0
      %s91 = sadd.s32 %s90, 1
      %s92 = scalar_select %p89, %s90, %s91
      %p95 = pneg %p89
      %p96 = scmp.eq.s32.totalorder %s16, 1
      %p97 = por %p95, %p96
      %p98 = scmp.ne.s32.totalorder %s90, %s93
      %p99 = scmp.eq.s32.totalorder %s16, 0
      %p100 = por %p98, %p99
      %p101 = scmp.ne.s32.totalorder %s90, %s93
      %p102 = scmp.eq.s32.totalorder %s21, 1
      %p103 = por %p101, %p102
      %p104 = scmp.ne.s32.totalorder %s93, %s94
      %p105 = scmp.eq.s32.totalorder %s21, 0
      %p106 = por %p104, %p105
      %p107 = scmp.ne.s32.totalorder %s93, %s94
      %p108 = scmp.eq.s32.totalorder %s22, 1
      %p109 = por %p107, %p108
      %p111 = scmp.ne.s32.totalorder %s94, %s110
      %p112 = scmp.eq.s32.totalorder %s22, 0
      %p113 = por %p111, %p112
      %s114 = ssub.s32 %s23, %s35
      %s115 = ssub.s32 %s24, %s31
      %s116 = sor.u32 %s114, %s115
      %p117 = scmp.eq.s32.totalorder %s116, 0
      %s119 = sadd.s32 %s118, 1
      %s120 = scalar_select %p117, %s118, %s119
      %p123 = pneg %p117
      %p124 = scmp.eq.s32.totalorder %s16, 1
      %p125 = por %p123, %p124
      %p126 = scmp.ne.s32.totalorder %s118, %s121
      %p127 = scmp.eq.s32.totalorder %s16, 0
      %p128 = por %p126, %p127
      %p129 = scmp.ne.s32.totalorder %s118, %s121
      %p130 = scmp.eq.s32.totalorder %s21, 1
      %p131 = por %p129, %p130
      %p132 = scmp.ne.s32.totalorder %s121, %s122
      %p133 = scmp.eq.s32.totalorder %s21, 0
      %p134 = por %p132, %p133
      %p135 = scmp.ne.s32.totalorder %s121, %s122
      %p136 = scmp.eq.s32.totalorder %s22, 1
      %p137 = por %p135, %p136
      %p139 = scmp.ne.s32.totalorder %s122, %s138
      %p140 = scmp.eq.s32.totalorder %s22, 0
      %p141 = por %p139, %p140
      %p142 = scmp.le.s32.totalorder 1, %s16
      %p143 = scmp.lt.s32.totalorder %s16, 3
      %p144 = pnand %p142, %p143
      %p145 = pneg %p144
      // Predicated region
      $region9: #{transformer_forward.27} parent=5 // pred_check
        _
      $region10: #{transformer_forward.27} parent=5 // pred_check_branch
        %147 = sbr.rel (%p144) target = $region12
      $region11: #{transformer_forward.27} parent=5 // pred_region
        %s148 = ssub.s32 %s16, 1
        // Predicated region
        $region13: #{transformer_forward.27} parent=11 // pred_check
          %p149 = pneg %p54
        $region14: #{transformer_forward.27} parent=11 // pred_check_branch
          %151 = sbr.rel (%p149) target = $region16
        $region15: #{transformer_forward.27} parent=11 // pred_region
          %s152 = smul.u32 3, %s25
          %s154 = ssub.s32 192, 192
          %155 = vsyncadd [#allocation3], %s154
          %s156 = smul.addr %s152, 64
          %s157 = scalar_lea.hbm %s0, %s156
          %s158 = sshll.u32 [#allocation2], 4
          %s159 = int_to_ptr.vmem [resolvable:$true] %s158
          %164 = dma.hbm_to_vmem [thread:$0]  %s157, 192, %s159, [#allocation3], 64, 64, 4
        $region16: #{transformer_forward.27} parent=11 // pred_fallthru
          _
      $region12: #{transformer_forward.27} parent=5 // pred_fallthru
        _
      %p165 = scmp.lt.s32.totalorder %s16, 2
      // Predicated region
      $region17: #{transformer_forward.27} parent=5 // pred_check
        %p166 = pneg %p165
      $region18: #{transformer_forward.27} parent=5 // pred_check_branch
        %168 = sbr.rel (%p166) target = $region20
      $region19: #{transformer_forward.27} parent=5 // pred_region
        // Predicated region
        $region21: #{transformer_forward.27} parent=19 // pred_check
          %p169 = pneg %p74
        $region22: #{transformer_forward.27} parent=19 // pred_check_branch
          %171 = sbr.rel (%p169) target = $region24
        $region23: #{transformer_forward.27} parent=19 // pred_region
          %s172 = sand.u32 %s16, 1
          %s173 = scalar_lea.sflag [#allocation6], %s172
          %s174 = sand.u32 %s64, 1
          %s175 = smul.addr %s174, 128
          %s176 = scalar_lea.vmem [#allocation5], %s175
          %s177 = smul.u32 2, %s24
          %s178 = ssub.s32 3, %s177
          %p179 = scmp.lt.s32.totalorder %s178, 2
          %s180 = scalar_select %p179, %s178, 2
          %s181 = smul.u32 1024, %s180
          %s183 = ssub.s32 2048, %s181
          %184 = vsyncadd %s173, %s183
          %p185 = scmp.ne.s32.totalorder 0, %s181
          %s186 = smul.addr %s177, 64
          %s187 = scalar_lea.hbm %s1, %s186
          %s188 = smul.u32 %s180, 4
          %s189 = smul.u32 %s188, 16
          %s190 = sshll.u32 %s176, 4
          %s191 = int_to_ptr.vmem [resolvable:$true] %s190
          %s192 = sshll.u32 %s189, 4
          %196 = dma.hbm_to_vmem [thread:$0]  (%p185), %s187, %s192, %s191, %s173, 192, 128, %s188
        $region24: #{transformer_forward.27} parent=19 // pred_fallthru
          _
        // Predicated region
        $region25: #{transformer_forward.27} parent=19 // pred_check
          %p197 = pneg %p100
        $region26: #{transformer_forward.27} parent=19 // pred_check_branch
          %199 = sbr.rel (%p197) target = $region28
        $region27: #{transformer_forward.27} parent=19 // pred_region
          %s200 = sand.u32 %s16, 1
          %s201 = scalar_lea.sflag [#allocation6], %s200
          %s202 = sand.u32 %s90, 1
          %s203 = smul.addr %s202, 2
          %s204 = scalar_lea.vmem [#allocation7], %s203
          %s205 = smul.u32 2, %s24
          %s206 = ssub.s32 3, %s205
          %p207 = scmp.lt.s32.totalorder %s206, 2
          %s208 = scalar_select %p207, %s206, 2
          %s209 = smul.u32 16, %s208
          %s211 = ssub.s32 32, %s209
          %212 = vsyncadd %s201, %s211
          %p213 = scmp.ne.s32.totalorder 0, %s209
          %s214 = smul.addr %s205, 16
          %s215 = scalar_lea.hbm %s2, %s214
          %s216 = sshll.u32 %s208, 4
          %s217 = sshll.u32 %s204, 4
          %s218 = int_to_ptr.vmem [resolvable:$true] %s217
          %220 = dma.hbm_to_vmem [thread:$0]  (%p213), %s215, %s216, %s218, %s201
        $region28: #{transformer_forward.27} parent=19 // pred_fallthru
          _
      $region20: #{transformer_forward.27} parent=5 // pred_fallthru
        _
      %p221 = scmp.le.s32.totalorder 1, %s16
      %p222 = scmp.lt.s32.totalorder %s16, 3
      %p223 = pnand %p221, %p222
      %p224 = pneg %p223
      // Predicated region
      $region29: #{transformer_forward.27} parent=5 // pred_check
        _
      $region30: #{transformer_forward.27} parent=5 // pred_check_branch
        %226 = sbr.rel (%p223) target = $region32
      $region31: #{transformer_forward.27} parent=5 // pred_region
        %s227 = ssub.s32 %s16, 1
        // Predicated region
        $region33: #{transformer_forward.27} parent=31 // pred_check
          %p228 = pneg %p54
        $region34: #{transformer_forward.27} parent=31 // pred_check_branch
          %230 = sbr.rel (%p228) target = $region36
        $region35: #{transformer_forward.27} parent=31 // pred_region
          %231 = dma.done [#allocation3], 192
        $region36: #{transformer_forward.27} parent=31 // pred_fallthru
          _
        %s232 = sand.u32 %s21, 1
        %s233 = scalar_lea.sflag [#allocation6], %s232
        %s234 = sand.u32 %s67, 1
        %s235 = smul.addr %s234, 128
        %s236 = scalar_lea.vmem [#allocation5], %s235
        // Predicated region
        $region37: #{transformer_forward.27} parent=31 // pred_check
          %p237 = pneg %p80
        $region38: #{transformer_forward.27} parent=31 // pred_check_branch
          %239 = sbr.rel (%p237) target = $region40
        $region39: #{transformer_forward.27} parent=31 // pred_region
          %240 = dma.done %s233, 2048
        $region40: #{transformer_forward.27} parent=31 // pred_fallthru
          _
        %s241 = sand.u32 %s21, 1
        %s242 = scalar_lea.sflag [#allocation6], %s241
        %s243 = sand.u32 %s93, 1
        %s244 = smul.addr %s243, 2
        %s245 = scalar_lea.vmem [#allocation7], %s244
        // Predicated region
        $region41: #{transformer_forward.27} parent=31 // pred_check
          %p246 = pneg %p106
        $region42: #{transformer_forward.27} parent=31 // pred_check_branch
          %248 = sbr.rel (%p246) target = $region44
        $region43: #{transformer_forward.27} parent=31 // pred_region
          %249 = dma.done %s242, 32
        $region44: #{transformer_forward.27} parent=31 // pred_fallthru
          _
        %p250 = pneg %p54
        %p251 = pneg %p51
        %s252 = sand.u32 %s21, 1
        %s253 = scalar_lea.sflag [#allocation6], %s252
        %s254 = sand.u32 %s67, 1
        %s255 = smul.addr %s254, 128
        %s256 = scalar_lea.vmem [#allocation5], %s255
        %p257 = pneg %p80
        %p258 = pneg %p77
        %s259 = sand.u32 %s21, 1
        %s260 = scalar_lea.sflag [#allocation6], %s259
        %s261 = sand.u32 %s93, 1
        %s262 = smul.addr %s261, 2
        %s263 = scalar_lea.vmem [#allocation7], %s262
        %p264 = pneg %p106
        %p265 = pneg %p103
        %p266 = pneg %p134
        %p267 = pneg %p131
        %s268 = sand.u32 %s121, 1
        %s269 = scalar_lea.sflag [#allocation4], %s268
        %s270 = sand.u32 %s121, 1
        %s271 = smul.addr %s270, 24
        %s272 = scalar_lea.vmem [#allocation8], %s271
        %s273 = smul.u32 3, %s25
        %s274 = smul.u32 2, %s26
        %s275 = ssub.s32 3, %s274
        %p276 = scmp.lt.s32.totalorder %s275, 2
        %s277 = scalar_select %p276, %s275, 2
        %s278 = smul.u32 1024, %s277
        %s279 = smul.u32 2, %s26
        %s280 = ssub.s32 3, %s279
        %p281 = scmp.lt.s32.totalorder %s280, 2
        %s282 = scalar_select %p281, %s280, 2
        %s283 = smul.u32 16, %s282
        %s284 = smul.u32 3, %s25
        %s285 = smul.u32 2, %s26
        %s286 = ssub.s32 3, %s285
        %p287 = scmp.lt.s32.totalorder %s286, 2
        %s288 = scalar_select %p287, %s286, 2
        %s289 = smul.u32 192, %s288
        %v291 = vld [vmem:[#allocation2] sm:$0xf]
        %v292 = vld [vmem:[#allocation2 + $0x4] sm:$0xf]
        %v293 = vld [vmem:[#allocation2 + $0x8] sm:$0xf]
        %v294 = vld [vmem:[%s236] sm:$0xff]
        %v295 = vld [vmem:[%s236 + $0x8] sm:$0xff]
        %v296 = vld [vmem:[%s236 + $0x10] sm:$0xff]
        %v297 = vld [vmem:[%s236 + $0x18] sm:$0xff]
        %v298 = vld [vmem:[%s236 + $0x20] sm:$0xff]
        %v299 = vld [vmem:[%s236 + $0x28] sm:$0xff]
        %v300 = vld [vmem:[%s236 + $0x30] sm:$0xff]
        %v301 = vld [vmem:[%s236 + $0x38] sm:$0xff]
        %v302 = vld [vmem:[%s236 + $0x40] sm:$0xff]
        %v303 = vld [vmem:[%s236 + $0x48] sm:$0xff]
        %v304 = vld [vmem:[%s236 + $0x50] sm:$0xff]
        %v305 = vld [vmem:[%s236 + $0x58] sm:$0xff]
        %v306 = vld [vmem:[%s236 + $0x60] sm:$0xff]
        %v307 = vld [vmem:[%s236 + $0x68] sm:$0xff]
        %v308 = vld [vmem:[%s236 + $0x70] sm:$0xff]
        %v309 = vld [vmem:[%s236 + $0x78] sm:$0xff]
        %v310 = vld [vmem:[%s245] sm:$0x3]
        %v312 = vlaneseq
        %v313 = vshrl.u32 %v312, 7
        %v314 = vsub.s32 0, %v313
        %v315 = vrot.slane %v310, %v314
        %v316 = vlaneseq
        %v317 = vshrl.u32 %v316, 7
        %v318 = vsub.s32 1, %v317
        %v319 = vrot.slane %v310, %v318
        %v325 = vunpack.c.l.b16 %v291
        %v326 = vunpack.c.l.b16 %v292
        %v327 = vunpack.c.l.b16 %v293
        %v328 = vpack.c.b16 %v326, %v325
        %v329 = vpack.c.b16 %v327, %v327
        %v348 = vunpack.c.l.b16 %v294
        %v349 = vunpack.c.h.b16 %v294
        %v350 = vunpack.c.l.b16 %v295
        %v351 = vunpack.c.h.b16 %v295
        %v352 = vunpack.c.l.b16 %v296
        %v353 = vunpack.c.h.b16 %v296
        %v354 = vunpack.c.l.b16 %v297
        %v355 = vunpack.c.h.b16 %v297
        %v356 = vunpack.c.l.b16 %v298
        %v357 = vunpack.c.h.b16 %v298
        %v358 = vunpack.c.l.b16 %v299
        %v359 = vunpack.c.h.b16 %v299
        %v360 = vunpack.c.l.b16 %v300
        %v361 = vunpack.c.h.b16 %v300
        %v362 = vunpack.c.l.b16 %v301
        %v363 = vunpack.c.h.b16 %v301
        %v364 = vunpack.c.l.b16 %v302
        %v365 = vunpack.c.h.b16 %v302
        %v366 = vunpack.c.l.b16 %v303
        %v367 = vunpack.c.h.b16 %v303
        %v368 = vunpack.c.l.b16 %v304
        %v369 = vunpack.c.h.b16 %v304
        %v370 = vunpack.c.l.b16 %v305
        %v371 = vunpack.c.h.b16 %v305
        %v372 = vunpack.c.l.b16 %v306
        %v373 = vunpack.c.h.b16 %v306
        %v374 = vunpack.c.l.b16 %v307
        %v375 = vunpack.c.h.b16 %v307
        %v376 = vunpack.c.l.b16 %v308
        %v377 = vunpack.c.h.b16 %v308
        %v378 = vunpack.c.l.b16 %v309
        %v379 = vunpack.c.h.b16 %v309
        %v380 = vpack.c.b16 %v350, %v348
        %v381 = vpack.c.b16 %v351, %v349
        %v382 = vpack.c.b16 %v354, %v352
        %v383 = vpack.c.b16 %v355, %v353
        %v384 = vpack.c.b16 %v358, %v356
        %v385 = vpack.c.b16 %v359, %v357
        %v386 = vpack.c.b16 %v362, %v360
        %v387 = vpack.c.b16 %v363, %v361
        %v388 = vpack.c.b16 %v366, %v364
        %v389 = vpack.c.b16 %v367, %v365
        %v390 = vpack.c.b16 %v370, %v368
        %v391 = vpack.c.b16 %v371, %v369
        %v392 = vpack.c.b16 %v374, %v372
        %v393 = vpack.c.b16 %v375, %v373
        %v394 = vpack.c.b16 %v378, %v376
        %v395 = vpack.c.b16 %v379, %v377
        %412 = vmatprep.subr.bf16.mxu0 %v381
        %413 = vmatpush1.bf16.msra.mxu0 %v380
        %414 = vmatprep.subr.bf16.mxu0 %v383
        %415 = vmatpush1.bf16.msra.mxu0 %v382
        %416 = vmatprep.subr.bf16.mxu0 %v385
        %417 = vmatpush1.bf16.msra.mxu0 %v384
        %418 = vmatprep.subr.bf16.mxu0 %v387
        %419 = vmatpush1.bf16.msra.mxu0 %v386
        %420 = vmatprep.subr.bf16.mxu0 %v389
        %421 = vmatpush1.bf16.msra.mxu0 %v388
        %422 = vmatprep.subr.bf16.mxu0 %v391
        %423 = vmatpush1.bf16.msra.mxu0 %v390
        %424 = vmatprep.subr.bf16.mxu0 %v393
        %425 = vmatpush1.bf16.msra.mxu0 %v392
        %426 = vmatprep.subr.bf16.mxu0 %v395
        %427 = vmatpush1.bf16.msra.mxu0 %v394
        %428 = vmatprep.subr.bf16.mxu0 0
        %429 = vmatpush1.bf16.msra.mxu0 0
        %430 = vmatprep.subr.bf16.mxu0 0
        %431 = vmatpush1.bf16.msra.mxu0 0
        %432 = vmatprep.subr.bf16.mxu0 0
        %433 = vmatpush1.bf16.msra.mxu0 0
        %434 = vmatprep.subr.bf16.mxu0 0
        %435 = vmatpush1.bf16.msra.mxu0 0
        %436 = vmatprep.subr.bf16.mxu0 0
        %437 = vmatpush1.bf16.msra.mxu0 0
        %438 = vmatprep.subr.bf16.mxu0 0
        %439 = vmatpush1.bf16.msra.mxu0 0
        %440 = vmatprep.subr.bf16.mxu0 0
        %441 = vmatpush1.bf16.msra.mxu0 0
        %442 = vmatprep.subr.bf16.mxu0 0
        %443 = vmatpush1.bf16.msra.mxu0 0
        %444 = vmatprep.mubr.bf16.mxu0 0
        %445 = vmatmul.mubr.bf16.gmra.mrb[0].mxu0 %v328
        %v446 = vpop.f32.mrb[0].mxu0
        %v447 = vadd.f32 %v315, %v446
        %v448 = vpop.f32.mrb[0].mxu0
        %v449 = vadd.f32 %v319, %v448
        %v450 = vpop.f32.mrb[0].mxu0
        %v451 = vadd.f32 %v315, %v450
        %v452 = vpop.f32.mrb[0].mxu0
        %v453 = vadd.f32 %v319, %v452
        %454 = vmatprep.mubr.bf16.mxu0 0
        %455 = vmatmul.mubr.bf16.gmra.mrb[0].mxu0 %v329
        %v456 = vpop.f32.mrb[0].mxu0
        %v457 = vadd.f32 %v315, %v456
        %v458 = vpop.f32.mrb[0].mxu0
        %v459 = vadd.f32 %v319, %v458
        %v460 = vpop.f32.mrb[0].mxu0
        %v461 = vpop.f32.mrb[0].mxu0
        %462 = vdwg.mxu0
        %v463 = vpack.c.bf16 %v451, %v447
        %v464 = vpack.c.bf16 %v453, %v449
        %v465 = vpack.c.bf16 %v457, %v457
        %v466 = vpack.c.bf16 %v459, %v459
        %v471 = vunpack.c.l.b16 %v463
        %v472 = vunpack.c.l.b16 %v464
        %v473 = vunpack.c.h.b16 %v463
        %v474 = vunpack.c.h.b16 %v464
        %v475 = vunpack.c.l.b16 %v465
        %v476 = vunpack.c.l.b16 %v466
        %v477 = vpack.c.b16 %v472, %v471
        %v478 = vpack.c.b16 %v474, %v473
        %v479 = vpack.c.b16 %v476, %v475
        %483 = vst [vmem:[%s272] sm:$0xff] %v477
        %484 = vst [vmem:[%s272 + $0x8] sm:$0xff] %v478
        %485 = vst [vmem:[%s272 + $0x10] sm:$0xff] %v479
        %s486 = sand.u32 %s121, 1
        %s487 = scalar_lea.sflag [#allocation4], %s486
        %s488 = sand.u32 %s121, 1
        %s489 = smul.addr %s488, 24
        %s490 = scalar_lea.vmem [#allocation8], %s489
        // Predicated region
        $region45: #{transformer_forward.27} parent=31 // pred_check
          %p491 = pneg %p131
        $region46: #{transformer_forward.27} parent=31 // pred_check_branch
          %493 = sbr.rel (%p491) target = $region48
        $region47: #{transformer_forward.27} parent=31 // pred_region
          %s494 = smul.u32 3, %s25
          %s495 = smul.u32 2, %s26
          %s496 = ssub.s32 3, %s495
          %p497 = scmp.lt.s32.totalorder %s496, 2
          %s498 = scalar_select %p497, %s496, 2
          %s499 = smul.u32 192, %s498
          %s501 = ssub.s32 384, %s499
          %502 = vsyncadd %s487, %s501
          %p503 = scmp.ne.s32.totalorder 0, %s499
          %s504 = smul.addr %s494, 3
          %s505 = sadd.s32 %s495, %s504
          %s506 = smul.addr %s505, 64
          %s507 = scalar_lea.hbm %s3, %s506
          %s508 = smul.u32 %s498, 4
          %s509 = smul.u32 %s508, 3
          %s510 = sshll.u32 %s490, 4
          %s511 = int_to_ptr.vmem [resolvable:$true] %s510
          %s512 = sshll.u32 %s509, 4
          %516 = dma.vmem_to_hbm [thread:$0]  (%p503), %s511, %s512, %s507, %s487, 128, 192, %s508
        $region48: #{transformer_forward.27} parent=31 // pred_fallthru
          _
      $region32: #{transformer_forward.27} parent=5 // pred_fallthru
        _
      %p517 = scmp.le.s32.totalorder 2, %s16
      // Predicated region
      $region49: #{transformer_forward.27} parent=5 // pred_check
        %p518 = pneg %p517
      $region50: #{transformer_forward.27} parent=5 // pred_check_branch
        %520 = sbr.rel (%p518) target = $region52
      $region51: #{transformer_forward.27} parent=5 // pred_region
        %s521 = ssub.s32 %s16, 2
        // Predicated region
        $region53: #{transformer_forward.27} parent=51 // pred_check
          %p522 = pneg %p137
        $region54: #{transformer_forward.27} parent=51 // pred_check_branch
          %524 = sbr.rel (%p522) target = $region56
        $region55: #{transformer_forward.27} parent=51 // pred_region
          %s525 = sand.u32 %s122, 1
          %s526 = scalar_lea.sflag [#allocation4], %s525
          %s527 = sand.u32 %s122, 1
          %s528 = smul.addr %s527, 24
          %s529 = scalar_lea.vmem [#allocation8], %s528
          %530 = dma.done %s526, 384
        $region56: #{transformer_forward.27} parent=51 // pred_fallthru
          _
      $region52: #{transformer_forward.27} parent=5 // pred_fallthru
        _
    $region6: #{transformer_forward.27} parent=1 // loop_footer
      %s20 = sadd.s32 1, %s16
    $region7: #{transformer_forward.27} parent=1 // loop_footer_branch
      %15 = sbr.rel target = $region3
    $region8: #{transformer_forward.27} parent=1 // loop_exit
      _
    %531 = vsyncpa [#allocation3], 1
    %s532 = scalar_lea.sflag [#allocation3], 1
    %533 = vsyncpa %s532, 1
    %534 = vsyncpa [#allocation6], 1
    %s535 = scalar_lea.sflag [#allocation6], 1
    %536 = vsyncpa %s535, 1
    %537 = vsyncpa [#allocation4], 1
    %s538 = scalar_lea.sflag [#allocation4], 1
    %539 = vsyncpa %s538, 1

// kernel: transformer_forward.28
$region0: #{transformer_forward.28}
  #allocation0 [shape = 'u32[]', space=smem, size = 0x4, offset = 0x4, fixed_abs, tag = 'smem constant byte address 0x4 - core index']
  #allocation1 [shape = 'u32[144,128]{1,0:T(1,128)}', space=vmem, size = 0x12000, scoped, tag = 'internal scratch']
  %s0 = inlined_call_operand.hbm [shape: bf16[2,12,384], index: 0, kind: input, shape index: {}]
  %s1 = inlined_call_operand.hbm [shape: bf16[2,12,128], index: 1, kind: output, shape index: {}]
  %s2 = sld [smem:[#allocation0]]
  $region41: #{transformer_forward.28} parent=0
    _
  %s4 = ssub.s32 1, %s2
  %s5 = scalar_select 0, %s4, %s2
  $region1: #{transformer_forward.28} parent=0
    #allocation2 [shape = 'u8[24576]{0}', space=vmem, size = 0x6000, scoped, tag = 'input window, operand 0']
    #allocation3 [shape = 's32[2]{0}', space=sflag, size = 0x8, scoped, tag = 'scoped memory for transformer_forward.28']
    #allocation4 [shape = 's32[2]{0}', space=sflag, size = 0x8, scoped, tag = 'scoped memory for transformer_forward.28']
    #allocation5 [shape = 'u8[8192]{0}', space=vmem, size = 0x2000, scoped, tag = 'output window, operand 0']
    %6 = vsyncpa [#allocation3], 0
    %s7 = scalar_lea.sflag [#allocation3], 1
    %8 = vsyncpa %s7, 0
    %9 = vsyncpa [#allocation4], 0
    %s10 = scalar_lea.sflag [#allocation4], 1
    %11 = vsyncpa %s10, 0
    loop: start=0, step=1, limit=4
    $region2: #{transformer_forward.28} parent=1 // loop_pre_header
      _
    $region3: #{transformer_forward.28} parent=1 // loop_header
      %s13 = sphi 0, %s17
      %p14 = scmp.ge.s32.totalorder %s13, 4
      %s23 = sphi 0, %s25
      %s26 = sphi 0, %s23
      %s27 = sphi 0, %s26
      %s43 = sphi 0, %s27
      %s49 = sphi 0, %s51
      %s52 = sphi 0, %s49
      %s53 = sphi 0, %s52
      %s69 = sphi 0, %s53
    $region4: #{transformer_forward.28} parent=1 // loop_header_branch
      %16 = sbr.rel (%p14) target = $region8
    $region5: #{transformer_forward.28} parent=1 // loop_body
      %s18 = ssub.s32 %s13, 1
      %s19 = ssub.s32 %s13, 2
      %s20 = sadd.s32 %s13, 1
      %s21 = ssub.s32 %s13, %s20
      %p22 = scmp.eq.s32.totalorder %s21, 0
      %s24 = sadd.s32 %s23, 1
      %s25 = scalar_select %p22, %s23, %s24
      %p28 = pneg %p22
      %p29 = scmp.eq.s32.totalorder %s13, 1
      %p30 = por %p28, %p29
      %p31 = scmp.ne.s32.totalorder %s23, %s26
      %p32 = scmp.eq.s32.totalorder %s13, 0
      %p33 = por %p31, %p32
      %p34 = scmp.ne.s32.totalorder %s23, %s26
      %p35 = scmp.eq.s32.totalorder %s18, 1
      %p36 = por %p34, %p35
      %p37 = scmp.ne.s32.totalorder %s26, %s27
      %p38 = scmp.eq.s32.totalorder %s18, 0
      %p39 = por %p37, %p38
      %p40 = scmp.ne.s32.totalorder %s26, %s27
      %p41 = scmp.eq.s32.totalorder %s19, 1
      %p42 = por %p40, %p41
      %p44 = scmp.ne.s32.totalorder %s27, %s43
      %p45 = scmp.eq.s32.totalorder %s19, 0
      %p46 = por %p44, %p45
      %s47 = ssub.s32 %s13, %s20
      %p48 = scmp.eq.s32.totalorder %s47, 0
      %s50 = sadd.s32 %s49, 1
      %s51 = scalar_select %p48, %s49, %s50
      %p54 = pneg %p48
      %p55 = scmp.eq.s32.totalorder %s13, 1
      %p56 = por %p54, %p55
      %p57 = scmp.ne.s32.totalorder %s49, %s52
      %p58 = scmp.eq.s32.totalorder %s13, 0
      %p59 = por %p57, %p58
      %p60 = scmp.ne.s32.totalorder %s49, %s52
      %p61 = scmp.eq.s32.totalorder %s18, 1
      %p62 = por %p60, %p61
      %p63 = scmp.ne.s32.totalorder %s52, %s53
      %p64 = scmp.eq.s32.totalorder %s18, 0
      %p65 = por %p63, %p64
      %p66 = scmp.ne.s32.totalorder %s52, %s53
      %p67 = scmp.eq.s32.totalorder %s19, 1
      %p68 = por %p66, %p67
      %p70 = scmp.ne.s32.totalorder %s53, %s69
      %p71 = scmp.eq.s32.totalorder %s19, 0
      %p72 = por %p70, %p71
      %p73 = scmp.le.s32.totalorder 1, %s13
      %p74 = scmp.lt.s32.totalorder %s13, 3
      %p75 = pnand %p73, %p74
      %p76 = pneg %p75
      // Predicated region
      $region9: #{transformer_forward.28} parent=5 // pred_check
        _
      $region10: #{transformer_forward.28} parent=5 // pred_check_branch
        %78 = sbr.rel (%p75) target = $region12
      $region11: #{transformer_forward.28} parent=5 // pred_region
        %s79 = ssub.s32 %s13, 1
      $region12: #{transformer_forward.28} parent=5 // pred_fallthru
        _
      %p80 = scmp.lt.s32.totalorder %s13, 2
      // Predicated region
      $region13: #{transformer_forward.28} parent=5 // pred_check
        %p81 = pneg %p80
      $region14: #{transformer_forward.28} parent=5 // pred_check_branch
        %83 = sbr.rel (%p81) target = $region16
      $region15: #{transformer_forward.28} parent=5 // pred_region
        // Predicated region
        $region17: #{transformer_forward.28} parent=15 // pred_check
          %p84 = pneg %p33
        $region18: #{transformer_forward.28} parent=15 // pred_check_branch
          %86 = sbr.rel (%p84) target = $region20
        $region19: #{transformer_forward.28} parent=15 // pred_region
          %s87 = sand.u32 %s23, 1
          %s88 = scalar_lea.sflag [#allocation3], %s87
          %s89 = sand.u32 %s23, 1
          %s90 = smul.addr %s89, 24
          %s91 = scalar_lea.vmem [#allocation2], %s90
          %s93 = ssub.s32 384, 384
          %94 = vsyncadd %s88, %s93
          %s95 = smul.addr %s13, 6
          %s96 = smul.addr %s95, 64
          %s97 = scalar_lea.hbm %s0, %s96
          %s98 = sshll.u32 %s91, 4
          %s99 = int_to_ptr.vmem [resolvable:$true] %s98
          %104 = dma.hbm_to_vmem [thread:$0]  %s97, 384, %s99, %s88, 192, 192, 12
        $region20: #{transformer_forward.28} parent=15 // pred_fallthru
          _
      $region16: #{transformer_forward.28} parent=5 // pred_fallthru
        _
      %p105 = scmp.le.s32.totalorder 1, %s13
      %p106 = scmp.lt.s32.totalorder %s13, 3
      %p107 = pnand %p105, %p106
      %p108 = pneg %p107
      // Predicated region
      $region21: #{transformer_forward.28} parent=5 // pred_check
        _
      $region22: #{transformer_forward.28} parent=5 // pred_check_branch
        %110 = sbr.rel (%p107) target = $region24
      $region23: #{transformer_forward.28} parent=5 // pred_region
        %s111 = ssub.s32 %s13, 1
        %s112 = sand.u32 %s26, 1
        %s113 = scalar_lea.sflag [#allocation3], %s112
        %s114 = sand.u32 %s26, 1
        %s115 = smul.addr %s114, 24
        %s116 = scalar_lea.vmem [#allocation2], %s115
        // Predicated region
        $region25: #{transformer_forward.28} parent=23 // pred_check
          %p117 = pneg %p39
        $region26: #{transformer_forward.28} parent=23 // pred_check_branch
          %119 = sbr.rel (%p117) target = $region28
        $region27: #{transformer_forward.28} parent=23 // pred_region
          %120 = dma.done %s113, 384
        $region28: #{transformer_forward.28} parent=23 // pred_fallthru
          _
        %s121 = sand.u32 %s26, 1
        %s122 = scalar_lea.sflag [#allocation3], %s121
        %s123 = sand.u32 %s26, 1
        %s124 = smul.addr %s123, 24
        %s125 = scalar_lea.vmem [#allocation2], %s124
        %p126 = pneg %p39
        %p127 = pneg %p36
        %p128 = pneg %p65
        %p129 = pneg %p62
        %s130 = sand.u32 %s52, 1
        %s131 = scalar_lea.sflag [#allocation4], %s130
        %s132 = sand.u32 %s52, 1
        %s133 = smul.addr %s132, 8
        %s134 = scalar_lea.vmem [#allocation5], %s133
        %v136 = vld [vmem:[%s116] sm:$0xff]
        %v137 = vld [vmem:[%s116 + $0x8] sm:$0xf]
        %v138 = vld [vmem:[%s116 + $0xc] sm:$0x33]
        %v139 = vld [vmem:[%s116 + $0x14] sm:$0x3]
        %v142 = vunpack.c.l.b16 %v136
        %v143 = vunpack.c.l.b16 %v138
        %v144 = vpack.c.b16 %v143, %v142
        %v145 = vunpack.c.h.b16 %v136
        %v146 = vunpack.c.h.b16 %v138
        %v147 = vpack.c.b16 %v146, %v145
        %vm148 = vcmask 261120
        %v150 = vsel %vm148, %v144, 0
        %v153 = vsel %vm148, %v147, 0
        %155 = vmatprep.subr.bf16.mxu0 0
        %156 = vmatpush1.bf16.xpose.msra.mxu0 %v153
        %157 = vmatprep.subr.bf16.mxu0 0
        %158 = vmatpush1.bf16.xpose.msra.mxu0 0
        %159 = vmatprep.subr.bf16.mxu0 0
        %160 = vmatpush1.bf16.xpose.msra.mxu0 0
        %161 = vmatprep.subr.bf16.mxu0 0
        %162 = vmatpush1.bf16.xpose.msra.mxu0 0
        %163 = vmatprep.subr.bf16.mxu0 0
        %164 = vmatpush1.bf16.xpose.msra.mxu0 0
        %165 = vmatprep.subr.bf16.mxu0 0
        %166 = vmatpush1.bf16.xpose.msra.mxu0 0
        %167 = vmatprep.subr.bf16.mxu0 0
        %168 = vmatpush1.bf16.xpose.msra.mxu0 0
        %169 = vmatprep.subr.bf16.mxu0 0
        %170 = vmatpush1.bf16.xpose.msra.mxu0 0
        %171 = vmatprep.subr.bf16.mxu0 0
        %172 = vmatpush1.bf16.xpose.msra.mxu0 0
        %173 = vmatprep.subr.bf16.mxu0 0
        %174 = vmatpush1.bf16.xpose.msra.mxu0 0
        %175 = vmatprep.subr.bf16.mxu0 0
        %176 = vmatpush1.bf16.xpose.msra.mxu0 0
        %177 = vmatprep.subr.bf16.mxu0 0
        %178 = vmatpush1.bf16.xpose.msra.mxu0 0
        %179 = vmatprep.subr.bf16.mxu0 0
        %180 = vmatpush1.bf16.xpose.msra.mxu0 0
        %181 = vmatprep.subr.bf16.mxu0 0
        %182 = vmatpush1.bf16.xpose.msra.mxu0 0
        %183 = vmatprep.subr.bf16.mxu0 0
        %184 = vmatpush1.bf16.xpose.msra.mxu0 0
        %185 = vmatprep.subr.bf16.mxu0 0
        %186 = vmatpush1.bf16.xpose.msra.mxu0 0
        %187 = vmatprep.mubr.bf16.mxu0 0
        %188 = vmatmul.mubr.bf16.gmra.mrb[0].mxu0 %v150
        %v189 = vpop.f32.mrb[0].mxu0
        %v190 = vadd.f32 0.0, %v189
        %v191 = vpop.f32.mrb[0].mxu0
        %v192 = vpop.f32.mrb[0].mxu0
        %v193 = vadd.f32 0.0, %v192
        %v194 = vpop.f32.mrb[0].mxu0
        %195 = vdwg.mxu0
        %v196 = vmul.f32 %v190, 0.17677669
        %v197 = vmul.f32 %v193, 0.17677669
        %vm198 = vcmask 97280
        %v199 = vsel %vm198, %v196, -inf
        %200 = vmax.xlane.f32.xlu0 %v199
        %v201 = vpop.xlane.xlu0 %200
        %vm202 = vcmask 93184
        %v203 = vsel %vm202, %v197, -inf
        %204 = vmax.xlane.f32.xlu0 %v203
        %v205 = vpop.xlane.xlu0 %204
        %v206 = vsub.f32 %v196, %v201
        %v207 = vsub.f32 %v197, %v205
        %v208 = vmul.f32 %v206, 1.442695
        %v209 = vpow.pop %v208
        %v210 = vmul.f32 %v207, 1.442695
        %v211 = vpow.pop %v210
        %v212 = vsel %vm198, %v209, 0.0
        %213 = vadd.xlane.f32.xlu0 %v212
        %v214 = vpop.xlane.xlu0 %213
        %v215 = vsel %vm202, %v211, 0.0
        %216 = vadd.xlane.f32.xlu0 %v215
        %v217 = vpop.xlane.xlu0 %216
        %v218 = vpack.c.bf16 %v211, %v209
        %v221 = vunpack.c.l.b16 %v137
        %v222 = vunpack.c.l.b16 %v139
        %v223 = vpack.c.b16 %v222, %v221
        %v225 = vsel %vm198, %v218, 0
        %vm227 = vcmask 1045504
        %v229 = vsel %vm227, %v223, 0
        %231 = vmatprep.subr.bf16.mxu0 0
        %232 = vmatpush1.bf16.msra.mxu0 %v229
        %233 = vmatprep.subr.bf16.mxu0 0
        %234 = vmatpush1.bf16.msra.mxu0 0
        %235 = vmatprep.subr.bf16.mxu0 0
        %236 = vmatpush1.bf16.msra.mxu0 0
        %237 = vmatprep.subr.bf16.mxu0 0
        %238 = vmatpush1.bf16.msra.mxu0 0
        %239 = vmatprep.subr.bf16.mxu0 0
        %240 = vmatpush1.bf16.msra.mxu0 0
        %241 = vmatprep.subr.bf16.mxu0 0
        %242 = vmatpush1.bf16.msra.mxu0 0
        %243 = vmatprep.subr.bf16.mxu0 0
        %244 = vmatpush1.bf16.msra.mxu0 0
        %245 = vmatprep.subr.bf16.mxu0 0
        %246 = vmatpush1.bf16.msra.mxu0 0
        %247 = vmatprep.subr.bf16.mxu0 0
        %248 = vmatpush1.bf16.msra.mxu0 0
        %249 = vmatprep.subr.bf16.mxu0 0
        %250 = vmatpush1.bf16.msra.mxu0 0
        %251 = vmatprep.subr.bf16.mxu0 0
        %252 = vmatpush1.bf16.msra.mxu0 0
        %253 = vmatprep.subr.bf16.mxu0 0
        %254 = vmatpush1.bf16.msra.mxu0 0
        %255 = vmatprep.subr.bf16.mxu0 0
        %256 = vmatpush1.bf16.msra.mxu0 0
        %257 = vmatprep.subr.bf16.mxu0 0
        %258 = vmatpush1.bf16.msra.mxu0 0
        %259 = vmatprep.subr.bf16.mxu0 0
        %260 = vmatpush1.bf16.msra.mxu0 0
        %261 = vmatprep.subr.bf16.mxu0 0
        %262 = vmatpush1.bf16.msra.mxu0 0
        %263 = vmatprep.mubr.bf16.mxu0 0
        %264 = vmatmul.mubr.bf16.gmra.mrb[0].mxu0 %v225
        %v265 = vpop.f32.mrb[0].mxu0
        %v266 = vadd.f32 0.0, %v265
        %v267 = vpop.f32.mrb[0].mxu0
        %v268 = vpop.f32.mrb[0].mxu0
        %v269 = vadd.f32 0.0, %v268
        %v270 = vpop.f32.mrb[0].mxu0
        %271 = vdwg.mxu0
        %v272 = vrcp.pop %v214
        %v273 = vrcp.pop %v217
        %v274 = vmul.f32 %v266, %v272
        %v275 = vmul.f32 %v269, %v273
        %276 = vrot.lane.b32.xlu0 %v144, 96
        %v277 = vpop.permute.xlu0 %276
        %278 = vrot.lane.b32.xlu0 %v147, 96
        %v279 = vpop.permute.xlu0 %278
        %v281 = vsel %vm148, %v277, 0
        %v284 = vsel %vm148, %v279, 0
        %286 = vmatprep.subr.bf16.mxu0 0
        %287 = vmatpush1.bf16.xpose.msra.mxu0 %v284
        %288 = vmatprep.subr.bf16.mxu0 0
        %289 = vmatpush1.bf16.xpose.msra.mxu0 0
        %290 = vmatprep.subr.bf16.mxu0 0
        %291 = vmatpush1.bf16.xpose.msra.mxu0 0
        %292 = vmatprep.subr.bf16.mxu0 0
        %293 = vmatpush1.bf16.xpose.msra.mxu0 0
        %294 = vmatprep.subr.bf16.mxu0 0
        %295 = vmatpush1.bf16.xpose.msra.mxu0 0
        %296 = vmatprep.subr.bf16.mxu0 0
        %297 = vmatpush1.bf16.xpose.msra.mxu0 0
        %298 = vmatprep.subr.bf16.mxu0 0
        %299 = vmatpush1.bf16.xpose.msra.mxu0 0
        %300 = vmatprep.subr.bf16.mxu0 0
        %301 = vmatpush1.bf16.xpose.msra.mxu0 0
        %302 = vmatprep.subr.bf16.mxu0 0
        %303 = vmatpush1.bf16.xpose.msra.mxu0 0
        %304 = vmatprep.subr.bf16.mxu0 0
        %305 = vmatpush1.bf16.xpose.msra.mxu0 0
        %306 = vmatprep.subr.bf16.mxu0 0
        %307 = vmatpush1.bf16.xpose.msra.mxu0 0
        %308 = vmatprep.subr.bf16.mxu0 0
        %309 = vmatpush1.bf16.xpose.msra.mxu0 0
        %310 = vmatprep.subr.bf16.mxu0 0
        %311 = vmatpush1.bf16.xpose.msra.mxu0 0
        %312 = vmatprep.subr.bf16.mxu0 0
        %313 = vmatpush1.bf16.xpose.msra.mxu0 0
        %314 = vmatprep.subr.bf16.mxu0 0
        %315 = vmatpush1.bf16.xpose.msra.mxu0 0
        %316 = vmatprep.subr.bf16.mxu0 0
        %317 = vmatpush1.bf16.xpose.msra.mxu0 0
        %318 = vmatprep.mubr.bf16.mxu0 0
        %319 = vmatmul.mubr.bf16.gmra.mrb[0].mxu0 %v281
        %v320 = vpop.f32.mrb[0].mxu0
        %v321 = vadd.f32 0.0, %v320
        %v322 = vpop.f32.mrb[0].mxu0
        %v323 = vpop.f32.mrb[0].mxu0
        %v324 = vadd.f32 0.0, %v323
        %v325 = vpop.f32.mrb[0].mxu0
        %326 = vdwg.mxu0
        %v327 = vmul.f32 %v321, 0.17677669
        %v328 = vmul.f32 %v324, 0.17677669
        %v329 = vsel %vm198, %v327, -inf
        %330 = vmax.xlane.f32.xlu0 %v329
        %v331 = vpop.xlane.xlu0 %330
        %v332 = vsel %vm202, %v328, -inf
        %333 = vmax.xlane.f32.xlu0 %v332
        %v334 = vpop.xlane.xlu0 %333
        %v335 = vsub.f32 %v327, %v331
        %v336 = vsub.f32 %v328, %v334
        %v337 = vmul.f32 %v335, 1.442695
        %v338 = vpow.pop %v337
        %v339 = vmul.f32 %v336, 1.442695
        %v340 = vpow.pop %v339
        %v341 = vsel %vm198, %v338, 0.0
        %342 = vadd.xlane.f32.xlu0 %v341
        %v343 = vpop.xlane.xlu0 %342
        %v344 = vsel %vm202, %v340, 0.0
        %345 = vadd.xlane.f32.xlu0 %v344
        %v346 = vpop.xlane.xlu0 %345
        %v347 = vpack.c.bf16 %v340, %v338
        %348 = vrot.lane.b32.xlu0 %v223, 96
        %v349 = vpop.permute.xlu0 %348
        %v351 = vsel %vm198, %v347, 0
        %v354 = vsel %vm227, %v349, 0
        %356 = vmatprep.subr.bf16.mxu0 0
        %357 = vmatpush1.bf16.msra.mxu0 %v354
        %358 = vmatprep.subr.bf16.mxu0 0
        %359 = vmatpush1.bf16.msra.mxu0 0
        %360 = vmatprep.subr.bf16.mxu0 0
        %361 = vmatpush1.bf16.msra.mxu0 0
        %362 = vmatprep.subr.bf16.mxu0 0
        %363 = vmatpush1.bf16.msra.mxu0 0
        %364 = vmatprep.subr.bf16.mxu0 0
        %365 = vmatpush1.bf16.msra.mxu0 0
        %366 = vmatprep.subr.bf16.mxu0 0
        %367 = vmatpush1.bf16.msra.mxu0 0
        %368 = vmatprep.subr.bf16.mxu0 0
        %369 = vmatpush1.bf16.msra.mxu0 0
        %370 = vmatprep.subr.bf16.mxu0 0
        %371 = vmatpush1.bf16.msra.mxu0 0
        %372 = vmatprep.subr.bf16.mxu0 0
        %373 = vmatpush1.bf16.msra.mxu0 0
        %374 = vmatprep.subr.bf16.mxu0 0
        %375 = vmatpush1.bf16.msra.mxu0 0
        %376 = vmatprep.subr.bf16.mxu0 0
        %377 = vmatpush1.bf16.msra.mxu0 0
        %378 = vmatprep.subr.bf16.mxu0 0
        %379 = vmatpush1.bf16.msra.mxu0 0
        %380 = vmatprep.subr.bf16.mxu0 0
        %381 = vmatpush1.bf16.msra.mxu0 0
        %382 = vmatprep.subr.bf16.mxu0 0
        %383 = vmatpush1.bf16.msra.mxu0 0
        %384 = vmatprep.subr.bf16.mxu0 0
        %385 = vmatpush1.bf16.msra.mxu0 0
        %386 = vmatprep.subr.bf16.mxu0 0
        %387 = vmatpush1.bf16.msra.mxu0 0
        %388 = vmatprep.mubr.bf16.mxu0 0
        %389 = vmatmul.mubr.bf16.gmra.mrb[0].mxu0 %v351
        %v390 = vpop.f32.mrb[0].mxu0
        %v391 = vadd.f32 0.0, %v390
        %v392 = vpop.f32.mrb[0].mxu0
        %v393 = vpop.f32.mrb[0].mxu0
        %v394 = vadd.f32 0.0, %v393
        %v395 = vpop.f32.mrb[0].mxu0
        %396 = vdwg.mxu0
        %v397 = vrcp.pop %v343
        %v398 = vrcp.pop %v346
        %v399 = vmul.f32 %v391, %v397
        %v400 = vmul.f32 %v394, %v398
        %401 = vrot.lane.b32.xlu0 %v144, 64
        %v402 = vpop.permute.xlu0 %401
        %403 = vrot.lane.b32.xlu0 %v147, 64
        %v404 = vpop.permute.xlu0 %403
        %v406 = vsel %vm148, %v402, 0
        %v409 = vsel %vm148, %v404, 0
        %411 = vmatprep.subr.bf16.mxu0 0
        %412 = vmatpush1.bf16.xpose.msra.mxu0 %v409
        %413 = vmatprep.subr.bf16.mxu0 0
        %414 = vmatpush1.bf16.xpose.msra.mxu0 0
        %415 = vmatprep.subr.bf16.mxu0 0
        %416 = vmatpush1.bf16.xpose.msra.mxu0 0
        %417 = vmatprep.subr.bf16.mxu0 0
        %418 = vmatpush1.bf16.xpose.msra.mxu0 0
        %419 = vmatprep.subr.bf16.mxu0 0
        %420 = vmatpush1.bf16.xpose.msra.mxu0 0
        %421 = vmatprep.subr.bf16.mxu0 0
        %422 = vmatpush1.bf16.xpose.msra.mxu0 0
        %423 = vmatprep.subr.bf16.mxu0 0
        %424 = vmatpush1.bf16.xpose.msra.mxu0 0
        %425 = vmatprep.subr.bf16.mxu0 0
        %426 = vmatpush1.bf16.xpose.msra.mxu0 0
        %427 = vmatprep.subr.bf16.mxu0 0
        %428 = vmatpush1.bf16.xpose.msra.mxu0 0
        %429 = vmatprep.subr.bf16.mxu0 0
        %430 = vmatpush1.bf16.xpose.msra.mxu0 0
        %431 = vmatprep.subr.bf16.mxu0 0
        %432 = vmatpush1.bf16.xpose.msra.mxu0 0
        %433 = vmatprep.subr.bf16.mxu0 0
        %434 = vmatpush1.bf16.xpose.msra.mxu0 0
        %435 = vmatprep.subr.bf16.mxu0 0
        %436 = vmatpush1.bf16.xpose.msra.mxu0 0
        %437 = vmatprep.subr.bf16.mxu0 0
        %438 = vmatpush1.bf16.xpose.msra.mxu0 0
        %439 = vmatprep.subr.bf16.mxu0 0
        %440 = vmatpush1.bf16.xpose.msra.mxu0 0
        %441 = vmatprep.subr.bf16.mxu0 0
        %442 = vmatpush1.bf16.xpose.msra.mxu0 0
        %443 = vmatprep.mubr.bf16.mxu0 0
        %444 = vmatmul.mubr.bf16.gmra.mrb[0].mxu0 %v406
        %v445 = vpop.f32.mrb[0].mxu0
        %v446 = vadd.f32 0.0, %v445
        %v447 = vpop.f32.mrb[0].mxu0
        %v448 = vpop.f32.mrb[0].mxu0
        %v449 = vadd.f32 0.0, %v448
        %v450 = vpop.f32.mrb[0].mxu0
        %451 = vdwg.mxu0
        %v452 = vmul.f32 %v446, 0.17677669
        %v453 = vmul.f32 %v449, 0.17677669
        %v454 = vsel %vm198, %v452, -inf
        %455 = vmax.xlane.f32.xlu0 %v454
        %v456 = vpop.xlane.xlu0 %455
        %v457 = vsel %vm202, %v453, -inf
        %458 = vmax.xlane.f32.xlu0 %v457
        %v459 = vpop.xlane.xlu0 %458
        %v460 = vsub.f32 %v452, %v456
        %v461 = vsub.f32 %v453, %v459
        %v462 = vmul.f32 %v460, 1.442695
        %v463 = vpow.pop %v462
        %v464 = vmul.f32 %v461, 1.442695
        %v465 = vpow.pop %v464
        %v466 = vsel %vm198, %v463, 0.0
        %467 = vadd.xlane.f32.xlu0 %v466
        %v468 = vpop.xlane.xlu0 %467
        %v469 = vsel %vm202, %v465, 0.0
        %470 = vadd.xlane.f32.xlu0 %v469
        %v471 = vpop.xlane.xlu0 %470
        %v472 = vpack.c.bf16 %v465, %v463
        %473 = vrot.lane.b32.xlu0 %v223, 64
        %v474 = vpop.permute.xlu0 %473
        %v476 = vsel %vm198, %v472, 0
        %v479 = vsel %vm227, %v474, 0
        %481 = vmatprep.subr.bf16.mxu0 0
        %482 = vmatpush1.bf16.msra.mxu0 %v479
        %483 = vmatprep.subr.bf16.mxu0 0
        %484 = vmatpush1.bf16.msra.mxu0 0
        %485 = vmatprep.subr.bf16.mxu0 0
        %486 = vmatpush1.bf16.msra.mxu0 0
        %487 = vmatprep.subr.bf16.mxu0 0
        %488 = vmatpush1.bf16.msra.mxu0 0
        %489 = vmatprep.subr.bf16.mxu0 0
        %490 = vmatpush1.bf16.msra.mxu0 0
        %491 = vmatprep.subr.bf16.mxu0 0
        %492 = vmatpush1.bf16.msra.mxu0 0
        %493 = vmatprep.subr.bf16.mxu0 0
        %494 = vmatpush1.bf16.msra.mxu0 0
        %495 = vmatprep.subr.bf16.mxu0 0
        %496 = vmatpush1.bf16.msra.mxu0 0
        %497 = vmatprep.subr.bf16.mxu0 0
        %498 = vmatpush1.bf16.msra.mxu0 0
        %499 = vmatprep.subr.bf16.mxu0 0
        %500 = vmatpush1.bf16.msra.mxu0 0
        %501 = vmatprep.subr.bf16.mxu0 0
        %502 = vmatpush1.bf16.msra.mxu0 0
        %503 = vmatprep.subr.bf16.mxu0 0
        %504 = vmatpush1.bf16.msra.mxu0 0
        %505 = vmatprep.subr.bf16.mxu0 0
        %506 = vmatpush1.bf16.msra.mxu0 0
        %507 = vmatprep.subr.bf16.mxu0 0
        %508 = vmatpush1.bf16.msra.mxu0 0
        %509 = vmatprep.subr.bf16.mxu0 0
        %510 = vmatpush1.bf16.msra.mxu0 0
        %511 = vmatprep.subr.bf16.mxu0 0
        %512 = vmatpush1.bf16.msra.mxu0 0
        %513 = vmatprep.mubr.bf16.mxu0 0
        %514 = vmatmul.mubr.bf16.gmra.mrb[0].mxu0 %v476
        %v515 = vpop.f32.mrb[0].mxu0
        %v516 = vadd.f32 0.0, %v515
        %v517 = vpop.f32.mrb[0].mxu0
        %v518 = vpop.f32.mrb[0].mxu0
        %v519 = vadd.f32 0.0, %v518
        %v520 = vpop.f32.mrb[0].mxu0
        %521 = vdwg.mxu0
        %v522 = vrcp.pop %v468
        %v523 = vrcp.pop %v471
        %v524 = vmul.f32 %v516, %v522
        %v525 = vmul.f32 %v519, %v523
        %526 = vrot.lane.b32.xlu0 %v144, 32
        %v527 = vpop.permute.xlu0 %526
        %528 = vrot.lane.b32.xlu0 %v147, 32
        %v529 = vpop.permute.xlu0 %528
        %v531 = vsel %vm148, %v527, 0
        %v534 = vsel %vm148, %v529, 0
        %536 = vmatprep.subr.bf16.mxu0 0
        %537 = vmatpush1.bf16.xpose.msra.mxu0 %v534
        %538 = vmatprep.subr.bf16.mxu0 0
        %539 = vmatpush1.bf16.xpose.msra.mxu0 0
        %540 = vmatprep.subr.bf16.mxu0 0
        %541 = vmatpush1.bf16.xpose.msra.mxu0 0
        %542 = vmatprep.subr.bf16.mxu0 0
        %543 = vmatpush1.bf16.xpose.msra.mxu0 0
        %544 = vmatprep.subr.bf16.mxu0 0
        %545 = vmatpush1.bf16.xpose.msra.mxu0 0
        %546 = vmatprep.subr.bf16.mxu0 0
        %547 = vmatpush1.bf16.xpose.msra.mxu0 0
        %548 = vmatprep.subr.bf16.mxu0 0
        %549 = vmatpush1.bf16.xpose.msra.mxu0 0
        %550 = vmatprep.subr.bf16.mxu0 0
        %551 = vmatpush1.bf16.xpose.msra.mxu0 0
        %552 = vmatprep.subr.bf16.mxu0 0
        %553 = vmatpush1.bf16.xpose.msra.mxu0 0
        %554 = vmatprep.subr.bf16.mxu0 0
        %555 = vmatpush1.bf16.xpose.msra.mxu0 0
        %556 = vmatprep.subr.bf16.mxu0 0
        %557 = vmatpush1.bf16.xpose.msra.mxu0 0
        %558 = vmatprep.subr.bf16.mxu0 0
        %559 = vmatpush1.bf16.xpose.msra.mxu0 0
        %560 = vmatprep.subr.bf16.mxu0 0
        %561 = vmatpush1.bf16.xpose.msra.mxu0 0
        %562 = vmatprep.subr.bf16.mxu0 0
        %563 = vmatpush1.bf16.xpose.msra.mxu0 0
        %564 = vmatprep.subr.bf16.mxu0 0
        %565 = vmatpush1.bf16.xpose.msra.mxu0 0
        %566 = vmatprep.subr.bf16.mxu0 0
        %567 = vmatpush1.bf16.xpose.msra.mxu0 0
        %568 = vmatprep.mubr.bf16.mxu0 0
        %569 = vmatmul.mubr.bf16.gmra.mrb[0].mxu0 %v531
        %v570 = vpop.f32.mrb[0].mxu0
        %v571 = vadd.f32 0.0, %v570
        %v572 = vpop.f32.mrb[0].mxu0
        %v573 = vpop.f32.mrb[0].mxu0
        %v574 = vadd.f32 0.0, %v573
        %v575 = vpop.f32.mrb[0].mxu0
        %576 = vdwg.mxu0
        %v577 = vmul.f32 %v571, 0.17677669
        %v578 = vmul.f32 %v574, 0.17677669
        %v579 = vsel %vm198, %v577, -inf
        %580 = vmax.xlane.f32.xlu0 %v579
        %v581 = vpop.xlane.xlu0 %580
        %v582 = vsel %vm202, %v578, -inf
        %583 = vmax.xlane.f32.xlu0 %v582
        %v584 = vpop.xlane.xlu0 %583
        %v585 = vsub.f32 %v577, %v581
        %v586 = vsub.f32 %v578, %v584
        %v587 = vmul.f32 %v585, 1.442695
        %v588 = vpow.pop %v587
        %v589 = vmul.f32 %v586, 1.442695
        %v590 = vpow.pop %v589
        %v591 = vsel %vm198, %v588, 0.0
        %592 = vadd.xlane.f32.xlu0 %v591
        %v593 = vpop.xlane.xlu0 %592
        %v594 = vsel %vm202, %v590, 0.0
        %595 = vadd.xlane.f32.xlu0 %v594
        %v596 = vpop.xlane.xlu0 %595
        %v597 = vpack.c.bf16 %v590, %v588
        %598 = vrot.lane.b32.xlu0 %v223, 32
        %v599 = vpop.permute.xlu0 %598
        %v601 = vsel %vm198, %v597, 0
        %v604 = vsel %vm227, %v599, 0
        %606 = vmatprep.subr.bf16.mxu0 0
        %607 = vmatpush1.bf16.msra.mxu0 %v604
        %608 = vmatprep.subr.bf16.mxu0 0
        %609 = vmatpush1.bf16.msra.mxu0 0
        %610 = vmatprep.subr.bf16.mxu0 0
        %611 = vmatpush1.bf16.msra.mxu0 0
        %612 = vmatprep.subr.bf16.mxu0 0
        %613 = vmatpush1.bf16.msra.mxu0 0
        %614 = vmatprep.subr.bf16.mxu0 0
        %615 = vmatpush1.bf16.msra.mxu0 0
        %616 = vmatprep.subr.bf16.mxu0 0
        %617 = vmatpush1.bf16.msra.mxu0 0
        %618 = vmatprep.subr.bf16.mxu0 0
        %619 = vmatpush1.bf16.msra.mxu0 0
        %620 = vmatprep.subr.bf16.mxu0 0
        %621 = vmatpush1.bf16.msra.mxu0 0
        %622 = vmatprep.subr.bf16.mxu0 0
        %623 = vmatpush1.bf16.msra.mxu0 0
        %624 = vmatprep.subr.bf16.mxu0 0
        %625 = vmatpush1.bf16.msra.mxu0 0
        %626 = vmatprep.subr.bf16.mxu0 0
        %627 = vmatpush1.bf16.msra.mxu0 0
        %628 = vmatprep.subr.bf16.mxu0 0
        %629 = vmatpush1.bf16.msra.mxu0 0
        %630 = vmatprep.subr.bf16.mxu0 0
        %631 = vmatpush1.bf16.msra.mxu0 0
        %632 = vmatprep.subr.bf16.mxu0 0
        %633 = vmatpush1.bf16.msra.mxu0 0
        %634 = vmatprep.subr.bf16.mxu0 0
        %635 = vmatpush1.bf16.msra.mxu0 0
        %636 = vmatprep.subr.bf16.mxu0 0
        %637 = vmatpush1.bf16.msra.mxu0 0
        %638 = vmatprep.mubr.bf16.mxu0 0
        %639 = vmatmul.mubr.bf16.gmra.mrb[0].mxu0 %v601
        %v640 = vpop.f32.mrb[0].mxu0
        %v641 = vadd.f32 0.0, %v640
        %v642 = vpop.f32.mrb[0].mxu0
        %v643 = vpop.f32.mrb[0].mxu0
        %v644 = vadd.f32 0.0, %v643
        %v645 = vpop.f32.mrb[0].mxu0
        %646 = vdwg.mxu0
        %v647 = vrcp.pop %v593
        %v648 = vrcp.pop %v596
        %v649 = vmul.f32 %v641, %v647
        %v650 = vmul.f32 %v644, %v648
        %653 = vrot.lane.b32.xlu0 %v399, 32
        %v654 = vpop.permute.xlu0 %653
        %655 = vrot.lane.b32.xlu0 %v400, 32
        %v656 = vpop.permute.xlu0 %655
        %661 = vrot.lane.b32.xlu0 %v524, 64
        %v662 = vpop.permute.xlu0 %661
        %663 = vrot.lane.b32.xlu0 %v525, 64
        %v664 = vpop.permute.xlu0 %663
        %669 = vrot.lane.b32.xlu0 %v649, 96
        %v670 = vpop.permute.xlu0 %669
        %671 = vrot.lane.b32.xlu0 %v650, 96
        %v672 = vpop.permute.xlu0 %671
        %v675 = vsel %vm148, %v274, %v654
        %v676 = vsel %vm148, %v275, %v656
        %vm677 = vcmask 523264
        %v678 = vsel %vm677, %v675, %v662
        %v679 = vsel %vm677, %v676, %v664
        %vm680 = vcmask 785408
        %v681 = vsel %vm680, %v678, %v670
        %v682 = vsel %vm680, %v679, %v672
        %v683 = vpack.c.bf16 %v682, %v681
        %v685 = vunpack.c.l.b16 %v683
        %v686 = vunpack.c.h.b16 %v683
        %v687 = vpack.c.b16 %v685, %v685
        %v688 = vpack.c.b16 %v686, %v686
        %691 = vst [vmem:[%s134] sm:$0xf] %v687
        %692 = vst [vmem:[%s134 + $0x4] sm:$0x3] %v688
        %s693 = sand.u32 %s52, 1
        %s694 = scalar_lea.sflag [#allocation4], %s693
        %s695 = sand.u32 %s52, 1
        %s696 = smul.addr %s695, 8
        %s697 = scalar_lea.vmem [#allocation5], %s696
        // Predicated region
        $region29: #{transformer_forward.28} parent=23 // pred_check
          %p698 = pneg %p62
        $region30: #{transformer_forward.28} parent=23 // pred_check_branch
          %700 = sbr.rel (%p698) target = $region32
        $region31: #{transformer_forward.28} parent=23 // pred_region
          %s702 = ssub.s32 128, 128
          %703 = vsyncadd %s694, %s702
          %s704 = smul.addr %s18, 2
          %s705 = smul.addr %s704, 64
          %s706 = scalar_lea.hbm %s1, %s705
          %s707 = sshll.u32 %s697, 4
          %s708 = int_to_ptr.vmem [resolvable:$true] %s707
          %713 = dma.vmem_to_hbm [thread:$0]  %s708, 128, %s706, %s694, 64, 64, 4
        $region32: #{transformer_forward.28} parent=23 // pred_fallthru
          _
      $region24: #{transformer_forward.28} parent=5 // pred_fallthru
        _
      %p714 = scmp.le.s32.totalorder 2, %s13
      // Predicated region
      $region33: #{transformer_forward.28} parent=5 // pred_check
        %p715 = pneg %p714
      $region34: #{transformer_forward.28} parent=5 // pred_check_branch
        %717 = sbr.rel (%p715) target = $region36
      $region35: #{transformer_forward.28} parent=5 // pred_region
        %s718 = ssub.s32 %s13, 2
        // Predicated region
        $region37: #{transformer_forward.28} parent=35 // pred_check
          %p719 = pneg %p68
        $region38: #{transformer_forward.28} parent=35 // pred_check_branch
          %721 = sbr.rel (%p719) target = $region40
        $region39: #{transformer_forward.28} parent=35 // pred_region
          %s722 = sand.u32 %s53, 1
          %s723 = scalar_lea.sflag [#allocation4], %s722
          %s724 = sand.u32 %s53, 1
          %s725 = smul.addr %s724, 8
          %s726 = scalar_lea.vmem [#allocation5], %s725
          %727 = dma.done %s723, 128
        $region40: #{transformer_forward.28} parent=35 // pred_fallthru
          _
      $region36: #{transformer_forward.28} parent=5 // pred_fallthru
        _
    $region6: #{transformer_forward.28} parent=1 // loop_footer
      %s17 = sadd.s32 1, %s13
    $region7: #{transformer_forward.28} parent=1 // loop_footer_branch
      %12 = sbr.rel target = $region3
    $region8: #{transformer_forward.28} parent=1 // loop_exit
      _
    %728 = vsyncpa [#allocation3], 1
    %s729 = scalar_lea.sflag [#allocation3], 1
    %730 = vsyncpa %s729, 1
    %731 = vsyncpa [#allocation4], 1
    %s732 = scalar_lea.sflag [#allocation4], 1
    %733 = vsyncpa %s732, 1

// kernel: transformer_forward.30
$region0: #{transformer_forward.30}
  #allocation0 [shape = 'u32[]', space=smem, size = 0x4, offset = 0x4, fixed_abs, tag = 'smem constant byte address 0x4 - core index']
  #allocation1 [shape = 'u32[144,128]{1,0:T(1,128)}', space=vmem, size = 0x12000, scoped, tag = 'internal scratch']
  %s0 = inlined_call_operand.hbm [shape: bf16[24,128], index: 0, kind: input, shape index: {}]
  %s1 = inlined_call_operand.hbm [shape: bf16[128,256], index: 1, kind: input, shape index: {}]
  %s2 = inlined_call_operand.hbm [shape: f32[1,256], index: 2, kind: input, shape index: {}]
  %s3 = inlined_call_operand.hbm [shape: bf16[256,128], index: 3, kind: input, shape index: {}]
  %s4 = inlined_call_operand.hbm [shape: f32[1,128], index: 4, kind: input, shape index: {}]
  %s5 = inlined_call_operand.hbm [shape: f32[1,128], index: 5, kind: input, shape index: {}]
  %s6 = inlined_call_operand.hbm [shape: f32[1,128], index: 6, kind: input, shape index: {}]
  %s7 = inlined_call_operand.hbm [shape: bf16[24,128], index: 7, kind: output, shape index: {}]
  %s8 = sld [smem:[#allocation0]]
  $region66: #{transformer_forward.30} parent=0
    _
  %s10 = ssub.s32 1, %s8
  %s11 = scalar_select 0, %s10, %s8
  $region1: #{transformer_forward.30} parent=0
    #allocation2 [shape = 'u8[6144]{0}', space=vmem, size = 0x1800, scoped, tag = 'input window, operand 0, single buffered']
    #allocation3 [shape = 's32[1]{0}', space=sflag, size = 0x4, scoped, tag = 'scoped memory for transformer_forward.30']
    #allocation4 [shape = 's32[1]{0}', space=sflag, size = 0x4, scoped, tag = 'scoped memory for transformer_forward.30']
    #allocation5 [shape = 'u8[65536]{0}', space=vmem, size = 0x10000, scoped, tag = 'input window, operand 1, single buffered']
    #allocation6 [shape = 's32[1]{0}', space=sflag, size = 0x4, scoped, tag = 'scoped memory for transformer_forward.30']
    #allocation7 [shape = 'u8[1024]{0}', space=vmem, size = 0x400, scoped, tag = 'input window, operand 2, single buffered']
    #allocation8 [shape = 'u8[65536]{0}', space=vmem, size = 0x10000, scoped, tag = 'input window, operand 3, single buffered']
    #allocation9 [shape = 's32[1]{0}', space=sflag, size = 0x4, scoped, tag = 'scoped memory for transformer_forward.30']
    #allocation10 [shape = 'u8[512]{0}', space=vmem, size = 0x400, scoped, tag = 'input window, operand 4, single buffered']
    #allocation11 [shape = 'u8[512]{0}', space=vmem, size = 0x400, scoped, tag = 'input window, operand 5, single buffered']
    #allocation12 [shape = 's32[1]{0}', space=sflag, size = 0x4, scoped, tag = 'scoped memory for transformer_forward.30']
    #allocation13 [shape = 'u8[512]{0}', space=vmem, size = 0x400, scoped, tag = 'input window, operand 6, single buffered']
    #allocation14 [shape = 'u8[6144]{0}', space=vmem, size = 0x1800, scoped, tag = 'output window, operand 0, single buffered']
    %12 = vsyncpa [#allocation3], 0
    %13 = vsyncpa [#allocation6], 0
    %14 = vsyncpa [#allocation9], 0
    %15 = vsyncpa [#allocation12], 0
    %16 = vsyncpa [#allocation4], 0
    // Predicated region
    $region2: #{transformer_forward.30} parent=1 // pred_check
      _
    $region3: #{transformer_forward.30} parent=1 // pred_check_branch
      %18 = sbr.rel (0) target = $region5
    $region4: #{transformer_forward.30} parent=1 // pred_region
      %s20 = ssub.s32 192, 192
      %21 = vsyncadd [#allocation3], %s20
      %s22 = sshll.u32 [#allocation2], 4
      %s23 = int_to_ptr.vmem [resolvable:$true] %s22
      %28 = dma.hbm_to_vmem [thread:$0]  %s0, 192, %s23, [#allocation3], 64, 64, 4
    $region5: #{transformer_forward.30} parent=1 // pred_fallthru
      _
    // Predicated region
    $region6: #{transformer_forward.30} parent=1 // pred_check
      _
    $region7: #{transformer_forward.30} parent=1 // pred_check_branch
      %30 = sbr.rel (0) target = $region9
    $region8: #{transformer_forward.30} parent=1 // pred_region
      %s32 = ssub.s32 2048, 2048
      %33 = vsyncadd [#allocation6], %s32
      %s34 = sshll.u32 [#allocation5], 4
      %s35 = int_to_ptr.vmem [resolvable:$true] %s34
      %40 = dma.hbm_to_vmem [thread:$0]  %s1, 2048, %s35, [#allocation6], 128, 128, 8
    $region9: #{transformer_forward.30} parent=1 // pred_fallthru
      _
    // Predicated region
    $region10: #{transformer_forward.30} parent=1 // pred_check
      _
    $region11: #{transformer_forward.30} parent=1 // pred_check_branch
      %42 = sbr.rel (0) target = $region13
    $region12: #{transformer_forward.30} parent=1 // pred_region
      %s44 = ssub.s32 32, 32
      %45 = vsyncadd [#allocation6], %s44
      %s47 = sshll.u32 [#allocation7], 4
      %s48 = int_to_ptr.vmem [resolvable:$true] %s47
      %50 = dma.hbm_to_vmem [thread:$0]  %s2, 32, %s48, [#allocation6]
    $region13: #{transformer_forward.30} parent=1 // pred_fallthru
      _
    // Predicated region
    $region14: #{transformer_forward.30} parent=1 // pred_check
      _
    $region15: #{transformer_forward.30} parent=1 // pred_check_branch
      %52 = sbr.rel (0) target = $region17
    $region16: #{transformer_forward.30} parent=1 // pred_region
      %s54 = ssub.s32 2048, 2048
      %55 = vsyncadd [#allocation9], %s54
      %s56 = sshll.u32 [#allocation8], 4
      %s57 = int_to_ptr.vmem [resolvable:$true] %s56
      %62 = dma.hbm_to_vmem [thread:$0]  %s3, 2048, %s57, [#allocation9], 64, 64, 4
    $region17: #{transformer_forward.30} parent=1 // pred_fallthru
      _
    // Predicated region
    $region18: #{transformer_forward.30} parent=1 // pred_check
      _
    $region19: #{transformer_forward.30} parent=1 // pred_check_branch
      %64 = sbr.rel (0) target = $region21
    $region20: #{transformer_forward.30} parent=1 // pred_region
      %s66 = ssub.s32 16, 16
      %67 = vsyncadd [#allocation9], %s66
      %s69 = sshll.u32 [#allocation10], 4
      %s70 = int_to_ptr.vmem [resolvable:$true] %s69
      %72 = dma.hbm_to_vmem [thread:$0]  %s4, 16, %s70, [#allocation9]
    $region21: #{transformer_forward.30} parent=1 // pred_fallthru
      _
    // Predicated region
    $region22: #{transformer_forward.30} parent=1 // pred_check
      _
    $region23: #{transformer_forward.30} parent=1 // pred_check_branch
      %74 = sbr.rel (0) target = $region25
    $region24: #{transformer_forward.30} parent=1 // pred_region
      %s76 = ssub.s32 16, 16
      %77 = vsyncadd [#allocation12], %s76
      %s79 = sshll.u32 [#allocation11], 4
      %s80 = int_to_ptr.vmem [resolvable:$true] %s79
      %82 = dma.hbm_to_vmem [thread:$0]  %s5, 16, %s80, [#allocation12]
    $region25: #{transformer_forward.30} parent=1 // pred_fallthru
      _
    // Predicated region
    $region26: #{transformer_forward.30} parent=1 // pred_check
      _
    $region27: #{transformer_forward.30} parent=1 // pred_check_branch
      %84 = sbr.rel (0) target = $region29
    $region28: #{transformer_forward.30} parent=1 // pred_region
      %s86 = ssub.s32 16, 16
      %87 = vsyncadd [#allocation12], %s86
      %s89 = sshll.u32 [#allocation13], 4
      %s90 = int_to_ptr.vmem [resolvable:$true] %s89
      %92 = dma.hbm_to_vmem [thread:$0]  %s6, 16, %s90, [#allocation12]
    $region29: #{transformer_forward.30} parent=1 // pred_fallthru
      _
    // Predicated region
    $region30: #{transformer_forward.30} parent=1 // pred_check
      _
    $region31: #{transformer_forward.30} parent=1 // pred_check_branch
      %94 = sbr.rel (0) target = $region33
    $region32: #{transformer_forward.30} parent=1 // pred_region
      %95 = dma.done [#allocation3], 192
    $region33: #{transformer_forward.30} parent=1 // pred_fallthru
      _
    // Predicated region
    $region34: #{transformer_forward.30} parent=1 // pred_check
      _
    $region35: #{transformer_forward.30} parent=1 // pred_check_branch
      %97 = sbr.rel (0) target = $region37
    $region36: #{transformer_forward.30} parent=1 // pred_region
      %98 = dma.done [#allocation6], 2048
    $region37: #{transformer_forward.30} parent=1 // pred_fallthru
      _
    // Predicated region
    $region38: #{transformer_forward.30} parent=1 // pred_check
      _
    $region39: #{transformer_forward.30} parent=1 // pred_check_branch
      %100 = sbr.rel (0) target = $region41
    $region40: #{transformer_forward.30} parent=1 // pred_region
      %101 = dma.done [#allocation6], 32
    $region41: #{transformer_forward.30} parent=1 // pred_fallthru
      _
    // Predicated region
    $region42: #{transformer_forward.30} parent=1 // pred_check
      _
    $region43: #{transformer_forward.30} parent=1 // pred_check_branch
      %103 = sbr.rel (0) target = $region45
    $region44: #{transformer_forward.30} parent=1 // pred_region
      %104 = dma.done [#allocation9], 2048
    $region45: #{transformer_forward.30} parent=1 // pred_fallthru
      _
    // Predicated region
    $region46: #{transformer_forward.30} parent=1 // pred_check
      _
    $region47: #{transformer_forward.30} parent=1 // pred_check_branch
      %106 = sbr.rel (0) target = $region49
    $region48: #{transformer_forward.30} parent=1 // pred_region
      %107 = dma.done [#allocation9], 16
    $region49: #{transformer_forward.30} parent=1 // pred_fallthru
      _
    // Predicated region
    $region50: #{transformer_forward.30} parent=1 // pred_check
      _
    $region51: #{transformer_forward.30} parent=1 // pred_check_branch
      %109 = sbr.rel (0) target = $region53
    $region52: #{transformer_forward.30} parent=1 // pred_region
      %110 = dma.done [#allocation12], 16
    $region53: #{transformer_forward.30} parent=1 // pred_fallthru
      _
    // Predicated region
    $region54: #{transformer_forward.30} parent=1 // pred_check
      _
    $region55: #{transformer_forward.30} parent=1 // pred_check_branch
      %112 = sbr.rel (0) target = $region57
    $region56: #{transformer_forward.30} parent=1 // pred_region
      %113 = dma.done [#allocation12], 16
    $region57: #{transformer_forward.30} parent=1 // pred_fallthru
      _
    %v115 = vld [vmem:[#allocation2] sm:$0xf]
    %v116 = vld [vmem:[#allocation2 + $0x4] sm:$0xf]
    %v117 = vld [vmem:[#allocation2 + $0x8] sm:$0xf]
    %v118 = vld [vmem:[#allocation5] sm:$0xff]
    %v119 = vld [vmem:[#allocation5 + $0x8] sm:$0xff]
    %v120 = vld [vmem:[#allocation5 + $0x10] sm:$0xff]
    %v121 = vld [vmem:[#allocation5 + $0x18] sm:$0xff]
    %v122 = vld [vmem:[#allocation5 + $0x20] sm:$0xff]
    %v123 = vld [vmem:[#allocation5 + $0x28] sm:$0xff]
    %v124 = vld [vmem:[#allocation5 + $0x30] sm:$0xff]
    %v125 = vld [vmem:[#allocation5 + $0x38] sm:$0xff]
    %v126 = vld [vmem:[#allocation5 + $0x40] sm:$0xff]
    %v127 = vld [vmem:[#allocation5 + $0x48] sm:$0xff]
    %v128 = vld [vmem:[#allocation5 + $0x50] sm:$0xff]
    %v129 = vld [vmem:[#allocation5 + $0x58] sm:$0xff]
    %v130 = vld [vmem:[#allocation5 + $0x60] sm:$0xff]
    %v131 = vld [vmem:[#allocation5 + $0x68] sm:$0xff]
    %v132 = vld [vmem:[#allocation5 + $0x70] sm:$0xff]
    %v133 = vld [vmem:[#allocation5 + $0x78] sm:$0xff]
    %v134 = vld [vmem:[#allocation7] sm:$0x3]
    %v136 = vlaneseq
    %v137 = vshrl.u32 %v136, 7
    %v138 = vsub.s32 0, %v137
    %v139 = vrot.slane %v134, %v138
    %v140 = vlaneseq
    %v141 = vshrl.u32 %v140, 7
    %v142 = vsub.s32 1, %v141
    %v143 = vrot.slane %v134, %v142
    %v149 = vunpack.c.l.b16 %v115
    %v150 = vunpack.c.l.b16 %v116
    %v151 = vunpack.c.l.b16 %v117
    %v152 = vpack.c.b16 %v150, %v149
    %v153 = vpack.c.b16 %v151, %v151
    %v172 = vunpack.c.l.b16 %v118
    %v173 = vunpack.c.h.b16 %v118
    %v174 = vunpack.c.l.b16 %v119
    %v175 = vunpack.c.h.b16 %v119
    %v176 = vunpack.c.l.b16 %v120
    %v177 = vunpack.c.h.b16 %v120
    %v178 = vunpack.c.l.b16 %v121
    %v179 = vunpack.c.h.b16 %v121
    %v180 = vunpack.c.l.b16 %v122
    %v181 = vunpack.c.h.b16 %v122
    %v182 = vunpack.c.l.b16 %v123
    %v183 = vunpack.c.h.b16 %v123
    %v184 = vunpack.c.l.b16 %v124
    %v185 = vunpack.c.h.b16 %v124
    %v186 = vunpack.c.l.b16 %v125
    %v187 = vunpack.c.h.b16 %v125
    %v188 = vunpack.c.l.b16 %v126
    %v189 = vunpack.c.h.b16 %v126
    %v190 = vunpack.c.l.b16 %v127
    %v191 = vunpack.c.h.b16 %v127
    %v192 = vunpack.c.l.b16 %v128
    %v193 = vunpack.c.h.b16 %v128
    %v194 = vunpack.c.l.b16 %v129
    %v195 = vunpack.c.h.b16 %v129
    %v196 = vunpack.c.l.b16 %v130
    %v197 = vunpack.c.h.b16 %v130
    %v198 = vunpack.c.l.b16 %v131
    %v199 = vunpack.c.h.b16 %v131
    %v200 = vunpack.c.l.b16 %v132
    %v201 = vunpack.c.h.b16 %v132
    %v202 = vunpack.c.l.b16 %v133
    %v203 = vunpack.c.h.b16 %v133
    %v204 = vpack.c.b16 %v174, %v172
    %v205 = vpack.c.b16 %v175, %v173
    %v206 = vpack.c.b16 %v178, %v176
    %v207 = vpack.c.b16 %v179, %v177
    %v208 = vpack.c.b16 %v182, %v180
    %v209 = vpack.c.b16 %v183, %v181
    %v210 = vpack.c.b16 %v186, %v184
    %v211 = vpack.c.b16 %v187, %v185
    %v212 = vpack.c.b16 %v190, %v188
    %v213 = vpack.c.b16 %v191, %v189
    %v214 = vpack.c.b16 %v194, %v192
    %v215 = vpack.c.b16 %v195, %v193
    %v216 = vpack.c.b16 %v198, %v196
    %v217 = vpack.c.b16 %v199, %v197
    %v218 = vpack.c.b16 %v202, %v200
    %v219 = vpack.c.b16 %v203, %v201
    %236 = vmatprep.subr.bf16.mxu0 %v205
    %237 = vmatpush1.bf16.msra.mxu0 %v204
    %238 = vmatprep.subr.bf16.mxu0 %v207
    %239 = vmatpush1.bf16.msra.mxu0 %v206
    %240 = vmatprep.subr.bf16.mxu0 %v209
    %241 = vmatpush1.bf16.msra.mxu0 %v208
    %242 = vmatprep.subr.bf16.mxu0 %v211
    %243 = vmatpush1.bf16.msra.mxu0 %v210
    %244 = vmatprep.subr.bf16.mxu0 %v213
    %245 = vmatpush1.bf16.msra.mxu0 %v212
    %246 = vmatprep.subr.bf16.mxu0 %v215
    %247 = vmatpush1.bf16.msra.mxu0 %v214
    %248 = vmatprep.subr.bf16.mxu0 %v217
    %249 = vmatpush1.bf16.msra.mxu0 %v216
    %250 = vmatprep.subr.bf16.mxu0 %v219
    %251 = vmatpush1.bf16.msra.mxu0 %v218
    %252 = vmatprep.subr.bf16.mxu0 0
    %253 = vmatpush1.bf16.msra.mxu0 0
    %254 = vmatprep.subr.bf16.mxu0 0
    %255 = vmatpush1.bf16.msra.mxu0 0
    %256 = vmatprep.subr.bf16.mxu0 0
    %257 = vmatpush1.bf16.msra.mxu0 0
    %258 = vmatprep.subr.bf16.mxu0 0
    %259 = vmatpush1.bf16.msra.mxu0 0
    %260 = vmatprep.subr.bf16.mxu0 0
    %261 = vmatpush1.bf16.msra.mxu0 0
    %262 = vmatprep.subr.bf16.mxu0 0
    %263 = vmatpush1.bf16.msra.mxu0 0
    %264 = vmatprep.subr.bf16.mxu0 0
    %265 = vmatpush1.bf16.msra.mxu0 0
    %266 = vmatprep.subr.bf16.mxu0 0
    %267 = vmatpush1.bf16.msra.mxu0 0
    %268 = vmatprep.mubr.bf16.mxu0 0
    %269 = vmatmul.mubr.bf16.gmra.mrb[0].mxu0 %v152
    %v270 = vpop.f32.mrb[0].mxu0
    %v271 = vadd.f32 %v139, %v270
    %v272 = vpop.f32.mrb[0].mxu0
    %v273 = vadd.f32 %v143, %v272
    %v274 = vpop.f32.mrb[0].mxu0
    %v275 = vadd.f32 %v139, %v274
    %v276 = vpop.f32.mrb[0].mxu0
    %v277 = vadd.f32 %v143, %v276
    %278 = vmatprep.mubr.bf16.mxu0 0
    %279 = vmatmul.mubr.bf16.gmra.mrb[0].mxu0 %v153
    %v280 = vpop.f32.mrb[0].mxu0
    %v281 = vadd.f32 %v139, %v280
    %v282 = vpop.f32.mrb[0].mxu0
    %v283 = vadd.f32 %v143, %v282
    %v284 = vpop.f32.mrb[0].mxu0
    %v285 = vpop.f32.mrb[0].mxu0
    %286 = vdwg.mxu0
    %v287 = vmax.f32 %v271, 0.0
    %v288 = vmax.f32 %v273, 0.0
    %v289 = vmax.f32 %v275, 0.0
    %v290 = vmax.f32 %v277, 0.0
    %v291 = vmax.f32 %v281, 0.0
    %v292 = vmax.f32 %v283, 0.0
    %v293 = vpack.c.bf16 %v289, %v287
    %v294 = vpack.c.bf16 %v290, %v288
    %v295 = vpack.c.bf16 %v291, %v291
    %v296 = vpack.c.bf16 %v292, %v292
    %v297 = vld [vmem:[#allocation8] sm:$0xf]
    %v298 = vld [vmem:[#allocation8 + $0x4] sm:$0xf]
    %v299 = vld [vmem:[#allocation8 + $0x8] sm:$0xf]
    %v300 = vld [vmem:[#allocation8 + $0xc] sm:$0xf]
    %v301 = vld [vmem:[#allocation8 + $0x10] sm:$0xf]
    %v302 = vld [vmem:[#allocation8 + $0x14] sm:$0xf]
    %v303 = vld [vmem:[#allocation8 + $0x18] sm:$0xf]
    %v304 = vld [vmem:[#allocation8 + $0x1c] sm:$0xf]
    %v305 = vld [vmem:[#allocation8 + $0x20] sm:$0xf]
    %v306 = vld [vmem:[#allocation8 + $0x24] sm:$0xf]
    %v307 = vld [vmem:[#allocation8 + $0x28] sm:$0xf]
    %v308 = vld [vmem:[#allocation8 + $0x2c] sm:$0xf]
    %v309 = vld [vmem:[#allocation8 + $0x30] sm:$0xf]
    %v310 = vld [vmem:[#allocation8 + $0x34] sm:$0xf]
    %v311 = vld [vmem:[#allocation8 + $0x38] sm:$0xf]
    %v312 = vld [vmem:[#allocation8 + $0x3c] sm:$0xf]
    %v313 = vld [vmem:[#allocation8 + $0x40] sm:$0xf]
    %v314 = vld [vmem:[#allocation8 + $0x44] sm:$0xf]
    %v315 = vld [vmem:[#allocation8 + $0x48] sm:$0xf]
    %v316 = vld [vmem:[#allocation8 + $0x4c] sm:$0xf]
    %v317 = vld [vmem:[#allocation8 + $0x50] sm:$0xf]
    %v318 = vld [vmem:[#allocation8 + $0x54] sm:$0xf]
    %v319 = vld [vmem:[#allocation8 + $0x58] sm:$0xf]
    %v320 = vld [vmem:[#allocation8 + $0x5c] sm:$0xf]
    %v321 = vld [vmem:[#allocation8 + $0x60] sm:$0xf]
    %v322 = vld [vmem:[#allocation8 + $0x64] sm:$0xf]
    %v323 = vld [vmem:[#allocation8 + $0x68] sm:$0xf]
    %v324 = vld [vmem:[#allocation8 + $0x6c] sm:$0xf]
    %v325 = vld [vmem:[#allocation8 + $0x70] sm:$0xf]
    %v326 = vld [vmem:[#allocation8 + $0x74] sm:$0xf]
    %v327 = vld [vmem:[#allocation8 + $0x78] sm:$0xf]
    %v328 = vld [vmem:[#allocation8 + $0x7c] sm:$0xf]
    %v329 = vld [vmem:[#allocation10] sm:$0x1]
    %v331 = vlaneseq
    %v332 = vshrl.u32 %v331, 7
    %v333 = vsub.s32 0, %v332
    %v334 = vrot.slane %v329, %v333
    %v368 = vunpack.c.l.b16 %v297
    %v369 = vunpack.c.l.b16 %v298
    %v370 = vunpack.c.l.b16 %v299
    %v371 = vunpack.c.l.b16 %v300
    %v372 = vunpack.c.l.b16 %v301
    %v373 = vunpack.c.l.b16 %v302
    %v374 = vunpack.c.l.b16 %v303
    %v375 = vunpack.c.l.b16 %v304
    %v376 = vunpack.c.l.b16 %v305
    %v377 = vunpack.c.l.b16 %v306
    %v378 = vunpack.c.l.b16 %v307
    %v379 = vunpack.c.l.b16 %v308
    %v380 = vunpack.c.l.b16 %v309
    %v381 = vunpack.c.l.b16 %v310
    %v382 = vunpack.c.l.b16 %v311
    %v383 = vunpack.c.l.b16 %v312
    %v384 = vunpack.c.l.b16 %v313
    %v385 = vunpack.c.l.b16 %v314
    %v386 = vunpack.c.l.b16 %v315
    %v387 = vunpack.c.l.b16 %v316
    %v388 = vunpack.c.l.b16 %v317
    %v389 = vunpack.c.l.b16 %v318
    %v390 = vunpack.c.l.b16 %v319
    %v391 = vunpack.c.l.b16 %v320
    %v392 = vunpack.c.l.b16 %v321
    %v393 = vunpack.c.l.b16 %v322
    %v394 = vunpack.c.l.b16 %v323
    %v395 = vunpack.c.l.b16 %v324
    %v396 = vunpack.c.l.b16 %v325
    %v397 = vunpack.c.l.b16 %v326
    %v398 = vunpack.c.l.b16 %v327
    %v399 = vunpack.c.l.b16 %v328
    %v400 = vpack.c.b16 %v369, %v368
    %v401 = vpack.c.b16 %v371, %v370
    %v402 = vpack.c.b16 %v373, %v372
    %v403 = vpack.c.b16 %v375, %v374
    %v404 = vpack.c.b16 %v377, %v376
    %v405 = vpack.c.b16 %v379, %v378
    %v406 = vpack.c.b16 %v381, %v380
    %v407 = vpack.c.b16 %v383, %v382
    %v408 = vpack.c.b16 %v385, %v384
    %v409 = vpack.c.b16 %v387, %v386
    %v410 = vpack.c.b16 %v389, %v388
    %v411 = vpack.c.b16 %v391, %v390
    %v412 = vpack.c.b16 %v393, %v392
    %v413 = vpack.c.b16 %v395, %v394
    %v414 = vpack.c.b16 %v397, %v396
    %v415 = vpack.c.b16 %v399, %v398
    %432 = vmatprep.subr.bf16.mxu0 0
    %433 = vmatpush1.bf16.msra.mxu0 %v400
    %434 = vmatprep.subr.bf16.mxu0 0
    %435 = vmatpush1.bf16.msra.mxu0 %v401
    %436 = vmatprep.subr.bf16.mxu0 0
    %437 = vmatpush1.bf16.msra.mxu0 %v402
    %438 = vmatprep.subr.bf16.mxu0 0
    %439 = vmatpush1.bf16.msra.mxu0 %v403
    %440 = vmatprep.subr.bf16.mxu0 0
    %441 = vmatpush1.bf16.msra.mxu0 %v404
    %442 = vmatprep.subr.bf16.mxu0 0
    %443 = vmatpush1.bf16.msra.mxu0 %v405
    %444 = vmatprep.subr.bf16.mxu0 0
    %445 = vmatpush1.bf16.msra.mxu0 %v406
    %446 = vmatprep.subr.bf16.mxu0 0
    %447 = vmatpush1.bf16.msra.mxu0 %v407
    %448 = vmatprep.subr.bf16.mxu0 0
    %449 = vmatpush1.bf16.msra.mxu0 %v408
    %450 = vmatprep.subr.bf16.mxu0 0
    %451 = vmatpush1.bf16.msra.mxu0 %v409
    %452 = vmatprep.subr.bf16.mxu0 0
    %453 = vmatpush1.bf16.msra.mxu0 %v410
    %454 = vmatprep.subr.bf16.mxu0 0
    %455 = vmatpush1.bf16.msra.mxu0 %v411
    %456 = vmatprep.subr.bf16.mxu0 0
    %457 = vmatpush1.bf16.msra.mxu0 %v412
    %458 = vmatprep.subr.bf16.mxu0 0
    %459 = vmatpush1.bf16.msra.mxu0 %v413
    %460 = vmatprep.subr.bf16.mxu0 0
    %461 = vmatpush1.bf16.msra.mxu0 %v414
    %462 = vmatprep.subr.bf16.mxu0 0
    %463 = vmatpush1.bf16.msra.mxu0 %v415
    %464 = vmatprep.mubr.bf16.mxu0 %v294
    %465 = vmatmul.mubr.bf16.gmra.mrb[0].mxu0 %v293
    %v466 = vpop.f32.mrb[0].mxu0
    %v467 = vadd.f32 %v334, %v466
    %v468 = vpop.f32.mrb[0].mxu0
    %v469 = vpop.f32.mrb[0].mxu0
    %v470 = vadd.f32 %v334, %v469
    %v471 = vpop.f32.mrb[0].mxu0
    %472 = vmatprep.mubr.bf16.mxu0 %v296
    %473 = vmatmul.mubr.bf16.gmra.mrb[0].mxu0 %v295
    %v474 = vpop.f32.mrb[0].mxu0
    %v475 = vadd.f32 %v334, %v474
    %v476 = vpop.f32.mrb[0].mxu0
    %v477 = vpop.f32.mrb[0].mxu0
    %v478 = vpop.f32.mrb[0].mxu0
    %479 = vdwg.mxu0
    %v480 = vunpack.c.l.bf16 %v115
    %v481 = vunpack.c.l.bf16 %v116
    %v482 = vunpack.c.l.bf16 %v117
    %v483 = vadd.f32 %v480, %v467
    %v484 = vadd.f32 %v481, %v470
    %v485 = vadd.f32 %v482, %v475
    %486 = vadd.xlane.f32.xlu0 %v483
    %v487 = vpop.xlane.xlu0 %486
    %488 = vadd.xlane.f32.xlu0 %v484
    %v489 = vpop.xlane.xlu0 %488
    %490 = vadd.xlane.f32.xlu0 %v485
    %v491 = vpop.xlane.xlu0 %490
    %v492 = vrcp.pop 128.0
    %v493 = vmul.f32 %v487, %v492
    %v494 = vmul.f32 %v489, %v492
    %v495 = vmul.f32 %v491, %v492
    %v496 = vsub.f32 %v483, %v493
    %v497 = vsub.f32 %v484, %v494
    %v498 = vsub.f32 %v485, %v495
    %v499 = vmul.f32 %v496, %v496
    %v500 = vmul.f32 %v497, %v497
    %v501 = vmul.f32 %v498, %v498
    %502 = vadd.xlane.f32.xlu0 %v499
    %v503 = vpop.xlane.xlu0 %502
    %504 = vadd.xlane.f32.xlu0 %v500
    %v505 = vpop.xlane.xlu0 %504
    %506 = vadd.xlane.f32.xlu0 %v501
    %v507 = vpop.xlane.xlu0 %506
    %v508 = vmul.f32 %v503, %v492
    %v509 = vmul.f32 %v505, %v492
    %v510 = vmul.f32 %v507, %v492
    %v511 = vadd.f32 %v508, 1e-05
    %v512 = vadd.f32 %v509, 1e-05
    %v513 = vadd.f32 %v510, 1e-05
    %v514 = vrsqrt.pop %v511
    %v515 = vrsqrt.pop %v512
    %v516 = vrsqrt.pop %v513
    %v517 = vmul.f32 %v496, %v514
    %v518 = vmul.f32 %v497, %v515
    %v519 = vmul.f32 %v498, %v516
    %v520 = vld [vmem:[#allocation11] sm:$0x1]
    %v522 = vlaneseq
    %v523 = vshrl.u32 %v522, 7
    %v524 = vsub.s32 0, %v523
    %v525 = vrot.slane %v520, %v524
    %v527 = vmul.f32 %v517, %v525
    %v528 = vmul.f32 %v518, %v525
    %v529 = vmul.f32 %v519, %v525
    %v530 = vld [vmem:[#allocation13] sm:$0x1]
    %v532 = vlaneseq
    %v533 = vshrl.u32 %v532, 7
    %v534 = vsub.s32 0, %v533
    %v535 = vrot.slane %v530, %v534
    %v537 = vadd.f32 %v527, %v535
    %v538 = vadd.f32 %v528, %v535
    %v539 = vadd.f32 %v529, %v535
    %v540 = vpack.c.bf16 %v538, %v537
    %v541 = vpack.c.bf16 %v539, %v539
    %v544 = vunpack.c.l.b16 %v540
    %v545 = vunpack.c.h.b16 %v540
    %v546 = vunpack.c.l.b16 %v541
    %v547 = vpack.c.b16 %v544, %v544
    %v548 = vpack.c.b16 %v545, %v545
    %v549 = vpack.c.b16 %v546, %v546
    %553 = vst [vmem:[#allocation14] sm:$0xf] %v547
    %554 = vst [vmem:[#allocation14 + $0x4] sm:$0xf] %v548
    %555 = vst [vmem:[#allocation14 + $0x8] sm:$0xf] %v549
    // Predicated region
    $region58: #{transformer_forward.30} parent=1 // pred_check
      _
    $region59: #{transformer_forward.30} parent=1 // pred_check_branch
      %557 = sbr.rel (0) target = $region61
    $region60: #{transformer_forward.30} parent=1 // pred_region
      %s559 = ssub.s32 192, 192
      %560 = vsyncadd [#allocation4], %s559
      %s561 = sshll.u32 [#allocation14], 4
      %s562 = int_to_ptr.vmem [resolvable:$true] %s561
      %567 = dma.vmem_to_hbm [thread:$0]  %s562, 192, %s7, [#allocation4], 64, 64, 4
    $region61: #{transformer_forward.30} parent=1 // pred_fallthru
      _
    // Predicated region
    $region62: #{transformer_forward.30} parent=1 // pred_check
      _
    $region63: #{transformer_forward.30} parent=1 // pred_check_branch
      %569 = sbr.rel (0) target = $region65
    $region64: #{transformer_forward.30} parent=1 // pred_region
      %570 = dma.done [#allocation4], 192
    $region65: #{transformer_forward.30} parent=1 // pred_fallthru
      _
    %571 = vsyncpa [#allocation3], 1
    %572 = vsyncpa [#allocation6], 1
    %573 = vsyncpa [#allocation9], 1
    %574 = vsyncpa [#allocation12], 1
    %575 = vsyncpa [#allocation4], 1

// kernel: transformer_forward.35
$region0: #{transformer_forward.35}
  #allocation0 [shape = 'u32[]', space=smem, size = 0x4, offset = 0x4, fixed_abs, tag = 'smem constant byte address 0x4 - core index']
  #allocation1 [shape = 'u32[144,128]{1,0:T(1,128)}', space=vmem, size = 0x12000, scoped, tag = 'internal scratch']
  %s0 = inlined_call_operand.hbm [shape: bf16[24,128], index: 0, kind: input, shape index: {}]
  %s1 = inlined_call_operand.hbm [shape: f32[1,128], index: 1, kind: input, shape index: {}]
  %s2 = inlined_call_operand.hbm [shape: f32[1,128], index: 2, kind: input, shape index: {}]
  %s3 = inlined_call_operand.hbm [shape: bf16[24,128], index: 3, kind: output, shape index: {}]
  %s4 = sld [smem:[#allocation0]]
  $region34: #{transformer_forward.35} parent=0
    _
  %s6 = ssub.s32 1, %s4
  %s7 = scalar_select 0, %s6, %s4
  $region1: #{transformer_forward.35} parent=0
    #allocation2 [shape = 'u8[6144]{0}', space=vmem, size = 0x1800, scoped, tag = 'input window, operand 0, single buffered']
    #allocation3 [shape = 's32[1]{0}', space=sflag, size = 0x4, scoped, tag = 'scoped memory for transformer_forward.35']
    #allocation4 [shape = 's32[1]{0}', space=sflag, size = 0x4, scoped, tag = 'scoped memory for transformer_forward.35']
    #allocation5 [shape = 'u8[512]{0}', space=vmem, size = 0x400, scoped, tag = 'input window, operand 1, single buffered']
    #allocation6 [shape = 's32[1]{0}', space=sflag, size = 0x4, scoped, tag = 'scoped memory for transformer_forward.35']
    #allocation7 [shape = 'u8[512]{0}', space=vmem, size = 0x400, scoped, tag = 'input window, operand 2, single buffered']
    #allocation8 [shape = 'u8[6144]{0}', space=vmem, size = 0x1800, scoped, tag = 'output window, operand 0, single buffered']
    %8 = vsyncpa [#allocation3], 0
    %9 = vsyncpa [#allocation6], 0
    %10 = vsyncpa [#allocation4], 0
    // Predicated region
    $region2: #{transformer_forward.35} parent=1 // pred_check
      _
    $region3: #{transformer_forward.35} parent=1 // pred_check_branch
      %12 = sbr.rel (0) target = $region5
    $region4: #{transformer_forward.35} parent=1 // pred_region
      %s14 = ssub.s32 192, 192
      %15 = vsyncadd [#allocation3], %s14
      %s16 = sshll.u32 [#allocation2], 4
      %s17 = int_to_ptr.vmem [resolvable:$true] %s16
      %22 = dma.hbm_to_vmem [thread:$0]  %s0, 192, %s17, [#allocation3], 64, 64, 4
    $region5: #{transformer_forward.35} parent=1 // pred_fallthru
      _
    // Predicated region
    $region6: #{transformer_forward.35} parent=1 // pred_check
      _
    $region7: #{transformer_forward.35} parent=1 // pred_check_branch
      %24 = sbr.rel (0) target = $region9
    $region8: #{transformer_forward.35} parent=1 // pred_region
      %s26 = ssub.s32 16, 16
      %27 = vsyncadd [#allocation6], %s26
      %s29 = sshll.u32 [#allocation5], 4
      %s30 = int_to_ptr.vmem [resolvable:$true] %s29
      %32 = dma.hbm_to_vmem [thread:$0]  %s1, 16, %s30, [#allocation6]
    $region9: #{transformer_forward.35} parent=1 // pred_fallthru
      _
    // Predicated region
    $region10: #{transformer_forward.35} parent=1 // pred_check
      _
    $region11: #{transformer_forward.35} parent=1 // pred_check_branch
      %34 = sbr.rel (0) target = $region13
    $region12: #{transformer_forward.35} parent=1 // pred_region
      %s36 = ssub.s32 16, 16
      %37 = vsyncadd [#allocation6], %s36
      %s39 = sshll.u32 [#allocation7], 4
      %s40 = int_to_ptr.vmem [resolvable:$true] %s39
      %42 = dma.hbm_to_vmem [thread:$0]  %s2, 16, %s40, [#allocation6]
    $region13: #{transformer_forward.35} parent=1 // pred_fallthru
      _
    // Predicated region
    $region14: #{transformer_forward.35} parent=1 // pred_check
      _
    $region15: #{transformer_forward.35} parent=1 // pred_check_branch
      %44 = sbr.rel (0) target = $region17
    $region16: #{transformer_forward.35} parent=1 // pred_region
      %45 = dma.done [#allocation3], 192
    $region17: #{transformer_forward.35} parent=1 // pred_fallthru
      _
    // Predicated region
    $region18: #{transformer_forward.35} parent=1 // pred_check
      _
    $region19: #{transformer_forward.35} parent=1 // pred_check_branch
      %47 = sbr.rel (0) target = $region21
    $region20: #{transformer_forward.35} parent=1 // pred_region
      %48 = dma.done [#allocation6], 16
    $region21: #{transformer_forward.35} parent=1 // pred_fallthru
      _
    // Predicated region
    $region22: #{transformer_forward.35} parent=1 // pred_check
      _
    $region23: #{transformer_forward.35} parent=1 // pred_check_branch
      %50 = sbr.rel (0) target = $region25
    $region24: #{transformer_forward.35} parent=1 // pred_region
      %51 = dma.done [#allocation6], 16
    $region25: #{transformer_forward.35} parent=1 // pred_fallthru
      _
    %v52 = vld [vmem:[#allocation2] sm:$0xf]
    %v53 = vld [vmem:[#allocation2 + $0x4] sm:$0xf]
    %v54 = vld [vmem:[#allocation2 + $0x8] sm:$0xf]
    %v55 = vunpack.c.l.bf16 %v52
    %v56 = vunpack.c.l.bf16 %v53
    %v57 = vunpack.c.l.bf16 %v54
    %58 = vadd.xlane.f32.xlu0 %v55
    %v59 = vpop.xlane.xlu0 %58
    %60 = vadd.xlane.f32.xlu0 %v56
    %v61 = vpop.xlane.xlu0 %60
    %62 = vadd.xlane.f32.xlu0 %v57
    %v63 = vpop.xlane.xlu0 %62
    %v64 = vrcp.pop 128.0
    %v65 = vmul.f32 %v59, %v64
    %v66 = vmul.f32 %v61, %v64
    %v67 = vmul.f32 %v63, %v64
    %v68 = vsub.f32 %v55, %v65
    %v69 = vsub.f32 %v56, %v66
    %v70 = vsub.f32 %v57, %v67
    %v71 = vmul.f32 %v68, %v68
    %v72 = vmul.f32 %v69, %v69
    %v73 = vmul.f32 %v70, %v70
    %74 = vadd.xlane.f32.xlu0 %v71
    %v75 = vpop.xlane.xlu0 %74
    %76 = vadd.xlane.f32.xlu0 %v72
    %v77 = vpop.xlane.xlu0 %76
    %78 = vadd.xlane.f32.xlu0 %v73
    %v79 = vpop.xlane.xlu0 %78
    %v80 = vmul.f32 %v75, %v64
    %v81 = vmul.f32 %v77, %v64
    %v82 = vmul.f32 %v79, %v64
    %v83 = vadd.f32 %v80, 1e-05
    %v84 = vadd.f32 %v81, 1e-05
    %v85 = vadd.f32 %v82, 1e-05
    %v86 = vrsqrt.pop %v83
    %v87 = vrsqrt.pop %v84
    %v88 = vrsqrt.pop %v85
    %v89 = vmul.f32 %v68, %v86
    %v90 = vmul.f32 %v69, %v87
    %v91 = vmul.f32 %v70, %v88
    %v92 = vld [vmem:[#allocation5] sm:$0x1]
    %v94 = vlaneseq
    %v95 = vshrl.u32 %v94, 7
    %v96 = vsub.s32 0, %v95
    %v97 = vrot.slane %v92, %v96
    %v99 = vmul.f32 %v89, %v97
    %v100 = vmul.f32 %v90, %v97
    %v101 = vmul.f32 %v91, %v97
    %v102 = vld [vmem:[#allocation7] sm:$0x1]
    %v104 = vlaneseq
    %v105 = vshrl.u32 %v104, 7
    %v106 = vsub.s32 0, %v105
    %v107 = vrot.slane %v102, %v106
    %v109 = vadd.f32 %v99, %v107
    %v110 = vadd.f32 %v100, %v107
    %v111 = vadd.f32 %v101, %v107
    %v112 = vpack.c.bf16 %v110, %v109
    %v113 = vpack.c.bf16 %v111, %v111
    %v116 = vunpack.c.l.b16 %v112
    %v117 = vunpack.c.h.b16 %v112
    %v118 = vunpack.c.l.b16 %v113
    %v119 = vpack.c.b16 %v116, %v116
    %v120 = vpack.c.b16 %v117, %v117
    %v121 = vpack.c.b16 %v118, %v118
    %125 = vst [vmem:[#allocation8] sm:$0xf] %v119
    %126 = vst [vmem:[#allocation8 + $0x4] sm:$0xf] %v120
    %127 = vst [vmem:[#allocation8 + $0x8] sm:$0xf] %v121
    // Predicated region
    $region26: #{transformer_forward.35} parent=1 // pred_check
      _
    $region27: #{transformer_forward.35} parent=1 // pred_check_branch
      %129 = sbr.rel (0) target = $region29
    $region28: #{transformer_forward.35} parent=1 // pred_region
      %s131 = ssub.s32 192, 192
      %132 = vsyncadd [#allocation4], %s131
      %s133 = sshll.u32 [#allocation8], 4
      %s134 = int_to_ptr.vmem [resolvable:$true] %s133
      %139 = dma.vmem_to_hbm [thread:$0]  %s134, 192, %s3, [#allocation4], 64, 64, 4
    $region29: #{transformer_forward.35} parent=1 // pred_fallthru
      _
    // Predicated region
    $region30: #{transformer_forward.35} parent=1 // pred_check
      _
    $region31: #{transformer_forward.35} parent=1 // pred_check_branch
      %141 = sbr.rel (0) target = $region33
    $region32: #{transformer_forward.35} parent=1 // pred_region
      %142 = dma.done [#allocation4], 192
    $region33: #{transformer_forward.35} parent=1 // pred_fallthru
      _
    %143 = vsyncpa [#allocation3], 1
    %144 = vsyncpa [#allocation6], 1
    %145 = vsyncpa [#allocation4], 1

// kernel: transformer_forward.40
$region0: #{transformer_forward.40}
  #allocation0 [shape = 'u32[]', space=smem, size = 0x4, offset = 0x4, fixed_abs, tag = 'smem constant byte address 0x4 - core index']
  #allocation1 [shape = 'u32[144,128]{1,0:T(1,128)}', space=vmem, size = 0x12000, scoped, tag = 'internal scratch']
  %s0 = inlined_call_operand.hbm [shape: bf16[24,128], index: 0, kind: input, shape index: {}]
  %s1 = inlined_call_operand.hbm [shape: bf16[128,256], index: 1, kind: input, shape index: {}]
  %s2 = inlined_call_operand.hbm [shape: f32[1,256], index: 2, kind: input, shape index: {}]
  %s3 = inlined_call_operand.hbm [shape: bf16[24,256], index: 3, kind: output, shape index: {}]
  %s4 = sld [smem:[#allocation0]]
  $region34: #{transformer_forward.40} parent=0
    _
  %s6 = ssub.s32 1, %s4
  %s7 = scalar_select 0, %s6, %s4
  $region1: #{transformer_forward.40} parent=0
    #allocation2 [shape = 'u8[6144]{0}', space=vmem, size = 0x1800, scoped, tag = 'input window, operand 0, single buffered']
    #allocation3 [shape = 's32[1]{0}', space=sflag, size = 0x4, scoped, tag = 'scoped memory for transformer_forward.40']
    #allocation4 [shape = 's32[1]{0}', space=sflag, size = 0x4, scoped, tag = 'scoped memory for transformer_forward.40']
    #allocation5 [shape = 'u8[65536]{0}', space=vmem, size = 0x10000, scoped, tag = 'input window, operand 1, single buffered']
    #allocation6 [shape = 's32[1]{0}', space=sflag, size = 0x4, scoped, tag = 'scoped memory for transformer_forward.40']
    #allocation7 [shape = 'u8[1024]{0}', space=vmem, size = 0x400, scoped, tag = 'input window, operand 2, single buffered']
    #allocation8 [shape = 'u8[12288]{0}', space=vmem, size = 0x3000, scoped, tag = 'output window, operand 0, single buffered']
    %8 = vsyncpa [#allocation3], 0
    %9 = vsyncpa [#allocation6], 0
    %10 = vsyncpa [#allocation4], 0
    // Predicated region
    $region2: #{transformer_forward.40} parent=1 // pred_check
      _
    $region3: #{transformer_forward.40} parent=1 // pred_check_branch
      %12 = sbr.rel (0) target = $region5
    $region4: #{transformer_forward.40} parent=1 // pred_region
      %s14 = ssub.s32 192, 192
      %15 = vsyncadd [#allocation3], %s14
      %s16 = sshll.u32 [#allocation2], 4
      %s17 = int_to_ptr.vmem [resolvable:$true] %s16
      %22 = dma.hbm_to_vmem [thread:$0]  %s0, 192, %s17, [#allocation3], 64, 64, 4
    $region5: #{transformer_forward.40} parent=1 // pred_fallthru
      _
    // Predicated region
    $region6: #{transformer_forward.40} parent=1 // pred_check
      _
    $region7: #{transformer_forward.40} parent=1 // pred_check_branch
      %24 = sbr.rel (0) target = $region9
    $region8: #{transformer_forward.40} parent=1 // pred_region
      %s26 = ssub.s32 2048, 2048
      %27 = vsyncadd [#allocation6], %s26
      %s28 = sshll.u32 [#allocation5], 4
      %s29 = int_to_ptr.vmem [resolvable:$true] %s28
      %34 = dma.hbm_to_vmem [thread:$0]  %s1, 2048, %s29, [#allocation6], 128, 128, 8
    $region9: #{transformer_forward.40} parent=1 // pred_fallthru
      _
    // Predicated region
    $region10: #{transformer_forward.40} parent=1 // pred_check
      _
    $region11: #{transformer_forward.40} parent=1 // pred_check_branch
      %36 = sbr.rel (0) target = $region13
    $region12: #{transformer_forward.40} parent=1 // pred_region
      %s38 = ssub.s32 32, 32
      %39 = vsyncadd [#allocation6], %s38
      %s41 = sshll.u32 [#allocation7], 4
      %s42 = int_to_ptr.vmem [resolvable:$true] %s41
      %44 = dma.hbm_to_vmem [thread:$0]  %s2, 32, %s42, [#allocation6]
    $region13: #{transformer_forward.40} parent=1 // pred_fallthru
      _
    // Predicated region
    $region14: #{transformer_forward.40} parent=1 // pred_check
      _
    $region15: #{transformer_forward.40} parent=1 // pred_check_branch
      %46 = sbr.rel (0) target = $region17
    $region16: #{transformer_forward.40} parent=1 // pred_region
      %47 = dma.done [#allocation3], 192
    $region17: #{transformer_forward.40} parent=1 // pred_fallthru
      _
    // Predicated region
    $region18: #{transformer_forward.40} parent=1 // pred_check
      _
    $region19: #{transformer_forward.40} parent=1 // pred_check_branch
      %49 = sbr.rel (0) target = $region21
    $region20: #{transformer_forward.40} parent=1 // pred_region
      %50 = dma.done [#allocation6], 2048
    $region21: #{transformer_forward.40} parent=1 // pred_fallthru
      _
    // Predicated region
    $region22: #{transformer_forward.40} parent=1 // pred_check
      _
    $region23: #{transformer_forward.40} parent=1 // pred_check_branch
      %52 = sbr.rel (0) target = $region25
    $region24: #{transformer_forward.40} parent=1 // pred_region
      %53 = dma.done [#allocation6], 32
    $region25: #{transformer_forward.40} parent=1 // pred_fallthru
      _
    %v55 = vld [vmem:[#allocation2] sm:$0xf]
    %v56 = vld [vmem:[#allocation2 + $0x4] sm:$0xf]
    %v57 = vld [vmem:[#allocation2 + $0x8] sm:$0xf]
    %v58 = vld [vmem:[#allocation5] sm:$0xff]
    %v59 = vld [vmem:[#allocation5 + $0x8] sm:$0xff]
    %v60 = vld [vmem:[#allocation5 + $0x10] sm:$0xff]
    %v61 = vld [vmem:[#allocation5 + $0x18] sm:$0xff]
    %v62 = vld [vmem:[#allocation5 + $0x20] sm:$0xff]
    %v63 = vld [vmem:[#allocation5 + $0x28] sm:$0xff]
    %v64 = vld [vmem:[#allocation5 + $0x30] sm:$0xff]
    %v65 = vld [vmem:[#allocation5 + $0x38] sm:$0xff]
    %v66 = vld [vmem:[#allocation5 + $0x40] sm:$0xff]
    %v67 = vld [vmem:[#allocation5 + $0x48] sm:$0xff]
    %v68 = vld [vmem:[#allocation5 + $0x50] sm:$0xff]
    %v69 = vld [vmem:[#allocation5 + $0x58] sm:$0xff]
    %v70 = vld [vmem:[#allocation5 + $0x60] sm:$0xff]
    %v71 = vld [vmem:[#allocation5 + $0x68] sm:$0xff]
    %v72 = vld [vmem:[#allocation5 + $0x70] sm:$0xff]
    %v73 = vld [vmem:[#allocation5 + $0x78] sm:$0xff]
    %v74 = vld [vmem:[#allocation7] sm:$0x3]
    %v76 = vlaneseq
    %v77 = vshrl.u32 %v76, 7
    %v78 = vsub.s32 0, %v77
    %v79 = vrot.slane %v74, %v78
    %v80 = vlaneseq
    %v81 = vshrl.u32 %v80, 7
    %v82 = vsub.s32 1, %v81
    %v83 = vrot.slane %v74, %v82
    %v89 = vunpack.c.l.b16 %v55
    %v90 = vunpack.c.l.b16 %v56
    %v91 = vunpack.c.l.b16 %v57
    %v92 = vpack.c.b16 %v90, %v89
    %v93 = vpack.c.b16 %v91, %v91
    %v112 = vunpack.c.l.b16 %v58
    %v113 = vunpack.c.h.b16 %v58
    %v114 = vunpack.c.l.b16 %v59
    %v115 = vunpack.c.h.b16 %v59
    %v116 = vunpack.c.l.b16 %v60
    %v117 = vunpack.c.h.b16 %v60
    %v118 = vunpack.c.l.b16 %v61
    %v119 = vunpack.c.h.b16 %v61
    %v120 = vunpack.c.l.b16 %v62
    %v121 = vunpack.c.h.b16 %v62
    %v122 = vunpack.c.l.b16 %v63
    %v123 = vunpack.c.h.b16 %v63
    %v124 = vunpack.c.l.b16 %v64
    %v125 = vunpack.c.h.b16 %v64
    %v126 = vunpack.c.l.b16 %v65
    %v127 = vunpack.c.h.b16 %v65
    %v128 = vunpack.c.l.b16 %v66
    %v129 = vunpack.c.h.b16 %v66
    %v130 = vunpack.c.l.b16 %v67
    %v131 = vunpack.c.h.b16 %v67
    %v132 = vunpack.c.l.b16 %v68
    %v133 = vunpack.c.h.b16 %v68
    %v134 = vunpack.c.l.b16 %v69
    %v135 = vunpack.c.h.b16 %v69
    %v136 = vunpack.c.l.b16 %v70
    %v137 = vunpack.c.h.b16 %v70
    %v138 = vunpack.c.l.b16 %v71
    %v139 = vunpack.c.h.b16 %v71
    %v140 = vunpack.c.l.b16 %v72
    %v141 = vunpack.c.h.b16 %v72
    %v142 = vunpack.c.l.b16 %v73
    %v143 = vunpack.c.h.b16 %v73
    %v144 = vpack.c.b16 %v114, %v112
    %v145 = vpack.c.b16 %v115, %v113
    %v146 = vpack.c.b16 %v118, %v116
    %v147 = vpack.c.b16 %v119, %v117
    %v148 = vpack.c.b16 %v122, %v120
    %v149 = vpack.c.b16 %v123, %v121
    %v150 = vpack.c.b16 %v126, %v124
    %v151 = vpack.c.b16 %v127, %v125
    %v152 = vpack.c.b16 %v130, %v128
    %v153 = vpack.c.b16 %v131, %v129
    %v154 = vpack.c.b16 %v134, %v132
    %v155 = vpack.c.b16 %v135, %v133
    %v156 = vpack.c.b16 %v138, %v136
    %v157 = vpack.c.b16 %v139, %v137
    %v158 = vpack.c.b16 %v142, %v140
    %v159 = vpack.c.b16 %v143, %v141
    %176 = vmatprep.subr.bf16.mxu0 %v145
    %177 = vmatpush1.bf16.msra.mxu0 %v144
    %178 = vmatprep.subr.bf16.mxu0 %v147
    %179 = vmatpush1.bf16.msra.mxu0 %v146
    %180 = vmatprep.subr.bf16.mxu0 %v149
    %181 = vmatpush1.bf16.msra.mxu0 %v148
    %182 = vmatprep.subr.bf16.mxu0 %v151
    %183 = vmatpush1.bf16.msra.mxu0 %v150
    %184 = vmatprep.subr.bf16.mxu0 %v153
    %185 = vmatpush1.bf16.msra.mxu0 %v152
    %186 = vmatprep.subr.bf16.mxu0 %v155
    %187 = vmatpush1.bf16.msra.mxu0 %v154
    %188 = vmatprep.subr.bf16.mxu0 %v157
    %189 = vmatpush1.bf16.msra.mxu0 %v156
    %190 = vmatprep.subr.bf16.mxu0 %v159
    %191 = vmatpush1.bf16.msra.mxu0 %v158
    %192 = vmatprep.subr.bf16.mxu0 0
    %193 = vmatpush1.bf16.msra.mxu0 0
    %194 = vmatprep.subr.bf16.mxu0 0
    %195 = vmatpush1.bf16.msra.mxu0 0
    %196 = vmatprep.subr.bf16.mxu0 0
    %197 = vmatpush1.bf16.msra.mxu0 0
    %198 = vmatprep.subr.bf16.mxu0 0
    %199 = vmatpush1.bf16.msra.mxu0 0
    %200 = vmatprep.subr.bf16.mxu0 0
    %201 = vmatpush1.bf16.msra.mxu0 0
    %202 = vmatprep.subr.bf16.mxu0 0
    %203 = vmatpush1.bf16.msra.mxu0 0
    %204 = vmatprep.subr.bf16.mxu0 0
    %205 = vmatpush1.bf16.msra.mxu0 0
    %206 = vmatprep.subr.bf16.mxu0 0
    %207 = vmatpush1.bf16.msra.mxu0 0
    %208 = vmatprep.mubr.bf16.mxu0 0
    %209 = vmatmul.mubr.bf16.gmra.mrb[0].mxu0 %v92
    %v210 = vpop.f32.mrb[0].mxu0
    %v211 = vadd.f32 %v79, %v210
    %v212 = vpop.f32.mrb[0].mxu0
    %v213 = vadd.f32 %v83, %v212
    %v214 = vpop.f32.mrb[0].mxu0
    %v215 = vadd.f32 %v79, %v214
    %v216 = vpop.f32.mrb[0].mxu0
    %v217 = vadd.f32 %v83, %v216
    %218 = vmatprep.mubr.bf16.mxu0 0
    %219 = vmatmul.mubr.bf16.gmra.mrb[0].mxu0 %v93
    %v220 = vpop.f32.mrb[0].mxu0
    %v221 = vadd.f32 %v79, %v220
    %v222 = vpop.f32.mrb[0].mxu0
    %v223 = vadd.f32 %v83, %v222
    %v224 = vpop.f32.mrb[0].mxu0
    %v225 = vpop.f32.mrb[0].mxu0
    %226 = vdwg.mxu0
    %v227 = vpack.c.bf16 %v215, %v211
    %v228 = vpack.c.bf16 %v217, %v213
    %v229 = vpack.c.bf16 %v221, %v221
    %v230 = vpack.c.bf16 %v223, %v223
    %v235 = vunpack.c.l.b16 %v227
    %v236 = vunpack.c.l.b16 %v228
    %v237 = vunpack.c.h.b16 %v227
    %v238 = vunpack.c.h.b16 %v228
    %v239 = vunpack.c.l.b16 %v229
    %v240 = vunpack.c.l.b16 %v230
    %v241 = vpack.c.b16 %v236, %v235
    %v242 = vpack.c.b16 %v238, %v237
    %v243 = vpack.c.b16 %v240, %v239
    %247 = vst [vmem:[#allocation8] sm:$0xff] %v241
    %248 = vst [vmem:[#allocation8 + $0x8] sm:$0xff] %v242
    %249 = vst [vmem:[#allocation8 + $0x10] sm:$0xff] %v243
    // Predicated region
    $region26: #{transformer_forward.40} parent=1 // pred_check
      _
    $region27: #{transformer_forward.40} parent=1 // pred_check_branch
      %251 = sbr.rel (0) target = $region29
    $region28: #{transformer_forward.40} parent=1 // pred_region
      %s253 = ssub.s32 384, 384
      %254 = vsyncadd [#allocation4], %s253
      %s255 = sshll.u32 [#allocation8], 4
      %s256 = int_to_ptr.vmem [resolvable:$true] %s255
      %261 = dma.vmem_to_hbm [thread:$0]  %s256, 384, %s3, [#allocation4], 128, 128, 8
    $region29: #{transformer_forward.40} parent=1 // pred_fallthru
      _
    // Predicated region
    $region30: #{transformer_forward.40} parent=1 // pred_check
      _
    $region31: #{transformer_forward.40} parent=1 // pred_check_branch
      %263 = sbr.rel (0) target = $region33
    $region32: #{transformer_forward.40} parent=1 // pred_region
      %264 = dma.done [#allocation4], 384
    $region33: #{transformer_forward.40} parent=1 // pred_fallthru
      _
    %265 = vsyncpa [#allocation3], 1
    %266 = vsyncpa [#allocation6], 1
    %267 = vsyncpa [#allocation4], 1

// kernel: transformer_forward.36
$region0: #{transformer_forward.36}
  #allocation0 [shape = 'u32[]', space=smem, size = 0x4, offset = 0x4, fixed_abs, tag = 'smem constant byte address 0x4 - core index']
  #allocation1 [shape = 'u32[144,128]{1,0:T(1,128)}', space=vmem, size = 0x12000, scoped, tag = 'internal scratch']
  %s0 = inlined_call_operand.hbm [shape: bf16[16,128], index: 0, kind: input, shape index: {}]
  %s1 = inlined_call_operand.hbm [shape: bf16[128,384], index: 1, kind: input, shape index: {}]
  %s2 = inlined_call_operand.hbm [shape: f32[1,384], index: 2, kind: input, shape index: {}]
  %s3 = inlined_call_operand.hbm [shape: bf16[16,384], index: 3, kind: output, shape index: {}]
  %s4 = sld [smem:[#allocation0]]
  $region57: #{transformer_forward.36} parent=0
    _
  %s6 = ssub.s32 1, %s4
  %s7 = scalar_select 0, %s6, %s4
  $region1: #{transformer_forward.36} parent=0
    #allocation2 [shape = 'u8[4096]{0}', space=vmem, size = 0x1000, scoped, tag = 'input window, operand 0, single buffered']
    #allocation3 [shape = 's32[2]{0}', space=sflag, size = 0x8, scoped, tag = 'scoped memory for transformer_forward.36']
    #allocation4 [shape = 's32[2]{0}', space=sflag, size = 0x8, scoped, tag = 'scoped memory for transformer_forward.36']
    #allocation5 [shape = 'u8[131072]{0}', space=vmem, size = 0x20000, scoped, tag = 'input window, operand 1']
    #allocation6 [shape = 's32[2]{0}', space=sflag, size = 0x8, scoped, tag = 'scoped memory for transformer_forward.36']
    #allocation7 [shape = 'u8[2048]{0}', space=vmem, size = 0x800, scoped, tag = 'input window, operand 2']
    #allocation8 [shape = 'u8[16384]{0}', space=vmem, size = 0x4000, scoped, tag = 'output window, operand 0']
    %8 = vsyncpa [#allocation3], 0
    %9 = vsyncpa [#allocation6], 0
    %s10 = scalar_lea.sflag [#allocation6], 1
    %11 = vsyncpa %s10, 0
    %12 = vsyncpa [#allocation4], 0
    %s13 = scalar_lea.sflag [#allocation4], 1
    %14 = vsyncpa %s13, 0
    loop: start=0, step=1, limit=4
    $region2: #{transformer_forward.36} parent=1 // loop_pre_header
      _
    $region3: #{transformer_forward.36} parent=1 // loop_header
      %s16 = sphi 0, %s20
      %p17 = scmp.ge.s32.totalorder %s16, 4
      %s23 = sphi 0, %s35
      %s24 = sphi 0, %s31
      %s25 = sphi 0, %s23
      %s26 = sphi 0, %s24
      %s27 = sphi 0, %s25
      %s28 = sphi 0, %s26
      %s38 = sphi 0, %s40
      %s41 = sphi 0, %s38
      %s42 = sphi 0, %s41
      %s58 = sphi 0, %s42
      %s64 = sphi 0, %s66
      %s67 = sphi 0, %s64
      %s68 = sphi 0, %s67
      %s84 = sphi 0, %s68
      %s90 = sphi 0, %s92
      %s93 = sphi 0, %s90
      %s94 = sphi 0, %s93
      %s110 = sphi 0, %s94
      %s118 = sphi 0, %s120
      %s121 = sphi 0, %s118
      %s122 = sphi 0, %s121
      %s138 = sphi 0, %s122
    $region4: #{transformer_forward.36} parent=1 // loop_header_branch
      %19 = sbr.rel (%p17) target = $region8
    $region5: #{transformer_forward.36} parent=1 // loop_body
      %s21 = ssub.s32 %s16, 1
      %s22 = ssub.s32 %s16, 2
      %s29 = sadd.s32 1, %s24
      %p30 = scmp.ge.s32.totalorder %s29, 2
      %s31 = scalar_select %p30, 0, %s29
      %s32 = sadd.s32 1, %s23
      %s33 = scalar_select %p30, %s32, %s23
      %p34 = scmp.ge.s32.totalorder %s33, 1
      %s35 = scalar_select %p34, 0, %s33
      %s36 = ssub.s32 %s23, %s35
      %p37 = scmp.eq.s32.totalorder %s36, 0
      %s39 = sadd.s32 %s38, 1
      %s40 = scalar_select %p37, %s38, %s39
      %p43 = pneg %p37
      %p44 = scmp.eq.s32.totalorder %s16, 1
      %p45 = por %p43, %p44
      %p46 = scmp.ne.s32.totalorder %s38, %s41
      %p47 = scmp.eq.s32.totalorder %s16, 0
      %p48 = por %p46, %p47
      %p49 = scmp.ne.s32.totalorder %s38, %s41
      %p50 = scmp.eq.s32.totalorder %s21, 1
      %p51 = por %p49, %p50
      %p52 = scmp.ne.s32.totalorder %s41, %s42
      %p53 = scmp.eq.s32.totalorder %s21, 0
      %p54 = por %p52, %p53
      %p55 = scmp.ne.s32.totalorder %s41, %s42
      %p56 = scmp.eq.s32.totalorder %s22, 1
      %p57 = por %p55, %p56
      %p59 = scmp.ne.s32.totalorder %s42, %s58
      %p60 = scmp.eq.s32.totalorder %s22, 0
      %p61 = por %p59, %p60
      %s62 = ssub.s32 %s24, %s31
      %p63 = scmp.eq.s32.totalorder %s62, 0
      %s65 = sadd.s32 %s64, 1
      %s66 = scalar_select %p63, %s64, %s65
      %p69 = pneg %p63
      %p70 = scmp.eq.s32.totalorder %s16, 1
      %p71 = por %p69, %p70
      %p72 = scmp.ne.s32.totalorder %s64, %s67
      %p73 = scmp.eq.s32.totalorder %s16, 0
      %p74 = por %p72, %p73
      %p75 = scmp.ne.s32.totalorder %s64, %s67
      %p76 = scmp.eq.s32.totalorder %s21, 1
      %p77 = por %p75, %p76
      %p78 = scmp.ne.s32.totalorder %s67, %s68
      %p79 = scmp.eq.s32.totalorder %s21, 0
      %p80 = por %p78, %p79
      %p81 = scmp.ne.s32.totalorder %s67, %s68
      %p82 = scmp.eq.s32.totalorder %s22, 1
      %p83 = por %p81, %p82
      %p85 = scmp.ne.s32.totalorder %s68, %s84
      %p86 = scmp.eq.s32.totalorder %s22, 0
      %p87 = por %p85, %p86
      %s88 = ssub.s32 %s24, %s31
      %p89 = scmp.eq.s32.totalorder %s88, 0
      %s91 = sadd.s32 %s90, 1
      %s92 = scalar_select %p89, %s90, %s91
      %p95 = pneg %p89
      %p96 = scmp.eq.s32.totalorder %s16, 1
      %p97 = por %p95, %p96
      %p98 = scmp.ne.s32.totalorder %s90, %s93
      %p99 = scmp.eq.s32.totalorder %s16, 0
      %p100 = por %p98, %p99
      %p101 = scmp.ne.s32.totalorder %s90, %s93
      %p102 = scmp.eq.s32.totalorder %s21, 1
      %p103 = por %p101, %p102
      %p104 = scmp.ne.s32.totalorder %s93, %s94
      %p105 = scmp.eq.s32.totalorder %s21, 0
      %p106 = por %p104, %p105
      %p107 = scmp.ne.s32.totalorder %s93, %s94
      %p108 = scmp.eq.s32.totalorder %s22, 1
      %p109 = por %p107, %p108
      %p111 = scmp.ne.s32.totalorder %s94, %s110
      %p112 = scmp.eq.s32.totalorder %s22, 0
      %p113 = por %p111, %p112
      %s114 = ssub.s32 %s23, %s35
      %s115 = ssub.s32 %s24, %s31
      %s116 = sor.u32 %s114, %s115
      %p117 = scmp.eq.s32.totalorder %s116, 0
      %s119 = sadd.s32 %s118, 1
      %s120 = scalar_select %p117, %s118, %s119
      %p123 = pneg %p117
      %p124 = scmp.eq.s32.totalorder %s16, 1
      %p125 = por %p123, %p124
      %p126 = scmp.ne.s32.totalorder %s118, %s121
      %p127 = scmp.eq.s32.totalorder %s16, 0
      %p128 = por %p126, %p127
      %p129 = scmp.ne.s32.totalorder %s118, %s121
      %p130 = scmp.eq.s32.totalorder %s21, 1
      %p131 = por %p129, %p130
      %p132 = scmp.ne.s32.totalorder %s121, %s122
      %p133 = scmp.eq.s32.totalorder %s21, 0
      %p134 = por %p132, %p133
      %p135 = scmp.ne.s32.totalorder %s121, %s122
      %p136 = scmp.eq.s32.totalorder %s22, 1
      %p137 = por %p135, %p136
      %p139 = scmp.ne.s32.totalorder %s122, %s138
      %p140 = scmp.eq.s32.totalorder %s22, 0
      %p141 = por %p139, %p140
      %p142 = scmp.le.s32.totalorder 1, %s16
      %p143 = scmp.lt.s32.totalorder %s16, 3
      %p144 = pnand %p142, %p143
      %p145 = pneg %p144
      // Predicated region
      $region9: #{transformer_forward.36} parent=5 // pred_check
        _
      $region10: #{transformer_forward.36} parent=5 // pred_check_branch
        %147 = sbr.rel (%p144) target = $region12
      $region11: #{transformer_forward.36} parent=5 // pred_region
        %s148 = ssub.s32 %s16, 1
        // Predicated region
        $region13: #{transformer_forward.36} parent=11 // pred_check
          %p149 = pneg %p54
        $region14: #{transformer_forward.36} parent=11 // pred_check_branch
          %151 = sbr.rel (%p149) target = $region16
        $region15: #{transformer_forward.36} parent=11 // pred_region
          %s152 = smul.u32 2, %s25
          %s154 = ssub.s32 128, 128
          %155 = vsyncadd [#allocation3], %s154
          %s156 = smul.addr %s152, 64
          %s157 = scalar_lea.hbm %s0, %s156
          %s158 = sshll.u32 [#allocation2], 4
          %s159 = int_to_ptr.vmem [resolvable:$true] %s158
          %164 = dma.hbm_to_vmem [thread:$0]  %s157, 128, %s159, [#allocation3], 64, 64, 4
        $region16: #{transformer_forward.36} parent=11 // pred_fallthru
          _
      $region12: #{transformer_forward.36} parent=5 // pred_fallthru
        _
      %p165 = scmp.lt.s32.totalorder %s16, 2
      // Predicated region
      $region17: #{transformer_forward.36} parent=5 // pred_check
        %p166 = pneg %p165
      $region18: #{transformer_forward.36} parent=5 // pred_check_branch
        %168 = sbr.rel (%p166) target = $region20
      $region19: #{transformer_forward.36} parent=5 // pred_region
        // Predicated region
        $region21: #{transformer_forward.36} parent=19 // pred_check
          %p169 = pneg %p74
        $region22: #{transformer_forward.36} parent=19 // pred_check_branch
          %171 = sbr.rel (%p169) target = $region24
        $region23: #{transformer_forward.36} parent=19 // pred_region
          %s172 = sand.u32 %s16, 1
          %s173 = scalar_lea.sflag [#allocation6], %s172
          %s174 = sand.u32 %s64, 1
          %s175 = smul.addr %s174, 128
          %s176 = scalar_lea.vmem [#allocation5], %s175
          %s177 = smul.u32 2, %s24
          %s178 = ssub.s32 3, %s177
          %p179 = scmp.lt.s32.totalorder %s178, 2
          %s180 = scalar_select %p179, %s178, 2
          %s181 = smul.u32 1024, %s180
          %s183 = ssub.s32 2048, %s181
          %184 = vsyncadd %s173, %s183
          %p185 = scmp.ne.s32.totalorder 0, %s181
          %s186 = smul.addr %s177, 64
          %s187 = scalar_lea.hbm %s1, %s186
          %s188 = smul.u32 %s180, 4
          %s189 = smul.u32 %s188, 16
          %s190 = sshll.u32 %s176, 4
          %s191 = int_to_ptr.vmem [resolvable:$true] %s190
          %s192 = sshll.u32 %s189, 4
          %196 = dma.hbm_to_vmem [thread:$0]  (%p185), %s187, %s192, %s191, %s173, 192, 128, %s188
        $region24: #{transformer_forward.36} parent=19 // pred_fallthru
          _
        // Predicated region
        $region25: #{transformer_forward.36} parent=19 // pred_check
          %p197 = pneg %p100
        $region26: #{transformer_forward.36} parent=19 // pred_check_branch
          %199 = sbr.rel (%p197) target = $region28
        $region27: #{transformer_forward.36} parent=19 // pred_region
          %s200 = sand.u32 %s16, 1
          %s201 = scalar_lea.sflag [#allocation6], %s200
          %s202 = sand.u32 %s90, 1
          %s203 = smul.addr %s202, 2
          %s204 = scalar_lea.vmem [#allocation7], %s203
          %s205 = smul.u32 2, %s24
          %s206 = ssub.s32 3, %s205
          %p207 = scmp.lt.s32.totalorder %s206, 2
          %s208 = scalar_select %p207, %s206, 2
          %s209 = smul.u32 16, %s208
          %s211 = ssub.s32 32, %s209
          %212 = vsyncadd %s201, %s211
          %p213 = scmp.ne.s32.totalorder 0, %s209
          %s214 = smul.addr %s205, 16
          %s215 = scalar_lea.hbm %s2, %s214
          %s216 = sshll.u32 %s208, 4
          %s217 = sshll.u32 %s204, 4
          %s218 = int_to_ptr.vmem [resolvable:$true] %s217
          %220 = dma.hbm_to_vmem [thread:$0]  (%p213), %s215, %s216, %s218, %s201
        $region28: #{transformer_forward.36} parent=19 // pred_fallthru
          _
      $region20: #{transformer_forward.36} parent=5 // pred_fallthru
        _
      %p221 = scmp.le.s32.totalorder 1, %s16
      %p222 = scmp.lt.s32.totalorder %s16, 3
      %p223 = pnand %p221, %p222
      %p224 = pneg %p223
      // Predicated region
      $region29: #{transformer_forward.36} parent=5 // pred_check
        _
      $region30: #{transformer_forward.36} parent=5 // pred_check_branch
        %226 = sbr.rel (%p223) target = $region32
      $region31: #{transformer_forward.36} parent=5 // pred_region
        %s227 = ssub.s32 %s16, 1
        // Predicated region
        $region33: #{transformer_forward.36} parent=31 // pred_check
          %p228 = pneg %p54
        $region34: #{transformer_forward.36} parent=31 // pred_check_branch
          %230 = sbr.rel (%p228) target = $region36
        $region35: #{transformer_forward.36} parent=31 // pred_region
          %231 = dma.done [#allocation3], 128
        $region36: #{transformer_forward.36} parent=31 // pred_fallthru
          _
        %s232 = sand.u32 %s21, 1
        %s233 = scalar_lea.sflag [#allocation6], %s232
        %s234 = sand.u32 %s67, 1
        %s235 = smul.addr %s234, 128
        %s236 = scalar_lea.vmem [#allocation5], %s235
        // Predicated region
        $region37: #{transformer_forward.36} parent=31 // pred_check
          %p237 = pneg %p80
        $region38: #{transformer_forward.36} parent=31 // pred_check_branch
          %239 = sbr.rel (%p237) target = $region40
        $region39: #{transformer_forward.36} parent=31 // pred_region
          %240 = dma.done %s233, 2048
        $region40: #{transformer_forward.36} parent=31 // pred_fallthru
          _
        %s241 = sand.u32 %s21, 1
        %s242 = scalar_lea.sflag [#allocation6], %s241
        %s243 = sand.u32 %s93, 1
        %s244 = smul.addr %s243, 2
        %s245 = scalar_lea.vmem [#allocation7], %s244
        // Predicated region
        $region41: #{transformer_forward.36} parent=31 // pred_check
          %p246 = pneg %p106
        $region42: #{transformer_forward.36} parent=31 // pred_check_branch
          %248 = sbr.rel (%p246) target = $region44
        $region43: #{transformer_forward.36} parent=31 // pred_region
          %249 = dma.done %s242, 32
        $region44: #{transformer_forward.36} parent=31 // pred_fallthru
          _
        %p250 = pneg %p54
        %p251 = pneg %p51
        %s252 = sand.u32 %s21, 1
        %s253 = scalar_lea.sflag [#allocation6], %s252
        %s254 = sand.u32 %s67, 1
        %s255 = smul.addr %s254, 128
        %s256 = scalar_lea.vmem [#allocation5], %s255
        %p257 = pneg %p80
        %p258 = pneg %p77
        %s259 = sand.u32 %s21, 1
        %s260 = scalar_lea.sflag [#allocation6], %s259
        %s261 = sand.u32 %s93, 1
        %s262 = smul.addr %s261, 2
        %s263 = scalar_lea.vmem [#allocation7], %s262
        %p264 = pneg %p106
        %p265 = pneg %p103
        %p266 = pneg %p134
        %p267 = pneg %p131
        %s268 = sand.u32 %s121, 1
        %s269 = scalar_lea.sflag [#allocation4], %s268
        %s270 = sand.u32 %s121, 1
        %s271 = smul.addr %s270, 16
        %s272 = scalar_lea.vmem [#allocation8], %s271
        %s273 = smul.u32 2, %s25
        %s274 = smul.u32 2, %s26
        %s275 = ssub.s32 3, %s274
        %p276 = scmp.lt.s32.totalorder %s275, 2
        %s277 = scalar_select %p276, %s275, 2
        %s278 = smul.u32 1024, %s277
        %s279 = smul.u32 2, %s26
        %s280 = ssub.s32 3, %s279
        %p281 = scmp.lt.s32.totalorder %s280, 2
        %s282 = scalar_select %p281, %s280, 2
        %s283 = smul.u32 16, %s282
        %s284 = smul.u32 2, %s25
        %s285 = smul.u32 2, %s26
        %s286 = ssub.s32 3, %s285
        %p287 = scmp.lt.s32.totalorder %s286, 2
        %s288 = scalar_select %p287, %s286, 2
        %s289 = smul.u32 128, %s288
        %v291 = vld [vmem:[#allocation2] sm:$0xf]
        %v292 = vld [vmem:[#allocation2 + $0x4] sm:$0xf]
        %v293 = vld [vmem:[%s236] sm:$0xff]
        %v294 = vld [vmem:[%s236 + $0x8] sm:$0xff]
        %v295 = vld [vmem:[%s236 + $0x10] sm:$0xff]
        %v296 = vld [vmem:[%s236 + $0x18] sm:$0xff]
        %v297 = vld [vmem:[%s236 + $0x20] sm:$0xff]
        %v298 = vld [vmem:[%s236 + $0x28] sm:$0xff]
        %v299 = vld [vmem:[%s236 + $0x30] sm:$0xff]
        %v300 = vld [vmem:[%s236 + $0x38] sm:$0xff]
        %v301 = vld [vmem:[%s236 + $0x40] sm:$0xff]
        %v302 = vld [vmem:[%s236 + $0x48] sm:$0xff]
        %v303 = vld [vmem:[%s236 + $0x50] sm:$0xff]
        %v304 = vld [vmem:[%s236 + $0x58] sm:$0xff]
        %v305 = vld [vmem:[%s236 + $0x60] sm:$0xff]
        %v306 = vld [vmem:[%s236 + $0x68] sm:$0xff]
        %v307 = vld [vmem:[%s236 + $0x70] sm:$0xff]
        %v308 = vld [vmem:[%s236 + $0x78] sm:$0xff]
        %v309 = vld [vmem:[%s245] sm:$0x3]
        %v311 = vlaneseq
        %v312 = vshrl.u32 %v311, 7
        %v313 = vsub.s32 0, %v312
        %v314 = vrot.slane %v309, %v313
        %v315 = vlaneseq
        %v316 = vshrl.u32 %v315, 7
        %v317 = vsub.s32 1, %v316
        %v318 = vrot.slane %v309, %v317
        %v323 = vunpack.c.l.b16 %v291
        %v324 = vunpack.c.l.b16 %v292
        %v325 = vpack.c.b16 %v324, %v323
        %v343 = vunpack.c.l.b16 %v293
        %v344 = vunpack.c.h.b16 %v293
        %v345 = vunpack.c.l.b16 %v294
        %v346 = vunpack.c.h.b16 %v294
        %v347 = vunpack.c.l.b16 %v295
        %v348 = vunpack.c.h.b16 %v295
        %v349 = vunpack.c.l.b16 %v296
        %v350 = vunpack.c.h.b16 %v296
        %v351 = vunpack.c.l.b16 %v297
        %v352 = vunpack.c.h.b16 %v297
        %v353 = vunpack.c.l.b16 %v298
        %v354 = vunpack.c.h.b16 %v298
        %v355 = vunpack.c.l.b16 %v299
        %v356 = vunpack.c.h.b16 %v299
        %v357 = vunpack.c.l.b16 %v300
        %v358 = vunpack.c.h.b16 %v300
        %v359 = vunpack.c.l.b16 %v301
        %v360 = vunpack.c.h.b16 %v301
        %v361 = vunpack.c.l.b16 %v302
        %v362 = vunpack.c.h.b16 %v302
        %v363 = vunpack.c.l.b16 %v303
        %v364 = vunpack.c.h.b16 %v303
        %v365 = vunpack.c.l.b16 %v304
        %v366 = vunpack.c.h.b16 %v304
        %v367 = vunpack.c.l.b16 %v305
        %v368 = vunpack.c.h.b16 %v305
        %v369 = vunpack.c.l.b16 %v306
        %v370 = vunpack.c.h.b16 %v306
        %v371 = vunpack.c.l.b16 %v307
        %v372 = vunpack.c.h.b16 %v307
        %v373 = vunpack.c.l.b16 %v308
        %v374 = vunpack.c.h.b16 %v308
        %v375 = vpack.c.b16 %v345, %v343
        %v376 = vpack.c.b16 %v346, %v344
        %v377 = vpack.c.b16 %v349, %v347
        %v378 = vpack.c.b16 %v350, %v348
        %v379 = vpack.c.b16 %v353, %v351
        %v380 = vpack.c.b16 %v354, %v352
        %v381 = vpack.c.b16 %v357, %v355
        %v382 = vpack.c.b16 %v358, %v356
        %v383 = vpack.c.b16 %v361, %v359
        %v384 = vpack.c.b16 %v362, %v360
        %v385 = vpack.c.b16 %v365, %v363
        %v386 = vpack.c.b16 %v366, %v364
        %v387 = vpack.c.b16 %v369, %v367
        %v388 = vpack.c.b16 %v370, %v368
        %v389 = vpack.c.b16 %v373, %v371
        %v390 = vpack.c.b16 %v374, %v372
        %407 = vmatprep.subr.bf16.mxu0 %v376
        %408 = vmatpush1.bf16.msra.mxu0 %v375
        %409 = vmatprep.subr.bf16.mxu0 %v378
        %410 = vmatpush1.bf16.msra.mxu0 %v377
        %411 = vmatprep.subr.bf16.mxu0 %v380
        %412 = vmatpush1.bf16.msra.mxu0 %v379
        %413 = vmatprep.subr.bf16.mxu0 %v382
        %414 = vmatpush1.bf16.msra.mxu0 %v381
        %415 = vmatprep.subr.bf16.mxu0 %v384
        %416 = vmatpush1.bf16.msra.mxu0 %v383
        %417 = vmatprep.subr.bf16.mxu0 %v386
        %418 = vmatpush1.bf16.msra.mxu0 %v385
        %419 = vmatprep.subr.bf16.mxu0 %v388
        %420 = vmatpush1.bf16.msra.mxu0 %v387
        %421 = vmatprep.subr.bf16.mxu0 %v390
        %422 = vmatpush1.bf16.msra.mxu0 %v389
        %423 = vmatprep.subr.bf16.mxu0 0
        %424 = vmatpush1.bf16.msra.mxu0 0
        %425 = vmatprep.subr.bf16.mxu0 0
        %426 = vmatpush1.bf16.msra.mxu0 0
        %427 = vmatprep.subr.bf16.mxu0 0
        %428 = vmatpush1.bf16.msra.mxu0 0
        %429 = vmatprep.subr.bf16.mxu0 0
        %430 = vmatpush1.bf16.msra.mxu0 0
        %431 = vmatprep.subr.bf16.mxu0 0
        %432 = vmatpush1.bf16.msra.mxu0 0
        %433 = vmatprep.subr.bf16.mxu0 0
        %434 = vmatpush1.bf16.msra.mxu0 0
        %435 = vmatprep.subr.bf16.mxu0 0
        %436 = vmatpush1.bf16.msra.mxu0 0
        %437 = vmatprep.subr.bf16.mxu0 0
        %438 = vmatpush1.bf16.msra.mxu0 0
        %439 = vmatprep.mubr.bf16.mxu0 0
        %440 = vmatmul.mubr.bf16.gmra.mrb[0].mxu0 %v325
        %v441 = vpop.f32.mrb[0].mxu0
        %v442 = vadd.f32 %v314, %v441
        %v443 = vpop.f32.mrb[0].mxu0
        %v444 = vadd.f32 %v318, %v443
        %v445 = vpop.f32.mrb[0].mxu0
        %v446 = vadd.f32 %v314, %v445
        %v447 = vpop.f32.mrb[0].mxu0
        %v448 = vadd.f32 %v318, %v447
        %449 = vdwg.mxu0
        %v450 = vpack.c.bf16 %v446, %v442
        %v451 = vpack.c.bf16 %v448, %v444
        %v454 = vunpack.c.l.b16 %v450
        %v455 = vunpack.c.l.b16 %v451
        %v456 = vunpack.c.h.b16 %v450
        %v457 = vunpack.c.h.b16 %v451
        %v458 = vpack.c.b16 %v455, %v454
        %v459 = vpack.c.b16 %v457, %v456
        %462 = vst [vmem:[%s272] sm:$0xff] %v458
        %463 = vst [vmem:[%s272 + $0x8] sm:$0xff] %v459
        %s464 = sand.u32 %s121, 1
        %s465 = scalar_lea.sflag [#allocation4], %s464
        %s466 = sand.u32 %s121, 1
        %s467 = smul.addr %s466, 16
        %s468 = scalar_lea.vmem [#allocation8], %s467
        // Predicated region
        $region45: #{transformer_forward.36} parent=31 // pred_check
          %p469 = pneg %p131
        $region46: #{transformer_forward.36} parent=31 // pred_check_branch
          %471 = sbr.rel (%p469) target = $region48
        $region47: #{transformer_forward.36} parent=31 // pred_region
          %s472 = smul.u32 2, %s25
          %s473 = smul.u32 2, %s26
          %s474 = ssub.s32 3, %s473
          %p475 = scmp.lt.s32.totalorder %s474, 2
          %s476 = scalar_select %p475, %s474, 2
          %s477 = smul.u32 128, %s476
          %s479 = ssub.s32 256, %s477
          %480 = vsyncadd %s465, %s479
          %p481 = scmp.ne.s32.totalorder 0, %s477
          %s482 = smul.addr %s472, 3
          %s483 = sadd.s32 %s473, %s482
          %s484 = smul.addr %s483, 64
          %s485 = scalar_lea.hbm %s3, %s484
          %s486 = smul.u32 %s476, 4
          %s487 = smul.u32 %s486, 2
          %s488 = sshll.u32 %s468, 4
          %s489 = int_to_ptr.vmem [resolvable:$true] %s488
          %s490 = sshll.u32 %s487, 4
          %494 = dma.vmem_to_hbm [thread:$0]  (%p481), %s489, %s490, %s485, %s465, 128, 192, %s486
        $region48: #{transformer_forward.36} parent=31 // pred_fallthru
          _
      $region32: #{transformer_forward.36} parent=5 // pred_fallthru
        _
      %p495 = scmp.le.s32.totalorder 2, %s16
      // Predicated region
      $region49: #{transformer_forward.36} parent=5 // pred_check
        %p496 = pneg %p495
      $region50: #{transformer_forward.36} parent=5 // pred_check_branch
        %498 = sbr.rel (%p496) target = $region52
      $region51: #{transformer_forward.36} parent=5 // pred_region
        %s499 = ssub.s32 %s16, 2
        // Predicated region
        $region53: #{transformer_forward.36} parent=51 // pred_check
          %p500 = pneg %p137
        $region54: #{transformer_forward.36} parent=51 // pred_check_branch
          %502 = sbr.rel (%p500) target = $region56
        $region55: #{transformer_forward.36} parent=51 // pred_region
          %s503 = sand.u32 %s122, 1
          %s504 = scalar_lea.sflag [#allocation4], %s503
          %s505 = sand.u32 %s122, 1
          %s506 = smul.addr %s505, 16
          %s507 = scalar_lea.vmem [#allocation8], %s506
          %508 = dma.done %s504, 256
        $region56: #{transformer_forward.36} parent=51 // pred_fallthru
          _
      $region52: #{transformer_forward.36} parent=5 // pred_fallthru
        _
    $region6: #{transformer_forward.36} parent=1 // loop_footer
      %s20 = sadd.s32 1, %s16
    $region7: #{transformer_forward.36} parent=1 // loop_footer_branch
      %15 = sbr.rel target = $region3
    $region8: #{transformer_forward.36} parent=1 // loop_exit
      _
    %509 = vsyncpa [#allocation3], 1
    %s510 = scalar_lea.sflag [#allocation3], 1
    %511 = vsyncpa %s510, 1
    %512 = vsyncpa [#allocation6], 1
    %s513 = scalar_lea.sflag [#allocation6], 1
    %514 = vsyncpa %s513, 1
    %515 = vsyncpa [#allocation4], 1
    %s516 = scalar_lea.sflag [#allocation4], 1
    %517 = vsyncpa %s516, 1

// kernel: transformer_forward.37
$region0: #{transformer_forward.37}
  #allocation0 [shape = 'u32[]', space=smem, size = 0x4, offset = 0x4, fixed_abs, tag = 'smem constant byte address 0x4 - core index']
  #allocation1 [shape = 'u32[144,128]{1,0:T(1,128)}', space=vmem, size = 0x12000, scoped, tag = 'internal scratch']
  %s0 = inlined_call_operand.hbm [shape: bf16[2,8,384], index: 0, kind: input, shape index: {}]
  %s1 = inlined_call_operand.hbm [shape: bf16[2,8,128], index: 1, kind: output, shape index: {}]
  %s2 = sld [smem:[#allocation0]]
  $region41: #{transformer_forward.37} parent=0
    _
  %s4 = ssub.s32 1, %s2
  %s5 = scalar_select 0, %s4, %s2
  $region1: #{transformer_forward.37} parent=0
    #allocation2 [shape = 'u8[12288]{0}', space=vmem, size = 0x3000, scoped, tag = 'input window, operand 0']
    #allocation3 [shape = 's32[2]{0}', space=sflag, size = 0x8, scoped, tag = 'scoped memory for transformer_forward.37']
    #allocation4 [shape = 's32[2]{0}', space=sflag, size = 0x8, scoped, tag = 'scoped memory for transformer_forward.37']
    #allocation5 [shape = 'u8[4096]{0}', space=vmem, size = 0x1000, scoped, tag = 'output window, operand 0']
    %6 = vsyncpa [#allocation3], 0
    %s7 = scalar_lea.sflag [#allocation3], 1
    %8 = vsyncpa %s7, 0
    %9 = vsyncpa [#allocation4], 0
    %s10 = scalar_lea.sflag [#allocation4], 1
    %11 = vsyncpa %s10, 0
    loop: start=0, step=1, limit=4
    $region2: #{transformer_forward.37} parent=1 // loop_pre_header
      _
    $region3: #{transformer_forward.37} parent=1 // loop_header
      %s13 = sphi 0, %s17
      %p14 = scmp.ge.s32.totalorder %s13, 4
      %s23 = sphi 0, %s25
      %s26 = sphi 0, %s23
      %s27 = sphi 0, %s26
      %s43 = sphi 0, %s27
      %s49 = sphi 0, %s51
      %s52 = sphi 0, %s49
      %s53 = sphi 0, %s52
      %s69 = sphi 0, %s53
    $region4: #{transformer_forward.37} parent=1 // loop_header_branch
      %16 = sbr.rel (%p14) target = $region8
    $region5: #{transformer_forward.37} parent=1 // loop_body
      %s18 = ssub.s32 %s13, 1
      %s19 = ssub.s32 %s13, 2
      %s20 = sadd.s32 %s13, 1
      %s21 = ssub.s32 %s13, %s20
      %p22 = scmp.eq.s32.totalorder %s21, 0
      %s24 = sadd.s32 %s23, 1
      %s25 = scalar_select %p22, %s23, %s24
      %p28 = pneg %p22
      %p29 = scmp.eq.s32.totalorder %s13, 1
      %p30 = por %p28, %p29
      %p31 = scmp.ne.s32.totalorder %s23, %s26
      %p32 = scmp.eq.s32.totalorder %s13, 0
      %p33 = por %p31, %p32
      %p34 = scmp.ne.s32.totalorder %s23, %s26
      %p35 = scmp.eq.s32.totalorder %s18, 1
      %p36 = por %p34, %p35
      %p37 = scmp.ne.s32.totalorder %s26, %s27
      %p38 = scmp.eq.s32.totalorder %s18, 0
      %p39 = por %p37, %p38
      %p40 = scmp.ne.s32.totalorder %s26, %s27
      %p41 = scmp.eq.s32.totalorder %s19, 1
      %p42 = por %p40, %p41
      %p44 = scmp.ne.s32.totalorder %s27, %s43
      %p45 = scmp.eq.s32.totalorder %s19, 0
      %p46 = por %p44, %p45
      %s47 = ssub.s32 %s13, %s20
      %p48 = scmp.eq.s32.totalorder %s47, 0
      %s50 = sadd.s32 %s49, 1
      %s51 = scalar_select %p48, %s49, %s50
      %p54 = pneg %p48
      %p55 = scmp.eq.s32.totalorder %s13, 1
      %p56 = por %p54, %p55
      %p57 = scmp.ne.s32.totalorder %s49, %s52
      %p58 = scmp.eq.s32.totalorder %s13, 0
      %p59 = por %p57, %p58
      %p60 = scmp.ne.s32.totalorder %s49, %s52
      %p61 = scmp.eq.s32.totalorder %s18, 1
      %p62 = por %p60, %p61
      %p63 = scmp.ne.s32.totalorder %s52, %s53
      %p64 = scmp.eq.s32.totalorder %s18, 0
      %p65 = por %p63, %p64
      %p66 = scmp.ne.s32.totalorder %s52, %s53
      %p67 = scmp.eq.s32.totalorder %s19, 1
      %p68 = por %p66, %p67
      %p70 = scmp.ne.s32.totalorder %s53, %s69
      %p71 = scmp.eq.s32.totalorder %s19, 0
      %p72 = por %p70, %p71
      %p73 = scmp.le.s32.totalorder 1, %s13
      %p74 = scmp.lt.s32.totalorder %s13, 3
      %p75 = pnand %p73, %p74
      %p76 = pneg %p75
      // Predicated region
      $region9: #{transformer_forward.37} parent=5 // pred_check
        _
      $region10: #{transformer_forward.37} parent=5 // pred_check_branch
        %78 = sbr.rel (%p75) target = $region12
      $region11: #{transformer_forward.37} parent=5 // pred_region
        %s79 = ssub.s32 %s13, 1
      $region12: #{transformer_forward.37} parent=5 // pred_fallthru
        _
      %p80 = scmp.lt.s32.totalorder %s13, 2
      // Predicated region
      $region13: #{transformer_forward.37} parent=5 // pred_check
        %p81 = pneg %p80
      $region14: #{transformer_forward.37} parent=5 // pred_check_branch
        %83 = sbr.rel (%p81) target = $region16
      $region15: #{transformer_forward.37} parent=5 // pred_region
        // Predicated region
        $region17: #{transformer_forward.37} parent=15 // pred_check
          %p84 = pneg %p33
        $region18: #{transformer_forward.37} parent=15 // pred_check_branch
          %86 = sbr.rel (%p84) target = $region20
        $region19: #{transformer_forward.37} parent=15 // pred_region
          %s87 = sand.u32 %s23, 1
          %s88 = scalar_lea.sflag [#allocation3], %s87
          %s89 = sand.u32 %s23, 1
          %s90 = smul.addr %s89, 12
          %s91 = scalar_lea.vmem [#allocation2], %s90
          %s93 = ssub.s32 192, 192
          %94 = vsyncadd %s88, %s93
          %s95 = smul.addr %s13, 3
          %s96 = smul.addr %s95, 64
          %s97 = scalar_lea.hbm %s0, %s96
          %s99 = sshll.u32 %s91, 4
          %s100 = int_to_ptr.vmem [resolvable:$true] %s99
          %102 = dma.hbm_to_vmem [thread:$0]  %s97, 192, %s100, %s88
        $region20: #{transformer_forward.37} parent=15 // pred_fallthru
          _
      $region16: #{transformer_forward.37} parent=5 // pred_fallthru
        _
      %p103 = scmp.le.s32.totalorder 1, %s13
      %p104 = scmp.lt.s32.totalorder %s13, 3
      %p105 = pnand %p103, %p104
      %p106 = pneg %p105
      // Predicated region
      $region21: #{transformer_forward.37} parent=5 // pred_check
        _
      $region22: #{transformer_forward.37} parent=5 // pred_check_branch
        %108 = sbr.rel (%p105) target = $region24
      $region23: #{transformer_forward.37} parent=5 // pred_region
        %s109 = ssub.s32 %s13, 1
        %s110 = sand.u32 %s26, 1
        %s111 = scalar_lea.sflag [#allocation3], %s110
        %s112 = sand.u32 %s26, 1
        %s113 = smul.addr %s112, 12
        %s114 = scalar_lea.vmem [#allocation2], %s113
        // Predicated region
        $region25: #{transformer_forward.37} parent=23 // pred_check
          %p115 = pneg %p39
        $region26: #{transformer_forward.37} parent=23 // pred_check_branch
          %117 = sbr.rel (%p115) target = $region28
        $region27: #{transformer_forward.37} parent=23 // pred_region
          %118 = dma.done %s111, 192
        $region28: #{transformer_forward.37} parent=23 // pred_fallthru
          _
        %s119 = sand.u32 %s26, 1
        %s120 = scalar_lea.sflag [#allocation3], %s119
        %s121 = sand.u32 %s26, 1
        %s122 = smul.addr %s121, 12
        %s123 = scalar_lea.vmem [#allocation2], %s122
        %p124 = pneg %p39
        %p125 = pneg %p36
        %p126 = pneg %p65
        %p127 = pneg %p62
        %s128 = sand.u32 %s52, 1
        %s129 = scalar_lea.sflag [#allocation4], %s128
        %s130 = sand.u32 %s52, 1
        %s131 = smul.addr %s130, 4
        %s132 = scalar_lea.vmem [#allocation5], %s131
        %v134 = vld [vmem:[%s114] sm:$0xff]
        %v135 = vld [vmem:[%s114 + $0x8] sm:$0xf]
        %v136 = vlaneseq
        %v137 = vshrl.u32 %v136, 7
        %v138 = vlaneseq
        %v139 = vand.u32 %v138, 127
        %vm140 = vcmp.gt.s32.totalorder %v139, %v137
        %v141 = vsel %vm140, -1e+30, 0.0
        %v143 = vunpack.c.h.b16 %v134
        %v144 = vpack.c.b16 %v143, %v143
        %vm145 = vcmask 261120
        %v147 = vsel %vm145, %v134, 0
        %v150 = vsel %vm145, %v144, 0
        %152 = vmatprep.subr.bf16.mxu0 0
        %153 = vmatpush1.bf16.xpose.msra.mxu0 %v150
        %154 = vmatprep.subr.bf16.mxu0 0
        %155 = vmatpush1.bf16.xpose.msra.mxu0 0
        %156 = vmatprep.subr.bf16.mxu0 0
        %157 = vmatpush1.bf16.xpose.msra.mxu0 0
        %158 = vmatprep.subr.bf16.mxu0 0
        %159 = vmatpush1.bf16.xpose.msra.mxu0 0
        %160 = vmatprep.subr.bf16.mxu0 0
        %161 = vmatpush1.bf16.xpose.msra.mxu0 0
        %162 = vmatprep.subr.bf16.mxu0 0
        %163 = vmatpush1.bf16.xpose.msra.mxu0 0
        %164 = vmatprep.subr.bf16.mxu0 0
        %165 = vmatpush1.bf16.xpose.msra.mxu0 0
        %166 = vmatprep.subr.bf16.mxu0 0
        %167 = vmatpush1.bf16.xpose.msra.mxu0 0
        %168 = vmatprep.subr.bf16.mxu0 0
        %169 = vmatpush1.bf16.xpose.msra.mxu0 0
        %170 = vmatprep.subr.bf16.mxu0 0
        %171 = vmatpush1.bf16.xpose.msra.mxu0 0
        %172 = vmatprep.subr.bf16.mxu0 0
        %173 = vmatpush1.bf16.xpose.msra.mxu0 0
        %174 = vmatprep.subr.bf16.mxu0 0
        %175 = vmatpush1.bf16.xpose.msra.mxu0 0
        %176 = vmatprep.subr.bf16.mxu0 0
        %177 = vmatpush1.bf16.xpose.msra.mxu0 0
        %178 = vmatprep.subr.bf16.mxu0 0
        %179 = vmatpush1.bf16.xpose.msra.mxu0 0
        %180 = vmatprep.subr.bf16.mxu0 0
        %181 = vmatpush1.bf16.xpose.msra.mxu0 0
        %182 = vmatprep.subr.bf16.mxu0 0
        %183 = vmatpush1.bf16.xpose.msra.mxu0 0
        %184 = vmatprep.mubr.bf16.mxu0 0
        %185 = vmatmul.mubr.bf16.gmra.mrb[0].mxu0 %v147
        %v186 = vpop.f32.mrb[0].mxu0
        %v187 = vadd.f32 0.0, %v186
        %v188 = vpop.f32.mrb[0].mxu0
        %v189 = vpop.f32.mrb[0].mxu0
        %v190 = vpop.f32.mrb[0].mxu0
        %191 = vdwg.mxu0
        %v192 = vmul.f32 %v187, 0.17677669
        %v193 = vadd.f32 %v192, %v141
        %vm194 = vcmask 64512
        %v195 = vsel %vm194, %v193, -inf
        %196 = vmax.xlane.f32.xlu0 %v195
        %v197 = vpop.xlane.xlu0 %196
        %v198 = vsub.f32 %v193, %v197
        %v199 = vmul.f32 %v198, 1.442695
        %v200 = vpow.pop %v199
        %v201 = vsel %vm194, %v200, 0.0
        %202 = vadd.xlane.f32.xlu0 %v201
        %v203 = vpop.xlane.xlu0 %202
        %v204 = vpack.c.bf16 %v200, %v200
        %v206 = vsel %vm194, %v204, 0
        %vm208 = vcmask 1043456
        %v210 = vsel %vm208, %v135, 0
        %212 = vmatprep.subr.bf16.mxu0 0
        %213 = vmatpush1.bf16.msra.mxu0 %v210
        %214 = vmatprep.subr.bf16.mxu0 0
        %215 = vmatpush1.bf16.msra.mxu0 0
        %216 = vmatprep.subr.bf16.mxu0 0
        %217 = vmatpush1.bf16.msra.mxu0 0
        %218 = vmatprep.subr.bf16.mxu0 0
        %219 = vmatpush1.bf16.msra.mxu0 0
        %220 = vmatprep.subr.bf16.mxu0 0
        %221 = vmatpush1.bf16.msra.mxu0 0
        %222 = vmatprep.subr.bf16.mxu0 0
        %223 = vmatpush1.bf16.msra.mxu0 0
        %224 = vmatprep.subr.bf16.mxu0 0
        %225 = vmatpush1.bf16.msra.mxu0 0
        %226 = vmatprep.subr.bf16.mxu0 0
        %227 = vmatpush1.bf16.msra.mxu0 0
        %228 = vmatprep.subr.bf16.mxu0 0
        %229 = vmatpush1.bf16.msra.mxu0 0
        %230 = vmatprep.subr.bf16.mxu0 0
        %231 = vmatpush1.bf16.msra.mxu0 0
        %232 = vmatprep.subr.bf16.mxu0 0
        %233 = vmatpush1.bf16.msra.mxu0 0
        %234 = vmatprep.subr.bf16.mxu0 0
        %235 = vmatpush1.bf16.msra.mxu0 0
        %236 = vmatprep.subr.bf16.mxu0 0
        %237 = vmatpush1.bf16.msra.mxu0 0
        %238 = vmatprep.subr.bf16.mxu0 0
        %239 = vmatpush1.bf16.msra.mxu0 0
        %240 = vmatprep.subr.bf16.mxu0 0
        %241 = vmatpush1.bf16.msra.mxu0 0
        %242 = vmatprep.subr.bf16.mxu0 0
        %243 = vmatpush1.bf16.msra.mxu0 0
        %244 = vmatprep.mubr.bf16.mxu0 0
        %245 = vmatmul.mubr.bf16.gmra.mrb[0].mxu0 %v206
        %v246 = vpop.f32.mrb[0].mxu0
        %v247 = vadd.f32 0.0, %v246
        %v248 = vpop.f32.mrb[0].mxu0
        %v249 = vpop.f32.mrb[0].mxu0
        %v250 = vpop.f32.mrb[0].mxu0
        %251 = vdwg.mxu0
        %v252 = vrcp.pop %v203
        %v253 = vmul.f32 %v247, %v252
        %v254 = vunpack.c.l.b16 %v134
        %v255 = vpack.c.b16 %v254, %v254
        %256 = vrot.lane.b32.xlu0 %v255, 96
        %v257 = vpop.permute.xlu0 %256
        %258 = vrot.lane.b32.xlu0 %v144, 96
        %v259 = vpop.permute.xlu0 %258
        %v261 = vsel %vm145, %v257, 0
        %v264 = vsel %vm145, %v259, 0
        %266 = vmatprep.subr.bf16.mxu0 0
        %267 = vmatpush1.bf16.xpose.msra.mxu0 %v264
        %268 = vmatprep.subr.bf16.mxu0 0
        %269 = vmatpush1.bf16.xpose.msra.mxu0 0
        %270 = vmatprep.subr.bf16.mxu0 0
        %271 = vmatpush1.bf16.xpose.msra.mxu0 0
        %272 = vmatprep.subr.bf16.mxu0 0
        %273 = vmatpush1.bf16.xpose.msra.mxu0 0
        %274 = vmatprep.subr.bf16.mxu0 0
        %275 = vmatpush1.bf16.xpose.msra.mxu0 0
        %276 = vmatprep.subr.bf16.mxu0 0
        %277 = vmatpush1.bf16.xpose.msra.mxu0 0
        %278 = vmatprep.subr.bf16.mxu0 0
        %279 = vmatpush1.bf16.xpose.msra.mxu0 0
        %280 = vmatprep.subr.bf16.mxu0 0
        %281 = vmatpush1.bf16.xpose.msra.mxu0 0
        %282 = vmatprep.subr.bf16.mxu0 0
        %283 = vmatpush1.bf16.xpose.msra.mxu0 0
        %284 = vmatprep.subr.bf16.mxu0 0
        %285 = vmatpush1.bf16.xpose.msra.mxu0 0
        %286 = vmatprep.subr.bf16.mxu0 0
        %287 = vmatpush1.bf16.xpose.msra.mxu0 0
        %288 = vmatprep.subr.bf16.mxu0 0
        %289 = vmatpush1.bf16.xpose.msra.mxu0 0
        %290 = vmatprep.subr.bf16.mxu0 0
        %291 = vmatpush1.bf16.xpose.msra.mxu0 0
        %292 = vmatprep.subr.bf16.mxu0 0
        %293 = vmatpush1.bf16.xpose.msra.mxu0 0
        %294 = vmatprep.subr.bf16.mxu0 0
        %295 = vmatpush1.bf16.xpose.msra.mxu0 0
        %296 = vmatprep.subr.bf16.mxu0 0
        %297 = vmatpush1.bf16.xpose.msra.mxu0 0
        %298 = vmatprep.mubr.bf16.mxu0 0
        %299 = vmatmul.mubr.bf16.gmra.mrb[0].mxu0 %v261
        %v300 = vpop.f32.mrb[0].mxu0
        %v301 = vadd.f32 0.0, %v300
        %v302 = vpop.f32.mrb[0].mxu0
        %v303 = vpop.f32.mrb[0].mxu0
        %v304 = vpop.f32.mrb[0].mxu0
        %305 = vdwg.mxu0
        %v306 = vmul.f32 %v301, 0.17677669
        %v307 = vadd.f32 %v306, %v141
        %v308 = vsel %vm194, %v307, -inf
        %309 = vmax.xlane.f32.xlu0 %v308
        %v310 = vpop.xlane.xlu0 %309
        %v311 = vsub.f32 %v307, %v310
        %v312 = vmul.f32 %v311, 1.442695
        %v313 = vpow.pop %v312
        %v314 = vsel %vm194, %v313, 0.0
        %315 = vadd.xlane.f32.xlu0 %v314
        %v316 = vpop.xlane.xlu0 %315
        %v317 = vpack.c.bf16 %v313, %v313
        %v319 = vunpack.c.l.b16 %v135
        %v320 = vpack.c.b16 %v319, %v319
        %321 = vrot.lane.b32.xlu0 %v320, 96
        %v322 = vpop.permute.xlu0 %321
        %v324 = vsel %vm194, %v317, 0
        %v327 = vsel %vm208, %v322, 0
        %329 = vmatprep.subr.bf16.mxu0 0
        %330 = vmatpush1.bf16.msra.mxu0 %v327
        %331 = vmatprep.subr.bf16.mxu0 0
        %332 = vmatpush1.bf16.msra.mxu0 0
        %333 = vmatprep.subr.bf16.mxu0 0
        %334 = vmatpush1.bf16.msra.mxu0 0
        %335 = vmatprep.subr.bf16.mxu0 0
        %336 = vmatpush1.bf16.msra.mxu0 0
        %337 = vmatprep.subr.bf16.mxu0 0
        %338 = vmatpush1.bf16.msra.mxu0 0
        %339 = vmatprep.subr.bf16.mxu0 0
        %340 = vmatpush1.bf16.msra.mxu0 0
        %341 = vmatprep.subr.bf16.mxu0 0
        %342 = vmatpush1.bf16.msra.mxu0 0
        %343 = vmatprep.subr.bf16.mxu0 0
        %344 = vmatpush1.bf16.msra.mxu0 0
        %345 = vmatprep.subr.bf16.mxu0 0
        %346 = vmatpush1.bf16.msra.mxu0 0
        %347 = vmatprep.subr.bf16.mxu0 0
        %348 = vmatpush1.bf16.msra.mxu0 0
        %349 = vmatprep.subr.bf16.mxu0 0
        %350 = vmatpush1.bf16.msra.mxu0 0
        %351 = vmatprep.subr.bf16.mxu0 0
        %352 = vmatpush1.bf16.msra.mxu0 0
        %353 = vmatprep.subr.bf16.mxu0 0
        %354 = vmatpush1.bf16.msra.mxu0 0
        %355 = vmatprep.subr.bf16.mxu0 0
        %356 = vmatpush1.bf16.msra.mxu0 0
        %357 = vmatprep.subr.bf16.mxu0 0
        %358 = vmatpush1.bf16.msra.mxu0 0
        %359 = vmatprep.subr.bf16.mxu0 0
        %360 = vmatpush1.bf16.msra.mxu0 0
        %361 = vmatprep.mubr.bf16.mxu0 0
        %362 = vmatmul.mubr.bf16.gmra.mrb[0].mxu0 %v324
        %v363 = vpop.f32.mrb[0].mxu0
        %v364 = vadd.f32 0.0, %v363
        %v365 = vpop.f32.mrb[0].mxu0
        %v366 = vpop.f32.mrb[0].mxu0
        %v367 = vpop.f32.mrb[0].mxu0
        %368 = vdwg.mxu0
        %v369 = vrcp.pop %v316
        %v370 = vmul.f32 %v364, %v369
        %371 = vrot.lane.b32.xlu0 %v255, 64
        %v372 = vpop.permute.xlu0 %371
        %373 = vrot.lane.b32.xlu0 %v144, 64
        %v374 = vpop.permute.xlu0 %373
        %v376 = vsel %vm145, %v372, 0
        %v379 = vsel %vm145, %v374, 0
        %381 = vmatprep.subr.bf16.mxu0 0
        %382 = vmatpush1.bf16.xpose.msra.mxu0 %v379
        %383 = vmatprep.subr.bf16.mxu0 0
        %384 = vmatpush1.bf16.xpose.msra.mxu0 0
        %385 = vmatprep.subr.bf16.mxu0 0
        %386 = vmatpush1.bf16.xpose.msra.mxu0 0
        %387 = vmatprep.subr.bf16.mxu0 0
        %388 = vmatpush1.bf16.xpose.msra.mxu0 0
        %389 = vmatprep.subr.bf16.mxu0 0
        %390 = vmatpush1.bf16.xpose.msra.mxu0 0
        %391 = vmatprep.subr.bf16.mxu0 0
        %392 = vmatpush1.bf16.xpose.msra.mxu0 0
        %393 = vmatprep.subr.bf16.mxu0 0
        %394 = vmatpush1.bf16.xpose.msra.mxu0 0
        %395 = vmatprep.subr.bf16.mxu0 0
        %396 = vmatpush1.bf16.xpose.msra.mxu0 0
        %397 = vmatprep.subr.bf16.mxu0 0
        %398 = vmatpush1.bf16.xpose.msra.mxu0 0
        %399 = vmatprep.subr.bf16.mxu0 0
        %400 = vmatpush1.bf16.xpose.msra.mxu0 0
        %401 = vmatprep.subr.bf16.mxu0 0
        %402 = vmatpush1.bf16.xpose.msra.mxu0 0
        %403 = vmatprep.subr.bf16.mxu0 0
        %404 = vmatpush1.bf16.xpose.msra.mxu0 0
        %405 = vmatprep.subr.bf16.mxu0 0
        %406 = vmatpush1.bf16.xpose.msra.mxu0 0
        %407 = vmatprep.subr.bf16.mxu0 0
        %408 = vmatpush1.bf16.xpose.msra.mxu0 0
        %409 = vmatprep.subr.bf16.mxu0 0
        %410 = vmatpush1.bf16.xpose.msra.mxu0 0
        %411 = vmatprep.subr.bf16.mxu0 0
        %412 = vmatpush1.bf16.xpose.msra.mxu0 0
        %413 = vmatprep.mubr.bf16.mxu0 0
        %414 = vmatmul.mubr.bf16.gmra.mrb[0].mxu0 %v376
        %v415 = vpop.f32.mrb[0].mxu0
        %v416 = vadd.f32 0.0, %v415
        %v417 = vpop.f32.mrb[0].mxu0
        %v418 = vpop.f32.mrb[0].mxu0
        %v419 = vpop.f32.mrb[0].mxu0
        %420 = vdwg.mxu0
        %v421 = vmul.f32 %v416, 0.17677669
        %v422 = vadd.f32 %v421, %v141
        %v423 = vsel %vm194, %v422, -inf
        %424 = vmax.xlane.f32.xlu0 %v423
        %v425 = vpop.xlane.xlu0 %424
        %v426 = vsub.f32 %v422, %v425
        %v427 = vmul.f32 %v426, 1.442695
        %v428 = vpow.pop %v427
        %v429 = vsel %vm194, %v428, 0.0
        %430 = vadd.xlane.f32.xlu0 %v429
        %v431 = vpop.xlane.xlu0 %430
        %v432 = vpack.c.bf16 %v428, %v428
        %433 = vrot.lane.b32.xlu0 %v320, 64
        %v434 = vpop.permute.xlu0 %433
        %v436 = vsel %vm194, %v432, 0
        %v439 = vsel %vm208, %v434, 0
        %441 = vmatprep.subr.bf16.mxu0 0
        %442 = vmatpush1.bf16.msra.mxu0 %v439
        %443 = vmatprep.subr.bf16.mxu0 0
        %444 = vmatpush1.bf16.msra.mxu0 0
        %445 = vmatprep.subr.bf16.mxu0 0
        %446 = vmatpush1.bf16.msra.mxu0 0
        %447 = vmatprep.subr.bf16.mxu0 0
        %448 = vmatpush1.bf16.msra.mxu0 0
        %449 = vmatprep.subr.bf16.mxu0 0
        %450 = vmatpush1.bf16.msra.mxu0 0
        %451 = vmatprep.subr.bf16.mxu0 0
        %452 = vmatpush1.bf16.msra.mxu0 0
        %453 = vmatprep.subr.bf16.mxu0 0
        %454 = vmatpush1.bf16.msra.mxu0 0
        %455 = vmatprep.subr.bf16.mxu0 0
        %456 = vmatpush1.bf16.msra.mxu0 0
        %457 = vmatprep.subr.bf16.mxu0 0
        %458 = vmatpush1.bf16.msra.mxu0 0
        %459 = vmatprep.subr.bf16.mxu0 0
        %460 = vmatpush1.bf16.msra.mxu0 0
        %461 = vmatprep.subr.bf16.mxu0 0
        %462 = vmatpush1.bf16.msra.mxu0 0
        %463 = vmatprep.subr.bf16.mxu0 0
        %464 = vmatpush1.bf16.msra.mxu0 0
        %465 = vmatprep.subr.bf16.mxu0 0
        %466 = vmatpush1.bf16.msra.mxu0 0
        %467 = vmatprep.subr.bf16.mxu0 0
        %468 = vmatpush1.bf16.msra.mxu0 0
        %469 = vmatprep.subr.bf16.mxu0 0
        %470 = vmatpush1.bf16.msra.mxu0 0
        %471 = vmatprep.subr.bf16.mxu0 0
        %472 = vmatpush1.bf16.msra.mxu0 0
        %473 = vmatprep.mubr.bf16.mxu0 0
        %474 = vmatmul.mubr.bf16.gmra.mrb[0].mxu0 %v436
        %v475 = vpop.f32.mrb[0].mxu0
        %v476 = vadd.f32 0.0, %v475
        %v477 = vpop.f32.mrb[0].mxu0
        %v478 = vpop.f32.mrb[0].mxu0
        %v479 = vpop.f32.mrb[0].mxu0
        %480 = vdwg.mxu0
        %v481 = vrcp.pop %v431
        %v482 = vmul.f32 %v476, %v481
        %483 = vrot.lane.b32.xlu0 %v255, 32
        %v484 = vpop.permute.xlu0 %483
        %485 = vrot.lane.b32.xlu0 %v144, 32
        %v486 = vpop.permute.xlu0 %485
        %v488 = vsel %vm145, %v484, 0
        %v491 = vsel %vm145, %v486, 0
        %493 = vmatprep.subr.bf16.mxu0 0
        %494 = vmatpush1.bf16.xpose.msra.mxu0 %v491
        %495 = vmatprep.subr.bf16.mxu0 0
        %496 = vmatpush1.bf16.xpose.msra.mxu0 0
        %497 = vmatprep.subr.bf16.mxu0 0
        %498 = vmatpush1.bf16.xpose.msra.mxu0 0
        %499 = vmatprep.subr.bf16.mxu0 0
        %500 = vmatpush1.bf16.xpose.msra.mxu0 0
        %501 = vmatprep.subr.bf16.mxu0 0
        %502 = vmatpush1.bf16.xpose.msra.mxu0 0
        %503 = vmatprep.subr.bf16.mxu0 0
        %504 = vmatpush1.bf16.xpose.msra.mxu0 0
        %505 = vmatprep.subr.bf16.mxu0 0
        %506 = vmatpush1.bf16.xpose.msra.mxu0 0
        %507 = vmatprep.subr.bf16.mxu0 0
        %508 = vmatpush1.bf16.xpose.msra.mxu0 0
        %509 = vmatprep.subr.bf16.mxu0 0
        %510 = vmatpush1.bf16.xpose.msra.mxu0 0
        %511 = vmatprep.subr.bf16.mxu0 0
        %512 = vmatpush1.bf16.xpose.msra.mxu0 0
        %513 = vmatprep.subr.bf16.mxu0 0
        %514 = vmatpush1.bf16.xpose.msra.mxu0 0
        %515 = vmatprep.subr.bf16.mxu0 0
        %516 = vmatpush1.bf16.xpose.msra.mxu0 0
        %517 = vmatprep.subr.bf16.mxu0 0
        %518 = vmatpush1.bf16.xpose.msra.mxu0 0
        %519 = vmatprep.subr.bf16.mxu0 0
        %520 = vmatpush1.bf16.xpose.msra.mxu0 0
        %521 = vmatprep.subr.bf16.mxu0 0
        %522 = vmatpush1.bf16.xpose.msra.mxu0 0
        %523 = vmatprep.subr.bf16.mxu0 0
        %524 = vmatpush1.bf16.xpose.msra.mxu0 0
        %525 = vmatprep.mubr.bf16.mxu0 0
        %526 = vmatmul.mubr.bf16.gmra.mrb[0].mxu0 %v488
        %v527 = vpop.f32.mrb[0].mxu0
        %v528 = vadd.f32 0.0, %v527
        %v529 = vpop.f32.mrb[0].mxu0
        %v530 = vpop.f32.mrb[0].mxu0
        %v531 = vpop.f32.mrb[0].mxu0
        %532 = vdwg.mxu0
        %v533 = vmul.f32 %v528, 0.17677669
        %v534 = vadd.f32 %v533, %v141
        %v535 = vsel %vm194, %v534, -inf
        %536 = vmax.xlane.f32.xlu0 %v535
        %v537 = vpop.xlane.xlu0 %536
        %v538 = vsub.f32 %v534, %v537
        %v539 = vmul.f32 %v538, 1.442695
        %v540 = vpow.pop %v539
        %v541 = vsel %vm194, %v540, 0.0
        %542 = vadd.xlane.f32.xlu0 %v541
        %v543 = vpop.xlane.xlu0 %542
        %v544 = vpack.c.bf16 %v540, %v540
        %545 = vrot.lane.b32.xlu0 %v320, 32
        %v546 = vpop.permute.xlu0 %545
        %v548 = vsel %vm194, %v544, 0
        %v551 = vsel %vm208, %v546, 0
        %553 = vmatprep.subr.bf16.mxu0 0
        %554 = vmatpush1.bf16.msra.mxu0 %v551
        %555 = vmatprep.subr.bf16.mxu0 0
        %556 = vmatpush1.bf16.msra.mxu0 0
        %557 = vmatprep.subr.bf16.mxu0 0
        %558 = vmatpush1.bf16.msra.mxu0 0
        %559 = vmatprep.subr.bf16.mxu0 0
        %560 = vmatpush1.bf16.msra.mxu0 0
        %561 = vmatprep.subr.bf16.mxu0 0
        %562 = vmatpush1.bf16.msra.mxu0 0
        %563 = vmatprep.subr.bf16.mxu0 0
        %564 = vmatpush1.bf16.msra.mxu0 0
        %565 = vmatprep.subr.bf16.mxu0 0
        %566 = vmatpush1.bf16.msra.mxu0 0
        %567 = vmatprep.subr.bf16.mxu0 0
        %568 = vmatpush1.bf16.msra.mxu0 0
        %569 = vmatprep.subr.bf16.mxu0 0
        %570 = vmatpush1.bf16.msra.mxu0 0
        %571 = vmatprep.subr.bf16.mxu0 0
        %572 = vmatpush1.bf16.msra.mxu0 0
        %573 = vmatprep.subr.bf16.mxu0 0
        %574 = vmatpush1.bf16.msra.mxu0 0
        %575 = vmatprep.subr.bf16.mxu0 0
        %576 = vmatpush1.bf16.msra.mxu0 0
        %577 = vmatprep.subr.bf16.mxu0 0
        %578 = vmatpush1.bf16.msra.mxu0 0
        %579 = vmatprep.subr.bf16.mxu0 0
        %580 = vmatpush1.bf16.msra.mxu0 0
        %581 = vmatprep.subr.bf16.mxu0 0
        %582 = vmatpush1.bf16.msra.mxu0 0
        %583 = vmatprep.subr.bf16.mxu0 0
        %584 = vmatpush1.bf16.msra.mxu0 0
        %585 = vmatprep.mubr.bf16.mxu0 0
        %586 = vmatmul.mubr.bf16.gmra.mrb[0].mxu0 %v548
        %v587 = vpop.f32.mrb[0].mxu0
        %v588 = vadd.f32 0.0, %v587
        %v589 = vpop.f32.mrb[0].mxu0
        %v590 = vpop.f32.mrb[0].mxu0
        %v591 = vpop.f32.mrb[0].mxu0
        %592 = vdwg.mxu0
        %v593 = vrcp.pop %v543
        %v594 = vmul.f32 %v588, %v593
        %596 = vrot.lane.b32.xlu0 %v370, 32
        %v597 = vpop.permute.xlu0 %596
        %600 = vrot.lane.b32.xlu0 %v482, 64
        %v601 = vpop.permute.xlu0 %600
        %604 = vrot.lane.b32.xlu0 %v594, 96
        %v605 = vpop.permute.xlu0 %604
        %v607 = vsel %vm145, %v253, %v597
        %vm608 = vcmask 523264
        %v609 = vsel %vm608, %v607, %v601
        %vm610 = vcmask 785408
        %v611 = vsel %vm610, %v609, %v605
        %v612 = vpack.c.bf16 %v611, %v611
        %613 = vst [vmem:[%s132] sm:$0xf] %v612
        %s614 = sand.u32 %s52, 1
        %s615 = scalar_lea.sflag [#allocation4], %s614
        %s616 = sand.u32 %s52, 1
        %s617 = smul.addr %s616, 4
        %s618 = scalar_lea.vmem [#allocation5], %s617
        // Predicated region
        $region29: #{transformer_forward.37} parent=23 // pred_check
          %p619 = pneg %p62
        $region30: #{transformer_forward.37} parent=23 // pred_check_branch
          %621 = sbr.rel (%p619) target = $region32
        $region31: #{transformer_forward.37} parent=23 // pred_region
          %s623 = ssub.s32 64, 64
          %624 = vsyncadd %s615, %s623
          %s625 = smul.addr %s18, 64
          %s626 = scalar_lea.hbm %s1, %s625
          %s628 = sshll.u32 %s618, 4
          %s629 = int_to_ptr.vmem [resolvable:$true] %s628
          %631 = dma.vmem_to_hbm [thread:$0]  %s629, 64, %s626, %s615
        $region32: #{transformer_forward.37} parent=23 // pred_fallthru
          _
      $region24: #{transformer_forward.37} parent=5 // pred_fallthru
        _
      %p632 = scmp.le.s32.totalorder 2, %s13
      // Predicated region
      $region33: #{transformer_forward.37} parent=5 // pred_check
        %p633 = pneg %p632
      $region34: #{transformer_forward.37} parent=5 // pred_check_branch
        %635 = sbr.rel (%p633) target = $region36
      $region35: #{transformer_forward.37} parent=5 // pred_region
        %s636 = ssub.s32 %s13, 2
        // Predicated region
        $region37: #{transformer_forward.37} parent=35 // pred_check
          %p637 = pneg %p68
        $region38: #{transformer_forward.37} parent=35 // pred_check_branch
          %639 = sbr.rel (%p637) target = $region40
        $region39: #{transformer_forward.37} parent=35 // pred_region
          %s640 = sand.u32 %s53, 1
          %s641 = scalar_lea.sflag [#allocation4], %s640
          %s642 = sand.u32 %s53, 1
          %s643 = smul.addr %s642, 4
          %s644 = scalar_lea.vmem [#allocation5], %s643
          %645 = dma.done %s641, 64
        $region40: #{transformer_forward.37} parent=35 // pred_fallthru
          _
      $region36: #{transformer_forward.37} parent=5 // pred_fallthru
        _
    $region6: #{transformer_forward.37} parent=1 // loop_footer
      %s17 = sadd.s32 1, %s13
    $region7: #{transformer_forward.37} parent=1 // loop_footer_branch
      %12 = sbr.rel target = $region3
    $region8: #{transformer_forward.37} parent=1 // loop_exit
      _
    %646 = vsyncpa [#allocation3], 1
    %s647 = scalar_lea.sflag [#allocation3], 1
    %648 = vsyncpa %s647, 1
    %649 = vsyncpa [#allocation4], 1
    %s650 = scalar_lea.sflag [#allocation4], 1
    %651 = vsyncpa %s650, 1

// kernel: transformer_forward.39
$region0: #{transformer_forward.39}
  #allocation0 [shape = 'u32[]', space=smem, size = 0x4, offset = 0x4, fixed_abs, tag = 'smem constant byte address 0x4 - core index']
  #allocation1 [shape = 'u32[144,128]{1,0:T(1,128)}', space=vmem, size = 0x12000, scoped, tag = 'internal scratch']
  %s0 = inlined_call_operand.hbm [shape: bf16[16,128], index: 0, kind: input, shape index: {}]
  %s1 = inlined_call_operand.hbm [shape: bf16[128,128], index: 1, kind: input, shape index: {}]
  %s2 = inlined_call_operand.hbm [shape: f32[1,128], index: 2, kind: input, shape index: {}]
  %s3 = inlined_call_operand.hbm [shape: bf16[16,128], index: 3, kind: output, shape index: {}]
  %s4 = sld [smem:[#allocation0]]
  $region34: #{transformer_forward.39} parent=0
    _
  %s6 = ssub.s32 1, %s4
  %s7 = scalar_select 0, %s6, %s4
  $region1: #{transformer_forward.39} parent=0
    #allocation2 [shape = 'u8[4096]{0}', space=vmem, size = 0x1000, scoped, tag = 'input window, operand 0, single buffered']
    #allocation3 [shape = 's32[1]{0}', space=sflag, size = 0x4, scoped, tag = 'scoped memory for transformer_forward.39']
    #allocation4 [shape = 's32[1]{0}', space=sflag, size = 0x4, scoped, tag = 'scoped memory for transformer_forward.39']
    #allocation5 [shape = 'u8[32768]{0}', space=vmem, size = 0x8000, scoped, tag = 'input window, operand 1, single buffered']
    #allocation6 [shape = 's32[1]{0}', space=sflag, size = 0x4, scoped, tag = 'scoped memory for transformer_forward.39']
    #allocation7 [shape = 'u8[512]{0}', space=vmem, size = 0x400, scoped, tag = 'input window, operand 2, single buffered']
    #allocation8 [shape = 'u8[4096]{0}', space=vmem, size = 0x1000, scoped, tag = 'output window, operand 0, single buffered']
    %8 = vsyncpa [#allocation3], 0
    %9 = vsyncpa [#allocation6], 0
    %10 = vsyncpa [#allocation4], 0
    // Predicated region
    $region2: #{transformer_forward.39} parent=1 // pred_check
      _
    $region3: #{transformer_forward.39} parent=1 // pred_check_branch
      %12 = sbr.rel (0) target = $region5
    $region4: #{transformer_forward.39} parent=1 // pred_region
      %s14 = ssub.s32 128, 128
      %15 = vsyncadd [#allocation3], %s14
      %s16 = sshll.u32 [#allocation2], 4
      %s17 = int_to_ptr.vmem [resolvable:$true] %s16
      %22 = dma.hbm_to_vmem [thread:$0]  %s0, 128, %s17, [#allocation3], 64, 64, 4
    $region5: #{transformer_forward.39} parent=1 // pred_fallthru
      _
    // Predicated region
    $region6: #{transformer_forward.39} parent=1 // pred_check
      _
    $region7: #{transformer_forward.39} parent=1 // pred_check_branch
      %24 = sbr.rel (0) target = $region9
    $region8: #{transformer_forward.39} parent=1 // pred_region
      %s26 = ssub.s32 1024, 1024
      %27 = vsyncadd [#allocation6], %s26
      %s28 = sshll.u32 [#allocation5], 4
      %s29 = int_to_ptr.vmem [resolvable:$true] %s28
      %34 = dma.hbm_to_vmem [thread:$0]  %s1, 1024, %s29, [#allocation6], 64, 64, 4
    $region9: #{transformer_forward.39} parent=1 // pred_fallthru
      _
    // Predicated region
    $region10: #{transformer_forward.39} parent=1 // pred_check
      _
    $region11: #{transformer_forward.39} parent=1 // pred_check_branch
      %36 = sbr.rel (0) target = $region13
    $region12: #{transformer_forward.39} parent=1 // pred_region
      %s38 = ssub.s32 16, 16
      %39 = vsyncadd [#allocation6], %s38
      %s41 = sshll.u32 [#allocation7], 4
      %s42 = int_to_ptr.vmem [resolvable:$true] %s41
      %44 = dma.hbm_to_vmem [thread:$0]  %s2, 16, %s42, [#allocation6]
    $region13: #{transformer_forward.39} parent=1 // pred_fallthru
      _
    // Predicated region
    $region14: #{transformer_forward.39} parent=1 // pred_check
      _
    $region15: #{transformer_forward.39} parent=1 // pred_check_branch
      %46 = sbr.rel (0) target = $region17
    $region16: #{transformer_forward.39} parent=1 // pred_region
      %47 = dma.done [#allocation3], 128
    $region17: #{transformer_forward.39} parent=1 // pred_fallthru
      _
    // Predicated region
    $region18: #{transformer_forward.39} parent=1 // pred_check
      _
    $region19: #{transformer_forward.39} parent=1 // pred_check_branch
      %49 = sbr.rel (0) target = $region21
    $region20: #{transformer_forward.39} parent=1 // pred_region
      %50 = dma.done [#allocation6], 1024
    $region21: #{transformer_forward.39} parent=1 // pred_fallthru
      _
    // Predicated region
    $region22: #{transformer_forward.39} parent=1 // pred_check
      _
    $region23: #{transformer_forward.39} parent=1 // pred_check_branch
      %52 = sbr.rel (0) target = $region25
    $region24: #{transformer_forward.39} parent=1 // pred_region
      %53 = dma.done [#allocation6], 16
    $region25: #{transformer_forward.39} parent=1 // pred_fallthru
      _
    %v55 = vld [vmem:[#allocation2] sm:$0xf]
    %v56 = vld [vmem:[#allocation2 + $0x4] sm:$0xf]
    %v57 = vld [vmem:[#allocation5] sm:$0xf]
    %v58 = vld [vmem:[#allocation5 + $0x4] sm:$0xf]
    %v59 = vld [vmem:[#allocation5 + $0x8] sm:$0xf]
    %v60 = vld [vmem:[#allocation5 + $0xc] sm:$0xf]
    %v61 = vld [vmem:[#allocation5 + $0x10] sm:$0xf]
    %v62 = vld [vmem:[#allocation5 + $0x14] sm:$0xf]
    %v63 = vld [vmem:[#allocation5 + $0x18] sm:$0xf]
    %v64 = vld [vmem:[#allocation5 + $0x1c] sm:$0xf]
    %v65 = vld [vmem:[#allocation5 + $0x20] sm:$0xf]
    %v66 = vld [vmem:[#allocation5 + $0x24] sm:$0xf]
    %v67 = vld [vmem:[#allocation5 + $0x28] sm:$0xf]
    %v68 = vld [vmem:[#allocation5 + $0x2c] sm:$0xf]
    %v69 = vld [vmem:[#allocation5 + $0x30] sm:$0xf]
    %v70 = vld [vmem:[#allocation5 + $0x34] sm:$0xf]
    %v71 = vld [vmem:[#allocation5 + $0x38] sm:$0xf]
    %v72 = vld [vmem:[#allocation5 + $0x3c] sm:$0xf]
    %v73 = vld [vmem:[#allocation7] sm:$0x1]
    %v75 = vlaneseq
    %v76 = vshrl.u32 %v75, 7
    %v77 = vsub.s32 0, %v76
    %v78 = vrot.slane %v73, %v77
    %v82 = vunpack.c.l.b16 %v55
    %v83 = vunpack.c.l.b16 %v56
    %v84 = vpack.c.b16 %v83, %v82
    %v102 = vunpack.c.l.b16 %v57
    %v103 = vunpack.c.l.b16 %v58
    %v104 = vunpack.c.l.b16 %v59
    %v105 = vunpack.c.l.b16 %v60
    %v106 = vunpack.c.l.b16 %v61
    %v107 = vunpack.c.l.b16 %v62
    %v108 = vunpack.c.l.b16 %v63
    %v109 = vunpack.c.l.b16 %v64
    %v110 = vunpack.c.l.b16 %v65
    %v111 = vunpack.c.l.b16 %v66
    %v112 = vunpack.c.l.b16 %v67
    %v113 = vunpack.c.l.b16 %v68
    %v114 = vunpack.c.l.b16 %v69
    %v115 = vunpack.c.l.b16 %v70
    %v116 = vunpack.c.l.b16 %v71
    %v117 = vunpack.c.l.b16 %v72
    %v118 = vpack.c.b16 %v103, %v102
    %v119 = vpack.c.b16 %v105, %v104
    %v120 = vpack.c.b16 %v107, %v106
    %v121 = vpack.c.b16 %v109, %v108
    %v122 = vpack.c.b16 %v111, %v110
    %v123 = vpack.c.b16 %v113, %v112
    %v124 = vpack.c.b16 %v115, %v114
    %v125 = vpack.c.b16 %v117, %v116
    %134 = vmatprep.subr.bf16.mxu0 0
    %135 = vmatpush1.bf16.msra.mxu0 %v118
    %136 = vmatprep.subr.bf16.mxu0 0
    %137 = vmatpush1.bf16.msra.mxu0 %v119
    %138 = vmatprep.subr.bf16.mxu0 0
    %139 = vmatpush1.bf16.msra.mxu0 %v120
    %140 = vmatprep.subr.bf16.mxu0 0
    %141 = vmatpush1.bf16.msra.mxu0 %v121
    %142 = vmatprep.subr.bf16.mxu0 0
    %143 = vmatpush1.bf16.msra.mxu0 %v122
    %144 = vmatprep.subr.bf16.mxu0 0
    %145 = vmatpush1.bf16.msra.mxu0 %v123
    %146 = vmatprep.subr.bf16.mxu0 0
    %147 = vmatpush1.bf16.msra.mxu0 %v124
    %148 = vmatprep.subr.bf16.mxu0 0
    %149 = vmatpush1.bf16.msra.mxu0 %v125
    %150 = vmatprep.subr.bf16.mxu0 0
    %151 = vmatpush1.bf16.msra.mxu0 0
    %152 = vmatprep.subr.bf16.mxu0 0
    %153 = vmatpush1.bf16.msra.mxu0 0
    %154 = vmatprep.subr.bf16.mxu0 0
    %155 = vmatpush1.bf16.msra.mxu0 0
    %156 = vmatprep.subr.bf16.mxu0 0
    %157 = vmatpush1.bf16.msra.mxu0 0
    %158 = vmatprep.subr.bf16.mxu0 0
    %159 = vmatpush1.bf16.msra.mxu0 0
    %160 = vmatprep.subr.bf16.mxu0 0
    %161 = vmatpush1.bf16.msra.mxu0 0
    %162 = vmatprep.subr.bf16.mxu0 0
    %163 = vmatpush1.bf16.msra.mxu0 0
    %164 = vmatprep.subr.bf16.mxu0 0
    %165 = vmatpush1.bf16.msra.mxu0 0
    %166 = vmatprep.mubr.bf16.mxu0 0
    %167 = vmatmul.mubr.bf16.gmra.mrb[0].mxu0 %v84
    %v168 = vpop.f32.mrb[0].mxu0
    %v169 = vadd.f32 %v78, %v168
    %v170 = vpop.f32.mrb[0].mxu0
    %v171 = vpop.f32.mrb[0].mxu0
    %v172 = vadd.f32 %v78, %v171
    %v173 = vpop.f32.mrb[0].mxu0
    %174 = vdwg.mxu0
    %v175 = vpack.c.bf16 %v172, %v169
    %v177 = vunpack.c.l.b16 %v175
    %v178 = vunpack.c.h.b16 %v175
    %v179 = vpack.c.b16 %v177, %v177
    %v180 = vpack.c.b16 %v178, %v178
    %183 = vst [vmem:[#allocation8] sm:$0xf] %v179
    %184 = vst [vmem:[#allocation8 + $0x4] sm:$0xf] %v180
    // Predicated region
    $region26: #{transformer_forward.39} parent=1 // pred_check
      _
    $region27: #{transformer_forward.39} parent=1 // pred_check_branch
      %186 = sbr.rel (0) target = $region29
    $region28: #{transformer_forward.39} parent=1 // pred_region
      %s188 = ssub.s32 128, 128
      %189 = vsyncadd [#allocation4], %s188
      %s190 = sshll.u32 [#allocation8], 4
      %s191 = int_to_ptr.vmem [resolvable:$true] %s190
      %196 = dma.vmem_to_hbm [thread:$0]  %s191, 128, %s3, [#allocation4], 64, 64, 4
    $region29: #{transformer_forward.39} parent=1 // pred_fallthru
      _
    // Predicated region
    $region30: #{transformer_forward.39} parent=1 // pred_check
      _
    $region31: #{transformer_forward.39} parent=1 // pred_check_branch
      %198 = sbr.rel (0) target = $region33
    $region32: #{transformer_forward.39} parent=1 // pred_region
      %199 = dma.done [#allocation4], 128
    $region33: #{transformer_forward.39} parent=1 // pred_fallthru
      _
    %200 = vsyncpa [#allocation3], 1
    %201 = vsyncpa [#allocation6], 1
    %202 = vsyncpa [#allocation4], 1

// kernel: transformer_forward.38
$region0: #{transformer_forward.38}
  #allocation0 [shape = 'u32[]', space=smem, size = 0x4, offset = 0x4, fixed_abs, tag = 'smem constant byte address 0x4 - core index']
  #allocation1 [shape = 'u32[144,128]{1,0:T(1,128)}', space=vmem, size = 0x12000, scoped, tag = 'internal scratch']
  %s0 = inlined_call_operand.hbm [shape: bf16[16,128], index: 0, kind: input, shape index: {}]
  %s1 = inlined_call_operand.hbm [shape: bf16[128,128], index: 1, kind: input, shape index: {}]
  %s2 = inlined_call_operand.hbm [shape: f32[1,128], index: 2, kind: input, shape index: {}]
  %s3 = inlined_call_operand.hbm [shape: bf16[16,128], index: 3, kind: input, shape index: {}]
  %s4 = inlined_call_operand.hbm [shape: f32[1,128], index: 4, kind: input, shape index: {}]
  %s5 = inlined_call_operand.hbm [shape: f32[1,128], index: 5, kind: input, shape index: {}]
  %s6 = inlined_call_operand.hbm [shape: bf16[16,128], index: 6, kind: output, shape index: {}]
  %s7 = sld [smem:[#allocation0]]
  $region58: #{transformer_forward.38} parent=0
    _
  %s9 = ssub.s32 1, %s7
  %s10 = scalar_select 0, %s9, %s7
  $region1: #{transformer_forward.38} parent=0
    #allocation2 [shape = 'u8[4096]{0}', space=vmem, size = 0x1000, scoped, tag = 'input window, operand 0, single buffered']
    #allocation3 [shape = 's32[1]{0}', space=sflag, size = 0x4, scoped, tag = 'scoped memory for transformer_forward.38']
    #allocation4 [shape = 's32[1]{0}', space=sflag, size = 0x4, scoped, tag = 'scoped memory for transformer_forward.38']
    #allocation5 [shape = 'u8[32768]{0}', space=vmem, size = 0x8000, scoped, tag = 'input window, operand 1, single buffered']
    #allocation6 [shape = 's32[1]{0}', space=sflag, size = 0x4, scoped, tag = 'scoped memory for transformer_forward.38']
    #allocation7 [shape = 'u8[512]{0}', space=vmem, size = 0x400, scoped, tag = 'input window, operand 2, single buffered']
    #allocation8 [shape = 'u8[4096]{0}', space=vmem, size = 0x1000, scoped, tag = 'input window, operand 3, single buffered']
    #allocation9 [shape = 's32[1]{0}', space=sflag, size = 0x4, scoped, tag = 'scoped memory for transformer_forward.38']
    #allocation10 [shape = 'u8[512]{0}', space=vmem, size = 0x400, scoped, tag = 'input window, operand 4, single buffered']
    #allocation11 [shape = 'u8[512]{0}', space=vmem, size = 0x400, scoped, tag = 'input window, operand 5, single buffered']
    #allocation12 [shape = 's32[1]{0}', space=sflag, size = 0x4, scoped, tag = 'scoped memory for transformer_forward.38']
    #allocation13 [shape = 'u8[4096]{0}', space=vmem, size = 0x1000, scoped, tag = 'output window, operand 0, single buffered']
    %11 = vsyncpa [#allocation3], 0
    %12 = vsyncpa [#allocation6], 0
    %13 = vsyncpa [#allocation9], 0
    %14 = vsyncpa [#allocation12], 0
    %15 = vsyncpa [#allocation4], 0
    // Predicated region
    $region2: #{transformer_forward.38} parent=1 // pred_check
      _
    $region3: #{transformer_forward.38} parent=1 // pred_check_branch
      %17 = sbr.rel (0) target = $region5
    $region4: #{transformer_forward.38} parent=1 // pred_region
      %s19 = ssub.s32 128, 128
      %20 = vsyncadd [#allocation3], %s19
      %s21 = sshll.u32 [#allocation2], 4
      %s22 = int_to_ptr.vmem [resolvable:$true] %s21
      %27 = dma.hbm_to_vmem [thread:$0]  %s0, 128, %s22, [#allocation3], 64, 64, 4
    $region5: #{transformer_forward.38} parent=1 // pred_fallthru
      _
    // Predicated region
    $region6: #{transformer_forward.38} parent=1 // pred_check
      _
    $region7: #{transformer_forward.38} parent=1 // pred_check_branch
      %29 = sbr.rel (0) target = $region9
    $region8: #{transformer_forward.38} parent=1 // pred_region
      %s31 = ssub.s32 1024, 1024
      %32 = vsyncadd [#allocation6], %s31
      %s33 = sshll.u32 [#allocation5], 4
      %s34 = int_to_ptr.vmem [resolvable:$true] %s33
      %39 = dma.hbm_to_vmem [thread:$0]  %s1, 1024, %s34, [#allocation6], 64, 64, 4
    $region9: #{transformer_forward.38} parent=1 // pred_fallthru
      _
    // Predicated region
    $region10: #{transformer_forward.38} parent=1 // pred_check
      _
    $region11: #{transformer_forward.38} parent=1 // pred_check_branch
      %41 = sbr.rel (0) target = $region13
    $region12: #{transformer_forward.38} parent=1 // pred_region
      %s43 = ssub.s32 16, 16
      %44 = vsyncadd [#allocation6], %s43
      %s46 = sshll.u32 [#allocation7], 4
      %s47 = int_to_ptr.vmem [resolvable:$true] %s46
      %49 = dma.hbm_to_vmem [thread:$0]  %s2, 16, %s47, [#allocation6]
    $region13: #{transformer_forward.38} parent=1 // pred_fallthru
      _
    // Predicated region
    $region14: #{transformer_forward.38} parent=1 // pred_check
      _
    $region15: #{transformer_forward.38} parent=1 // pred_check_branch
      %51 = sbr.rel (0) target = $region17
    $region16: #{transformer_forward.38} parent=1 // pred_region
      %s53 = ssub.s32 128, 128
      %54 = vsyncadd [#allocation9], %s53
      %s55 = sshll.u32 [#allocation8], 4
      %s56 = int_to_ptr.vmem [resolvable:$true] %s55
      %61 = dma.hbm_to_vmem [thread:$0]  %s3, 128, %s56, [#allocation9], 64, 64, 4
    $region17: #{transformer_forward.38} parent=1 // pred_fallthru
      _
    // Predicated region
    $region18: #{transformer_forward.38} parent=1 // pred_check
      _
    $region19: #{transformer_forward.38} parent=1 // pred_check_branch
      %63 = sbr.rel (0) target = $region21
    $region20: #{transformer_forward.38} parent=1 // pred_region
      %s65 = ssub.s32 16, 16
      %66 = vsyncadd [#allocation9], %s65
      %s68 = sshll.u32 [#allocation10], 4
      %s69 = int_to_ptr.vmem [resolvable:$true] %s68
      %71 = dma.hbm_to_vmem [thread:$0]  %s4, 16, %s69, [#allocation9]
    $region21: #{transformer_forward.38} parent=1 // pred_fallthru
      _
    // Predicated region
    $region22: #{transformer_forward.38} parent=1 // pred_check
      _
    $region23: #{transformer_forward.38} parent=1 // pred_check_branch
      %73 = sbr.rel (0) target = $region25
    $region24: #{transformer_forward.38} parent=1 // pred_region
      %s75 = ssub.s32 16, 16
      %76 = vsyncadd [#allocation12], %s75
      %s78 = sshll.u32 [#allocation11], 4
      %s79 = int_to_ptr.vmem [resolvable:$true] %s78
      %81 = dma.hbm_to_vmem [thread:$0]  %s5, 16, %s79, [#allocation12]
    $region25: #{transformer_forward.38} parent=1 // pred_fallthru
      _
    // Predicated region
    $region26: #{transformer_forward.38} parent=1 // pred_check
      _
    $region27: #{transformer_forward.38} parent=1 // pred_check_branch
      %83 = sbr.rel (0) target = $region29
    $region28: #{transformer_forward.38} parent=1 // pred_region
      %84 = dma.done [#allocation3], 128
    $region29: #{transformer_forward.38} parent=1 // pred_fallthru
      _
    // Predicated region
    $region30: #{transformer_forward.38} parent=1 // pred_check
      _
    $region31: #{transformer_forward.38} parent=1 // pred_check_branch
      %86 = sbr.rel (0) target = $region33
    $region32: #{transformer_forward.38} parent=1 // pred_region
      %87 = dma.done [#allocation6], 1024
    $region33: #{transformer_forward.38} parent=1 // pred_fallthru
      _
    // Predicated region
    $region34: #{transformer_forward.38} parent=1 // pred_check
      _
    $region35: #{transformer_forward.38} parent=1 // pred_check_branch
      %89 = sbr.rel (0) target = $region37
    $region36: #{transformer_forward.38} parent=1 // pred_region
      %90 = dma.done [#allocation6], 16
    $region37: #{transformer_forward.38} parent=1 // pred_fallthru
      _
    // Predicated region
    $region38: #{transformer_forward.38} parent=1 // pred_check
      _
    $region39: #{transformer_forward.38} parent=1 // pred_check_branch
      %92 = sbr.rel (0) target = $region41
    $region40: #{transformer_forward.38} parent=1 // pred_region
      %93 = dma.done [#allocation9], 128
    $region41: #{transformer_forward.38} parent=1 // pred_fallthru
      _
    // Predicated region
    $region42: #{transformer_forward.38} parent=1 // pred_check
      _
    $region43: #{transformer_forward.38} parent=1 // pred_check_branch
      %95 = sbr.rel (0) target = $region45
    $region44: #{transformer_forward.38} parent=1 // pred_region
      %96 = dma.done [#allocation9], 16
    $region45: #{transformer_forward.38} parent=1 // pred_fallthru
      _
    // Predicated region
    $region46: #{transformer_forward.38} parent=1 // pred_check
      _
    $region47: #{transformer_forward.38} parent=1 // pred_check_branch
      %98 = sbr.rel (0) target = $region49
    $region48: #{transformer_forward.38} parent=1 // pred_region
      %99 = dma.done [#allocation12], 16
    $region49: #{transformer_forward.38} parent=1 // pred_fallthru
      _
    %v101 = vld [vmem:[#allocation2] sm:$0xf]
    %v102 = vld [vmem:[#allocation2 + $0x4] sm:$0xf]
    %v103 = vld [vmem:[#allocation5] sm:$0xf]
    %v104 = vld [vmem:[#allocation5 + $0x4] sm:$0xf]
    %v105 = vld [vmem:[#allocation5 + $0x8] sm:$0xf]
    %v106 = vld [vmem:[#allocation5 + $0xc] sm:$0xf]
    %v107 = vld [vmem:[#allocation5 + $0x10] sm:$0xf]
    %v108 = vld [vmem:[#allocation5 + $0x14] sm:$0xf]
    %v109 = vld [vmem:[#allocation5 + $0x18] sm:$0xf]
    %v110 = vld [vmem:[#allocation5 + $0x1c] sm:$0xf]
    %v111 = vld [vmem:[#allocation5 + $0x20] sm:$0xf]
    %v112 = vld [vmem:[#allocation5 + $0x24] sm:$0xf]
    %v113 = vld [vmem:[#allocation5 + $0x28] sm:$0xf]
    %v114 = vld [vmem:[#allocation5 + $0x2c] sm:$0xf]
    %v115 = vld [vmem:[#allocation5 + $0x30] sm:$0xf]
    %v116 = vld [vmem:[#allocation5 + $0x34] sm:$0xf]
    %v117 = vld [vmem:[#allocation5 + $0x38] sm:$0xf]
    %v118 = vld [vmem:[#allocation5 + $0x3c] sm:$0xf]
    %v119 = vld [vmem:[#allocation7] sm:$0x1]
    %v121 = vlaneseq
    %v122 = vshrl.u32 %v121, 7
    %v123 = vsub.s32 0, %v122
    %v124 = vrot.slane %v119, %v123
    %v128 = vunpack.c.l.b16 %v101
    %v129 = vunpack.c.l.b16 %v102
    %v130 = vpack.c.b16 %v129, %v128
    %v148 = vunpack.c.l.b16 %v103
    %v149 = vunpack.c.l.b16 %v104
    %v150 = vunpack.c.l.b16 %v105
    %v151 = vunpack.c.l.b16 %v106
    %v152 = vunpack.c.l.b16 %v107
    %v153 = vunpack.c.l.b16 %v108
    %v154 = vunpack.c.l.b16 %v109
    %v155 = vunpack.c.l.b16 %v110
    %v156 = vunpack.c.l.b16 %v111
    %v157 = vunpack.c.l.b16 %v112
    %v158 = vunpack.c.l.b16 %v113
    %v159 = vunpack.c.l.b16 %v114
    %v160 = vunpack.c.l.b16 %v115
    %v161 = vunpack.c.l.b16 %v116
    %v162 = vunpack.c.l.b16 %v117
    %v163 = vunpack.c.l.b16 %v118
    %v164 = vpack.c.b16 %v149, %v148
    %v165 = vpack.c.b16 %v151, %v150
    %v166 = vpack.c.b16 %v153, %v152
    %v167 = vpack.c.b16 %v155, %v154
    %v168 = vpack.c.b16 %v157, %v156
    %v169 = vpack.c.b16 %v159, %v158
    %v170 = vpack.c.b16 %v161, %v160
    %v171 = vpack.c.b16 %v163, %v162
    %180 = vmatprep.subr.bf16.mxu0 0
    %181 = vmatpush1.bf16.msra.mxu0 %v164
    %182 = vmatprep.subr.bf16.mxu0 0
    %183 = vmatpush1.bf16.msra.mxu0 %v165
    %184 = vmatprep.subr.bf16.mxu0 0
    %185 = vmatpush1.bf16.msra.mxu0 %v166
    %186 = vmatprep.subr.bf16.mxu0 0
    %187 = vmatpush1.bf16.msra.mxu0 %v167
    %188 = vmatprep.subr.bf16.mxu0 0
    %189 = vmatpush1.bf16.msra.mxu0 %v168
    %190 = vmatprep.subr.bf16.mxu0 0
    %191 = vmatpush1.bf16.msra.mxu0 %v169
    %192 = vmatprep.subr.bf16.mxu0 0
    %193 = vmatpush1.bf16.msra.mxu0 %v170
    %194 = vmatprep.subr.bf16.mxu0 0
    %195 = vmatpush1.bf16.msra.mxu0 %v171
    %196 = vmatprep.subr.bf16.mxu0 0
    %197 = vmatpush1.bf16.msra.mxu0 0
    %198 = vmatprep.subr.bf16.mxu0 0
    %199 = vmatpush1.bf16.msra.mxu0 0
    %200 = vmatprep.subr.bf16.mxu0 0
    %201 = vmatpush1.bf16.msra.mxu0 0
    %202 = vmatprep.subr.bf16.mxu0 0
    %203 = vmatpush1.bf16.msra.mxu0 0
    %204 = vmatprep.subr.bf16.mxu0 0
    %205 = vmatpush1.bf16.msra.mxu0 0
    %206 = vmatprep.subr.bf16.mxu0 0
    %207 = vmatpush1.bf16.msra.mxu0 0
    %208 = vmatprep.subr.bf16.mxu0 0
    %209 = vmatpush1.bf16.msra.mxu0 0
    %210 = vmatprep.subr.bf16.mxu0 0
    %211 = vmatpush1.bf16.msra.mxu0 0
    %212 = vmatprep.mubr.bf16.mxu0 0
    %213 = vmatmul.mubr.bf16.gmra.mrb[0].mxu0 %v130
    %v214 = vpop.f32.mrb[0].mxu0
    %v215 = vadd.f32 %v124, %v214
    %v216 = vpop.f32.mrb[0].mxu0
    %v217 = vpop.f32.mrb[0].mxu0
    %v218 = vadd.f32 %v124, %v217
    %v219 = vpop.f32.mrb[0].mxu0
    %220 = vdwg.mxu0
    %v221 = vld [vmem:[#allocation8] sm:$0xf]
    %v222 = vld [vmem:[#allocation8 + $0x4] sm:$0xf]
    %v223 = vunpack.c.l.bf16 %v221
    %v224 = vunpack.c.l.bf16 %v222
    %v225 = vadd.f32 %v215, %v223
    %v226 = vadd.f32 %v218, %v224
    %227 = vadd.xlane.f32.xlu0 %v225
    %v228 = vpop.xlane.xlu0 %227
    %229 = vadd.xlane.f32.xlu0 %v226
    %v230 = vpop.xlane.xlu0 %229
    %v231 = vrcp.pop 128.0
    %v232 = vmul.f32 %v228, %v231
    %v233 = vmul.f32 %v230, %v231
    %v234 = vsub.f32 %v225, %v232
    %v235 = vsub.f32 %v226, %v233
    %v236 = vmul.f32 %v234, %v234
    %v237 = vmul.f32 %v235, %v235
    %238 = vadd.xlane.f32.xlu0 %v236
    %v239 = vpop.xlane.xlu0 %238
    %240 = vadd.xlane.f32.xlu0 %v237
    %v241 = vpop.xlane.xlu0 %240
    %v242 = vmul.f32 %v239, %v231
    %v243 = vmul.f32 %v241, %v231
    %v244 = vadd.f32 %v242, 1e-05
    %v245 = vadd.f32 %v243, 1e-05
    %v246 = vrsqrt.pop %v244
    %v247 = vrsqrt.pop %v245
    %v248 = vmul.f32 %v234, %v246
    %v249 = vmul.f32 %v235, %v247
    %v250 = vld [vmem:[#allocation10] sm:$0x1]
    %v252 = vlaneseq
    %v253 = vshrl.u32 %v252, 7
    %v254 = vsub.s32 0, %v253
    %v255 = vrot.slane %v250, %v254
    %v257 = vmul.f32 %v248, %v255
    %v258 = vmul.f32 %v249, %v255
    %v259 = vld [vmem:[#allocation11] sm:$0x1]
    %v261 = vlaneseq
    %v262 = vshrl.u32 %v261, 7
    %v263 = vsub.s32 0, %v262
    %v264 = vrot.slane %v259, %v263
    %v266 = vadd.f32 %v257, %v264
    %v267 = vadd.f32 %v258, %v264
    %v268 = vpack.c.bf16 %v267, %v266
    %v270 = vunpack.c.l.b16 %v268
    %v271 = vunpack.c.h.b16 %v268
    %v272 = vpack.c.b16 %v270, %v270
    %v273 = vpack.c.b16 %v271, %v271
    %276 = vst [vmem:[#allocation13] sm:$0xf] %v272
    %277 = vst [vmem:[#allocation13 + $0x4] sm:$0xf] %v273
    // Predicated region
    $region50: #{transformer_forward.38} parent=1 // pred_check
      _
    $region51: #{transformer_forward.38} parent=1 // pred_check_branch
      %279 = sbr.rel (0) target = $region53
    $region52: #{transformer_forward.38} parent=1 // pred_region
      %s281 = ssub.s32 128, 128
      %282 = vsyncadd [#allocation4], %s281
      %s283 = sshll.u32 [#allocation13], 4
      %s284 = int_to_ptr.vmem [resolvable:$true] %s283
      %289 = dma.vmem_to_hbm [thread:$0]  %s284, 128, %s6, [#allocation4], 64, 64, 4
    $region53: #{transformer_forward.38} parent=1 // pred_fallthru
      _
    // Predicated region
    $region54: #{transformer_forward.38} parent=1 // pred_check
      _
    $region55: #{transformer_forward.38} parent=1 // pred_check_branch
      %291 = sbr.rel (0) target = $region57
    $region56: #{transformer_forward.38} parent=1 // pred_region
      %292 = dma.done [#allocation4], 128
    $region57: #{transformer_forward.38} parent=1 // pred_fallthru
      _
    %293 = vsyncpa [#allocation3], 1
    %294 = vsyncpa [#allocation6], 1
    %295 = vsyncpa [#allocation9], 1
    %296 = vsyncpa [#allocation12], 1
    %297 = vsyncpa [#allocation4], 1

// kernel: transformer_forward.52
$region0: #{transformer_forward.52}
  #allocation0 [shape = 'u32[]', space=smem, size = 0x4, offset = 0x4, fixed_abs, tag = 'smem constant byte address 0x4 - core index']
  #allocation1 [shape = 'u32[144,128]{1,0:T(1,128)}', space=vmem, size = 0x12000, scoped, tag = 'internal scratch']
  %s0 = inlined_call_operand.hbm [shape: bf16[16,128], index: 0, kind: input, shape index: {}]
  %s1 = inlined_call_operand.hbm [shape: f32[1,128], index: 1, kind: input, shape index: {}]
  %s2 = inlined_call_operand.hbm [shape: f32[1,128], index: 2, kind: input, shape index: {}]
  %s3 = inlined_call_operand.hbm [shape: bf16[16,128], index: 3, kind: output, shape index: {}]
  %s4 = sld [smem:[#allocation0]]
  $region34: #{transformer_forward.52} parent=0
    _
  %s6 = ssub.s32 1, %s4
  %s7 = scalar_select 0, %s6, %s4
  $region1: #{transformer_forward.52} parent=0
    #allocation2 [shape = 'u8[4096]{0}', space=vmem, size = 0x1000, scoped, tag = 'input window, operand 0, single buffered']
    #allocation3 [shape = 's32[1]{0}', space=sflag, size = 0x4, scoped, tag = 'scoped memory for transformer_forward.52']
    #allocation4 [shape = 's32[1]{0}', space=sflag, size = 0x4, scoped, tag = 'scoped memory for transformer_forward.52']
    #allocation5 [shape = 'u8[512]{0}', space=vmem, size = 0x400, scoped, tag = 'input window, operand 1, single buffered']
    #allocation6 [shape = 's32[1]{0}', space=sflag, size = 0x4, scoped, tag = 'scoped memory for transformer_forward.52']
    #allocation7 [shape = 'u8[512]{0}', space=vmem, size = 0x400, scoped, tag = 'input window, operand 2, single buffered']
    #allocation8 [shape = 'u8[4096]{0}', space=vmem, size = 0x1000, scoped, tag = 'output window, operand 0, single buffered']
    %8 = vsyncpa [#allocation3], 0
    %9 = vsyncpa [#allocation6], 0
    %10 = vsyncpa [#allocation4], 0
    // Predicated region
    $region2: #{transformer_forward.52} parent=1 // pred_check
      _
    $region3: #{transformer_forward.52} parent=1 // pred_check_branch
      %12 = sbr.rel (0) target = $region5
    $region4: #{transformer_forward.52} parent=1 // pred_region
      %s14 = ssub.s32 128, 128
      %15 = vsyncadd [#allocation3], %s14
      %s16 = sshll.u32 [#allocation2], 4
      %s17 = int_to_ptr.vmem [resolvable:$true] %s16
      %22 = dma.hbm_to_vmem [thread:$0]  %s0, 128, %s17, [#allocation3], 64, 64, 4
    $region5: #{transformer_forward.52} parent=1 // pred_fallthru
      _
    // Predicated region
    $region6: #{transformer_forward.52} parent=1 // pred_check
      _
    $region7: #{transformer_forward.52} parent=1 // pred_check_branch
      %24 = sbr.rel (0) target = $region9
    $region8: #{transformer_forward.52} parent=1 // pred_region
      %s26 = ssub.s32 16, 16
      %27 = vsyncadd [#allocation6], %s26
      %s29 = sshll.u32 [#allocation5], 4
      %s30 = int_to_ptr.vmem [resolvable:$true] %s29
      %32 = dma.hbm_to_vmem [thread:$0]  %s1, 16, %s30, [#allocation6]
    $region9: #{transformer_forward.52} parent=1 // pred_fallthru
      _
    // Predicated region
    $region10: #{transformer_forward.52} parent=1 // pred_check
      _
    $region11: #{transformer_forward.52} parent=1 // pred_check_branch
      %34 = sbr.rel (0) target = $region13
    $region12: #{transformer_forward.52} parent=1 // pred_region
      %s36 = ssub.s32 16, 16
      %37 = vsyncadd [#allocation6], %s36
      %s39 = sshll.u32 [#allocation7], 4
      %s40 = int_to_ptr.vmem [resolvable:$true] %s39
      %42 = dma.hbm_to_vmem [thread:$0]  %s2, 16, %s40, [#allocation6]
    $region13: #{transformer_forward.52} parent=1 // pred_fallthru
      _
    // Predicated region
    $region14: #{transformer_forward.52} parent=1 // pred_check
      _
    $region15: #{transformer_forward.52} parent=1 // pred_check_branch
      %44 = sbr.rel (0) target = $region17
    $region16: #{transformer_forward.52} parent=1 // pred_region
      %45 = dma.done [#allocation3], 128
    $region17: #{transformer_forward.52} parent=1 // pred_fallthru
      _
    // Predicated region
    $region18: #{transformer_forward.52} parent=1 // pred_check
      _
    $region19: #{transformer_forward.52} parent=1 // pred_check_branch
      %47 = sbr.rel (0) target = $region21
    $region20: #{transformer_forward.52} parent=1 // pred_region
      %48 = dma.done [#allocation6], 16
    $region21: #{transformer_forward.52} parent=1 // pred_fallthru
      _
    // Predicated region
    $region22: #{transformer_forward.52} parent=1 // pred_check
      _
    $region23: #{transformer_forward.52} parent=1 // pred_check_branch
      %50 = sbr.rel (0) target = $region25
    $region24: #{transformer_forward.52} parent=1 // pred_region
      %51 = dma.done [#allocation6], 16
    $region25: #{transformer_forward.52} parent=1 // pred_fallthru
      _
    %v52 = vld [vmem:[#allocation2] sm:$0xf]
    %v53 = vld [vmem:[#allocation2 + $0x4] sm:$0xf]
    %v54 = vunpack.c.l.bf16 %v52
    %v55 = vunpack.c.l.bf16 %v53
    %56 = vadd.xlane.f32.xlu0 %v54
    %v57 = vpop.xlane.xlu0 %56
    %58 = vadd.xlane.f32.xlu0 %v55
    %v59 = vpop.xlane.xlu0 %58
    %v60 = vrcp.pop 128.0
    %v61 = vmul.f32 %v57, %v60
    %v62 = vmul.f32 %v59, %v60
    %v63 = vsub.f32 %v54, %v61
    %v64 = vsub.f32 %v55, %v62
    %v65 = vmul.f32 %v63, %v63
    %v66 = vmul.f32 %v64, %v64
    %67 = vadd.xlane.f32.xlu0 %v65
    %v68 = vpop.xlane.xlu0 %67
    %69 = vadd.xlane.f32.xlu0 %v66
    %v70 = vpop.xlane.xlu0 %69
    %v71 = vmul.f32 %v68, %v60
    %v72 = vmul.f32 %v70, %v60
    %v73 = vadd.f32 %v71, 1e-05
    %v74 = vadd.f32 %v72, 1e-05
    %v75 = vrsqrt.pop %v73
    %v76 = vrsqrt.pop %v74
    %v77 = vmul.f32 %v63, %v75
    %v78 = vmul.f32 %v64, %v76
    %v79 = vld [vmem:[#allocation5] sm:$0x1]
    %v81 = vlaneseq
    %v82 = vshrl.u32 %v81, 7
    %v83 = vsub.s32 0, %v82
    %v84 = vrot.slane %v79, %v83
    %v86 = vmul.f32 %v77, %v84
    %v87 = vmul.f32 %v78, %v84
    %v88 = vld [vmem:[#allocation7] sm:$0x1]
    %v90 = vlaneseq
    %v91 = vshrl.u32 %v90, 7
    %v92 = vsub.s32 0, %v91
    %v93 = vrot.slane %v88, %v92
    %v95 = vadd.f32 %v86, %v93
    %v96 = vadd.f32 %v87, %v93
    %v97 = vpack.c.bf16 %v96, %v95
    %v99 = vunpack.c.l.b16 %v97
    %v100 = vunpack.c.h.b16 %v97
    %v101 = vpack.c.b16 %v99, %v99
    %v102 = vpack.c.b16 %v100, %v100
    %105 = vst [vmem:[#allocation8] sm:$0xf] %v101
    %106 = vst [vmem:[#allocation8 + $0x4] sm:$0xf] %v102
    // Predicated region
    $region26: #{transformer_forward.52} parent=1 // pred_check
      _
    $region27: #{transformer_forward.52} parent=1 // pred_check_branch
      %108 = sbr.rel (0) target = $region29
    $region28: #{transformer_forward.52} parent=1 // pred_region
      %s110 = ssub.s32 128, 128
      %111 = vsyncadd [#allocation4], %s110
      %s112 = sshll.u32 [#allocation8], 4
      %s113 = int_to_ptr.vmem [resolvable:$true] %s112
      %118 = dma.vmem_to_hbm [thread:$0]  %s113, 128, %s3, [#allocation4], 64, 64, 4
    $region29: #{transformer_forward.52} parent=1 // pred_fallthru
      _
    // Predicated region
    $region30: #{transformer_forward.52} parent=1 // pred_check
      _
    $region31: #{transformer_forward.52} parent=1 // pred_check_branch
      %120 = sbr.rel (0) target = $region33
    $region32: #{transformer_forward.52} parent=1 // pred_region
      %121 = dma.done [#allocation4], 128
    $region33: #{transformer_forward.52} parent=1 // pred_fallthru
      _
    %122 = vsyncpa [#allocation3], 1
    %123 = vsyncpa [#allocation6], 1
    %124 = vsyncpa [#allocation4], 1

// kernel: transformer_forward.41
$region0: #{transformer_forward.41}
  #allocation0 [shape = 'u32[]', space=smem, size = 0x4, offset = 0x4, fixed_abs, tag = 'smem constant byte address 0x4 - core index']
  #allocation1 [shape = 'u32[144,128]{1,0:T(1,128)}', space=vmem, size = 0x12000, scoped, tag = 'internal scratch']
  %s0 = inlined_call_operand.hbm [shape: bf16[2,8,128], index: 0, kind: input, shape index: {}]
  %s1 = inlined_call_operand.hbm [shape: bf16[2,12,256], index: 1, kind: input, shape index: {}]
  %s2 = inlined_call_operand.hbm [shape: bf16[2,8,128], index: 2, kind: output, shape index: {}]
  %s3 = sld [smem:[#allocation0]]
  $region49: #{transformer_forward.41} parent=0
    _
  %s5 = ssub.s32 1, %s3
  %s6 = scalar_select 0, %s5, %s3
  $region1: #{transformer_forward.41} parent=0
    #allocation2 [shape = 'u8[4096]{0}', space=vmem, size = 0x1000, scoped, tag = 'input window, operand 0']
    #allocation3 [shape = 's32[2]{0}', space=sflag, size = 0x8, scoped, tag = 'scoped memory for transformer_forward.41']
    #allocation4 [shape = 's32[2]{0}', space=sflag, size = 0x8, scoped, tag = 'scoped memory for transformer_forward.41']
    #allocation5 [shape = 'u8[16384]{0}', space=vmem, size = 0x4000, scoped, tag = 'input window, operand 1']
    #allocation6 [shape = 's32[2]{0}', space=sflag, size = 0x8, scoped, tag = 'scoped memory for transformer_forward.41']
    #allocation7 [shape = 'u8[4096]{0}', space=vmem, size = 0x1000, scoped, tag = 'output window, operand 0']
    %7 = vsyncpa [#allocation3], 0
    %s8 = scalar_lea.sflag [#allocation3], 1
    %9 = vsyncpa %s8, 0
    %10 = vsyncpa [#allocation6], 0
    %s11 = scalar_lea.sflag [#allocation6], 1
    %12 = vsyncpa %s11, 0
    %13 = vsyncpa [#allocation4], 0
    %s14 = scalar_lea.sflag [#allocation4], 1
    %15 = vsyncpa %s14, 0
    loop: start=0, step=1, limit=4
    $region2: #{transformer_forward.41} parent=1 // loop_pre_header
      _
    $region3: #{transformer_forward.41} parent=1 // loop_header
      %s17 = sphi 0, %s21
      %p18 = scmp.ge.s32.totalorder %s17, 4
      %s27 = sphi 0, %s29
      %s30 = sphi 0, %s27
      %s31 = sphi 0, %s30
      %s47 = sphi 0, %s31
      %s53 = sphi 0, %s55
      %s56 = sphi 0, %s53
      %s57 = sphi 0, %s56
      %s73 = sphi 0, %s57
      %s79 = sphi 0, %s81
      %s82 = sphi 0, %s79
      %s83 = sphi 0, %s82
      %s99 = sphi 0, %s83
    $region4: #{transformer_forward.41} parent=1 // loop_header_branch
      %20 = sbr.rel (%p18) target = $region8
    $region5: #{transformer_forward.41} parent=1 // loop_body
      %s22 = ssub.s32 %s17, 1
      %s23 = ssub.s32 %s17, 2
      %s24 = sadd.s32 %s17, 1
      %s25 = ssub.s32 %s17, %s24
      %p26 = scmp.eq.s32.totalorder %s25, 0
      %s28 = sadd.s32 %s27, 1
      %s29 = scalar_select %p26, %s27, %s28
      %p32 = pneg %p26
      %p33 = scmp.eq.s32.totalorder %s17, 1
      %p34 = por %p32, %p33
      %p35 = scmp.ne.s32.totalorder %s27, %s30
      %p36 = scmp.eq.s32.totalorder %s17, 0
      %p37 = por %p35, %p36
      %p38 = scmp.ne.s32.totalorder %s27, %s30
      %p39 = scmp.eq.s32.totalorder %s22, 1
      %p40 = por %p38, %p39
      %p41 = scmp.ne.s32.totalorder %s30, %s31
      %p42 = scmp.eq.s32.totalorder %s22, 0
      %p43 = por %p41, %p42
      %p44 = scmp.ne.s32.totalorder %s30, %s31
      %p45 = scmp.eq.s32.totalorder %s23, 1
      %p46 = por %p44, %p45
      %p48 = scmp.ne.s32.totalorder %s31, %s47
      %p49 = scmp.eq.s32.totalorder %s23, 0
      %p50 = por %p48, %p49
      %s51 = ssub.s32 %s17, %s24
      %p52 = scmp.eq.s32.totalorder %s51, 0
      %s54 = sadd.s32 %s53, 1
      %s55 = scalar_select %p52, %s53, %s54
      %p58 = pneg %p52
      %p59 = scmp.eq.s32.totalorder %s17, 1
      %p60 = por %p58, %p59
      %p61 = scmp.ne.s32.totalorder %s53, %s56
      %p62 = scmp.eq.s32.totalorder %s17, 0
      %p63 = por %p61, %p62
      %p64 = scmp.ne.s32.totalorder %s53, %s56
      %p65 = scmp.eq.s32.totalorder %s22, 1
      %p66 = por %p64, %p65
      %p67 = scmp.ne.s32.totalorder %s56, %s57
      %p68 = scmp.eq.s32.totalorder %s22, 0
      %p69 = por %p67, %p68
      %p70 = scmp.ne.s32.totalorder %s56, %s57
      %p71 = scmp.eq.s32.totalorder %s23, 1
      %p72 = por %p70, %p71
      %p74 = scmp.ne.s32.totalorder %s57, %s73
      %p75 = scmp.eq.s32.totalorder %s23, 0
      %p76 = por %p74, %p75
      %s77 = ssub.s32 %s17, %s24
      %p78 = scmp.eq.s32.totalorder %s77, 0
      %s80 = sadd.s32 %s79, 1
      %s81 = scalar_select %p78, %s79, %s80
      %p84 = pneg %p78
      %p85 = scmp.eq.s32.totalorder %s17, 1
      %p86 = por %p84, %p85
      %p87 = scmp.ne.s32.totalorder %s79, %s82
      %p88 = scmp.eq.s32.totalorder %s17, 0
      %p89 = por %p87, %p88
      %p90 = scmp.ne.s32.totalorder %s79, %s82
      %p91 = scmp.eq.s32.totalorder %s22, 1
      %p92 = por %p90, %p91
      %p93 = scmp.ne.s32.totalorder %s82, %s83
      %p94 = scmp.eq.s32.totalorder %s22, 0
      %p95 = por %p93, %p94
      %p96 = scmp.ne.s32.totalorder %s82, %s83
      %p97 = scmp.eq.s32.totalorder %s23, 1
      %p98 = por %p96, %p97
      %p100 = scmp.ne.s32.totalorder %s83, %s99
      %p101 = scmp.eq.s32.totalorder %s23, 0
      %p102 = por %p100, %p101
      %p103 = scmp.le.s32.totalorder 1, %s17
      %p104 = scmp.lt.s32.totalorder %s17, 3
      %p105 = pnand %p103, %p104
      %p106 = pneg %p105
      // Predicated region
      $region9: #{transformer_forward.41} parent=5 // pred_check
        _
      $region10: #{transformer_forward.41} parent=5 // pred_check_branch
        %108 = sbr.rel (%p105) target = $region12
      $region11: #{transformer_forward.41} parent=5 // pred_region
        %s109 = ssub.s32 %s17, 1
      $region12: #{transformer_forward.41} parent=5 // pred_fallthru
        _
      %p110 = scmp.lt.s32.totalorder %s17, 2
      // Predicated region
      $region13: #{transformer_forward.41} parent=5 // pred_check
        %p111 = pneg %p110
      $region14: #{transformer_forward.41} parent=5 // pred_check_branch
        %113 = sbr.rel (%p111) target = $region16
      $region15: #{transformer_forward.41} parent=5 // pred_region
        // Predicated region
        $region17: #{transformer_forward.41} parent=15 // pred_check
          %p114 = pneg %p37
        $region18: #{transformer_forward.41} parent=15 // pred_check_branch
          %116 = sbr.rel (%p114) target = $region20
        $region19: #{transformer_forward.41} parent=15 // pred_region
          %s117 = sand.u32 %s27, 1
          %s118 = scalar_lea.sflag [#allocation3], %s117
          %s119 = sand.u32 %s27, 1
          %s120 = smul.addr %s119, 4
          %s121 = scalar_lea.vmem [#allocation2], %s120
          %s123 = ssub.s32 64, 64
          %124 = vsyncadd %s118, %s123
          %s125 = smul.addr %s17, 64
          %s126 = scalar_lea.hbm %s0, %s125
          %s128 = sshll.u32 %s121, 4
          %s129 = int_to_ptr.vmem [resolvable:$true] %s128
          %131 = dma.hbm_to_vmem [thread:$0]  %s126, 64, %s129, %s118
        $region20: #{transformer_forward.41} parent=15 // pred_fallthru
          _
        // Predicated region
        $region21: #{transformer_forward.41} parent=15 // pred_check
          %p132 = pneg %p63
        $region22: #{transformer_forward.41} parent=15 // pred_check_branch
          %134 = sbr.rel (%p132) target = $region24
        $region23: #{transformer_forward.41} parent=15 // pred_region
          %s135 = sand.u32 %s53, 1
          %s136 = scalar_lea.sflag [#allocation6], %s135
          %s137 = sand.u32 %s53, 1
          %s138 = smul.addr %s137, 16
          %s139 = scalar_lea.vmem [#allocation5], %s138
          %s141 = ssub.s32 256, 256
          %142 = vsyncadd %s136, %s141
          %s143 = smul.addr %s17, 4
          %s144 = smul.addr %s143, 64
          %s145 = scalar_lea.hbm %s1, %s144
          %s146 = sshll.u32 %s139, 4
          %s147 = int_to_ptr.vmem [resolvable:$true] %s146
          %152 = dma.hbm_to_vmem [thread:$0]  %s145, 256, %s147, %s136, 128, 128, 8
        $region24: #{transformer_forward.41} parent=15 // pred_fallthru
          _
      $region16: #{transformer_forward.41} parent=5 // pred_fallthru
        _
      %p153 = scmp.le.s32.totalorder 1, %s17
      %p154 = scmp.lt.s32.totalorder %s17, 3
      %p155 = pnand %p153, %p154
      %p156 = pneg %p155
      // Predicated region
      $region25: #{transformer_forward.41} parent=5 // pred_check
        _
      $region26: #{transformer_forward.41} parent=5 // pred_check_branch
        %158 = sbr.rel (%p155) target = $region28
      $region27: #{transformer_forward.41} parent=5 // pred_region
        %s159 = ssub.s32 %s17, 1
        %s160 = sand.u32 %s30, 1
        %s161 = scalar_lea.sflag [#allocation3], %s160
        %s162 = sand.u32 %s30, 1
        %s163 = smul.addr %s162, 4
        %s164 = scalar_lea.vmem [#allocation2], %s163
        // Predicated region
        $region29: #{transformer_forward.41} parent=27 // pred_check
          %p165 = pneg %p43
        $region30: #{transformer_forward.41} parent=27 // pred_check_branch
          %167 = sbr.rel (%p165) target = $region32
        $region31: #{transformer_forward.41} parent=27 // pred_region
          %168 = dma.done %s161, 64
        $region32: #{transformer_forward.41} parent=27 // pred_fallthru
          _
        %s169 = sand.u32 %s56, 1
        %s170 = scalar_lea.sflag [#allocation6], %s169
        %s171 = sand.u32 %s56, 1
        %s172 = smul.addr %s171, 16
        %s173 = scalar_lea.vmem [#allocation5], %s172
        // Predicated region
        $region33: #{transformer_forward.41} parent=27 // pred_check
          %p174 = pneg %p69
        $region34: #{transformer_forward.41} parent=27 // pred_check_branch
          %176 = sbr.rel (%p174) target = $region36
        $region35: #{transformer_forward.41} parent=27 // pred_region
          %177 = dma.done %s170, 256
        $region36: #{transformer_forward.41} parent=27 // pred_fallthru
          _
        %s178 = sand.u32 %s30, 1
        %s179 = scalar_lea.sflag [#allocation3], %s178
        %s180 = sand.u32 %s30, 1
        %s181 = smul.addr %s180, 4
        %s182 = scalar_lea.vmem [#allocation2], %s181
        %p183 = pneg %p43
        %p184 = pneg %p40
        %s185 = sand.u32 %s56, 1
        %s186 = scalar_lea.sflag [#allocation6], %s185
        %s187 = sand.u32 %s56, 1
        %s188 = smul.addr %s187, 16
        %s189 = scalar_lea.vmem [#allocation5], %s188
        %p190 = pneg %p69
        %p191 = pneg %p66
        %p192 = pneg %p95
        %p193 = pneg %p92
        %s194 = sand.u32 %s82, 1
        %s195 = scalar_lea.sflag [#allocation4], %s194
        %s196 = sand.u32 %s82, 1
        %s197 = smul.addr %s196, 4
        %s198 = scalar_lea.vmem [#allocation7], %s197
        %v200 = vld [vmem:[%s164] sm:$0xf]
        %v201 = vld [vmem:[%s173] sm:$0xff]
        %v202 = vld [vmem:[%s173 + $0x8] sm:$0x33]
        %v205 = vunpack.c.l.b16 %v201
        %v206 = vunpack.c.l.b16 %v202
        %v207 = vpack.c.b16 %v206, %v205
        %vm208 = vcmask 261120
        %v210 = vsel %vm208, %v200, 0
        %v213 = vsel %vm208, %v207, 0
        %215 = vmatprep.subr.bf16.mxu0 0
        %216 = vmatpush1.bf16.xpose.msra.mxu0 %v213
        %217 = vmatprep.subr.bf16.mxu0 0
        %218 = vmatpush1.bf16.xpose.msra.mxu0 0
        %219 = vmatprep.subr.bf16.mxu0 0
        %220 = vmatpush1.bf16.xpose.msra.mxu0 0
        %221 = vmatprep.subr.bf16.mxu0 0
        %222 = vmatpush1.bf16.xpose.msra.mxu0 0
        %223 = vmatprep.subr.bf16.mxu0 0
        %224 = vmatpush1.bf16.xpose.msra.mxu0 0
        %225 = vmatprep.subr.bf16.mxu0 0
        %226 = vmatpush1.bf16.xpose.msra.mxu0 0
        %227 = vmatprep.subr.bf16.mxu0 0
        %228 = vmatpush1.bf16.xpose.msra.mxu0 0
        %229 = vmatprep.subr.bf16.mxu0 0
        %230 = vmatpush1.bf16.xpose.msra.mxu0 0
        %231 = vmatprep.subr.bf16.mxu0 0
        %232 = vmatpush1.bf16.xpose.msra.mxu0 0
        %233 = vmatprep.subr.bf16.mxu0 0
        %234 = vmatpush1.bf16.xpose.msra.mxu0 0
        %235 = vmatprep.subr.bf16.mxu0 0
        %236 = vmatpush1.bf16.xpose.msra.mxu0 0
        %237 = vmatprep.subr.bf16.mxu0 0
        %238 = vmatpush1.bf16.xpose.msra.mxu0 0
        %239 = vmatprep.subr.bf16.mxu0 0
        %240 = vmatpush1.bf16.xpose.msra.mxu0 0
        %241 = vmatprep.subr.bf16.mxu0 0
        %242 = vmatpush1.bf16.xpose.msra.mxu0 0
        %243 = vmatprep.subr.bf16.mxu0 0
        %244 = vmatpush1.bf16.xpose.msra.mxu0 0
        %245 = vmatprep.subr.bf16.mxu0 0
        %246 = vmatpush1.bf16.xpose.msra.mxu0 0
        %247 = vmatprep.mubr.bf16.mxu0 0
        %248 = vmatmul.mubr.bf16.gmra.mrb[0].mxu0 %v210
        %v249 = vpop.f32.mrb[0].mxu0
        %v250 = vadd.f32 0.0, %v249
        %v251 = vpop.f32.mrb[0].mxu0
        %v252 = vpop.f32.mrb[0].mxu0
        %v253 = vpop.f32.mrb[0].mxu0
        %254 = vdwg.mxu0
        %v255 = vmul.f32 %v250, 0.17677669
        %vm256 = vcmask 97280
        %v257 = vsel %vm256, %v255, -inf
        %258 = vmax.xlane.f32.xlu0 %v257
        %v259 = vpop.xlane.xlu0 %258
        %v260 = vsub.f32 %v255, %v259
        %v261 = vmul.f32 %v260, 1.442695
        %v262 = vpow.pop %v261
        %v263 = vsel %vm256, %v262, 0.0
        %264 = vadd.xlane.f32.xlu0 %v263
        %v265 = vpop.xlane.xlu0 %264
        %v266 = vpack.c.bf16 %v262, %v262
        %v267 = vunpack.c.h.b16 %v201
        %v268 = vunpack.c.h.b16 %v202
        %v269 = vpack.c.b16 %v268, %v267
        %v271 = vsel %vm256, %v266, 0
        %vm273 = vcmask 1045504
        %v275 = vsel %vm273, %v269, 0
        %277 = vmatprep.subr.bf16.mxu0 0
        %278 = vmatpush1.bf16.msra.mxu0 %v275
        %279 = vmatprep.subr.bf16.mxu0 0
        %280 = vmatpush1.bf16.msra.mxu0 0
        %281 = vmatprep.subr.bf16.mxu0 0
        %282 = vmatpush1.bf16.msra.mxu0 0
        %283 = vmatprep.subr.bf16.mxu0 0
        %284 = vmatpush1.bf16.msra.mxu0 0
        %285 = vmatprep.subr.bf16.mxu0 0
        %286 = vmatpush1.bf16.msra.mxu0 0
        %287 = vmatprep.subr.bf16.mxu0 0
        %288 = vmatpush1.bf16.msra.mxu0 0
        %289 = vmatprep.subr.bf16.mxu0 0
        %290 = vmatpush1.bf16.msra.mxu0 0
        %291 = vmatprep.subr.bf16.mxu0 0
        %292 = vmatpush1.bf16.msra.mxu0 0
        %293 = vmatprep.subr.bf16.mxu0 0
        %294 = vmatpush1.bf16.msra.mxu0 0
        %295 = vmatprep.subr.bf16.mxu0 0
        %296 = vmatpush1.bf16.msra.mxu0 0
        %297 = vmatprep.subr.bf16.mxu0 0
        %298 = vmatpush1.bf16.msra.mxu0 0
        %299 = vmatprep.subr.bf16.mxu0 0
        %300 = vmatpush1.bf16.msra.mxu0 0
        %301 = vmatprep.subr.bf16.mxu0 0
        %302 = vmatpush1.bf16.msra.mxu0 0
        %303 = vmatprep.subr.bf16.mxu0 0
        %304 = vmatpush1.bf16.msra.mxu0 0
        %305 = vmatprep.subr.bf16.mxu0 0
        %306 = vmatpush1.bf16.msra.mxu0 0
        %307 = vmatprep.subr.bf16.mxu0 0
        %308 = vmatpush1.bf16.msra.mxu0 0
        %309 = vmatprep.mubr.bf16.mxu0 0
        %310 = vmatmul.mubr.bf16.gmra.mrb[0].mxu0 %v271
        %v311 = vpop.f32.mrb[0].mxu0
        %v312 = vadd.f32 0.0, %v311
        %v313 = vpop.f32.mrb[0].mxu0
        %v314 = vpop.f32.mrb[0].mxu0
        %v315 = vpop.f32.mrb[0].mxu0
        %316 = vdwg.mxu0
        %v317 = vrcp.pop %v265
        %v318 = vmul.f32 %v312, %v317
        %v320 = vunpack.c.l.b16 %v200
        %v321 = vpack.c.b16 %v320, %v320
        %322 = vrot.lane.b32.xlu0 %v321, 96
        %v323 = vpop.permute.xlu0 %322
        %324 = vrot.lane.b32.xlu0 %v207, 96
        %v325 = vpop.permute.xlu0 %324
        %v327 = vsel %vm208, %v323, 0
        %v330 = vsel %vm208, %v325, 0
        %332 = vmatprep.subr.bf16.mxu0 0
        %333 = vmatpush1.bf16.xpose.msra.mxu0 %v330
        %334 = vmatprep.subr.bf16.mxu0 0
        %335 = vmatpush1.bf16.xpose.msra.mxu0 0
        %336 = vmatprep.subr.bf16.mxu0 0
        %337 = vmatpush1.bf16.xpose.msra.mxu0 0
        %338 = vmatprep.subr.bf16.mxu0 0
        %339 = vmatpush1.bf16.xpose.msra.mxu0 0
        %340 = vmatprep.subr.bf16.mxu0 0
        %341 = vmatpush1.bf16.xpose.msra.mxu0 0
        %342 = vmatprep.subr.bf16.mxu0 0
        %343 = vmatpush1.bf16.xpose.msra.mxu0 0
        %344 = vmatprep.subr.bf16.mxu0 0
        %345 = vmatpush1.bf16.xpose.msra.mxu0 0
        %346 = vmatprep.subr.bf16.mxu0 0
        %347 = vmatpush1.bf16.xpose.msra.mxu0 0
        %348 = vmatprep.subr.bf16.mxu0 0
        %349 = vmatpush1.bf16.xpose.msra.mxu0 0
        %350 = vmatprep.subr.bf16.mxu0 0
        %351 = vmatpush1.bf16.xpose.msra.mxu0 0
        %352 = vmatprep.subr.bf16.mxu0 0
        %353 = vmatpush1.bf16.xpose.msra.mxu0 0
        %354 = vmatprep.subr.bf16.mxu0 0
        %355 = vmatpush1.bf16.xpose.msra.mxu0 0
        %356 = vmatprep.subr.bf16.mxu0 0
        %357 = vmatpush1.bf16.xpose.msra.mxu0 0
        %358 = vmatprep.subr.bf16.mxu0 0
        %359 = vmatpush1.bf16.xpose.msra.mxu0 0
        %360 = vmatprep.subr.bf16.mxu0 0
        %361 = vmatpush1.bf16.xpose.msra.mxu0 0
        %362 = vmatprep.subr.bf16.mxu0 0
        %363 = vmatpush1.bf16.xpose.msra.mxu0 0
        %364 = vmatprep.mubr.bf16.mxu0 0
        %365 = vmatmul.mubr.bf16.gmra.mrb[0].mxu0 %v327
        %v366 = vpop.f32.mrb[0].mxu0
        %v367 = vadd.f32 0.0, %v366
        %v368 = vpop.f32.mrb[0].mxu0
        %v369 = vpop.f32.mrb[0].mxu0
        %v370 = vpop.f32.mrb[0].mxu0
        %371 = vdwg.mxu0
        %v372 = vmul.f32 %v367, 0.17677669
        %v373 = vsel %vm256, %v372, -inf
        %374 = vmax.xlane.f32.xlu0 %v373
        %v375 = vpop.xlane.xlu0 %374
        %v376 = vsub.f32 %v372, %v375
        %v377 = vmul.f32 %v376, 1.442695
        %v378 = vpow.pop %v377
        %v379 = vsel %vm256, %v378, 0.0
        %380 = vadd.xlane.f32.xlu0 %v379
        %v381 = vpop.xlane.xlu0 %380
        %v382 = vpack.c.bf16 %v378, %v378
        %383 = vrot.lane.b32.xlu0 %v269, 96
        %v384 = vpop.permute.xlu0 %383
        %v386 = vsel %vm256, %v382, 0
        %v389 = vsel %vm273, %v384, 0
        %391 = vmatprep.subr.bf16.mxu0 0
        %392 = vmatpush1.bf16.msra.mxu0 %v389
        %393 = vmatprep.subr.bf16.mxu0 0
        %394 = vmatpush1.bf16.msra.mxu0 0
        %395 = vmatprep.subr.bf16.mxu0 0
        %396 = vmatpush1.bf16.msra.mxu0 0
        %397 = vmatprep.subr.bf16.mxu0 0
        %398 = vmatpush1.bf16.msra.mxu0 0
        %399 = vmatprep.subr.bf16.mxu0 0
        %400 = vmatpush1.bf16.msra.mxu0 0
        %401 = vmatprep.subr.bf16.mxu0 0
        %402 = vmatpush1.bf16.msra.mxu0 0
        %403 = vmatprep.subr.bf16.mxu0 0
        %404 = vmatpush1.bf16.msra.mxu0 0
        %405 = vmatprep.subr.bf16.mxu0 0
        %406 = vmatpush1.bf16.msra.mxu0 0
        %407 = vmatprep.subr.bf16.mxu0 0
        %408 = vmatpush1.bf16.msra.mxu0 0
        %409 = vmatprep.subr.bf16.mxu0 0
        %410 = vmatpush1.bf16.msra.mxu0 0
        %411 = vmatprep.subr.bf16.mxu0 0
        %412 = vmatpush1.bf16.msra.mxu0 0
        %413 = vmatprep.subr.bf16.mxu0 0
        %414 = vmatpush1.bf16.msra.mxu0 0
        %415 = vmatprep.subr.bf16.mxu0 0
        %416 = vmatpush1.bf16.msra.mxu0 0
        %417 = vmatprep.subr.bf16.mxu0 0
        %418 = vmatpush1.bf16.msra.mxu0 0
        %419 = vmatprep.subr.bf16.mxu0 0
        %420 = vmatpush1.bf16.msra.mxu0 0
        %421 = vmatprep.subr.bf16.mxu0 0
        %422 = vmatpush1.bf16.msra.mxu0 0
        %423 = vmatprep.mubr.bf16.mxu0 0
        %424 = vmatmul.mubr.bf16.gmra.mrb[0].mxu0 %v386
        %v425 = vpop.f32.mrb[0].mxu0
        %v426 = vadd.f32 0.0, %v425
        %v427 = vpop.f32.mrb[0].mxu0
        %v428 = vpop.f32.mrb[0].mxu0
        %v429 = vpop.f32.mrb[0].mxu0
        %430 = vdwg.mxu0
        %v431 = vrcp.pop %v381
        %v432 = vmul.f32 %v426, %v431
        %433 = vrot.lane.b32.xlu0 %v321, 64
        %v434 = vpop.permute.xlu0 %433
        %435 = vrot.lane.b32.xlu0 %v207, 64
        %v436 = vpop.permute.xlu0 %435
        %v438 = vsel %vm208, %v434, 0
        %v441 = vsel %vm208, %v436, 0
        %443 = vmatprep.subr.bf16.mxu0 0
        %444 = vmatpush1.bf16.xpose.msra.mxu0 %v441
        %445 = vmatprep.subr.bf16.mxu0 0
        %446 = vmatpush1.bf16.xpose.msra.mxu0 0
        %447 = vmatprep.subr.bf16.mxu0 0
        %448 = vmatpush1.bf16.xpose.msra.mxu0 0
        %449 = vmatprep.subr.bf16.mxu0 0
        %450 = vmatpush1.bf16.xpose.msra.mxu0 0
        %451 = vmatprep.subr.bf16.mxu0 0
        %452 = vmatpush1.bf16.xpose.msra.mxu0 0
        %453 = vmatprep.subr.bf16.mxu0 0
        %454 = vmatpush1.bf16.xpose.msra.mxu0 0
        %455 = vmatprep.subr.bf16.mxu0 0
        %456 = vmatpush1.bf16.xpose.msra.mxu0 0
        %457 = vmatprep.subr.bf16.mxu0 0
        %458 = vmatpush1.bf16.xpose.msra.mxu0 0
        %459 = vmatprep.subr.bf16.mxu0 0
        %460 = vmatpush1.bf16.xpose.msra.mxu0 0
        %461 = vmatprep.subr.bf16.mxu0 0
        %462 = vmatpush1.bf16.xpose.msra.mxu0 0
        %463 = vmatprep.subr.bf16.mxu0 0
        %464 = vmatpush1.bf16.xpose.msra.mxu0 0
        %465 = vmatprep.subr.bf16.mxu0 0
        %466 = vmatpush1.bf16.xpose.msra.mxu0 0
        %467 = vmatprep.subr.bf16.mxu0 0
        %468 = vmatpush1.bf16.xpose.msra.mxu0 0
        %469 = vmatprep.subr.bf16.mxu0 0
        %470 = vmatpush1.bf16.xpose.msra.mxu0 0
        %471 = vmatprep.subr.bf16.mxu0 0
        %472 = vmatpush1.bf16.xpose.msra.mxu0 0
        %473 = vmatprep.subr.bf16.mxu0 0
        %474 = vmatpush1.bf16.xpose.msra.mxu0 0
        %475 = vmatprep.mubr.bf16.mxu0 0
        %476 = vmatmul.mubr.bf16.gmra.mrb[0].mxu0 %v438
        %v477 = vpop.f32.mrb[0].mxu0
        %v478 = vadd.f32 0.0, %v477
        %v479 = vpop.f32.mrb[0].mxu0
        %v480 = vpop.f32.mrb[0].mxu0
        %v481 = vpop.f32.mrb[0].mxu0
        %482 = vdwg.mxu0
        %v483 = vmul.f32 %v478, 0.17677669
        %v484 = vsel %vm256, %v483, -inf
        %485 = vmax.xlane.f32.xlu0 %v484
        %v486 = vpop.xlane.xlu0 %485
        %v487 = vsub.f32 %v483, %v486
        %v488 = vmul.f32 %v487, 1.442695
        %v489 = vpow.pop %v488
        %v490 = vsel %vm256, %v489, 0.0
        %491 = vadd.xlane.f32.xlu0 %v490
        %v492 = vpop.xlane.xlu0 %491
        %v493 = vpack.c.bf16 %v489, %v489
        %494 = vrot.lane.b32.xlu0 %v269, 64
        %v495 = vpop.permute.xlu0 %494
        %v497 = vsel %vm256, %v493, 0
        %v500 = vsel %vm273, %v495, 0
        %502 = vmatprep.subr.bf16.mxu0 0
        %503 = vmatpush1.bf16.msra.mxu0 %v500
        %504 = vmatprep.subr.bf16.mxu0 0
        %505 = vmatpush1.bf16.msra.mxu0 0
        %506 = vmatprep.subr.bf16.mxu0 0
        %507 = vmatpush1.bf16.msra.mxu0 0
        %508 = vmatprep.subr.bf16.mxu0 0
        %509 = vmatpush1.bf16.msra.mxu0 0
        %510 = vmatprep.subr.bf16.mxu0 0
        %511 = vmatpush1.bf16.msra.mxu0 0
        %512 = vmatprep.subr.bf16.mxu0 0
        %513 = vmatpush1.bf16.msra.mxu0 0
        %514 = vmatprep.subr.bf16.mxu0 0
        %515 = vmatpush1.bf16.msra.mxu0 0
        %516 = vmatprep.subr.bf16.mxu0 0
        %517 = vmatpush1.bf16.msra.mxu0 0
        %518 = vmatprep.subr.bf16.mxu0 0
        %519 = vmatpush1.bf16.msra.mxu0 0
        %520 = vmatprep.subr.bf16.mxu0 0
        %521 = vmatpush1.bf16.msra.mxu0 0
        %522 = vmatprep.subr.bf16.mxu0 0
        %523 = vmatpush1.bf16.msra.mxu0 0
        %524 = vmatprep.subr.bf16.mxu0 0
        %525 = vmatpush1.bf16.msra.mxu0 0
        %526 = vmatprep.subr.bf16.mxu0 0
        %527 = vmatpush1.bf16.msra.mxu0 0
        %528 = vmatprep.subr.bf16.mxu0 0
        %529 = vmatpush1.bf16.msra.mxu0 0
        %530 = vmatprep.subr.bf16.mxu0 0
        %531 = vmatpush1.bf16.msra.mxu0 0
        %532 = vmatprep.subr.bf16.mxu0 0
        %533 = vmatpush1.bf16.msra.mxu0 0
        %534 = vmatprep.mubr.bf16.mxu0 0
        %535 = vmatmul.mubr.bf16.gmra.mrb[0].mxu0 %v497
        %v536 = vpop.f32.mrb[0].mxu0
        %v537 = vadd.f32 0.0, %v536
        %v538 = vpop.f32.mrb[0].mxu0
        %v539 = vpop.f32.mrb[0].mxu0
        %v540 = vpop.f32.mrb[0].mxu0
        %541 = vdwg.mxu0
        %v542 = vrcp.pop %v492
        %v543 = vmul.f32 %v537, %v542
        %544 = vrot.lane.b32.xlu0 %v321, 32
        %v545 = vpop.permute.xlu0 %544
        %546 = vrot.lane.b32.xlu0 %v207, 32
        %v547 = vpop.permute.xlu0 %546
        %v549 = vsel %vm208, %v545, 0
        %v552 = vsel %vm208, %v547, 0
        %554 = vmatprep.subr.bf16.mxu0 0
        %555 = vmatpush1.bf16.xpose.msra.mxu0 %v552
        %556 = vmatprep.subr.bf16.mxu0 0
        %557 = vmatpush1.bf16.xpose.msra.mxu0 0
        %558 = vmatprep.subr.bf16.mxu0 0
        %559 = vmatpush1.bf16.xpose.msra.mxu0 0
        %560 = vmatprep.subr.bf16.mxu0 0
        %561 = vmatpush1.bf16.xpose.msra.mxu0 0
        %562 = vmatprep.subr.bf16.mxu0 0
        %563 = vmatpush1.bf16.xpose.msra.mxu0 0
        %564 = vmatprep.subr.bf16.mxu0 0
        %565 = vmatpush1.bf16.xpose.msra.mxu0 0
        %566 = vmatprep.subr.bf16.mxu0 0
        %567 = vmatpush1.bf16.xpose.msra.mxu0 0
        %568 = vmatprep.subr.bf16.mxu0 0
        %569 = vmatpush1.bf16.xpose.msra.mxu0 0
        %570 = vmatprep.subr.bf16.mxu0 0
        %571 = vmatpush1.bf16.xpose.msra.mxu0 0
        %572 = vmatprep.subr.bf16.mxu0 0
        %573 = vmatpush1.bf16.xpose.msra.mxu0 0
        %574 = vmatprep.subr.bf16.mxu0 0
        %575 = vmatpush1.bf16.xpose.msra.mxu0 0
        %576 = vmatprep.subr.bf16.mxu0 0
        %577 = vmatpush1.bf16.xpose.msra.mxu0 0
        %578 = vmatprep.subr.bf16.mxu0 0
        %579 = vmatpush1.bf16.xpose.msra.mxu0 0
        %580 = vmatprep.subr.bf16.mxu0 0
        %581 = vmatpush1.bf16.xpose.msra.mxu0 0
        %582 = vmatprep.subr.bf16.mxu0 0
        %583 = vmatpush1.bf16.xpose.msra.mxu0 0
        %584 = vmatprep.subr.bf16.mxu0 0
        %585 = vmatpush1.bf16.xpose.msra.mxu0 0
        %586 = vmatprep.mubr.bf16.mxu0 0
        %587 = vmatmul.mubr.bf16.gmra.mrb[0].mxu0 %v549
        %v588 = vpop.f32.mrb[0].mxu0
        %v589 = vadd.f32 0.0, %v588
        %v590 = vpop.f32.mrb[0].mxu0
        %v591 = vpop.f32.mrb[0].mxu0
        %v592 = vpop.f32.mrb[0].mxu0
        %593 = vdwg.mxu0
        %v594 = vmul.f32 %v589, 0.17677669
        %v595 = vsel %vm256, %v594, -inf
        %596 = vmax.xlane.f32.xlu0 %v595
        %v597 = vpop.xlane.xlu0 %596
        %v598 = vsub.f32 %v594, %v597
        %v599 = vmul.f32 %v598, 1.442695
        %v600 = vpow.pop %v599
        %v601 = vsel %vm256, %v600, 0.0
        %602 = vadd.xlane.f32.xlu0 %v601
        %v603 = vpop.xlane.xlu0 %602
        %v604 = vpack.c.bf16 %v600, %v600
        %605 = vrot.lane.b32.xlu0 %v269, 32
        %v606 = vpop.permute.xlu0 %605
        %v608 = vsel %vm256, %v604, 0
        %v611 = vsel %vm273, %v606, 0
        %613 = vmatprep.subr.bf16.mxu0 0
        %614 = vmatpush1.bf16.msra.mxu0 %v611
        %615 = vmatprep.subr.bf16.mxu0 0
        %616 = vmatpush1.bf16.msra.mxu0 0
        %617 = vmatprep.subr.bf16.mxu0 0
        %618 = vmatpush1.bf16.msra.mxu0 0
        %619 = vmatprep.subr.bf16.mxu0 0
        %620 = vmatpush1.bf16.msra.mxu0 0
        %621 = vmatprep.subr.bf16.mxu0 0
        %622 = vmatpush1.bf16.msra.mxu0 0
        %623 = vmatprep.subr.bf16.mxu0 0
        %624 = vmatpush1.bf16.msra.mxu0 0
        %625 = vmatprep.subr.bf16.mxu0 0
        %626 = vmatpush1.bf16.msra.mxu0 0
        %627 = vmatprep.subr.bf16.mxu0 0
        %628 = vmatpush1.bf16.msra.mxu0 0
        %629 = vmatprep.subr.bf16.mxu0 0
        %630 = vmatpush1.bf16.msra.mxu0 0
        %631 = vmatprep.subr.bf16.mxu0 0
        %632 = vmatpush1.bf16.msra.mxu0 0
        %633 = vmatprep.subr.bf16.mxu0 0
        %634 = vmatpush1.bf16.msra.mxu0 0
        %635 = vmatprep.subr.bf16.mxu0 0
        %636 = vmatpush1.bf16.msra.mxu0 0
        %637 = vmatprep.subr.bf16.mxu0 0
        %638 = vmatpush1.bf16.msra.mxu0 0
        %639 = vmatprep.subr.bf16.mxu0 0
        %640 = vmatpush1.bf16.msra.mxu0 0
        %641 = vmatprep.subr.bf16.mxu0 0
        %642 = vmatpush1.bf16.msra.mxu0 0
        %643 = vmatprep.subr.bf16.mxu0 0
        %644 = vmatpush1.bf16.msra.mxu0 0
        %645 = vmatprep.mubr.bf16.mxu0 0
        %646 = vmatmul.mubr.bf16.gmra.mrb[0].mxu0 %v608
        %v647 = vpop.f32.mrb[0].mxu0
        %v648 = vadd.f32 0.0, %v647
        %v649 = vpop.f32.mrb[0].mxu0
        %v650 = vpop.f32.mrb[0].mxu0
        %v651 = vpop.f32.mrb[0].mxu0
        %652 = vdwg.mxu0
        %v653 = vrcp.pop %v603
        %v654 = vmul.f32 %v648, %v653
        %656 = vrot.lane.b32.xlu0 %v432, 32
        %v657 = vpop.permute.xlu0 %656
        %660 = vrot.lane.b32.xlu0 %v543, 64
        %v661 = vpop.permute.xlu0 %660
        %664 = vrot.lane.b32.xlu0 %v654, 96
        %v665 = vpop.permute.xlu0 %664
        %v667 = vsel %vm208, %v318, %v657
        %vm668 = vcmask 523264
        %v669 = vsel %vm668, %v667, %v661
        %vm670 = vcmask 785408
        %v671 = vsel %vm670, %v669, %v665
        %v672 = vpack.c.bf16 %v671, %v671
        %673 = vst [vmem:[%s198] sm:$0xf] %v672
        %s674 = sand.u32 %s82, 1
        %s675 = scalar_lea.sflag [#allocation4], %s674
        %s676 = sand.u32 %s82, 1
        %s677 = smul.addr %s676, 4
        %s678 = scalar_lea.vmem [#allocation7], %s677
        // Predicated region
        $region37: #{transformer_forward.41} parent=27 // pred_check
          %p679 = pneg %p92
        $region38: #{transformer_forward.41} parent=27 // pred_check_branch
          %681 = sbr.rel (%p679) target = $region40
        $region39: #{transformer_forward.41} parent=27 // pred_region
          %s683 = ssub.s32 64, 64
          %684 = vsyncadd %s675, %s683
          %s685 = smul.addr %s22, 64
          %s686 = scalar_lea.hbm %s2, %s685
          %s688 = sshll.u32 %s678, 4
          %s689 = int_to_ptr.vmem [resolvable:$true] %s688
          %691 = dma.vmem_to_hbm [thread:$0]  %s689, 64, %s686, %s675
        $region40: #{transformer_forward.41} parent=27 // pred_fallthru
          _
      $region28: #{transformer_forward.41} parent=5 // pred_fallthru
        _
      %p692 = scmp.le.s32.totalorder 2, %s17
      // Predicated region
      $region41: #{transformer_forward.41} parent=5 // pred_check
        %p693 = pneg %p692
      $region42: #{transformer_forward.41} parent=5 // pred_check_branch
        %695 = sbr.rel (%p693) target = $region44
      $region43: #{transformer_forward.41} parent=5 // pred_region
        %s696 = ssub.s32 %s17, 2
        // Predicated region
        $region45: #{transformer_forward.41} parent=43 // pred_check
          %p697 = pneg %p98
        $region46: #{transformer_forward.41} parent=43 // pred_check_branch
          %699 = sbr.rel (%p697) target = $region48
        $region47: #{transformer_forward.41} parent=43 // pred_region
          %s700 = sand.u32 %s83, 1
          %s701 = scalar_lea.sflag [#allocation4], %s700
          %s702 = sand.u32 %s83, 1
          %s703 = smul.addr %s702, 4
          %s704 = scalar_lea.vmem [#allocation7], %s703
          %705 = dma.done %s701, 64
        $region48: #{transformer_forward.41} parent=43 // pred_fallthru
          _
      $region44: #{transformer_forward.41} parent=5 // pred_fallthru
        _
    $region6: #{transformer_forward.41} parent=1 // loop_footer
      %s21 = sadd.s32 1, %s17
    $region7: #{transformer_forward.41} parent=1 // loop_footer_branch
      %16 = sbr.rel target = $region3
    $region8: #{transformer_forward.41} parent=1 // loop_exit
      _
    %706 = vsyncpa [#allocation3], 1
    %s707 = scalar_lea.sflag [#allocation3], 1
    %708 = vsyncpa %s707, 1
    %709 = vsyncpa [#allocation6], 1
    %s710 = scalar_lea.sflag [#allocation6], 1
    %711 = vsyncpa %s710, 1
    %712 = vsyncpa [#allocation4], 1
    %s713 = scalar_lea.sflag [#allocation4], 1
    %714 = vsyncpa %s713, 1

// kernel: transformer_forward.43
$region0: #{transformer_forward.43}
  #allocation0 [shape = 'u32[]', space=smem, size = 0x4, offset = 0x4, fixed_abs, tag = 'smem constant byte address 0x4 - core index']
  #allocation1 [shape = 'u32[144,128]{1,0:T(1,128)}', space=vmem, size = 0x12000, scoped, tag = 'internal scratch']
  %s0 = inlined_call_operand.hbm [shape: bf16[16,128], index: 0, kind: input, shape index: {}]
  %s1 = inlined_call_operand.hbm [shape: bf16[128,256], index: 1, kind: input, shape index: {}]
  %s2 = inlined_call_operand.hbm [shape: f32[1,256], index: 2, kind: input, shape index: {}]
  %s3 = inlined_call_operand.hbm [shape: bf16[256,128], index: 3, kind: input, shape index: {}]
  %s4 = inlined_call_operand.hbm [shape: f32[1,128], index: 4, kind: input, shape index: {}]
  %s5 = inlined_call_operand.hbm [shape: f32[1,128], index: 5, kind: input, shape index: {}]
  %s6 = inlined_call_operand.hbm [shape: f32[1,128], index: 6, kind: input, shape index: {}]
  %s7 = inlined_call_operand.hbm [shape: bf16[16,128], index: 7, kind: output, shape index: {}]
  %s8 = sld [smem:[#allocation0]]
  $region66: #{transformer_forward.43} parent=0
    _
  %s10 = ssub.s32 1, %s8
  %s11 = scalar_select 0, %s10, %s8
  $region1: #{transformer_forward.43} parent=0
    #allocation2 [shape = 'u8[4096]{0}', space=vmem, size = 0x1000, scoped, tag = 'input window, operand 0, single buffered']
    #allocation3 [shape = 's32[1]{0}', space=sflag, size = 0x4, scoped, tag = 'scoped memory for transformer_forward.43']
    #allocation4 [shape = 's32[1]{0}', space=sflag, size = 0x4, scoped, tag = 'scoped memory for transformer_forward.43']
    #allocation5 [shape = 'u8[65536]{0}', space=vmem, size = 0x10000, scoped, tag = 'input window, operand 1, single buffered']
    #allocation6 [shape = 's32[1]{0}', space=sflag, size = 0x4, scoped, tag = 'scoped memory for transformer_forward.43']
    #allocation7 [shape = 'u8[1024]{0}', space=vmem, size = 0x400, scoped, tag = 'input window, operand 2, single buffered']
    #allocation8 [shape = 'u8[65536]{0}', space=vmem, size = 0x10000, scoped, tag = 'input window, operand 3, single buffered']
    #allocation9 [shape = 's32[1]{0}', space=sflag, size = 0x4, scoped, tag = 'scoped memory for transformer_forward.43']
    #allocation10 [shape = 'u8[512]{0}', space=vmem, size = 0x400, scoped, tag = 'input window, operand 4, single buffered']
    #allocation11 [shape = 'u8[512]{0}', space=vmem, size = 0x400, scoped, tag = 'input window, operand 5, single buffered']
    #allocation12 [shape = 's32[1]{0}', space=sflag, size = 0x4, scoped, tag = 'scoped memory for transformer_forward.43']
    #allocation13 [shape = 'u8[512]{0}', space=vmem, size = 0x400, scoped, tag = 'input window, operand 6, single buffered']
    #allocation14 [shape = 'u8[4096]{0}', space=vmem, size = 0x1000, scoped, tag = 'output window, operand 0, single buffered']
    %12 = vsyncpa [#allocation3], 0
    %13 = vsyncpa [#allocation6], 0
    %14 = vsyncpa [#allocation9], 0
    %15 = vsyncpa [#allocation12], 0
    %16 = vsyncpa [#allocation4], 0
    // Predicated region
    $region2: #{transformer_forward.43} parent=1 // pred_check
      _
    $region3: #{transformer_forward.43} parent=1 // pred_check_branch
      %18 = sbr.rel (0) target = $region5
    $region4: #{transformer_forward.43} parent=1 // pred_region
      %s20 = ssub.s32 128, 128
      %21 = vsyncadd [#allocation3], %s20
      %s22 = sshll.u32 [#allocation2], 4
      %s23 = int_to_ptr.vmem [resolvable:$true] %s22
      %28 = dma.hbm_to_vmem [thread:$0]  %s0, 128, %s23, [#allocation3], 64, 64, 4
    $region5: #{transformer_forward.43} parent=1 // pred_fallthru
      _
    // Predicated region
    $region6: #{transformer_forward.43} parent=1 // pred_check
      _
    $region7: #{transformer_forward.43} parent=1 // pred_check_branch
      %30 = sbr.rel (0) target = $region9
    $region8: #{transformer_forward.43} parent=1 // pred_region
      %s32 = ssub.s32 2048, 2048
      %33 = vsyncadd [#allocation6], %s32
      %s34 = sshll.u32 [#allocation5], 4
      %s35 = int_to_ptr.vmem [resolvable:$true] %s34
      %40 = dma.hbm_to_vmem [thread:$0]  %s1, 2048, %s35, [#allocation6], 128, 128, 8
    $region9: #{transformer_forward.43} parent=1 // pred_fallthru
      _
    // Predicated region
    $region10: #{transformer_forward.43} parent=1 // pred_check
      _
    $region11: #{transformer_forward.43} parent=1 // pred_check_branch
      %42 = sbr.rel (0) target = $region13
    $region12: #{transformer_forward.43} parent=1 // pred_region
      %s44 = ssub.s32 32, 32
      %45 = vsyncadd [#allocation6], %s44
      %s47 = sshll.u32 [#allocation7], 4
      %s48 = int_to_ptr.vmem [resolvable:$true] %s47
      %50 = dma.hbm_to_vmem [thread:$0]  %s2, 32, %s48, [#allocation6]
    $region13: #{transformer_forward.43} parent=1 // pred_fallthru
      _
    // Predicated region
    $region14: #{transformer_forward.43} parent=1 // pred_check
      _
    $region15: #{transformer_forward.43} parent=1 // pred_check_branch
      %52 = sbr.rel (0) target = $region17
    $region16: #{transformer_forward.43} parent=1 // pred_region
      %s54 = ssub.s32 2048, 2048
      %55 = vsyncadd [#allocation9], %s54
      %s56 = sshll.u32 [#allocation8], 4
      %s57 = int_to_ptr.vmem [resolvable:$true] %s56
      %62 = dma.hbm_to_vmem [thread:$0]  %s3, 2048, %s57, [#allocation9], 64, 64, 4
    $region17: #{transformer_forward.43} parent=1 // pred_fallthru
      _
    // Predicated region
    $region18: #{transformer_forward.43} parent=1 // pred_check
      _
    $region19: #{transformer_forward.43} parent=1 // pred_check_branch
      %64 = sbr.rel (0) target = $region21
    $region20: #{transformer_forward.43} parent=1 // pred_region
      %s66 = ssub.s32 16, 16
      %67 = vsyncadd [#allocation9], %s66
      %s69 = sshll.u32 [#allocation10], 4
      %s70 = int_to_ptr.vmem [resolvable:$true] %s69
      %72 = dma.hbm_to_vmem [thread:$0]  %s4, 16, %s70, [#allocation9]
    $region21: #{transformer_forward.43} parent=1 // pred_fallthru
      _
    // Predicated region
    $region22: #{transformer_forward.43} parent=1 // pred_check
      _
    $region23: #{transformer_forward.43} parent=1 // pred_check_branch
      %74 = sbr.rel (0) target = $region25
    $region24: #{transformer_forward.43} parent=1 // pred_region
      %s76 = ssub.s32 16, 16
      %77 = vsyncadd [#allocation12], %s76
      %s79 = sshll.u32 [#allocation11], 4
      %s80 = int_to_ptr.vmem [resolvable:$true] %s79
      %82 = dma.hbm_to_vmem [thread:$0]  %s5, 16, %s80, [#allocation12]
    $region25: #{transformer_forward.43} parent=1 // pred_fallthru
      _
    // Predicated region
    $region26: #{transformer_forward.43} parent=1 // pred_check
      _
    $region27: #{transformer_forward.43} parent=1 // pred_check_branch
      %84 = sbr.rel (0) target = $region29
    $region28: #{transformer_forward.43} parent=1 // pred_region
      %s86 = ssub.s32 16, 16
      %87 = vsyncadd [#allocation12], %s86
      %s89 = sshll.u32 [#allocation13], 4
      %s90 = int_to_ptr.vmem [resolvable:$true] %s89
      %92 = dma.hbm_to_vmem [thread:$0]  %s6, 16, %s90, [#allocation12]
    $region29: #{transformer_forward.43} parent=1 // pred_fallthru
      _
    // Predicated region
    $region30: #{transformer_forward.43} parent=1 // pred_check
      _
    $region31: #{transformer_forward.43} parent=1 // pred_check_branch
      %94 = sbr.rel (0) target = $region33
    $region32: #{transformer_forward.43} parent=1 // pred_region
      %95 = dma.done [#allocation3], 128
    $region33: #{transformer_forward.43} parent=1 // pred_fallthru
      _
    // Predicated region
    $region34: #{transformer_forward.43} parent=1 // pred_check
      _
    $region35: #{transformer_forward.43} parent=1 // pred_check_branch
      %97 = sbr.rel (0) target = $region37
    $region36: #{transformer_forward.43} parent=1 // pred_region
      %98 = dma.done [#allocation6], 2048
    $region37: #{transformer_forward.43} parent=1 // pred_fallthru
      _
    // Predicated region
    $region38: #{transformer_forward.43} parent=1 // pred_check
      _
    $region39: #{transformer_forward.43} parent=1 // pred_check_branch
      %100 = sbr.rel (0) target = $region41
    $region40: #{transformer_forward.43} parent=1 // pred_region
      %101 = dma.done [#allocation6], 32
    $region41: #{transformer_forward.43} parent=1 // pred_fallthru
      _
    // Predicated region
    $region42: #{transformer_forward.43} parent=1 // pred_check
      _
    $region43: #{transformer_forward.43} parent=1 // pred_check_branch
      %103 = sbr.rel (0) target = $region45
    $region44: #{transformer_forward.43} parent=1 // pred_region
      %104 = dma.done [#allocation9], 2048
    $region45: #{transformer_forward.43} parent=1 // pred_fallthru
      _
    // Predicated region
    $region46: #{transformer_forward.43} parent=1 // pred_check
      _
    $region47: #{transformer_forward.43} parent=1 // pred_check_branch
      %106 = sbr.rel (0) target = $region49
    $region48: #{transformer_forward.43} parent=1 // pred_region
      %107 = dma.done [#allocation9], 16
    $region49: #{transformer_forward.43} parent=1 // pred_fallthru
      _
    // Predicated region
    $region50: #{transformer_forward.43} parent=1 // pred_check
      _
    $region51: #{transformer_forward.43} parent=1 // pred_check_branch
      %109 = sbr.rel (0) target = $region53
    $region52: #{transformer_forward.43} parent=1 // pred_region
      %110 = dma.done [#allocation12], 16
    $region53: #{transformer_forward.43} parent=1 // pred_fallthru
      _
    // Predicated region
    $region54: #{transformer_forward.43} parent=1 // pred_check
      _
    $region55: #{transformer_forward.43} parent=1 // pred_check_branch
      %112 = sbr.rel (0) target = $region57
    $region56: #{transformer_forward.43} parent=1 // pred_region
      %113 = dma.done [#allocation12], 16
    $region57: #{transformer_forward.43} parent=1 // pred_fallthru
      _
    %v115 = vld [vmem:[#allocation2] sm:$0xf]
    %v116 = vld [vmem:[#allocation2 + $0x4] sm:$0xf]
    %v117 = vld [vmem:[#allocation5] sm:$0xff]
    %v118 = vld [vmem:[#allocation5 + $0x8] sm:$0xff]
    %v119 = vld [vmem:[#allocation5 + $0x10] sm:$0xff]
    %v120 = vld [vmem:[#allocation5 + $0x18] sm:$0xff]
    %v121 = vld [vmem:[#allocation5 + $0x20] sm:$0xff]
    %v122 = vld [vmem:[#allocation5 + $0x28] sm:$0xff]
    %v123 = vld [vmem:[#allocation5 + $0x30] sm:$0xff]
    %v124 = vld [vmem:[#allocation5 + $0x38] sm:$0xff]
    %v125 = vld [vmem:[#allocation5 + $0x40] sm:$0xff]
    %v126 = vld [vmem:[#allocation5 + $0x48] sm:$0xff]
    %v127 = vld [vmem:[#allocation5 + $0x50] sm:$0xff]
    %v128 = vld [vmem:[#allocation5 + $0x58] sm:$0xff]
    %v129 = vld [vmem:[#allocation5 + $0x60] sm:$0xff]
    %v130 = vld [vmem:[#allocation5 + $0x68] sm:$0xff]
    %v131 = vld [vmem:[#allocation5 + $0x70] sm:$0xff]
    %v132 = vld [vmem:[#allocation5 + $0x78] sm:$0xff]
    %v133 = vld [vmem:[#allocation7] sm:$0x3]
    %v135 = vlaneseq
    %v136 = vshrl.u32 %v135, 7
    %v137 = vsub.s32 0, %v136
    %v138 = vrot.slane %v133, %v137
    %v139 = vlaneseq
    %v140 = vshrl.u32 %v139, 7
    %v141 = vsub.s32 1, %v140
    %v142 = vrot.slane %v133, %v141
    %v147 = vunpack.c.l.b16 %v115
    %v148 = vunpack.c.l.b16 %v116
    %v149 = vpack.c.b16 %v148, %v147
    %v167 = vunpack.c.l.b16 %v117
    %v168 = vunpack.c.h.b16 %v117
    %v169 = vunpack.c.l.b16 %v118
    %v170 = vunpack.c.h.b16 %v118
    %v171 = vunpack.c.l.b16 %v119
    %v172 = vunpack.c.h.b16 %v119
    %v173 = vunpack.c.l.b16 %v120
    %v174 = vunpack.c.h.b16 %v120
    %v175 = vunpack.c.l.b16 %v121
    %v176 = vunpack.c.h.b16 %v121
    %v177 = vunpack.c.l.b16 %v122
    %v178 = vunpack.c.h.b16 %v122
    %v179 = vunpack.c.l.b16 %v123
    %v180 = vunpack.c.h.b16 %v123
    %v181 = vunpack.c.l.b16 %v124
    %v182 = vunpack.c.h.b16 %v124
    %v183 = vunpack.c.l.b16 %v125
    %v184 = vunpack.c.h.b16 %v125
    %v185 = vunpack.c.l.b16 %v126
    %v186 = vunpack.c.h.b16 %v126
    %v187 = vunpack.c.l.b16 %v127
    %v188 = vunpack.c.h.b16 %v127
    %v189 = vunpack.c.l.b16 %v128
    %v190 = vunpack.c.h.b16 %v128
    %v191 = vunpack.c.l.b16 %v129
    %v192 = vunpack.c.h.b16 %v129
    %v193 = vunpack.c.l.b16 %v130
    %v194 = vunpack.c.h.b16 %v130
    %v195 = vunpack.c.l.b16 %v131
    %v196 = vunpack.c.h.b16 %v131
    %v197 = vunpack.c.l.b16 %v132
    %v198 = vunpack.c.h.b16 %v132
    %v199 = vpack.c.b16 %v169, %v167
    %v200 = vpack.c.b16 %v170, %v168
    %v201 = vpack.c.b16 %v173, %v171
    %v202 = vpack.c.b16 %v174, %v172
    %v203 = vpack.c.b16 %v177, %v175
    %v204 = vpack.c.b16 %v178, %v176
    %v205 = vpack.c.b16 %v181, %v179
    %v206 = vpack.c.b16 %v182, %v180
    %v207 = vpack.c.b16 %v185, %v183
    %v208 = vpack.c.b16 %v186, %v184
    %v209 = vpack.c.b16 %v189, %v187
    %v210 = vpack.c.b16 %v190, %v188
    %v211 = vpack.c.b16 %v193, %v191
    %v212 = vpack.c.b16 %v194, %v192
    %v213 = vpack.c.b16 %v197, %v195
    %v214 = vpack.c.b16 %v198, %v196
    %231 = vmatprep.subr.bf16.mxu0 %v200
    %232 = vmatpush1.bf16.msra.mxu0 %v199
    %233 = vmatprep.subr.bf16.mxu0 %v202
    %234 = vmatpush1.bf16.msra.mxu0 %v201
    %235 = vmatprep.subr.bf16.mxu0 %v204
    %236 = vmatpush1.bf16.msra.mxu0 %v203
    %237 = vmatprep.subr.bf16.mxu0 %v206
    %238 = vmatpush1.bf16.msra.mxu0 %v205
    %239 = vmatprep.subr.bf16.mxu0 %v208
    %240 = vmatpush1.bf16.msra.mxu0 %v207
    %241 = vmatprep.subr.bf16.mxu0 %v210
    %242 = vmatpush1.bf16.msra.mxu0 %v209
    %243 = vmatprep.subr.bf16.mxu0 %v212
    %244 = vmatpush1.bf16.msra.mxu0 %v211
    %245 = vmatprep.subr.bf16.mxu0 %v214
    %246 = vmatpush1.bf16.msra.mxu0 %v213
    %247 = vmatprep.subr.bf16.mxu0 0
    %248 = vmatpush1.bf16.msra.mxu0 0
    %249 = vmatprep.subr.bf16.mxu0 0
    %250 = vmatpush1.bf16.msra.mxu0 0
    %251 = vmatprep.subr.bf16.mxu0 0
    %252 = vmatpush1.bf16.msra.mxu0 0
    %253 = vmatprep.subr.bf16.mxu0 0
    %254 = vmatpush1.bf16.msra.mxu0 0
    %255 = vmatprep.subr.bf16.mxu0 0
    %256 = vmatpush1.bf16.msra.mxu0 0
    %257 = vmatprep.subr.bf16.mxu0 0
    %258 = vmatpush1.bf16.msra.mxu0 0
    %259 = vmatprep.subr.bf16.mxu0 0
    %260 = vmatpush1.bf16.msra.mxu0 0
    %261 = vmatprep.subr.bf16.mxu0 0
    %262 = vmatpush1.bf16.msra.mxu0 0
    %263 = vmatprep.mubr.bf16.mxu0 0
    %264 = vmatmul.mubr.bf16.gmra.mrb[0].mxu0 %v149
    %v265 = vpop.f32.mrb[0].mxu0
    %v266 = vadd.f32 %v138, %v265
    %v267 = vpop.f32.mrb[0].mxu0
    %v268 = vadd.f32 %v142, %v267
    %v269 = vpop.f32.mrb[0].mxu0
    %v270 = vadd.f32 %v138, %v269
    %v271 = vpop.f32.mrb[0].mxu0
    %v272 = vadd.f32 %v142, %v271
    %273 = vdwg.mxu0
    %v274 = vmax.f32 %v266, 0.0
    %v275 = vmax.f32 %v268, 0.0
    %v276 = vmax.f32 %v270, 0.0
    %v277 = vmax.f32 %v272, 0.0
    %v278 = vpack.c.bf16 %v276, %v274
    %v279 = vpack.c.bf16 %v277, %v275
    %v280 = vld [vmem:[#allocation8] sm:$0xf]
    %v281 = vld [vmem:[#allocation8 + $0x4] sm:$0xf]
    %v282 = vld [vmem:[#allocation8 + $0x8] sm:$0xf]
    %v283 = vld [vmem:[#allocation8 + $0xc] sm:$0xf]
    %v284 = vld [vmem:[#allocation8 + $0x10] sm:$0xf]
    %v285 = vld [vmem:[#allocation8 + $0x14] sm:$0xf]
    %v286 = vld [vmem:[#allocation8 + $0x18] sm:$0xf]
    %v287 = vld [vmem:[#allocation8 + $0x1c] sm:$0xf]
    %v288 = vld [vmem:[#allocation8 + $0x20] sm:$0xf]
    %v289 = vld [vmem:[#allocation8 + $0x24] sm:$0xf]
    %v290 = vld [vmem:[#allocation8 + $0x28] sm:$0xf]
    %v291 = vld [vmem:[#allocation8 + $0x2c] sm:$0xf]
    %v292 = vld [vmem:[#allocation8 + $0x30] sm:$0xf]
    %v293 = vld [vmem:[#allocation8 + $0x34] sm:$0xf]
    %v294 = vld [vmem:[#allocation8 + $0x38] sm:$0xf]
    %v295 = vld [vmem:[#allocation8 + $0x3c] sm:$0xf]
    %v296 = vld [vmem:[#allocation8 + $0x40] sm:$0xf]
    %v297 = vld [vmem:[#allocation8 + $0x44] sm:$0xf]
    %v298 = vld [vmem:[#allocation8 + $0x48] sm:$0xf]
    %v299 = vld [vmem:[#allocation8 + $0x4c] sm:$0xf]
    %v300 = vld [vmem:[#allocation8 + $0x50] sm:$0xf]
    %v301 = vld [vmem:[#allocation8 + $0x54] sm:$0xf]
    %v302 = vld [vmem:[#allocation8 + $0x58] sm:$0xf]
    %v303 = vld [vmem:[#allocation8 + $0x5c] sm:$0xf]
    %v304 = vld [vmem:[#allocation8 + $0x60] sm:$0xf]
    %v305 = vld [vmem:[#allocation8 + $0x64] sm:$0xf]
    %v306 = vld [vmem:[#allocation8 + $0x68] sm:$0xf]
    %v307 = vld [vmem:[#allocation8 + $0x6c] sm:$0xf]
    %v308 = vld [vmem:[#allocation8 + $0x70] sm:$0xf]
    %v309 = vld [vmem:[#allocation8 + $0x74] sm:$0xf]
    %v310 = vld [vmem:[#allocation8 + $0x78] sm:$0xf]
    %v311 = vld [vmem:[#allocation8 + $0x7c] sm:$0xf]
    %v312 = vld [vmem:[#allocation10] sm:$0x1]
    %v314 = vlaneseq
    %v315 = vshrl.u32 %v314, 7
    %v316 = vsub.s32 0, %v315
    %v317 = vrot.slane %v312, %v316
    %v351 = vunpack.c.l.b16 %v280
    %v352 = vunpack.c.l.b16 %v281
    %v353 = vunpack.c.l.b16 %v282
    %v354 = vunpack.c.l.b16 %v283
    %v355 = vunpack.c.l.b16 %v284
    %v356 = vunpack.c.l.b16 %v285
    %v357 = vunpack.c.l.b16 %v286
    %v358 = vunpack.c.l.b16 %v287
    %v359 = vunpack.c.l.b16 %v288
    %v360 = vunpack.c.l.b16 %v289
    %v361 = vunpack.c.l.b16 %v290
    %v362 = vunpack.c.l.b16 %v291
    %v363 = vunpack.c.l.b16 %v292
    %v364 = vunpack.c.l.b16 %v293
    %v365 = vunpack.c.l.b16 %v294
    %v366 = vunpack.c.l.b16 %v295
    %v367 = vunpack.c.l.b16 %v296
    %v368 = vunpack.c.l.b16 %v297
    %v369 = vunpack.c.l.b16 %v298
    %v370 = vunpack.c.l.b16 %v299
    %v371 = vunpack.c.l.b16 %v300
    %v372 = vunpack.c.l.b16 %v301
    %v373 = vunpack.c.l.b16 %v302
    %v374 = vunpack.c.l.b16 %v303
    %v375 = vunpack.c.l.b16 %v304
    %v376 = vunpack.c.l.b16 %v305
    %v377 = vunpack.c.l.b16 %v306
    %v378 = vunpack.c.l.b16 %v307
    %v379 = vunpack.c.l.b16 %v308
    %v380 = vunpack.c.l.b16 %v309
    %v381 = vunpack.c.l.b16 %v310
    %v382 = vunpack.c.l.b16 %v311
    %v383 = vpack.c.b16 %v352, %v351
    %v384 = vpack.c.b16 %v354, %v353
    %v385 = vpack.c.b16 %v356, %v355
    %v386 = vpack.c.b16 %v358, %v357
    %v387 = vpack.c.b16 %v360, %v359
    %v388 = vpack.c.b16 %v362, %v361
    %v389 = vpack.c.b16 %v364, %v363
    %v390 = vpack.c.b16 %v366, %v365
    %v391 = vpack.c.b16 %v368, %v367
    %v392 = vpack.c.b16 %v370, %v369
    %v393 = vpack.c.b16 %v372, %v371
    %v394 = vpack.c.b16 %v374, %v373
    %v395 = vpack.c.b16 %v376, %v375
    %v396 = vpack.c.b16 %v378, %v377
    %v397 = vpack.c.b16 %v380, %v379
    %v398 = vpack.c.b16 %v382, %v381
    %415 = vmatprep.subr.bf16.mxu0 0
    %416 = vmatpush1.bf16.msra.mxu0 %v383
    %417 = vmatprep.subr.bf16.mxu0 0
    %418 = vmatpush1.bf16.msra.mxu0 %v384
    %419 = vmatprep.subr.bf16.mxu0 0
    %420 = vmatpush1.bf16.msra.mxu0 %v385
    %421 = vmatprep.subr.bf16.mxu0 0
    %422 = vmatpush1.bf16.msra.mxu0 %v386
    %423 = vmatprep.subr.bf16.mxu0 0
    %424 = vmatpush1.bf16.msra.mxu0 %v387
    %425 = vmatprep.subr.bf16.mxu0 0
    %426 = vmatpush1.bf16.msra.mxu0 %v388
    %427 = vmatprep.subr.bf16.mxu0 0
    %428 = vmatpush1.bf16.msra.mxu0 %v389
    %429 = vmatprep.subr.bf16.mxu0 0
    %430 = vmatpush1.bf16.msra.mxu0 %v390
    %431 = vmatprep.subr.bf16.mxu0 0
    %432 = vmatpush1.bf16.msra.mxu0 %v391
    %433 = vmatprep.subr.bf16.mxu0 0
    %434 = vmatpush1.bf16.msra.mxu0 %v392
    %435 = vmatprep.subr.bf16.mxu0 0
    %436 = vmatpush1.bf16.msra.mxu0 %v393
    %437 = vmatprep.subr.bf16.mxu0 0
    %438 = vmatpush1.bf16.msra.mxu0 %v394
    %439 = vmatprep.subr.bf16.mxu0 0
    %440 = vmatpush1.bf16.msra.mxu0 %v395
    %441 = vmatprep.subr.bf16.mxu0 0
    %442 = vmatpush1.bf16.msra.mxu0 %v396
    %443 = vmatprep.subr.bf16.mxu0 0
    %444 = vmatpush1.bf16.msra.mxu0 %v397
    %445 = vmatprep.subr.bf16.mxu0 0
    %446 = vmatpush1.bf16.msra.mxu0 %v398
    %447 = vmatprep.mubr.bf16.mxu0 %v279
    %448 = vmatmul.mubr.bf16.gmra.mrb[0].mxu0 %v278
    %v449 = vpop.f32.mrb[0].mxu0
    %v450 = vadd.f32 %v317, %v449
    %v451 = vpop.f32.mrb[0].mxu0
    %v452 = vpop.f32.mrb[0].mxu0
    %v453 = vadd.f32 %v317, %v452
    %v454 = vpop.f32.mrb[0].mxu0
    %455 = vdwg.mxu0
    %v456 = vunpack.c.l.bf16 %v115
    %v457 = vunpack.c.l.bf16 %v116
    %v458 = vadd.f32 %v456, %v450
    %v459 = vadd.f32 %v457, %v453
    %460 = vadd.xlane.f32.xlu0 %v458
    %v461 = vpop.xlane.xlu0 %460
    %462 = vadd.xlane.f32.xlu0 %v459
    %v463 = vpop.xlane.xlu0 %462
    %v464 = vrcp.pop 128.0
    %v465 = vmul.f32 %v461, %v464
    %v466 = vmul.f32 %v463, %v464
    %v467 = vsub.f32 %v458, %v465
    %v468 = vsub.f32 %v459, %v466
    %v469 = vmul.f32 %v467, %v467
    %v470 = vmul.f32 %v468, %v468
    %471 = vadd.xlane.f32.xlu0 %v469
    %v472 = vpop.xlane.xlu0 %471
    %473 = vadd.xlane.f32.xlu0 %v470
    %v474 = vpop.xlane.xlu0 %473
    %v475 = vmul.f32 %v472, %v464
    %v476 = vmul.f32 %v474, %v464
    %v477 = vadd.f32 %v475, 1e-05
    %v478 = vadd.f32 %v476, 1e-05
    %v479 = vrsqrt.pop %v477
    %v480 = vrsqrt.pop %v478
    %v481 = vmul.f32 %v467, %v479
    %v482 = vmul.f32 %v468, %v480
    %v483 = vld [vmem:[#allocation11] sm:$0x1]
    %v485 = vlaneseq
    %v486 = vshrl.u32 %v485, 7
    %v487 = vsub.s32 0, %v486
    %v488 = vrot.slane %v483, %v487
    %v490 = vmul.f32 %v481, %v488
    %v491 = vmul.f32 %v482, %v488
    %v492 = vld [vmem:[#allocation13] sm:$0x1]
    %v494 = vlaneseq
    %v495 = vshrl.u32 %v494, 7
    %v496 = vsub.s32 0, %v495
    %v497 = vrot.slane %v492, %v496
    %v499 = vadd.f32 %v490, %v497
    %v500 = vadd.f32 %v491, %v497
    %v501 = vpack.c.bf16 %v500, %v499
    %v503 = vunpack.c.l.b16 %v501
    %v504 = vunpack.c.h.b16 %v501
    %v505 = vpack.c.b16 %v503, %v503
    %v506 = vpack.c.b16 %v504, %v504
    %509 = vst [vmem:[#allocation14] sm:$0xf] %v505
    %510 = vst [vmem:[#allocation14 + $0x4] sm:$0xf] %v506
    // Predicated region
    $region58: #{transformer_forward.43} parent=1 // pred_check
      _
    $region59: #{transformer_forward.43} parent=1 // pred_check_branch
      %512 = sbr.rel (0) target = $region61
    $region60: #{transformer_forward.43} parent=1 // pred_region
      %s514 = ssub.s32 128, 128
      %515 = vsyncadd [#allocation4], %s514
      %s516 = sshll.u32 [#allocation14], 4
      %s517 = int_to_ptr.vmem [resolvable:$true] %s516
      %522 = dma.vmem_to_hbm [thread:$0]  %s517, 128, %s7, [#allocation4], 64, 64, 4
    $region61: #{transformer_forward.43} parent=1 // pred_fallthru
      _
    // Predicated region
    $region62: #{transformer_forward.43} parent=1 // pred_check
      _
    $region63: #{transformer_forward.43} parent=1 // pred_check_branch
      %524 = sbr.rel (0) target = $region65
    $region64: #{transformer_forward.43} parent=1 // pred_region
      %525 = dma.done [#allocation4], 128
    $region65: #{transformer_forward.43} parent=1 // pred_fallthru
      _
    %526 = vsyncpa [#allocation3], 1
    %527 = vsyncpa [#allocation6], 1
    %528 = vsyncpa [#allocation9], 1
    %529 = vsyncpa [#allocation12], 1
    %530 = vsyncpa [#allocation4], 1

// kernel: transformer_forward.53
$region0: #{transformer_forward.53}
  #allocation0 [shape = 'u32[]', space=smem, size = 0x4, offset = 0x4, fixed_abs, tag = 'smem constant byte address 0x4 - core index']
  #allocation1 [shape = 'u32[144,128]{1,0:T(1,128)}', space=vmem, size = 0x12000, scoped, tag = 'internal scratch']
  %s0 = inlined_call_operand.hbm [shape: bf16[16,128], index: 0, kind: input, shape index: {}]
  %s1 = inlined_call_operand.hbm [shape: bf16[128,60], index: 1, kind: input, shape index: {}]
  %s2 = inlined_call_operand.hbm [shape: f32[1,60], index: 2, kind: input, shape index: {}]
  %s3 = inlined_call_operand.hbm [shape: f32[16,60], index: 3, kind: output, shape index: {}]
  %s4 = sld [smem:[#allocation0]]
  $region34: #{transformer_forward.53} parent=0
    _
  %s6 = ssub.s32 1, %s4
  %s7 = scalar_select 0, %s6, %s4
  $region1: #{transformer_forward.53} parent=0
    #allocation2 [shape = 'u8[4096]{0}', space=vmem, size = 0x1000, scoped, tag = 'input window, operand 0, single buffered']
    #allocation3 [shape = 's32[1]{0}', space=sflag, size = 0x4, scoped, tag = 'scoped memory for transformer_forward.53']
    #allocation4 [shape = 's32[1]{0}', space=sflag, size = 0x4, scoped, tag = 'scoped memory for transformer_forward.53']
    #allocation5 [shape = 'u8[32768]{0}', space=vmem, size = 0x8000, scoped, tag = 'input window, operand 1, single buffered']
    #allocation6 [shape = 's32[1]{0}', space=sflag, size = 0x4, scoped, tag = 'scoped memory for transformer_forward.53']
    #allocation7 [shape = 'u8[512]{0}', space=vmem, size = 0x400, scoped, tag = 'input window, operand 2, single buffered']
    #allocation8 [shape = 'u8[8192]{0}', space=vmem, size = 0x2000, scoped, tag = 'output window, operand 0, single buffered']
    %8 = vsyncpa [#allocation3], 0
    %9 = vsyncpa [#allocation6], 0
    %10 = vsyncpa [#allocation4], 0
    // Predicated region
    $region2: #{transformer_forward.53} parent=1 // pred_check
      _
    $region3: #{transformer_forward.53} parent=1 // pred_check_branch
      %12 = sbr.rel (0) target = $region5
    $region4: #{transformer_forward.53} parent=1 // pred_region
      %s14 = ssub.s32 128, 128
      %15 = vsyncadd [#allocation3], %s14
      %s16 = sshll.u32 [#allocation2], 4
      %s17 = int_to_ptr.vmem [resolvable:$true] %s16
      %22 = dma.hbm_to_vmem [thread:$0]  %s0, 128, %s17, [#allocation3], 64, 64, 4
    $region5: #{transformer_forward.53} parent=1 // pred_fallthru
      _
    // Predicated region
    $region6: #{transformer_forward.53} parent=1 // pred_check
      _
    $region7: #{transformer_forward.53} parent=1 // pred_check_branch
      %24 = sbr.rel (0) target = $region9
    $region8: #{transformer_forward.53} parent=1 // pred_region
      %s26 = ssub.s32 1024, 1024
      %27 = vsyncadd [#allocation6], %s26
      %s28 = sshll.u32 [#allocation5], 4
      %s29 = int_to_ptr.vmem [resolvable:$true] %s28
      %34 = dma.hbm_to_vmem [thread:$0]  %s1, 1024, %s29, [#allocation6], 64, 64, 4
    $region9: #{transformer_forward.53} parent=1 // pred_fallthru
      _
    // Predicated region
    $region10: #{transformer_forward.53} parent=1 // pred_check
      _
    $region11: #{transformer_forward.53} parent=1 // pred_check_branch
      %36 = sbr.rel (0) target = $region13
    $region12: #{transformer_forward.53} parent=1 // pred_region
      %s38 = ssub.s32 16, 16
      %39 = vsyncadd [#allocation6], %s38
      %s41 = sshll.u32 [#allocation7], 4
      %s42 = int_to_ptr.vmem [resolvable:$true] %s41
      %44 = dma.hbm_to_vmem [thread:$0]  %s2, 16, %s42, [#allocation6]
    $region13: #{transformer_forward.53} parent=1 // pred_fallthru
      _
    // Predicated region
    $region14: #{transformer_forward.53} parent=1 // pred_check
      _
    $region15: #{transformer_forward.53} parent=1 // pred_check_branch
      %46 = sbr.rel (0) target = $region17
    $region16: #{transformer_forward.53} parent=1 // pred_region
      %47 = dma.done [#allocation3], 128
    $region17: #{transformer_forward.53} parent=1 // pred_fallthru
      _
    // Predicated region
    $region18: #{transformer_forward.53} parent=1 // pred_check
      _
    $region19: #{transformer_forward.53} parent=1 // pred_check_branch
      %49 = sbr.rel (0) target = $region21
    $region20: #{transformer_forward.53} parent=1 // pred_region
      %50 = dma.done [#allocation6], 1024
    $region21: #{transformer_forward.53} parent=1 // pred_fallthru
      _
    // Predicated region
    $region22: #{transformer_forward.53} parent=1 // pred_check
      _
    $region23: #{transformer_forward.53} parent=1 // pred_check_branch
      %52 = sbr.rel (0) target = $region25
    $region24: #{transformer_forward.53} parent=1 // pred_region
      %53 = dma.done [#allocation6], 16
    $region25: #{transformer_forward.53} parent=1 // pred_fallthru
      _
    %v55 = vld [vmem:[#allocation2] sm:$0xf]
    %v56 = vld [vmem:[#allocation2 + $0x4] sm:$0xf]
    %v57 = vld [vmem:[#allocation5] sm:$0xf]
    %v58 = vld [vmem:[#allocation5 + $0x4] sm:$0xf]
    %v59 = vld [vmem:[#allocation5 + $0x8] sm:$0xf]
    %v60 = vld [vmem:[#allocation5 + $0xc] sm:$0xf]
    %v61 = vld [vmem:[#allocation5 + $0x10] sm:$0xf]
    %v62 = vld [vmem:[#allocation5 + $0x14] sm:$0xf]
    %v63 = vld [vmem:[#allocation5 + $0x18] sm:$0xf]
    %v64 = vld [vmem:[#allocation5 + $0x1c] sm:$0xf]
    %v65 = vld [vmem:[#allocation5 + $0x20] sm:$0xf]
    %v66 = vld [vmem:[#allocation5 + $0x24] sm:$0xf]
    %v67 = vld [vmem:[#allocation5 + $0x28] sm:$0xf]
    %v68 = vld [vmem:[#allocation5 + $0x2c] sm:$0xf]
    %v69 = vld [vmem:[#allocation5 + $0x30] sm:$0xf]
    %v70 = vld [vmem:[#allocation5 + $0x34] sm:$0xf]
    %v71 = vld [vmem:[#allocation5 + $0x38] sm:$0xf]
    %v72 = vld [vmem:[#allocation5 + $0x3c] sm:$0xf]
    %v73 = vld [vmem:[#allocation7] sm:$0x1]
    %v75 = vlaneseq
    %v76 = vshrl.u32 %v75, 7
    %v77 = vsub.s32 0, %v76
    %v78 = vrot.slane %v73, %v77
    %v82 = vunpack.c.l.b16 %v55
    %v83 = vunpack.c.l.b16 %v56
    %v84 = vpack.c.b16 %v83, %v82
    %v102 = vunpack.c.l.b16 %v57
    %v103 = vunpack.c.l.b16 %v58
    %v104 = vunpack.c.l.b16 %v59
    %v105 = vunpack.c.l.b16 %v60
    %v106 = vunpack.c.l.b16 %v61
    %v107 = vunpack.c.l.b16 %v62
    %v108 = vunpack.c.l.b16 %v63
    %v109 = vunpack.c.l.b16 %v64
    %v110 = vunpack.c.l.b16 %v65
    %v111 = vunpack.c.l.b16 %v66
    %v112 = vunpack.c.l.b16 %v67
    %v113 = vunpack.c.l.b16 %v68
    %v114 = vunpack.c.l.b16 %v69
    %v115 = vunpack.c.l.b16 %v70
    %v116 = vunpack.c.l.b16 %v71
    %v117 = vunpack.c.l.b16 %v72
    %v118 = vpack.c.b16 %v103, %v102
    %v119 = vpack.c.b16 %v105, %v104
    %v120 = vpack.c.b16 %v107, %v106
    %v121 = vpack.c.b16 %v109, %v108
    %v122 = vpack.c.b16 %v111, %v110
    %v123 = vpack.c.b16 %v113, %v112
    %v124 = vpack.c.b16 %v115, %v114
    %v125 = vpack.c.b16 %v117, %v116
    %134 = vmatprep.subr.bf16.mxu0 0
    %135 = vmatpush1.bf16.msra.mxu0 %v118
    %136 = vmatprep.subr.bf16.mxu0 0
    %137 = vmatpush1.bf16.msra.mxu0 %v119
    %138 = vmatprep.subr.bf16.mxu0 0
    %139 = vmatpush1.bf16.msra.mxu0 %v120
    %140 = vmatprep.subr.bf16.mxu0 0
    %141 = vmatpush1.bf16.msra.mxu0 %v121
    %142 = vmatprep.subr.bf16.mxu0 0
    %143 = vmatpush1.bf16.msra.mxu0 %v122
    %144 = vmatprep.subr.bf16.mxu0 0
    %145 = vmatpush1.bf16.msra.mxu0 %v123
    %146 = vmatprep.subr.bf16.mxu0 0
    %147 = vmatpush1.bf16.msra.mxu0 %v124
    %148 = vmatprep.subr.bf16.mxu0 0
    %149 = vmatpush1.bf16.msra.mxu0 %v125
    %150 = vmatprep.subr.bf16.mxu0 0
    %151 = vmatpush1.bf16.msra.mxu0 0
    %152 = vmatprep.subr.bf16.mxu0 0
    %153 = vmatpush1.bf16.msra.mxu0 0
    %154 = vmatprep.subr.bf16.mxu0 0
    %155 = vmatpush1.bf16.msra.mxu0 0
    %156 = vmatprep.subr.bf16.mxu0 0
    %157 = vmatpush1.bf16.msra.mxu0 0
    %158 = vmatprep.subr.bf16.mxu0 0
    %159 = vmatpush1.bf16.msra.mxu0 0
    %160 = vmatprep.subr.bf16.mxu0 0
    %161 = vmatpush1.bf16.msra.mxu0 0
    %162 = vmatprep.subr.bf16.mxu0 0
    %163 = vmatpush1.bf16.msra.mxu0 0
    %164 = vmatprep.subr.bf16.mxu0 0
    %165 = vmatpush1.bf16.msra.mxu0 0
    %166 = vmatprep.mubr.bf16.mxu0 0
    %167 = vmatmul.mubr.bf16.gmra.mrb[0].mxu0 %v84
    %v168 = vpop.f32.mrb[0].mxu0
    %v169 = vadd.f32 %v78, %v168
    %v170 = vpop.f32.mrb[0].mxu0
    %v171 = vpop.f32.mrb[0].mxu0
    %v172 = vadd.f32 %v78, %v171
    %v173 = vpop.f32.mrb[0].mxu0
    %174 = vdwg.mxu0
    %vm175 = vcmask 490496
    %176 = vst.msk [vmem:[#allocation8] sm:$0xff] %vm175, %v169
    %177 = vst.msk [vmem:[#allocation8 + $0x8] sm:$0xff] %vm175, %v172
    // Predicated region
    $region26: #{transformer_forward.53} parent=1 // pred_check
      _
    $region27: #{transformer_forward.53} parent=1 // pred_check_branch
      %179 = sbr.rel (0) target = $region29
    $region28: #{transformer_forward.53} parent=1 // pred_region
      %s181 = ssub.s32 256, 256
      %182 = vsyncadd [#allocation4], %s181
      %s183 = sshll.u32 [#allocation8], 4
      %s184 = int_to_ptr.vmem [resolvable:$true] %s183
      %189 = dma.vmem_to_hbm [thread:$0]  %s184, 256, %s3, [#allocation4], 128, 128, 8
    $region29: #{transformer_forward.53} parent=1 // pred_fallthru
      _
    // Predicated region
    $region30: #{transformer_forward.53} parent=1 // pred_check
      _
    $region31: #{transformer_forward.53} parent=1 // pred_check_branch
      %191 = sbr.rel (0) target = $region33
    $region32: #{transformer_forward.53} parent=1 // pred_region
      %192 = dma.done [#allocation4], 256
    $region33: #{transformer_forward.53} parent=1 // pred_fallthru
      _
    %193 = vsyncpa [#allocation3], 1
    %194 = vsyncpa [#allocation6], 1
    %195 = vsyncpa [#allocation4], 1

</llo_original>
